<compile_context>
chip_gen: v7x
topology: tpu7x:2x2x1
jax: 0.10.0
libtpu: 0.0.40
codegen_flags: <defaults>
</compile_context>

<pallas_src>
from functools import partial

import numpy as np
import jax
import jax.numpy as jnp
from jax import lax
from jax.experimental import pallas as pl
from jax.experimental.pallas import tpu as pltpu


# ----------------------------------------------------------------------------
# Row-tiling helpers (2-D (rows, features) tensors)
# ----------------------------------------------------------------------------
def _row_tiling(m, max_tile=512):
    if m <= max_tile:
        return m, m
    tm = max_tile  # multiple of 8
    mp = ((m + tm - 1) // tm) * tm
    return tm, mp


def _pad_rows(x, mp):
    m = x.shape[0]
    return x if mp == m else jnp.pad(x, ((0, mp - m), (0, 0)))


# ----------------------------------------------------------------------------
# Kernel A: fused  LayerNorm(x)+pos  ->  value_proj(x)  and  q @ [off_w | aw_w]
# ----------------------------------------------------------------------------
def _attn_in_kernel(x_ref, pos_ref, g_ref, b_ref, vw_ref, vb_ref, qw_ref, qb_ref,
                    val_ref, offaw_ref, *, eps):
    x = x_ref[...]
    mean = jnp.mean(x, axis=-1, keepdims=True)
    xc = x - mean
    var = jnp.mean(xc * xc, axis=-1, keepdims=True)
    q = xc * lax.rsqrt(var + eps) * g_ref[...] + b_ref[...] + pos_ref[...]
    val_ref[...] = (jnp.dot(x, vw_ref[...], preferred_element_type=jnp.float32)
                    + vb_ref[...])
    offaw_ref[...] = (jnp.dot(q, qw_ref[...], preferred_element_type=jnp.float32)
                      + qb_ref[...])


def pallas_attn_in(x, pos, ln_g, ln_b, value_w, value_b, qproj_w, qproj_b,
                   eps=1e-5, row_tile=512):
    m, d = x.shape
    n = qproj_w.shape[1]
    tm, mp = _row_tiling(m, row_tile)
    xp, posp = _pad_rows(x, mp), _pad_rows(pos, mp)

    val, offaw = pl.pallas_call(
        partial(_attn_in_kernel, eps=eps),
        out_shape=(jax.ShapeDtypeStruct((mp, d), jnp.float32),
                   jax.ShapeDtypeStruct((mp, n), jnp.float32)),
        grid_spec=pltpu.PrefetchScalarGridSpec(
            num_scalar_prefetch=0,
            grid=(mp // tm,),
            in_specs=[
                pl.BlockSpec((tm, d), lambda i: (i, 0)),
                pl.BlockSpec((tm, d), lambda i: (i, 0)),
                pl.BlockSpec((1, d), lambda i: (0, 0)),
                pl.BlockSpec((1, d), lambda i: (0, 0)),
                pl.BlockSpec((d, d), lambda i: (0, 0)),
                pl.BlockSpec((1, d), lambda i: (0, 0)),
                pl.BlockSpec((d, n), lambda i: (0, 0)),
                pl.BlockSpec((1, n), lambda i: (0, 0)),
            ],
            out_specs=(pl.BlockSpec((tm, d), lambda i: (i, 0)),
                       pl.BlockSpec((tm, n), lambda i: (i, 0))),
        ),
        compiler_params=pltpu.CompilerParams(dimension_semantics=("parallel",)),
    )(xp, posp, ln_g.reshape(1, d), ln_b.reshape(1, d),
      value_w, value_b.reshape(1, d), qproj_w, qproj_b.reshape(1, n))
    return val[:m], offaw[:m]


# ----------------------------------------------------------------------------
# Kernel B: deformable-attention core.  Per (batch*head) grid point the
# bilinear sampling + attention-weighting is expressed as a dense (Lq, HW)
# weight matrix per level, multiplied against the level's value slab (MXU).
# grid_sample(mode=bilinear, padding=zeros, align_corners=False) semantics.
# ----------------------------------------------------------------------------
def _deform_core_kernel(locx_ref, locy_ref, aw_ref, v_ref, o_ref, *,
                        spatial_shapes, level_start, n_point):
    lq = o_ref.shape[1]
    hd = o_ref.shape[2]
    lx = locx_ref[0]                                      # (Lq, nl*P)
    ly = locy_ref[0]
    aw = aw_ref[0]
    v_full = v_ref[0]                                     # (L, hd)

    acc = jnp.zeros((lq, hd), jnp.float32)
    for lvl, (h, w) in enumerate(spatial_shapes):
        start = level_start[lvl]
        hw = h * w
        v = v_full[start:start + hw]                      # (HW, hd)
        col = lax.broadcasted_iota(jnp.int32, (1, hw), 1)  # (1, HW)

        a_mat = jnp.zeros((lq, hw), jnp.float32)
        for p in range(n_point):
            c = lvl * n_point + p
            x = lx[:, c:c + 1] * w - 0.5                  # (Lq, 1)
            y = ly[:, c:c + 1] * h - 0.5
            wgt_p = aw[:, c:c + 1]
            x0 = jnp.floor(x)
            y0 = jnp.floor(y)
            for dy in (0.0, 1.0):
                for dx in (0.0, 1.0):
                    ix = x0 + dx
                    iy = y0 + dy
                    bw = (1.0 - jnp.abs(x - ix)) * (1.0 - jnp.abs(y - iy))
                    valid = ((ix >= 0) & (ix <= w - 1)
                             & (iy >= 0) & (iy <= h - 1))
                    bw = bw * valid.astype(jnp.float32) * wgt_p
                    idx = (jnp.clip(iy, 0, h - 1) * w
                           + jnp.clip(ix, 0, w - 1)).astype(jnp.int32)
                    a_mat = a_mat + bw * (col == idx).astype(jnp.float32)
        acc = acc + jnp.dot(a_mat, v, preferred_element_type=jnp.float32)
    o_ref[0] = acc


def pallas_deform_core(locx, locy, aw, value, spatial_shapes, level_start, n_point):
    bh, lq, npl = locx.shape
    _, l, hd = value.shape
    kern = partial(_deform_core_kernel, spatial_shapes=tuple(spatial_shapes),
                   level_start=tuple(level_start), n_point=n_point)
    return pl.pallas_call(
        kern,
        out_shape=jax.ShapeDtypeStruct((bh, lq, hd), jnp.float32),
        grid_spec=pltpu.PrefetchScalarGridSpec(
            num_scalar_prefetch=0,
            grid=(bh,),
            in_specs=[
                pl.BlockSpec((1, lq, npl), lambda i: (i, 0, 0)),
                pl.BlockSpec((1, lq, npl), lambda i: (i, 0, 0)),
                pl.BlockSpec((1, lq, npl), lambda i: (i, 0, 0)),
                pl.BlockSpec((1, l, hd), lambda i: (i, 0, 0)),
            ],
            out_specs=pl.BlockSpec((1, lq, hd), lambda i: (i, 0, 0)),
        ),
        compiler_params=pltpu.CompilerParams(dimension_semantics=("parallel",)),
    )(locx, locy, aw, value)


# ----------------------------------------------------------------------------
# Kernel C: Linear (MXU) with bias, optional ReLU, optional residual add
# ----------------------------------------------------------------------------
def _linear_kernel(*refs, activation, has_residual):
    if has_residual:
        x_ref, w_ref, b_ref, r_ref, o_ref = refs
    else:
        x_ref, w_ref, b_ref, o_ref = refs
    y = jnp.dot(x_ref[...], w_ref[...], preferred_element_type=jnp.float32)
    y = y + b_ref[...]
    if activation == "relu":
        y = jnp.maximum(y, 0.0)
    if has_residual:
        y = y + r_ref[...]
    o_ref[...] = y.astype(o_ref.dtype)


def pallas_linear(x, w, b, residual=None, activation=None, row_tile=512):
    m, k = x.shape
    _, n = w.shape
    tm, mp = _row_tiling(m, row_tile)
    inputs = [_pad_rows(x, mp), w, b.reshape(1, n)]
    in_specs = [
        pl.BlockSpec((tm, k), lambda i: (i, 0)),
        pl.BlockSpec((k, n), lambda i: (0, 0)),
        pl.BlockSpec((1, n), lambda i: (0, 0)),
    ]
    if residual is not None:
        inputs.append(_pad_rows(residual, mp))
        in_specs.append(pl.BlockSpec((tm, n), lambda i: (i, 0)))

    out = pl.pallas_call(
        partial(_linear_kernel, activation=activation,
                has_residual=residual is not None),
        out_shape=jax.ShapeDtypeStruct((mp, n), jnp.float32),
        grid_spec=pltpu.PrefetchScalarGridSpec(
            num_scalar_prefetch=0,
            grid=(mp // tm,),
            in_specs=in_specs,
            out_specs=pl.BlockSpec((tm, n), lambda i: (i, 0)),
        ),
        compiler_params=pltpu.CompilerParams(dimension_semantics=("parallel",)),
    )(*inputs)
    return out[:m]


# ----------------------------------------------------------------------------
# Kernel D: fused FFN block   out = x + W2 @ relu(W1 @ LayerNorm(x) + b1) + b2
# ----------------------------------------------------------------------------
def _ffn_kernel(x_ref, g_ref, b_ref, w1_ref, b1_ref, w2_ref, b2_ref, o_ref, *, eps):
    x = x_ref[...]
    mean = jnp.mean(x, axis=-1, keepdims=True)
    xc = x - mean
    var = jnp.mean(xc * xc, axis=-1, keepdims=True)
    y = xc * lax.rsqrt(var + eps) * g_ref[...] + b_ref[...]
    h = jnp.dot(y, w1_ref[...], preferred_element_type=jnp.float32) + b1_ref[...]
    h = jnp.maximum(h, 0.0)
    o = jnp.dot(h, w2_ref[...], preferred_element_type=jnp.float32) + b2_ref[...]
    o_ref[...] = x + o


def pallas_ffn(x, g, b, w1, b1, w2, b2, eps=1e-5, row_tile=512):
    m, d = x.shape
    f = w1.shape[1]
    tm, mp = _row_tiling(m, row_tile)
    out = pl.pallas_call(
        partial(_ffn_kernel, eps=eps),
        out_shape=jax.ShapeDtypeStruct((mp, d), jnp.float32),
        grid_spec=pltpu.PrefetchScalarGridSpec(
            num_scalar_prefetch=0,
            grid=(mp // tm,),
            in_specs=[
                pl.BlockSpec((tm, d), lambda i: (i, 0)),
                pl.BlockSpec((1, d), lambda i: (0, 0)),
                pl.BlockSpec((1, d), lambda i: (0, 0)),
                pl.BlockSpec((d, f), lambda i: (0, 0)),
                pl.BlockSpec((1, f), lambda i: (0, 0)),
                pl.BlockSpec((f, d), lambda i: (0, 0)),
                pl.BlockSpec((1, d), lambda i: (0, 0)),
            ],
            out_specs=pl.BlockSpec((tm, d), lambda i: (i, 0)),
        ),
        compiler_params=pltpu.CompilerParams(dimension_semantics=("parallel",)),
    )(_pad_rows(x, mp), g.reshape(1, d), b.reshape(1, d),
      w1, b1.reshape(1, f), w2, b2.reshape(1, d))
    return out[:m]


# ----------------------------------------------------------------------------
# Full encoder-layer forward (Pallas path).  Dropout = identity (eval mode).
# ----------------------------------------------------------------------------
def encoder_layer_forward_pallas(params, x, pos, reference_point, spatial_shapes,
                                 level_start, mask=None, *, n_head, n_level, n_point):
    b, l, d = x.shape
    hd = d // n_head
    x2 = x.reshape(b * l, d)
    pos2 = pos.reshape(b * l, d) if pos is not None else jnp.zeros_like(x2)

    n_off = n_head * n_level * n_point * 2
    qproj_w = jnp.concatenate([params["offset_w"], params["attn_w_w"]], axis=1)
    qproj_b = jnp.concatenate([params["offset_b"], params["attn_w_b"]], axis=0)

    value2, offaw = pallas_attn_in(
        x2, pos2, params["self_norm_g"], params["self_norm_b"],
        params["value_w"], params["value_b"], qproj_w, qproj_b)

    if mask is not None:
        value2 = jnp.where(mask.reshape(b * l, 1), 0.0, value2)

    off = offaw[:, :n_off].reshape(b, l, n_head, n_level, n_point, 2)
    aw = offaw[:, n_off:].reshape(b, l, n_head, n_level * n_point)
    aw = jax.nn.softmax(aw, axis=-1).reshape(b, l, n_head, n_level, n_point)

    norm = jnp.array([[w, h] for (h, w) in spatial_shapes], dtype=jnp.float32)
    loc = (reference_point[:, :, None, :, None, :]
           + off / norm[None, None, None, :, None, :])        # (B, L, nh, nl, P, 2)

    # head-major layouts for the deform core kernel
    value_bh = (value2.reshape(b, l, n_head, hd)
                .transpose(0, 2, 1, 3).reshape(b * n_head, l, hd))
    locx = (loc[..., 0].transpose(0, 2, 1, 3, 4)
            .reshape(b * n_head, l, n_level * n_point))
    locy = (loc[..., 1].transpose(0, 2, 1, 3, 4)
            .reshape(b * n_head, l, n_level * n_point))
    aw_bh = (aw.transpose(0, 2, 1, 3, 4)
             .reshape(b * n_head, l, n_level * n_point))

    attn = pallas_deform_core(locx, locy, aw_bh, value_bh,
                              spatial_shapes, level_start, n_point)
    attn2 = (attn.reshape(b, n_head, l, hd)
             .transpose(0, 2, 1, 3).reshape(b * l, d))

    # output_proj + residual
    x2 = pallas_linear(attn2, params["out_proj_w"], params["out_proj_b"],
                       residual=x2)

    # fused feed-forward block
    x2 = pallas_ffn(x2, params["ff_norm_g"], params["ff_norm_b"],
                    params["ff_w1"], params["ff_b1"],
                    params["ff_w2"], params["ff_b2"])
    return x2.reshape(b, l, d)


# ----------------------------------------------------------------------------
# Pure-JAX reference (numerical ground truth)
# ----------------------------------------------------------------------------
def _jnp_layernorm(x, gamma, beta, pos=None, eps=1e-5):
    mean = jnp.mean(x, axis=-1, keepdims=True)
    xc = x - mean
    var = jnp.mean(xc * xc, axis=-1, keepdims=True)
    y = xc * lax.rsqrt(var + eps) * gamma + beta
    return y if pos is None else y + pos


def _jnp_linear(x, w, b, residual=None, activation=None):
    y = x @ w + b
    if activation == "relu":
        y = jnp.maximum(y, 0.0)
    if residual is not None:
        y = y + residual
    return y


def _bilinear_sample_level(v_flat, loc, h, w):
    x = loc[..., 0] * w - 0.5
    y = loc[..., 1] * h - 0.5
    x0 = jnp.floor(x)
    y0 = jnp.floor(y)
    out = 0.0
    for dy in (0.0, 1.0):
        for dx in (0.0, 1.0):
            ix = x0 + dx
            iy = y0 + dy
            wgt = (1.0 - jnp.abs(x - ix)) * (1.0 - jnp.abs(y - iy))
            valid = ((ix >= 0) & (ix <= w - 1) & (iy >= 0) & (iy <= h - 1))
            idx = (jnp.clip(iy, 0, h - 1) * w + jnp.clip(ix, 0, w - 1)).astype(jnp.int32)
            g = jax.vmap(lambda vf, ii: vf[ii])(v_flat, idx)
            out = out + g * (wgt * valid.astype(wgt.dtype))[..., None]
    return out


def ms_deform_attn_core_ref(value, spatial_shapes, level_start,
                            sampling_locations, attention_weights):
    b, _, nh, hd = value.shape
    lq = sampling_locations.shape[1]
    p = sampling_locations.shape[4]
    per_level = []
    for lvl, (h, w) in enumerate(spatial_shapes):
        s = level_start[lvl]
        v = value[:, s:s + h * w]
        v = jnp.transpose(v, (0, 2, 1, 3)).reshape(b * nh, h * w, hd)
        loc = sampling_locations[:, :, :, lvl]
        loc = jnp.transpose(loc, (0, 2, 1, 3, 4)).reshape(b * nh, lq, p, 2)
        per_level.append(_bilinear_sample_level(v, loc, h, w))
    sampled = jnp.stack(per_level, axis=2)
    aw = jnp.transpose(attention_weights, (0, 2, 1, 3, 4))
    aw = aw.reshape(b * nh, lq, len(spatial_shapes), p, 1)
    out = jnp.sum(sampled * aw, axis=(2, 3))
    return out.reshape(b, nh, lq, hd).transpose(0, 2, 1, 3).reshape(b, lq, nh * hd)


def encoder_layer_forward_ref(params, x, pos, reference_point, spatial_shapes,
                              level_start, mask=None, *, n_head, n_level, n_point):
    b, l, d = x.shape
    hd = d // n_head
    x2 = x.reshape(b * l, d)
    pos2 = pos.reshape(b * l, d) if pos is not None else None

    q2 = _jnp_layernorm(x2, params["self_norm_g"], params["self_norm_b"], pos=pos2)
    value = _jnp_linear(x2, params["value_w"], params["value_b"])
    if mask is not None:
        value = jnp.where(mask.reshape(b * l, 1), 0.0, value)
    value = value.reshape(b, l, n_head, hd)

    off = _jnp_linear(q2, params["offset_w"], params["offset_b"])
    off = off.reshape(b, l, n_head, n_level, n_point, 2)
    aw = _jnp_linear(q2, params["attn_w_w"], params["attn_w_b"])
    aw = jax.nn.softmax(aw.reshape(b, l, n_head, n_level * n_point), axis=-1)
    aw = aw.reshape(b, l, n_head, n_level, n_point)

    norm = jnp.array([[w, h] for (h, w) in spatial_shapes], dtype=jnp.float32)
    loc = (reference_point[:, :, None, :, None, :]
           + off / norm[None, None, None, :, None, :])

    attn = ms_deform_attn_core_ref(value, spatial_shapes, level_start, loc, aw)
    x2 = _jnp_linear(attn.reshape(b * l, d), params["out_proj_w"],
                     params["out_proj_b"], residual=x2)

    y2 = _jnp_layernorm(x2, params["ff_norm_g"], params["ff_norm_b"])
    h2 = _jnp_linear(y2, params["ff_w1"], params["ff_b1"], activation="relu")
    x2 = _jnp_linear(h2, params["ff_w2"], params["ff_b2"], residual=x2)
    return x2.reshape(b, l, d)


# ----------------------------------------------------------------------------
# Deterministic parameter init (Linear: N(0, 0.02), zero bias; LN: ones/zeros)
# ----------------------------------------------------------------------------
def init_params(key, dim, dim_ff, n_level, n_head, n_point):
    def lin(k, fan_in, fan_out):
        return jax.random.normal(k, (fan_in, fan_out), jnp.float32) * 0.02

    ks = jax.random.split(key, 6)
    return {
        "self_norm_g": jnp.ones((dim,), jnp.float32),
        "self_norm_b": jnp.zeros((dim,), jnp.float32),
        "ff_norm_g": jnp.ones((dim,), jnp.float32),
        "ff_norm_b": jnp.zeros((dim,), jnp.float32),
        "value_w": lin(ks[0], dim, dim),
        "value_b": jnp.zeros((dim,), jnp.float32),
        "offset_w": lin(ks[1], dim, n_head * n_level * n_point * 2),
        "offset_b": jnp.zeros((n_head * n_level * n_point * 2,), jnp.float32),
        "attn_w_w": lin(ks[2], dim, n_head * n_level * n_point),
        "attn_w_b": jnp.zeros((n_head * n_level * n_point,), jnp.float32),
        "out_proj_w": lin(ks[3], dim, dim),
        "out_proj_b": jnp.zeros((dim,), jnp.float32),
        "ff_w1": lin(ks[4], dim, dim_ff),
        "ff_b1": jnp.zeros((dim_ff,), jnp.float32),
        "ff_w2": lin(ks[5], dim_ff, dim),
        "ff_b2": jnp.zeros((dim,), jnp.float32),
    }


if __name__ == "__main__":
    dim, dim_ff, n_level, n_head, n_point = 32, 64, 2, 4, 2
    spatial_shapes = [(8, 8), (4, 4)]          # multi-scale feature map shapes
    level_start = [0, 64]                      # flattened level start indices
    B = 2
    L = sum(h * w for h, w in spatial_shapes)  # 80 tokens

    key = jax.random.PRNGKey(0)
    kp, kx, kpos, kref = jax.random.split(key, 4)
    params = init_params(kp, dim, dim_ff, n_level, n_head, n_point)
    x = jax.random.normal(kx, (B, L, dim), jnp.float32)
    pos = jax.random.normal(kpos, (B, L, dim), jnp.float32)
    reference_point = jax.random.uniform(kref, (B, L, n_level, 2), jnp.float32,
                                         minval=0.05, maxval=0.95)

    @jax.jit
    def run_pallas(params, x, pos, rp):
        return encoder_layer_forward_pallas(
            params, x, pos, rp, spatial_shapes, level_start, None,
            n_head=n_head, n_level=n_level, n_point=n_point)

    @jax.jit
    def run_ref(params, x, pos, rp):
        return encoder_layer_forward_ref(
            params, x, pos, rp, spatial_shapes, level_start, None,
            n_head=n_head, n_level=n_level, n_point=n_point)

    out = jax.block_until_ready(run_pallas(params, x, pos, reference_point))
    ref = jax.block_until_ready(run_ref(params, x, pos, reference_point))

    assert out.shape == (B, L, dim), out.shape
    np.testing.assert_allclose(np.asarray(out), np.asarray(ref),
                               rtol=2e-3, atol=2e-3)
    print("KERNEL_OK")
</pallas_src>

<mosaic_0001>
module attributes {stable_mosaic.version = 11 : i64} {
  func.func @_attn_in_kernel(%arg0: i32, %arg1: memref<160x32xf32, #tpu.memory_space<vmem>>, %arg2: memref<160x32xf32, #tpu.memory_space<vmem>>, %arg3: memref<1x32xf32, #tpu.memory_space<vmem>>, %arg4: memref<1x32xf32, #tpu.memory_space<vmem>>, %arg5: memref<32x32xf32, #tpu.memory_space<vmem>>, %arg6: memref<1x32xf32, #tpu.memory_space<vmem>>, %arg7: memref<32x48xf32, #tpu.memory_space<vmem>>, %arg8: memref<1x48xf32, #tpu.memory_space<vmem>>, %arg9: memref<160x32xf32, #tpu.memory_space<vmem>>, %arg10: memref<160x48xf32, #tpu.memory_space<vmem>>) attributes {dimension_semantics = [#tpu.dimension_semantics<parallel>], iteration_bounds = array<i64: 1>, scalar_prefetch = 0 : i64, scratch_operands = 0 : i64, tpu.core_type = #tpu.core_type<tc>, window_params = [{transform_indices = @transform_0, window_bounds = array<i64: 160, 32>}, {transform_indices = @transform_1, window_bounds = array<i64: 160, 32>}, {pipeline_mode = #tpu.pipeline_mode<synchronous>, transform_indices = @transform_2, window_bounds = array<i64: 1, 32>}, {pipeline_mode = #tpu.pipeline_mode<synchronous>, transform_indices = @transform_3, window_bounds = array<i64: 1, 32>}, {pipeline_mode = #tpu.pipeline_mode<synchronous>, transform_indices = @transform_4, window_bounds = array<i64: 32, 32>}, {pipeline_mode = #tpu.pipeline_mode<synchronous>, transform_indices = @transform_5, window_bounds = array<i64: 1, 32>}, {pipeline_mode = #tpu.pipeline_mode<synchronous>, transform_indices = @transform_6, window_bounds = array<i64: 32, 48>}, {pipeline_mode = #tpu.pipeline_mode<synchronous>, transform_indices = @transform_7, window_bounds = array<i64: 1, 48>}, {transform_indices = @transform_8, window_bounds = array<i64: 160, 32>}, {transform_indices = @transform_9, window_bounds = array<i64: 160, 48>}]} {
    %c0 = arith.constant 0 : index
    %c0_0 = arith.constant 0 : index
    %0 = vector.load %arg1[%c0, %c0_0] : memref<160x32xf32, #tpu.memory_space<vmem>>, vector<160x32xf32>
    %cst = arith.constant dense<0.000000e+00> : vector<160xf32>
    %1 = vector.multi_reduction <add>, %0, %cst [1] : vector<160x32xf32> to vector<160xf32>
    %2 = vector.shape_cast %1 : vector<160xf32> to vector<160x1xf32>
    %cst_1 = arith.constant 3.200000e+01 : f32
    %3 = vector.broadcast %cst_1 : f32 to vector<160x1xf32>
    %4 = arith.divf %2, %3 : vector<160x1xf32>
    %5 = vector.broadcast %4 : vector<160x1xf32> to vector<160x32xf32>
    %6 = arith.subf %0, %5 : vector<160x32xf32>
    %7 = arith.mulf %6, %6 : vector<160x32xf32>
    %cst_2 = arith.constant dense<0.000000e+00> : vector<160xf32>
    %8 = vector.multi_reduction <add>, %7, %cst_2 [1] : vector<160x32xf32> to vector<160xf32>
    %9 = vector.shape_cast %8 : vector<160xf32> to vector<160x1xf32>
    %cst_3 = arith.constant 3.200000e+01 : f32
    %10 = vector.broadcast %cst_3 : f32 to vector<160x1xf32>
    %11 = arith.divf %9, %10 : vector<160x1xf32>
    %cst_4 = arith.constant 9.99999974E-6 : f32
    %12 = vector.broadcast %cst_4 : f32 to vector<160x1xf32>
    %13 = arith.addf %11, %12 : vector<160x1xf32>
    %14 = math.rsqrt %13 : vector<160x1xf32>
    %15 = vector.broadcast %14 : vector<160x1xf32> to vector<160x32xf32>
    %16 = arith.mulf %6, %15 : vector<160x32xf32>
    %c0_5 = arith.constant 0 : index
    %c0_6 = arith.constant 0 : index
    %17 = vector.load %arg3[%c0_5, %c0_6] : memref<1x32xf32, #tpu.memory_space<vmem>>, vector<1x32xf32>
    %18 = vector.broadcast %17 : vector<1x32xf32> to vector<160x32xf32>
    %19 = arith.mulf %16, %18 : vector<160x32xf32>
    %c0_7 = arith.constant 0 : index
    %c0_8 = arith.constant 0 : index
    %20 = vector.load %arg4[%c0_7, %c0_8] : memref<1x32xf32, #tpu.memory_space<vmem>>, vector<1x32xf32>
    %21 = vector.broadcast %20 : vector<1x32xf32> to vector<160x32xf32>
    %22 = arith.addf %19, %21 : vector<160x32xf32>
    %c0_9 = arith.constant 0 : index
    %c0_10 = arith.constant 0 : index
    %23 = vector.load %arg2[%c0_9, %c0_10] : memref<160x32xf32, #tpu.memory_space<vmem>>, vector<160x32xf32>
    %24 = arith.addf %22, %23 : vector<160x32xf32>
    %c0_11 = arith.constant 0 : index
    %c0_12 = arith.constant 0 : index
    %25 = vector.load %arg5[%c0_11, %c0_12] : memref<32x32xf32, #tpu.memory_space<vmem>>, vector<32x32xf32>
    %cst_13 = arith.constant dense<0.000000e+00> : vector<160x32xf32>
    %26 = tpu.matmul %0, %25, %cst_13 {dimension_numbers = #tpu.dot_dimension_numbers<[1], [0], [0], [1], [0, 0, 1, 1], [], []>} : vector<160x32xf32>, vector<32x32xf32>, vector<160x32xf32> -> vector<160x32xf32>
    %c0_14 = arith.constant 0 : index
    %c0_15 = arith.constant 0 : index
    %27 = vector.load %arg6[%c0_14, %c0_15] : memref<1x32xf32, #tpu.memory_space<vmem>>, vector<1x32xf32>
    %28 = vector.broadcast %27 : vector<1x32xf32> to vector<160x32xf32>
    %29 = arith.addf %26, %28 : vector<160x32xf32>
    %c0_16 = arith.constant 0 : index
    %c0_17 = arith.constant 0 : index
    %30 = vector.load %arg9[%c0_16, %c0_17] : memref<160x32xf32, #tpu.memory_space<vmem>>, vector<160x32xf32>
    tpu.vector_store %arg9[%c0_16, %c0_17], %29 {strides = array<i32>} : memref<160x32xf32, #tpu.memory_space<vmem>>, vector<160x32xf32>,
    %c0_18 = arith.constant 0 : index
    %c0_19 = arith.constant 0 : index
    %31 = vector.load %arg7[%c0_18, %c0_19] : memref<32x48xf32, #tpu.memory_space<vmem>>, vector<32x48xf32>
    %cst_20 = arith.constant dense<0.000000e+00> : vector<160x48xf32>
    %32 = tpu.matmul %24, %31, %cst_20 {dimension_numbers = #tpu.dot_dimension_numbers<[1], [0], [0], [1], [0, 0, 1, 1], [], []>} : vector<160x32xf32>, vector<32x48xf32>, vector<160x48xf32> -> vector<160x48xf32>
    %c0_21 = arith.constant 0 : index
    %c0_22 = arith.constant 0 : index
    %33 = vector.load %arg8[%c0_21, %c0_22] : memref<1x48xf32, #tpu.memory_space<vmem>>, vector<1x48xf32>
    %34 = vector.broadcast %33 : vector<1x48xf32> to vector<160x48xf32>
    %35 = arith.addf %32, %34 : vector<160x48xf32>
    %c0_23 = arith.constant 0 : index
    %c0_24 = arith.constant 0 : index
    %36 = vector.load %arg10[%c0_23, %c0_24] : memref<160x48xf32, #tpu.memory_space<vmem>>, vector<160x48xf32>
    tpu.vector_store %arg10[%c0_23, %c0_24], %35 {strides = array<i32>} : memref<160x48xf32, #tpu.memory_space<vmem>>, vector<160x48xf32>,
    return
  }
  func.func @transform_0(%arg0: i32) -> (i32, i32) {
    %c0_i32 = arith.constant 0 : i32
    %c0_i32_0 = arith.constant 0 : i32
    return %arg0, %c0_i32 : i32, i32
  }
  func.func @transform_1(%arg0: i32) -> (i32, i32) {
    %c0_i32 = arith.constant 0 : i32
    %c0_i32_0 = arith.constant 0 : i32
    return %arg0, %c0_i32 : i32, i32
  }
  func.func @transform_2(%arg0: i32) -> (i32, i32) {
    %c0_i32 = arith.constant 0 : i32
    %c0_i32_0 = arith.constant 0 : i32
    %c0_i32_1 = arith.constant 0 : i32
    return %c0_i32, %c0_i32_0 : i32, i32
  }
  func.func @transform_3(%arg0: i32) -> (i32, i32) {
    %c0_i32 = arith.constant 0 : i32
    %c0_i32_0 = arith.constant 0 : i32
    %c0_i32_1 = arith.constant 0 : i32
    return %c0_i32, %c0_i32_0 : i32, i32
  }
  func.func @transform_4(%arg0: i32) -> (i32, i32) {
    %c0_i32 = arith.constant 0 : i32
    %c0_i32_0 = arith.constant 0 : i32
    %c0_i32_1 = arith.constant 0 : i32
    return %c0_i32, %c0_i32_0 : i32, i32
  }
  func.func @transform_5(%arg0: i32) -> (i32, i32) {
    %c0_i32 = arith.constant 0 : i32
    %c0_i32_0 = arith.constant 0 : i32
    %c0_i32_1 = arith.constant 0 : i32
    return %c0_i32, %c0_i32_0 : i32, i32
  }
  func.func @transform_6(%arg0: i32) -> (i32, i32) {
    %c0_i32 = arith.constant 0 : i32
    %c0_i32_0 = arith.constant 0 : i32
    %c0_i32_1 = arith.constant 0 : i32
    return %c0_i32, %c0_i32_0 : i32, i32
  }
  func.func @transform_7(%arg0: i32) -> (i32, i32) {
    %c0_i32 = arith.constant 0 : i32
    %c0_i32_0 = arith.constant 0 : i32
    %c0_i32_1 = arith.constant 0 : i32
    return %c0_i32, %c0_i32_0 : i32, i32
  }
  func.func @transform_8(%arg0: i32) -> (i32, i32) {
    %c0_i32 = arith.constant 0 : i32
    %c0_i32_0 = arith.constant 0 : i32
    return %arg0, %c0_i32 : i32, i32
  }
  func.func @transform_9(%arg0: i32) -> (i32, i32) {
    %c0_i32 = arith.constant 0 : i32
    %c0_i32_0 = arith.constant 0 : i32
    return %arg0, %c0_i32 : i32, i32
  }
}

module attributes {stable_mosaic.version = 11 : i64} {
  func.func @_deform_core_kernel(%arg0: i32, %arg1: memref<1x80x4xf32, #tpu.memory_space<vmem>>, %arg2: memref<1x80x4xf32, #tpu.memory_space<vmem>>, %arg3: memref<1x80x4xf32, #tpu.memory_space<vmem>>, %arg4: memref<1x80x8xf32, #tpu.memory_space<vmem>>, %arg5: memref<1x80x8xf32, #tpu.memory_space<vmem>>) attributes {dimension_semantics = [#tpu.dimension_semantics<parallel>], iteration_bounds = array<i64: 8>, scalar_prefetch = 0 : i64, scratch_operands = 0 : i64, tpu.core_type = #tpu.core_type<tc>, window_params = [{transform_indices = @transform_0, window_bounds = array<i64: 1, 80, 4>}, {transform_indices = @transform_1, window_bounds = array<i64: 1, 80, 4>}, {transform_indices = @transform_2, window_bounds = array<i64: 1, 80, 4>}, {transform_indices = @transform_3, window_bounds = array<i64: 1, 80, 8>}, {transform_indices = @transform_4, window_bounds = array<i64: 1, 80, 8>}]} {
    %c0 = arith.constant 0 : index
    %c0_0 = arith.constant 0 : index
    %c0_1 = arith.constant 0 : index
    %0 = vector.load %arg1[%c0, %c0_0, %c0_1] : memref<1x80x4xf32, #tpu.memory_space<vmem>>, vector<1x80x4xf32>
    %1 = vector.shape_cast %0 : vector<1x80x4xf32> to vector<80x4xf32>
    %c0_2 = arith.constant 0 : index
    %c0_3 = arith.constant 0 : index
    %c0_4 = arith.constant 0 : index
    %2 = vector.load %arg2[%c0_2, %c0_3, %c0_4] : memref<1x80x4xf32, #tpu.memory_space<vmem>>, vector<1x80x4xf32>
    %3 = vector.shape_cast %2 : vector<1x80x4xf32> to vector<80x4xf32>
    %c0_5 = arith.constant 0 : index
    %c0_6 = arith.constant 0 : index
    %c0_7 = arith.constant 0 : index
    %4 = vector.load %arg3[%c0_5, %c0_6, %c0_7] : memref<1x80x4xf32, #tpu.memory_space<vmem>>, vector<1x80x4xf32>
    %5 = vector.shape_cast %4 : vector<1x80x4xf32> to vector<80x4xf32>
    %c0_8 = arith.constant 0 : index
    %c0_9 = arith.constant 0 : index
    %c0_10 = arith.constant 0 : index
    %6 = vector.load %arg4[%c0_8, %c0_9, %c0_10] : memref<1x80x8xf32, #tpu.memory_space<vmem>>, vector<1x80x8xf32>
    %7 = vector.shape_cast %6 : vector<1x80x8xf32> to vector<80x8xf32>
    %cst = arith.constant 0.000000e+00 : f32
    %8 = vector.broadcast %cst : f32 to vector<80x8xf32>
    %9 = vector.extract_strided_slice %7 {offsets = [0, 0], sizes = [64, 8], strides = [1, 1]} : vector<80x8xf32> to vector<64x8xf32>
    %10 = tpu.iota {dimensions = array<i32: 1>} : vector<1x64xi32>
    %cst_11 = arith.constant 0.000000e+00 : f32
    %11 = vector.broadcast %cst_11 : f32 to vector<80x64xf32>
    %12 = vector.extract_strided_slice %1 {offsets = [0, 0], sizes = [80, 1], strides = [1, 1]} : vector<80x4xf32> to vector<80x1xf32>
    %cst_12 = arith.constant 8.000000e+00 : f32
    %13 = vector.broadcast %cst_12 : f32 to vector<80x1xf32>
    %14 = arith.mulf %12, %13 : vector<80x1xf32>
    %cst_13 = arith.constant 5.000000e-01 : f32
    %15 = vector.broadcast %cst_13 : f32 to vector<80x1xf32>
    %16 = arith.subf %14, %15 : vector<80x1xf32>
    %17 = vector.extract_strided_slice %3 {offsets = [0, 0], sizes = [80, 1], strides = [1, 1]} : vector<80x4xf32> to vector<80x1xf32>
    %cst_14 = arith.constant 8.000000e+00 : f32
    %18 = vector.broadcast %cst_14 : f32 to vector<80x1xf32>
    %19 = arith.mulf %17, %18 : vector<80x1xf32>
    %cst_15 = arith.constant 5.000000e-01 : f32
    %20 = vector.broadcast %cst_15 : f32 to vector<80x1xf32>
    %21 = arith.subf %19, %20 : vector<80x1xf32>
    %22 = vector.extract_strided_slice %5 {offsets = [0, 0], sizes = [80, 1], strides = [1, 1]} : vector<80x4xf32> to vector<80x1xf32>
    %23 = math.floor %16 : vector<80x1xf32>
    %24 = math.floor %21 : vector<80x1xf32>
    %cst_16 = arith.constant 0.000000e+00 : f32
    %25 = vector.broadcast %cst_16 : f32 to vector<80x1xf32>
    %26 = arith.addf %23, %25 : vector<80x1xf32>
    %cst_17 = arith.constant 0.000000e+00 : f32
    %27 = vector.broadcast %cst_17 : f32 to vector<80x1xf32>
    %28 = arith.addf %24, %27 : vector<80x1xf32>
    %29 = arith.subf %16, %26 : vector<80x1xf32>
    %30 = math.absf %29 : vector<80x1xf32>
    %cst_18 = arith.constant 1.000000e+00 : f32
    %31 = vector.broadcast %cst_18 : f32 to vector<80x1xf32>
    %32 = arith.subf %31, %30 : vector<80x1xf32>
    %33 = arith.subf %21, %28 : vector<80x1xf32>
    %34 = math.absf %33 : vector<80x1xf32>
    %cst_19 = arith.constant 1.000000e+00 : f32
    %35 = vector.broadcast %cst_19 : f32 to vector<80x1xf32>
    %36 = arith.subf %35, %34 : vector<80x1xf32>
    %37 = arith.mulf %32, %36 : vector<80x1xf32>
    %cst_20 = arith.constant 0.000000e+00 : f32
    %38 = vector.broadcast %cst_20 : f32 to vector<80x1xf32>
    %39 = arith.cmpf oge, %26, %38 : vector<80x1xf32>
    %cst_21 = arith.constant 7.000000e+00 : f32
    %40 = vector.broadcast %cst_21 : f32 to vector<80x1xf32>
    %41 = arith.cmpf ole, %26, %40 : vector<80x1xf32>
    %42 = arith.andi %39, %41 : vector<80x1xi1>
    %cst_22 = arith.constant 0.000000e+00 : f32
    %43 = vector.broadcast %cst_22 : f32 to vector<80x1xf32>
    %44 = arith.cmpf oge, %28, %43 : vector<80x1xf32>
    %45 = arith.andi %42, %44 : vector<80x1xi1>
    %cst_23 = arith.constant 7.000000e+00 : f32
    %46 = vector.broadcast %cst_23 : f32 to vector<80x1xf32>
    %47 = arith.cmpf ole, %28, %46 : vector<80x1xf32>
    %48 = arith.andi %45, %47 : vector<80x1xi1>
    %49 = arith.extui %48 : vector<80x1xi1> to vector<80x1xi32>
    %50 = arith.sitofp %49 : vector<80x1xi32> to vector<80x1xf32>
    %51 = arith.mulf %37, %50 : vector<80x1xf32>
    %52 = arith.mulf %51, %22 : vector<80x1xf32>
    %c0_i32 = arith.constant 0 : i32
    %c7_i32 = arith.constant 7 : i32
    %53 = arith.sitofp %c0_i32 : i32 to f32
    %54 = vector.broadcast %53 : f32 to vector<80x1xf32>
    %55 = arith.maximumf %54, %28 : vector<80x1xf32>
    %56 = arith.sitofp %c7_i32 : i32 to f32
    %57 = vector.broadcast %56 : f32 to vector<80x1xf32>
    %58 = arith.minimumf %57, %55 : vector<80x1xf32>
    %cst_24 = arith.constant 8.000000e+00 : f32
    %59 = vector.broadcast %cst_24 : f32 to vector<80x1xf32>
    %60 = arith.mulf %58, %59 : vector<80x1xf32>
    %c0_i32_25 = arith.constant 0 : i32
    %c7_i32_26 = arith.constant 7 : i32
    %61 = arith.sitofp %c0_i32_25 : i32 to f32
    %62 = vector.broadcast %61 : f32 to vector<80x1xf32>
    %63 = arith.maximumf %62, %26 : vector<80x1xf32>
    %64 = arith.sitofp %c7_i32_26 : i32 to f32
    %65 = vector.broadcast %64 : f32 to vector<80x1xf32>
    %66 = arith.minimumf %65, %63 : vector<80x1xf32>
    %67 = arith.addf %60, %66 : vector<80x1xf32>
    %68 = arith.fptosi %67 : vector<80x1xf32> to vector<80x1xi32>
    %69 = vector.broadcast %10 : vector<1x64xi32> to vector<80x64xi32>
    %70 = vector.broadcast %68 : vector<80x1xi32> to vector<80x64xi32>
    %71 = arith.cmpi eq, %69, %70 : vector<80x64xi32>
    %72 = arith.extui %71 : vector<80x64xi1> to vector<80x64xi32>
    %73 = arith.sitofp %72 : vector<80x64xi32> to vector<80x64xf32>
    %74 = vector.broadcast %52 : vector<80x1xf32> to vector<80x64xf32>
    %75 = arith.mulf %74, %73 : vector<80x64xf32>
    %76 = arith.addf %11, %75 : vector<80x64xf32>
    %cst_27 = arith.constant 1.000000e+00 : f32
    %77 = vector.broadcast %cst_27 : f32 to vector<80x1xf32>
    %78 = arith.addf %23, %77 : vector<80x1xf32>
    %cst_28 = arith.constant 0.000000e+00 : f32
    %79 = vector.broadcast %cst_28 : f32 to vector<80x1xf32>
    %80 = arith.addf %24, %79 : vector<80x1xf32>
    %81 = arith.subf %16, %78 : vector<80x1xf32>
    %82 = math.absf %81 : vector<80x1xf32>
    %cst_29 = arith.constant 1.000000e+00 : f32
    %83 = vector.broadcast %cst_29 : f32 to vector<80x1xf32>
    %84 = arith.subf %83, %82 : vector<80x1xf32>
    %85 = arith.subf %21, %80 : vector<80x1xf32>
    %86 = math.absf %85 : vector<80x1xf32>
    %cst_30 = arith.constant 1.000000e+00 : f32
    %87 = vector.broadcast %cst_30 : f32 to vector<80x1xf32>
    %88 = arith.subf %87, %86 : vector<80x1xf32>
    %89 = arith.mulf %84, %88 : vector<80x1xf32>
    %cst_31 = arith.constant 0.000000e+00 : f32
    %90 = vector.broadcast %cst_31 : f32 to vector<80x1xf32>
    %91 = arith.cmpf oge, %78, %90 : vector<80x1xf32>
    %cst_32 = arith.constant 7.000000e+00 : f32
    %92 = vector.broadcast %cst_32 : f32 to vector<80x1xf32>
    %93 = arith.cmpf ole, %78, %92 : vector<80x1xf32>
    %94 = arith.andi %91, %93 : vector<80x1xi1>
    %cst_33 = arith.constant 0.000000e+00 : f32
    %95 = vector.broadcast %cst_33 : f32 to vector<80x1xf32>
    %96 = arith.cmpf oge, %80, %95 : vector<80x1xf32>
    %97 = arith.andi %94, %96 : vector<80x1xi1>
    %cst_34 = arith.constant 7.000000e+00 : f32
    %98 = vector.broadcast %cst_34 : f32 to vector<80x1xf32>
    %99 = arith.cmpf ole, %80, %98 : vector<80x1xf32>
    %100 = arith.andi %97, %99 : vector<80x1xi1>
    %101 = arith.extui %100 : vector<80x1xi1> to vector<80x1xi32>
    %102 = arith.sitofp %101 : vector<80x1xi32> to vector<80x1xf32>
    %103 = arith.mulf %89, %102 : vector<80x1xf32>
    %104 = arith.mulf %103, %22 : vector<80x1xf32>
    %c0_i32_35 = arith.constant 0 : i32
    %c7_i32_36 = arith.constant 7 : i32
    %105 = arith.sitofp %c0_i32_35 : i32 to f32
    %106 = vector.broadcast %105 : f32 to vector<80x1xf32>
    %107 = arith.maximumf %106, %80 : vector<80x1xf32>
    %108 = arith.sitofp %c7_i32_36 : i32 to f32
    %109 = vector.broadcast %108 : f32 to vector<80x1xf32>
    %110 = arith.minimumf %109, %107 : vector<80x1xf32>
    %cst_37 = arith.constant 8.000000e+00 : f32
    %111 = vector.broadcast %cst_37 : f32 to vector<80x1xf32>
    %112 = arith.mulf %110, %111 : vector<80x1xf32>
    %c0_i32_38 = arith.constant 0 : i32
    %c7_i32_39 = arith.constant 7 : i32
    %113 = arith.sitofp %c0_i32_38 : i32 to f32
    %114 = vector.broadcast %113 : f32 to vector<80x1xf32>
    %115 = arith.maximumf %114, %78 : vector<80x1xf32>
    %116 = arith.sitofp %c7_i32_39 : i32 to f32
    %117 = vector.broadcast %116 : f32 to vector<80x1xf32>
    %118 = arith.minimumf %117, %115 : vector<80x1xf32>
    %119 = arith.addf %112, %118 : vector<80x1xf32>
    %120 = arith.fptosi %119 : vector<80x1xf32> to vector<80x1xi32>
    %121 = vector.broadcast %10 : vector<1x64xi32> to vector<80x64xi32>
    %122 = vector.broadcast %120 : vector<80x1xi32> to vector<80x64xi32>
    %123 = arith.cmpi eq, %121, %122 : vector<80x64xi32>
    %124 = arith.extui %123 : vector<80x64xi1> to vector<80x64xi32>
    %125 = arith.sitofp %124 : vector<80x64xi32> to vector<80x64xf32>
    %126 = vector.broadcast %104 : vector<80x1xf32> to vector<80x64xf32>
    %127 = arith.mulf %126, %125 : vector<80x64xf32>
    %128 = arith.addf %76, %127 : vector<80x64xf32>
    %cst_40 = arith.constant 0.000000e+00 : f32
    %129 = vector.broadcast %cst_40 : f32 to vector<80x1xf32>
    %130 = arith.addf %23, %129 : vector<80x1xf32>
    %cst_41 = arith.constant 1.000000e+00 : f32
    %131 = vector.broadcast %cst_41 : f32 to vector<80x1xf32>
    %132 = arith.addf %24, %131 : vector<80x1xf32>
    %133 = arith.subf %16, %130 : vector<80x1xf32>
    %134 = math.absf %133 : vector<80x1xf32>
    %cst_42 = arith.constant 1.000000e+00 : f32
    %135 = vector.broadcast %cst_42 : f32 to vector<80x1xf32>
    %136 = arith.subf %135, %134 : vector<80x1xf32>
    %137 = arith.subf %21, %132 : vector<80x1xf32>
    %138 = math.absf %137 : vector<80x1xf32>
    %cst_43 = arith.constant 1.000000e+00 : f32
    %139 = vector.broadcast %cst_43 : f32 to vector<80x1xf32>
    %140 = arith.subf %139, %138 : vector<80x1xf32>
    %141 = arith.mulf %136, %140 : vector<80x1xf32>
    %cst_44 = arith.constant 0.000000e+00 : f32
    %142 = vector.broadcast %cst_44 : f32 to vector<80x1xf32>
    %143 = arith.cmpf oge, %130, %142 : vector<80x1xf32>
    %cst_45 = arith.constant 7.000000e+00 : f32
    %144 = vector.broadcast %cst_45 : f32 to vector<80x1xf32>
    %145 = arith.cmpf ole, %130, %144 : vector<80x1xf32>
    %146 = arith.andi %143, %145 : vector<80x1xi1>
    %cst_46 = arith.constant 0.000000e+00 : f32
    %147 = vector.broadcast %cst_46 : f32 to vector<80x1xf32>
    %148 = arith.cmpf oge, %132, %147 : vector<80x1xf32>
    %149 = arith.andi %146, %148 : vector<80x1xi1>
    %cst_47 = arith.constant 7.000000e+00 : f32
    %150 = vector.broadcast %cst_47 : f32 to vector<80x1xf32>
    %151 = arith.cmpf ole, %132, %150 : vector<80x1xf32>
    %152 = arith.andi %149, %151 : vector<80x1xi1>
    %153 = arith.extui %152 : vector<80x1xi1> to vector<80x1xi32>
    %154 = arith.sitofp %153 : vector<80x1xi32> to vector<80x1xf32>
    %155 = arith.mulf %141, %154 : vector<80x1xf32>
    %156 = arith.mulf %155, %22 : vector<80x1xf32>
    %c0_i32_48 = arith.constant 0 : i32
    %c7_i32_49 = arith.constant 7 : i32
    %157 = arith.sitofp %c0_i32_48 : i32 to f32
    %158 = vector.broadcast %157 : f32 to vector<80x1xf32>
    %159 = arith.maximumf %158, %132 : vector<80x1xf32>
    %160 = arith.sitofp %c7_i32_49 : i32 to f32
    %161 = vector.broadcast %160 : f32 to vector<80x1xf32>
    %162 = arith.minimumf %161, %159 : vector<80x1xf32>
    %cst_50 = arith.constant 8.000000e+00 : f32
    %163 = vector.broadcast %cst_50 : f32 to vector<80x1xf32>
    %164 = arith.mulf %162, %163 : vector<80x1xf32>
    %c0_i32_51 = arith.constant 0 : i32
    %c7_i32_52 = arith.constant 7 : i32
    %165 = arith.sitofp %c0_i32_51 : i32 to f32
    %166 = vector.broadcast %165 : f32 to vector<80x1xf32>
    %167 = arith.maximumf %166, %130 : vector<80x1xf32>
    %168 = arith.sitofp %c7_i32_52 : i32 to f32
    %169 = vector.broadcast %168 : f32 to vector<80x1xf32>
    %170 = arith.minimumf %169, %167 : vector<80x1xf32>
    %171 = arith.addf %164, %170 : vector<80x1xf32>
    %172 = arith.fptosi %171 : vector<80x1xf32> to vector<80x1xi32>
    %173 = vector.broadcast %10 : vector<1x64xi32> to vector<80x64xi32>
    %174 = vector.broadcast %172 : vector<80x1xi32> to vector<80x64xi32>
    %175 = arith.cmpi eq, %173, %174 : vector<80x64xi32>
    %176 = arith.extui %175 : vector<80x64xi1> to vector<80x64xi32>
    %177 = arith.sitofp %176 : vector<80x64xi32> to vector<80x64xf32>
    %178 = vector.broadcast %156 : vector<80x1xf32> to vector<80x64xf32>
    %179 = arith.mulf %178, %177 : vector<80x64xf32>
    %180 = arith.addf %128, %179 : vector<80x64xf32>
    %cst_53 = arith.constant 1.000000e+00 : f32
    %181 = vector.broadcast %cst_53 : f32 to vector<80x1xf32>
    %182 = arith.addf %23, %181 : vector<80x1xf32>
    %cst_54 = arith.constant 1.000000e+00 : f32
    %183 = vector.broadcast %cst_54 : f32 to vector<80x1xf32>
    %184 = arith.addf %24, %183 : vector<80x1xf32>
    %185 = arith.subf %16, %182 : vector<80x1xf32>
    %186 = math.absf %185 : vector<80x1xf32>
    %cst_55 = arith.constant 1.000000e+00 : f32
    %187 = vector.broadcast %cst_55 : f32 to vector<80x1xf32>
    %188 = arith.subf %187, %186 : vector<80x1xf32>
    %189 = arith.subf %21, %184 : vector<80x1xf32>
    %190 = math.absf %189 : vector<80x1xf32>
    %cst_56 = arith.constant 1.000000e+00 : f32
    %191 = vector.broadcast %cst_56 : f32 to vector<80x1xf32>
    %192 = arith.subf %191, %190 : vector<80x1xf32>
    %193 = arith.mulf %188, %192 : vector<80x1xf32>
    %cst_57 = arith.constant 0.000000e+00 : f32
    %194 = vector.broadcast %cst_57 : f32 to vector<80x1xf32>
    %195 = arith.cmpf oge, %182, %194 : vector<80x1xf32>
    %cst_58 = arith.constant 7.000000e+00 : f32
    %196 = vector.broadcast %cst_58 : f32 to vector<80x1xf32>
    %197 = arith.cmpf ole, %182, %196 : vector<80x1xf32>
    %198 = arith.andi %195, %197 : vector<80x1xi1>
    %cst_59 = arith.constant 0.000000e+00 : f32
    %199 = vector.broadcast %cst_59 : f32 to vector<80x1xf32>
    %200 = arith.cmpf oge, %184, %199 : vector<80x1xf32>
    %201 = arith.andi %198, %200 : vector<80x1xi1>
    %cst_60 = arith.constant 7.000000e+00 : f32
    %202 = vector.broadcast %cst_60 : f32 to vector<80x1xf32>
    %203 = arith.cmpf ole, %184, %202 : vector<80x1xf32>
    %204 = arith.andi %201, %203 : vector<80x1xi1>
    %205 = arith.extui %204 : vector<80x1xi1> to vector<80x1xi32>
    %206 = arith.sitofp %205 : vector<80x1xi32> to vector<80x1xf32>
    %207 = arith.mulf %193, %206 : vector<80x1xf32>
    %208 = arith.mulf %207, %22 : vector<80x1xf32>
    %c0_i32_61 = arith.constant 0 : i32
    %c7_i32_62 = arith.constant 7 : i32
    %209 = arith.sitofp %c0_i32_61 : i32 to f32
    %210 = vector.broadcast %209 : f32 to vector<80x1xf32>
    %211 = arith.maximumf %210, %184 : vector<80x1xf32>
    %212 = arith.sitofp %c7_i32_62 : i32 to f32
    %213 = vector.broadcast %212 : f32 to vector<80x1xf32>
    %214 = arith.minimumf %213, %211 : vector<80x1xf32>
    %cst_63 = arith.constant 8.000000e+00 : f32
    %215 = vector.broadcast %cst_63 : f32 to vector<80x1xf32>
    %216 = arith.mulf %214, %215 : vector<80x1xf32>
    %c0_i32_64 = arith.constant 0 : i32
    %c7_i32_65 = arith.constant 7 : i32
    %217 = arith.sitofp %c0_i32_64 : i32 to f32
    %218 = vector.broadcast %217 : f32 to vector<80x1xf32>
    %219 = arith.maximumf %218, %182 : vector<80x1xf32>
    %220 = arith.sitofp %c7_i32_65 : i32 to f32
    %221 = vector.broadcast %220 : f32 to vector<80x1xf32>
    %222 = arith.minimumf %221, %219 : vector<80x1xf32>
    %223 = arith.addf %216, %222 : vector<80x1xf32>
    %224 = arith.fptosi %223 : vector<80x1xf32> to vector<80x1xi32>
    %225 = vector.broadcast %10 : vector<1x64xi32> to vector<80x64xi32>
    %226 = vector.broadcast %224 : vector<80x1xi32> to vector<80x64xi32>
    %227 = arith.cmpi eq, %225, %226 : vector<80x64xi32>
    %228 = arith.extui %227 : vector<80x64xi1> to vector<80x64xi32>
    %229 = arith.sitofp %228 : vector<80x64xi32> to vector<80x64xf32>
    %230 = vector.broadcast %208 : vector<80x1xf32> to vector<80x64xf32>
    %231 = arith.mulf %230, %229 : vector<80x64xf32>
    %232 = arith.addf %180, %231 : vector<80x64xf32>
    %233 = vector.extract_strided_slice %1 {offsets = [0, 1], sizes = [80, 1], strides = [1, 1]} : vector<80x4xf32> to vector<80x1xf32>
    %cst_66 = arith.constant 8.000000e+00 : f32
    %234 = vector.broadcast %cst_66 : f32 to vector<80x1xf32>
    %235 = arith.mulf %233, %234 : vector<80x1xf32>
    %cst_67 = arith.constant 5.000000e-01 : f32
    %236 = vector.broadcast %cst_67 : f32 to vector<80x1xf32>
    %237 = arith.subf %235, %236 : vector<80x1xf32>
    %238 = vector.extract_strided_slice %3 {offsets = [0, 1], sizes = [80, 1], strides = [1, 1]} : vector<80x4xf32> to vector<80x1xf32>
    %cst_68 = arith.constant 8.000000e+00 : f32
    %239 = vector.broadcast %cst_68 : f32 to vector<80x1xf32>
    %240 = arith.mulf %238, %239 : vector<80x1xf32>
    %cst_69 = arith.constant 5.000000e-01 : f32
    %241 = vector.broadcast %cst_69 : f32 to vector<80x1xf32>
    %242 = arith.subf %240, %241 : vector<80x1xf32>
    %243 = vector.extract_strided_slice %5 {offsets = [0, 1], sizes = [80, 1], strides = [1, 1]} : vector<80x4xf32> to vector<80x1xf32>
    %244 = math.floor %237 : vector<80x1xf32>
    %245 = math.floor %242 : vector<80x1xf32>
    %cst_70 = arith.constant 0.000000e+00 : f32
    %246 = vector.broadcast %cst_70 : f32 to vector<80x1xf32>
    %247 = arith.addf %244, %246 : vector<80x1xf32>
    %cst_71 = arith.constant 0.000000e+00 : f32
    %248 = vector.broadcast %cst_71 : f32 to vector<80x1xf32>
    %249 = arith.addf %245, %248 : vector<80x1xf32>
    %250 = arith.subf %237, %247 : vector<80x1xf32>
    %251 = math.absf %250 : vector<80x1xf32>
    %cst_72 = arith.constant 1.000000e+00 : f32
    %252 = vector.broadcast %cst_72 : f32 to vector<80x1xf32>
    %253 = arith.subf %252, %251 : vector<80x1xf32>
    %254 = arith.subf %242, %249 : vector<80x1xf32>
    %255 = math.absf %254 : vector<80x1xf32>
    %cst_73 = arith.constant 1.000000e+00 : f32
    %256 = vector.broadcast %cst_73 : f32 to vector<80x1xf32>
    %257 = arith.subf %256, %255 : vector<80x1xf32>
    %258 = arith.mulf %253, %257 : vector<80x1xf32>
    %cst_74 = arith.constant 0.000000e+00 : f32
    %259 = vector.broadcast %cst_74 : f32 to vector<80x1xf32>
    %260 = arith.cmpf oge, %247, %259 : vector<80x1xf32>
    %cst_75 = arith.constant 7.000000e+00 : f32
    %261 = vector.broadcast %cst_75 : f32 to vector<80x1xf32>
    %262 = arith.cmpf ole, %247, %261 : vector<80x1xf32>
    %263 = arith.andi %260, %262 : vector<80x1xi1>
    %cst_76 = arith.constant 0.000000e+00 : f32
    %264 = vector.broadcast %cst_76 : f32 to vector<80x1xf32>
    %265 = arith.cmpf oge, %249, %264 : vector<80x1xf32>
    %266 = arith.andi %263, %265 : vector<80x1xi1>
    %cst_77 = arith.constant 7.000000e+00 : f32
    %267 = vector.broadcast %cst_77 : f32 to vector<80x1xf32>
    %268 = arith.cmpf ole, %249, %267 : vector<80x1xf32>
    %269 = arith.andi %266, %268 : vector<80x1xi1>
    %270 = arith.extui %269 : vector<80x1xi1> to vector<80x1xi32>
    %271 = arith.sitofp %270 : vector<80x1xi32> to vector<80x1xf32>
    %272 = arith.mulf %258, %271 : vector<80x1xf32>
    %273 = arith.mulf %272, %243 : vector<80x1xf32>
    %c0_i32_78 = arith.constant 0 : i32
    %c7_i32_79 = arith.constant 7 : i32
    %274 = arith.sitofp %c0_i32_78 : i32 to f32
    %275 = vector.broadcast %274 : f32 to vector<80x1xf32>
    %276 = arith.maximumf %275, %249 : vector<80x1xf32>
    %277 = arith.sitofp %c7_i32_79 : i32 to f32
    %278 = vector.broadcast %277 : f32 to vector<80x1xf32>
    %279 = arith.minimumf %278, %276 : vector<80x1xf32>
    %cst_80 = arith.constant 8.000000e+00 : f32
    %280 = vector.broadcast %cst_80 : f32 to vector<80x1xf32>
    %281 = arith.mulf %279, %280 : vector<80x1xf32>
    %c0_i32_81 = arith.constant 0 : i32
    %c7_i32_82 = arith.constant 7 : i32
    %282 = arith.sitofp %c0_i32_81 : i32 to f32
    %283 = vector.broadcast %282 : f32 to vector<80x1xf32>
    %284 = arith.maximumf %283, %247 : vector<80x1xf32>
    %285 = arith.sitofp %c7_i32_82 : i32 to f32
    %286 = vector.broadcast %285 : f32 to vector<80x1xf32>
    %287 = arith.minimumf %286, %284 : vector<80x1xf32>
    %288 = arith.addf %281, %287 : vector<80x1xf32>
    %289 = arith.fptosi %288 : vector<80x1xf32> to vector<80x1xi32>
    %290 = vector.broadcast %10 : vector<1x64xi32> to vector<80x64xi32>
    %291 = vector.broadcast %289 : vector<80x1xi32> to vector<80x64xi32>
    %292 = arith.cmpi eq, %290, %291 : vector<80x64xi32>
    %293 = arith.extui %292 : vector<80x64xi1> to vector<80x64xi32>
    %294 = arith.sitofp %293 : vector<80x64xi32> to vector<80x64xf32>
    %295 = vector.broadcast %273 : vector<80x1xf32> to vector<80x64xf32>
    %296 = arith.mulf %295, %294 : vector<80x64xf32>
    %297 = arith.addf %232, %296 : vector<80x64xf32>
    %cst_83 = arith.constant 1.000000e+00 : f32
    %298 = vector.broadcast %cst_83 : f32 to vector<80x1xf32>
    %299 = arith.addf %244, %298 : vector<80x1xf32>
    %cst_84 = arith.constant 0.000000e+00 : f32
    %300 = vector.broadcast %cst_84 : f32 to vector<80x1xf32>
    %301 = arith.addf %245, %300 : vector<80x1xf32>
    %302 = arith.subf %237, %299 : vector<80x1xf32>
    %303 = math.absf %302 : vector<80x1xf32>
    %cst_85 = arith.constant 1.000000e+00 : f32
    %304 = vector.broadcast %cst_85 : f32 to vector<80x1xf32>
    %305 = arith.subf %304, %303 : vector<80x1xf32>
    %306 = arith.subf %242, %301 : vector<80x1xf32>
    %307 = math.absf %306 : vector<80x1xf32>
    %cst_86 = arith.constant 1.000000e+00 : f32
    %308 = vector.broadcast %cst_86 : f32 to vector<80x1xf32>
    %309 = arith.subf %308, %307 : vector<80x1xf32>
    %310 = arith.mulf %305, %309 : vector<80x1xf32>
    %cst_87 = arith.constant 0.000000e+00 : f32
    %311 = vector.broadcast %cst_87 : f32 to vector<80x1xf32>
    %312 = arith.cmpf oge, %299, %311 : vector<80x1xf32>
    %cst_88 = arith.constant 7.000000e+00 : f32
    %313 = vector.broadcast %cst_88 : f32 to vector<80x1xf32>
    %314 = arith.cmpf ole, %299, %313 : vector<80x1xf32>
    %315 = arith.andi %312, %314 : vector<80x1xi1>
    %cst_89 = arith.constant 0.000000e+00 : f32
    %316 = vector.broadcast %cst_89 : f32 to vector<80x1xf32>
    %317 = arith.cmpf oge, %301, %316 : vector<80x1xf32>
    %318 = arith.andi %315, %317 : vector<80x1xi1>
    %cst_90 = arith.constant 7.000000e+00 : f32
    %319 = vector.broadcast %cst_90 : f32 to vector<80x1xf32>
    %320 = arith.cmpf ole, %301, %319 : vector<80x1xf32>
    %321 = arith.andi %318, %320 : vector<80x1xi1>
    %322 = arith.extui %321 : vector<80x1xi1> to vector<80x1xi32>
    %323 = arith.sitofp %322 : vector<80x1xi32> to vector<80x1xf32>
    %324 = arith.mulf %310, %323 : vector<80x1xf32>
    %325 = arith.mulf %324, %243 : vector<80x1xf32>
    %c0_i32_91 = arith.constant 0 : i32
    %c7_i32_92 = arith.constant 7 : i32
    %326 = arith.sitofp %c0_i32_91 : i32 to f32
    %327 = vector.broadcast %326 : f32 to vector<80x1xf32>
    %328 = arith.maximumf %327, %301 : vector<80x1xf32>
    %329 = arith.sitofp %c7_i32_92 : i32 to f32
    %330 = vector.broadcast %329 : f32 to vector<80x1xf32>
    %331 = arith.minimumf %330, %328 : vector<80x1xf32>
    %cst_93 = arith.constant 8.000000e+00 : f32
    %332 = vector.broadcast %cst_93 : f32 to vector<80x1xf32>
    %333 = arith.mulf %331, %332 : vector<80x1xf32>
    %c0_i32_94 = arith.constant 0 : i32
    %c7_i32_95 = arith.constant 7 : i32
    %334 = arith.sitofp %c0_i32_94 : i32 to f32
    %335 = vector.broadcast %334 : f32 to vector<80x1xf32>
    %336 = arith.maximumf %335, %299 : vector<80x1xf32>
    %337 = arith.sitofp %c7_i32_95 : i32 to f32
    %338 = vector.broadcast %337 : f32 to vector<80x1xf32>
    %339 = arith.minimumf %338, %336 : vector<80x1xf32>
    %340 = arith.addf %333, %339 : vector<80x1xf32>
    %341 = arith.fptosi %340 : vector<80x1xf32> to vector<80x1xi32>
    %342 = vector.broadcast %10 : vector<1x64xi32> to vector<80x64xi32>
    %343 = vector.broadcast %341 : vector<80x1xi32> to vector<80x64xi32>
    %344 = arith.cmpi eq, %342, %343 : vector<80x64xi32>
    %345 = arith.extui %344 : vector<80x64xi1> to vector<80x64xi32>
    %346 = arith.sitofp %345 : vector<80x64xi32> to vector<80x64xf32>
    %347 = vector.broadcast %325 : vector<80x1xf32> to vector<80x64xf32>
    %348 = arith.mulf %347, %346 : vector<80x64xf32>
    %349 = arith.addf %297, %348 : vector<80x64xf32>
    %cst_96 = arith.constant 0.000000e+00 : f32
    %350 = vector.broadcast %cst_96 : f32 to vector<80x1xf32>
    %351 = arith.addf %244, %350 : vector<80x1xf32>
    %cst_97 = arith.constant 1.000000e+00 : f32
    %352 = vector.broadcast %cst_97 : f32 to vector<80x1xf32>
    %353 = arith.addf %245, %352 : vector<80x1xf32>
    %354 = arith.subf %237, %351 : vector<80x1xf32>
    %355 = math.absf %354 : vector<80x1xf32>
    %cst_98 = arith.constant 1.000000e+00 : f32
    %356 = vector.broadcast %cst_98 : f32 to vector<80x1xf32>
    %357 = arith.subf %356, %355 : vector<80x1xf32>
    %358 = arith.subf %242, %353 : vector<80x1xf32>
    %359 = math.absf %358 : vector<80x1xf32>
    %cst_99 = arith.constant 1.000000e+00 : f32
    %360 = vector.broadcast %cst_99 : f32 to vector<80x1xf32>
    %361 = arith.subf %360, %359 : vector<80x1xf32>
    %362 = arith.mulf %357, %361 : vector<80x1xf32>
    %cst_100 = arith.constant 0.000000e+00 : f32
    %363 = vector.broadcast %cst_100 : f32 to vector<80x1xf32>
    %364 = arith.cmpf oge, %351, %363 : vector<80x1xf32>
    %cst_101 = arith.constant 7.000000e+00 : f32
    %365 = vector.broadcast %cst_101 : f32 to vector<80x1xf32>
    %366 = arith.cmpf ole, %351, %365 : vector<80x1xf32>
    %367 = arith.andi %364, %366 : vector<80x1xi1>
    %cst_102 = arith.constant 0.000000e+00 : f32
    %368 = vector.broadcast %cst_102 : f32 to vector<80x1xf32>
    %369 = arith.cmpf oge, %353, %368 : vector<80x1xf32>
    %370 = arith.andi %367, %369 : vector<80x1xi1>
    %cst_103 = arith.constant 7.000000e+00 : f32
    %371 = vector.broadcast %cst_103 : f32 to vector<80x1xf32>
    %372 = arith.cmpf ole, %353, %371 : vector<80x1xf32>
    %373 = arith.andi %370, %372 : vector<80x1xi1>
    %374 = arith.extui %373 : vector<80x1xi1> to vector<80x1xi32>
    %375 = arith.sitofp %374 : vector<80x1xi32> to vector<80x1xf32>
    %376 = arith.mulf %362, %375 : vector<80x1xf32>
    %377 = arith.mulf %376, %243 : vector<80x1xf32>
    %c0_i32_104 = arith.constant 0 : i32
    %c7_i32_105 = arith.constant 7 : i32
    %378 = arith.sitofp %c0_i32_104 : i32 to f32
    %379 = vector.broadcast %378 : f32 to vector<80x1xf32>
    %380 = arith.maximumf %379, %353 : vector<80x1xf32>
    %381 = arith.sitofp %c7_i32_105 : i32 to f32
    %382 = vector.broadcast %381 : f32 to vector<80x1xf32>
    %383 = arith.minimumf %382, %380 : vector<80x1xf32>
    %cst_106 = arith.constant 8.000000e+00 : f32
    %384 = vector.broadcast %cst_106 : f32 to vector<80x1xf32>
    %385 = arith.mulf %383, %384 : vector<80x1xf32>
    %c0_i32_107 = arith.constant 0 : i32
    %c7_i32_108 = arith.constant 7 : i32
    %386 = arith.sitofp %c0_i32_107 : i32 to f32
    %387 = vector.broadcast %386 : f32 to vector<80x1xf32>
    %388 = arith.maximumf %387, %351 : vector<80x1xf32>
    %389 = arith.sitofp %c7_i32_108 : i32 to f32
    %390 = vector.broadcast %389 : f32 to vector<80x1xf32>
    %391 = arith.minimumf %390, %388 : vector<80x1xf32>
    %392 = arith.addf %385, %391 : vector<80x1xf32>
    %393 = arith.fptosi %392 : vector<80x1xf32> to vector<80x1xi32>
    %394 = vector.broadcast %10 : vector<1x64xi32> to vector<80x64xi32>
    %395 = vector.broadcast %393 : vector<80x1xi32> to vector<80x64xi32>
    %396 = arith.cmpi eq, %394, %395 : vector<80x64xi32>
    %397 = arith.extui %396 : vector<80x64xi1> to vector<80x64xi32>
    %398 = arith.sitofp %397 : vector<80x64xi32> to vector<80x64xf32>
    %399 = vector.broadcast %377 : vector<80x1xf32> to vector<80x64xf32>
    %400 = arith.mulf %399, %398 : vector<80x64xf32>
    %401 = arith.addf %349, %400 : vector<80x64xf32>
    %cst_109 = arith.constant 1.000000e+00 : f32
    %402 = vector.broadcast %cst_109 : f32 to vector<80x1xf32>
    %403 = arith.addf %244, %402 : vector<80x1xf32>
    %cst_110 = arith.constant 1.000000e+00 : f32
    %404 = vector.broadcast %cst_110 : f32 to vector<80x1xf32>
    %405 = arith.addf %245, %404 : vector<80x1xf32>
    %406 = arith.subf %237, %403 : vector<80x1xf32>
    %407 = math.absf %406 : vector<80x1xf32>
    %cst_111 = arith.constant 1.000000e+00 : f32
    %408 = vector.broadcast %cst_111 : f32 to vector<80x1xf32>
    %409 = arith.subf %408, %407 : vector<80x1xf32>
    %410 = arith.subf %242, %405 : vector<80x1xf32>
    %411 = math.absf %410 : vector<80x1xf32>
    %cst_112 = arith.constant 1.000000e+00 : f32
    %412 = vector.broadcast %cst_112 : f32 to vector<80x1xf32>
    %413 = arith.subf %412, %411 : vector<80x1xf32>
    %414 = arith.mulf %409, %413 : vector<80x1xf32>
    %cst_113 = arith.constant 0.000000e+00 : f32
    %415 = vector.broadcast %cst_113 : f32 to vector<80x1xf32>
    %416 = arith.cmpf oge, %403, %415 : vector<80x1xf32>
    %cst_114 = arith.constant 7.000000e+00 : f32
    %417 = vector.broadcast %cst_114 : f32 to vector<80x1xf32>
    %418 = arith.cmpf ole, %403, %417 : vector<80x1xf32>
    %419 = arith.andi %416, %418 : vector<80x1xi1>
    %cst_115 = arith.constant 0.000000e+00 : f32
    %420 = vector.broadcast %cst_115 : f32 to vector<80x1xf32>
    %421 = arith.cmpf oge, %405, %420 : vector<80x1xf32>
    %422 = arith.andi %419, %421 : vector<80x1xi1>
    %cst_116 = arith.constant 7.000000e+00 : f32
    %423 = vector.broadcast %cst_116 : f32 to vector<80x1xf32>
    %424 = arith.cmpf ole, %405, %423 : vector<80x1xf32>
    %425 = arith.andi %422, %424 : vector<80x1xi1>
    %426 = arith.extui %425 : vector<80x1xi1> to vector<80x1xi32>
    %427 = arith.sitofp %426 : vector<80x1xi32> to vector<80x1xf32>
    %428 = arith.mulf %414, %427 : vector<80x1xf32>
    %429 = arith.mulf %428, %243 : vector<80x1xf32>
    %c0_i32_117 = arith.constant 0 : i32
    %c7_i32_118 = arith.constant 7 : i32
    %430 = arith.sitofp %c0_i32_117 : i32 to f32
    %431 = vector.broadcast %430 : f32 to vector<80x1xf32>
    %432 = arith.maximumf %431, %405 : vector<80x1xf32>
    %433 = arith.sitofp %c7_i32_118 : i32 to f32
    %434 = vector.broadcast %433 : f32 to vector<80x1xf32>
    %435 = arith.minimumf %434, %432 : vector<80x1xf32>
    %cst_119 = arith.constant 8.000000e+00 : f32
    %436 = vector.broadcast %cst_119 : f32 to vector<80x1xf32>
    %437 = arith.mulf %435, %436 : vector<80x1xf32>
    %c0_i32_120 = arith.constant 0 : i32
    %c7_i32_121 = arith.constant 7 : i32
    %438 = arith.sitofp %c0_i32_120 : i32 to f32
    %439 = vector.broadcast %438 : f32 to vector<80x1xf32>
    %440 = arith.maximumf %439, %403 : vector<80x1xf32>
    %441 = arith.sitofp %c7_i32_121 : i32 to f32
    %442 = vector.broadcast %441 : f32 to vector<80x1xf32>
    %443 = arith.minimumf %442, %440 : vector<80x1xf32>
    %444 = arith.addf %437, %443 : vector<80x1xf32>
    %445 = arith.fptosi %444 : vector<80x1xf32> to vector<80x1xi32>
    %446 = vector.broadcast %10 : vector<1x64xi32> to vector<80x64xi32>
    %447 = vector.broadcast %445 : vector<80x1xi32> to vector<80x64xi32>
    %448 = arith.cmpi eq, %446, %447 : vector<80x64xi32>
    %449 = arith.extui %448 : vector<80x64xi1> to vector<80x64xi32>
    %450 = arith.sitofp %449 : vector<80x64xi32> to vector<80x64xf32>
    %451 = vector.broadcast %429 : vector<80x1xf32> to vector<80x64xf32>
    %452 = arith.mulf %451, %450 : vector<80x64xf32>
    %453 = arith.addf %401, %452 : vector<80x64xf32>
    %cst_122 = arith.constant dense<0.000000e+00> : vector<80x8xf32>
    %454 = tpu.matmul %453, %9, %cst_122 {dimension_numbers = #tpu.dot_dimension_numbers<[1], [0], [0], [1], [0, 0, 1, 1], [], []>} : vector<80x64xf32>, vector<64x8xf32>, vector<80x8xf32> -> vector<80x8xf32>
    %455 = arith.addf %8, %454 : vector<80x8xf32>
    %456 = vector.extract_strided_slice %7 {offsets = [64, 0], sizes = [16, 8], strides = [1, 1]} : vector<80x8xf32> to vector<16x8xf32>
    %457 = tpu.iota {dimensions = array<i32: 1>} : vector<1x16xi32>
    %cst_123 = arith.constant 0.000000e+00 : f32
    %458 = vector.broadcast %cst_123 : f32 to vector<80x16xf32>
    %459 = vector.extract_strided_slice %1 {offsets = [0, 2], sizes = [80, 1], strides = [1, 1]} : vector<80x4xf32> to vector<80x1xf32>
    %cst_124 = arith.constant 4.000000e+00 : f32
    %460 = vector.broadcast %cst_124 : f32 to vector<80x1xf32>
    %461 = arith.mulf %459, %460 : vector<80x1xf32>
    %cst_125 = arith.constant 5.000000e-01 : f32
    %462 = vector.broadcast %cst_125 : f32 to vector<80x1xf32>
    %463 = arith.subf %461, %462 : vector<80x1xf32>
    %464 = vector.extract_strided_slice %3 {offsets = [0, 2], sizes = [80, 1], strides = [1, 1]} : vector<80x4xf32> to vector<80x1xf32>
    %cst_126 = arith.constant 4.000000e+00 : f32
    %465 = vector.broadcast %cst_126 : f32 to vector<80x1xf32>
    %466 = arith.mulf %464, %465 : vector<80x1xf32>
    %cst_127 = arith.constant 5.000000e-01 : f32
    %467 = vector.broadcast %cst_127 : f32 to vector<80x1xf32>
    %468 = arith.subf %466, %467 : vector<80x1xf32>
    %469 = vector.extract_strided_slice %5 {offsets = [0, 2], sizes = [80, 1], strides = [1, 1]} : vector<80x4xf32> to vector<80x1xf32>
    %470 = math.floor %463 : vector<80x1xf32>
    %471 = math.floor %468 : vector<80x1xf32>
    %cst_128 = arith.constant 0.000000e+00 : f32
    %472 = vector.broadcast %cst_128 : f32 to vector<80x1xf32>
    %473 = arith.addf %470, %472 : vector<80x1xf32>
    %cst_129 = arith.constant 0.000000e+00 : f32
    %474 = vector.broadcast %cst_129 : f32 to vector<80x1xf32>
    %475 = arith.addf %471, %474 : vector<80x1xf32>
    %476 = arith.subf %463, %473 : vector<80x1xf32>
    %477 = math.absf %476 : vector<80x1xf32>
    %cst_130 = arith.constant 1.000000e+00 : f32
    %478 = vector.broadcast %cst_130 : f32 to vector<80x1xf32>
    %479 = arith.subf %478, %477 : vector<80x1xf32>
    %480 = arith.subf %468, %475 : vector<80x1xf32>
    %481 = math.absf %480 : vector<80x1xf32>
    %cst_131 = arith.constant 1.000000e+00 : f32
    %482 = vector.broadcast %cst_131 : f32 to vector<80x1xf32>
    %483 = arith.subf %482, %481 : vector<80x1xf32>
    %484 = arith.mulf %479, %483 : vector<80x1xf32>
    %cst_132 = arith.constant 0.000000e+00 : f32
    %485 = vector.broadcast %cst_132 : f32 to vector<80x1xf32>
    %486 = arith.cmpf oge, %473, %485 : vector<80x1xf32>
    %cst_133 = arith.constant 3.000000e+00 : f32
    %487 = vector.broadcast %cst_133 : f32 to vector<80x1xf32>
    %488 = arith.cmpf ole, %473, %487 : vector<80x1xf32>
    %489 = arith.andi %486, %488 : vector<80x1xi1>
    %cst_134 = arith.constant 0.000000e+00 : f32
    %490 = vector.broadcast %cst_134 : f32 to vector<80x1xf32>
    %491 = arith.cmpf oge, %475, %490 : vector<80x1xf32>
    %492 = arith.andi %489, %491 : vector<80x1xi1>
    %cst_135 = arith.constant 3.000000e+00 : f32
    %493 = vector.broadcast %cst_135 : f32 to vector<80x1xf32>
    %494 = arith.cmpf ole, %475, %493 : vector<80x1xf32>
    %495 = arith.andi %492, %494 : vector<80x1xi1>
    %496 = arith.extui %495 : vector<80x1xi1> to vector<80x1xi32>
    %497 = arith.sitofp %496 : vector<80x1xi32> to vector<80x1xf32>
    %498 = arith.mulf %484, %497 : vector<80x1xf32>
    %499 = arith.mulf %498, %469 : vector<80x1xf32>
    %c0_i32_136 = arith.constant 0 : i32
    %c3_i32 = arith.constant 3 : i32
    %500 = arith.sitofp %c0_i32_136 : i32 to f32
    %501 = vector.broadcast %500 : f32 to vector<80x1xf32>
    %502 = arith.maximumf %501, %475 : vector<80x1xf32>
    %503 = arith.sitofp %c3_i32 : i32 to f32
    %504 = vector.broadcast %503 : f32 to vector<80x1xf32>
    %505 = arith.minimumf %504, %502 : vector<80x1xf32>
    %cst_137 = arith.constant 4.000000e+00 : f32
    %506 = vector.broadcast %cst_137 : f32 to vector<80x1xf32>
    %507 = arith.mulf %505, %506 : vector<80x1xf32>
    %c0_i32_138 = arith.constant 0 : i32
    %c3_i32_139 = arith.constant 3 : i32
    %508 = arith.sitofp %c0_i32_138 : i32 to f32
    %509 = vector.broadcast %508 : f32 to vector<80x1xf32>
    %510 = arith.maximumf %509, %473 : vector<80x1xf32>
    %511 = arith.sitofp %c3_i32_139 : i32 to f32
    %512 = vector.broadcast %511 : f32 to vector<80x1xf32>
    %513 = arith.minimumf %512, %510 : vector<80x1xf32>
    %514 = arith.addf %507, %513 : vector<80x1xf32>
    %515 = arith.fptosi %514 : vector<80x1xf32> to vector<80x1xi32>
    %516 = vector.broadcast %457 : vector<1x16xi32> to vector<80x16xi32>
    %517 = vector.broadcast %515 : vector<80x1xi32> to vector<80x16xi32>
    %518 = arith.cmpi eq, %516, %517 : vector<80x16xi32>
    %519 = arith.extui %518 : vector<80x16xi1> to vector<80x16xi32>
    %520 = arith.sitofp %519 : vector<80x16xi32> to vector<80x16xf32>
    %521 = vector.broadcast %499 : vector<80x1xf32> to vector<80x16xf32>
    %522 = arith.mulf %521, %520 : vector<80x16xf32>
    %523 = arith.addf %458, %522 : vector<80x16xf32>
    %cst_140 = arith.constant 1.000000e+00 : f32
    %524 = vector.broadcast %cst_140 : f32 to vector<80x1xf32>
    %525 = arith.addf %470, %524 : vector<80x1xf32>
    %cst_141 = arith.constant 0.000000e+00 : f32
    %526 = vector.broadcast %cst_141 : f32 to vector<80x1xf32>
    %527 = arith.addf %471, %526 : vector<80x1xf32>
    %528 = arith.subf %463, %525 : vector<80x1xf32>
    %529 = math.absf %528 : vector<80x1xf32>
    %cst_142 = arith.constant 1.000000e+00 : f32
    %530 = vector.broadcast %cst_142 : f32 to vector<80x1xf32>
    %531 = arith.subf %530, %529 : vector<80x1xf32>
    %532 = arith.subf %468, %527 : vector<80x1xf32>
    %533 = math.absf %532 : vector<80x1xf32>
    %cst_143 = arith.constant 1.000000e+00 : f32
    %534 = vector.broadcast %cst_143 : f32 to vector<80x1xf32>
    %535 = arith.subf %534, %533 : vector<80x1xf32>
    %536 = arith.mulf %531, %535 : vector<80x1xf32>
    %cst_144 = arith.constant 0.000000e+00 : f32
    %537 = vector.broadcast %cst_144 : f32 to vector<80x1xf32>
    %538 = arith.cmpf oge, %525, %537 : vector<80x1xf32>
    %cst_145 = arith.constant 3.000000e+00 : f32
    %539 = vector.broadcast %cst_145 : f32 to vector<80x1xf32>
    %540 = arith.cmpf ole, %525, %539 : vector<80x1xf32>
    %541 = arith.andi %538, %540 : vector<80x1xi1>
    %cst_146 = arith.constant 0.000000e+00 : f32
    %542 = vector.broadcast %cst_146 : f32 to vector<80x1xf32>
    %543 = arith.cmpf oge, %527, %542 : vector<80x1xf32>
    %544 = arith.andi %541, %543 : vector<80x1xi1>
    %cst_147 = arith.constant 3.000000e+00 : f32
    %545 = vector.broadcast %cst_147 : f32 to vector<80x1xf32>
    %546 = arith.cmpf ole, %527, %545 : vector<80x1xf32>
    %547 = arith.andi %544, %546 : vector<80x1xi1>
    %548 = arith.extui %547 : vector<80x1xi1> to vector<80x1xi32>
    %549 = arith.sitofp %548 : vector<80x1xi32> to vector<80x1xf32>
    %550 = arith.mulf %536, %549 : vector<80x1xf32>
    %551 = arith.mulf %550, %469 : vector<80x1xf32>
    %c0_i32_148 = arith.constant 0 : i32
    %c3_i32_149 = arith.constant 3 : i32
    %552 = arith.sitofp %c0_i32_148 : i32 to f32
    %553 = vector.broadcast %552 : f32 to vector<80x1xf32>
    %554 = arith.maximumf %553, %527 : vector<80x1xf32>
    %555 = arith.sitofp %c3_i32_149 : i32 to f32
    %556 = vector.broadcast %555 : f32 to vector<80x1xf32>
    %557 = arith.minimumf %556, %554 : vector<80x1xf32>
    %cst_150 = arith.constant 4.000000e+00 : f32
    %558 = vector.broadcast %cst_150 : f32 to vector<80x1xf32>
    %559 = arith.mulf %557, %558 : vector<80x1xf32>
    %c0_i32_151 = arith.constant 0 : i32
    %c3_i32_152 = arith.constant 3 : i32
    %560 = arith.sitofp %c0_i32_151 : i32 to f32
    %561 = vector.broadcast %560 : f32 to vector<80x1xf32>
    %562 = arith.maximumf %561, %525 : vector<80x1xf32>
    %563 = arith.sitofp %c3_i32_152 : i32 to f32
    %564 = vector.broadcast %563 : f32 to vector<80x1xf32>
    %565 = arith.minimumf %564, %562 : vector<80x1xf32>
    %566 = arith.addf %559, %565 : vector<80x1xf32>
    %567 = arith.fptosi %566 : vector<80x1xf32> to vector<80x1xi32>
    %568 = vector.broadcast %457 : vector<1x16xi32> to vector<80x16xi32>
    %569 = vector.broadcast %567 : vector<80x1xi32> to vector<80x16xi32>
    %570 = arith.cmpi eq, %568, %569 : vector<80x16xi32>
    %571 = arith.extui %570 : vector<80x16xi1> to vector<80x16xi32>
    %572 = arith.sitofp %571 : vector<80x16xi32> to vector<80x16xf32>
    %573 = vector.broadcast %551 : vector<80x1xf32> to vector<80x16xf32>
    %574 = arith.mulf %573, %572 : vector<80x16xf32>
    %575 = arith.addf %523, %574 : vector<80x16xf32>
    %cst_153 = arith.constant 0.000000e+00 : f32
    %576 = vector.broadcast %cst_153 : f32 to vector<80x1xf32>
    %577 = arith.addf %470, %576 : vector<80x1xf32>
    %cst_154 = arith.constant 1.000000e+00 : f32
    %578 = vector.broadcast %cst_154 : f32 to vector<80x1xf32>
    %579 = arith.addf %471, %578 : vector<80x1xf32>
    %580 = arith.subf %463, %577 : vector<80x1xf32>
    %581 = math.absf %580 : vector<80x1xf32>
    %cst_155 = arith.constant 1.000000e+00 : f32
    %582 = vector.broadcast %cst_155 : f32 to vector<80x1xf32>
    %583 = arith.subf %582, %581 : vector<80x1xf32>
    %584 = arith.subf %468, %579 : vector<80x1xf32>
    %585 = math.absf %584 : vector<80x1xf32>
    %cst_156 = arith.constant 1.000000e+00 : f32
    %586 = vector.broadcast %cst_156 : f32 to vector<80x1xf32>
    %587 = arith.subf %586, %585 : vector<80x1xf32>
    %588 = arith.mulf %583, %587 : vector<80x1xf32>
    %cst_157 = arith.constant 0.000000e+00 : f32
    %589 = vector.broadcast %cst_157 : f32 to vector<80x1xf32>
    %590 = arith.cmpf oge, %577, %589 : vector<80x1xf32>
    %cst_158 = arith.constant 3.000000e+00 : f32
    %591 = vector.broadcast %cst_158 : f32 to vector<80x1xf32>
    %592 = arith.cmpf ole, %577, %591 : vector<80x1xf32>
    %593 = arith.andi %590, %592 : vector<80x1xi1>
    %cst_159 = arith.constant 0.000000e+00 : f32
    %594 = vector.broadcast %cst_159 : f32 to vector<80x1xf32>
    %595 = arith.cmpf oge, %579, %594 : vector<80x1xf32>
    %596 = arith.andi %593, %595 : vector<80x1xi1>
    %cst_160 = arith.constant 3.000000e+00 : f32
    %597 = vector.broadcast %cst_160 : f32 to vector<80x1xf32>
    %598 = arith.cmpf ole, %579, %597 : vector<80x1xf32>
    %599 = arith.andi %596, %598 : vector<80x1xi1>
    %600 = arith.extui %599 : vector<80x1xi1> to vector<80x1xi32>
    %601 = arith.sitofp %600 : vector<80x1xi32> to vector<80x1xf32>
    %602 = arith.mulf %588, %601 : vector<80x1xf32>
    %603 = arith.mulf %602, %469 : vector<80x1xf32>
    %c0_i32_161 = arith.constant 0 : i32
    %c3_i32_162 = arith.constant 3 : i32
    %604 = arith.sitofp %c0_i32_161 : i32 to f32
    %605 = vector.broadcast %604 : f32 to vector<80x1xf32>
    %606 = arith.maximumf %605, %579 : vector<80x1xf32>
    %607 = arith.sitofp %c3_i32_162 : i32 to f32
    %608 = vector.broadcast %607 : f32 to vector<80x1xf32>
    %609 = arith.minimumf %608, %606 : vector<80x1xf32>
    %cst_163 = arith.constant 4.000000e+00 : f32
    %610 = vector.broadcast %cst_163 : f32 to vector<80x1xf32>
    %611 = arith.mulf %609, %610 : vector<80x1xf32>
    %c0_i32_164 = arith.constant 0 : i32
    %c3_i32_165 = arith.constant 3 : i32
    %612 = arith.sitofp %c0_i32_164 : i32 to f32
    %613 = vector.broadcast %612 : f32 to vector<80x1xf32>
    %614 = arith.maximumf %613, %577 : vector<80x1xf32>
    %615 = arith.sitofp %c3_i32_165 : i32 to f32
    %616 = vector.broadcast %615 : f32 to vector<80x1xf32>
    %617 = arith.minimumf %616, %614 : vector<80x1xf32>
    %618 = arith.addf %611, %617 : vector<80x1xf32>
    %619 = arith.fptosi %618 : vector<80x1xf32> to vector<80x1xi32>
    %620 = vector.broadcast %457 : vector<1x16xi32> to vector<80x16xi32>
    %621 = vector.broadcast %619 : vector<80x1xi32> to vector<80x16xi32>
    %622 = arith.cmpi eq, %620, %621 : vector<80x16xi32>
    %623 = arith.extui %622 : vector<80x16xi1> to vector<80x16xi32>
    %624 = arith.sitofp %623 : vector<80x16xi32> to vector<80x16xf32>
    %625 = vector.broadcast %603 : vector<80x1xf32> to vector<80x16xf32>
    %626 = arith.mulf %625, %624 : vector<80x16xf32>
    %627 = arith.addf %575, %626 : vector<80x16xf32>
    %cst_166 = arith.constant 1.000000e+00 : f32
    %628 = vector.broadcast %cst_166 : f32 to vector<80x1xf32>
    %629 = arith.addf %470, %628 : vector<80x1xf32>
    %cst_167 = arith.constant 1.000000e+00 : f32
    %630 = vector.broadcast %cst_167 : f32 to vector<80x1xf32>
    %631 = arith.addf %471, %630 : vector<80x1xf32>
    %632 = arith.subf %463, %629 : vector<80x1xf32>
    %633 = math.absf %632 : vector<80x1xf32>
    %cst_168 = arith.constant 1.000000e+00 : f32
    %634 = vector.broadcast %cst_168 : f32 to vector<80x1xf32>
    %635 = arith.subf %634, %633 : vector<80x1xf32>
    %636 = arith.subf %468, %631 : vector<80x1xf32>
    %637 = math.absf %636 : vector<80x1xf32>
    %cst_169 = arith.constant 1.000000e+00 : f32
    %638 = vector.broadcast %cst_169 : f32 to vector<80x1xf32>
    %639 = arith.subf %638, %637 : vector<80x1xf32>
    %640 = arith.mulf %635, %639 : vector<80x1xf32>
    %cst_170 = arith.constant 0.000000e+00 : f32
    %641 = vector.broadcast %cst_170 : f32 to vector<80x1xf32>
    %642 = arith.cmpf oge, %629, %641 : vector<80x1xf32>
    %cst_171 = arith.constant 3.000000e+00 : f32
    %643 = vector.broadcast %cst_171 : f32 to vector<80x1xf32>
    %644 = arith.cmpf ole, %629, %643 : vector<80x1xf32>
    %645 = arith.andi %642, %644 : vector<80x1xi1>
    %cst_172 = arith.constant 0.000000e+00 : f32
    %646 = vector.broadcast %cst_172 : f32 to vector<80x1xf32>
    %647 = arith.cmpf oge, %631, %646 : vector<80x1xf32>
    %648 = arith.andi %645, %647 : vector<80x1xi1>
    %cst_173 = arith.constant 3.000000e+00 : f32
    %649 = vector.broadcast %cst_173 : f32 to vector<80x1xf32>
    %650 = arith.cmpf ole, %631, %649 : vector<80x1xf32>
    %651 = arith.andi %648, %650 : vector<80x1xi1>
    %652 = arith.extui %651 : vector<80x1xi1> to vector<80x1xi32>
    %653 = arith.sitofp %652 : vector<80x1xi32> to vector<80x1xf32>
    %654 = arith.mulf %640, %653 : vector<80x1xf32>
    %655 = arith.mulf %654, %469 : vector<80x1xf32>
    %c0_i32_174 = arith.constant 0 : i32
    %c3_i32_175 = arith.constant 3 : i32
    %656 = arith.sitofp %c0_i32_174 : i32 to f32
    %657 = vector.broadcast %656 : f32 to vector<80x1xf32>
    %658 = arith.maximumf %657, %631 : vector<80x1xf32>
    %659 = arith.sitofp %c3_i32_175 : i32 to f32
    %660 = vector.broadcast %659 : f32 to vector<80x1xf32>
    %661 = arith.minimumf %660, %658 : vector<80x1xf32>
    %cst_176 = arith.constant 4.000000e+00 : f32
    %662 = vector.broadcast %cst_176 : f32 to vector<80x1xf32>
    %663 = arith.mulf %661, %662 : vector<80x1xf32>
    %c0_i32_177 = arith.constant 0 : i32
    %c3_i32_178 = arith.constant 3 : i32
    %664 = arith.sitofp %c0_i32_177 : i32 to f32
    %665 = vector.broadcast %664 : f32 to vector<80x1xf32>
    %666 = arith.maximumf %665, %629 : vector<80x1xf32>
    %667 = arith.sitofp %c3_i32_178 : i32 to f32
    %668 = vector.broadcast %667 : f32 to vector<80x1xf32>
    %669 = arith.minimumf %668, %666 : vector<80x1xf32>
    %670 = arith.addf %663, %669 : vector<80x1xf32>
    %671 = arith.fptosi %670 : vector<80x1xf32> to vector<80x1xi32>
    %672 = vector.broadcast %457 : vector<1x16xi32> to vector<80x16xi32>
    %673 = vector.broadcast %671 : vector<80x1xi32> to vector<80x16xi32>
    %674 = arith.cmpi eq, %672, %673 : vector<80x16xi32>
    %675 = arith.extui %674 : vector<80x16xi1> to vector<80x16xi32>
    %676 = arith.sitofp %675 : vector<80x16xi32> to vector<80x16xf32>
    %677 = vector.broadcast %655 : vector<80x1xf32> to vector<80x16xf32>
    %678 = arith.mulf %677, %676 : vector<80x16xf32>
    %679 = arith.addf %627, %678 : vector<80x16xf32>
    %680 = vector.extract_strided_slice %1 {offsets = [0, 3], sizes = [80, 1], strides = [1, 1]} : vector<80x4xf32> to vector<80x1xf32>
    %cst_179 = arith.constant 4.000000e+00 : f32
    %681 = vector.broadcast %cst_179 : f32 to vector<80x1xf32>
    %682 = arith.mulf %680, %681 : vector<80x1xf32>
    %cst_180 = arith.constant 5.000000e-01 : f32
    %683 = vector.broadcast %cst_180 : f32 to vector<80x1xf32>
    %684 = arith.subf %682, %683 : vector<80x1xf32>
    %685 = vector.extract_strided_slice %3 {offsets = [0, 3], sizes = [80, 1], strides = [1, 1]} : vector<80x4xf32> to vector<80x1xf32>
    %cst_181 = arith.constant 4.000000e+00 : f32
    %686 = vector.broadcast %cst_181 : f32 to vector<80x1xf32>
    %687 = arith.mulf %685, %686 : vector<80x1xf32>
    %cst_182 = arith.constant 5.000000e-01 : f32
    %688 = vector.broadcast %cst_182 : f32 to vector<80x1xf32>
    %689 = arith.subf %687, %688 : vector<80x1xf32>
    %690 = vector.extract_strided_slice %5 {offsets = [0, 3], sizes = [80, 1], strides = [1, 1]} : vector<80x4xf32> to vector<80x1xf32>
    %691 = math.floor %684 : vector<80x1xf32>
    %692 = math.floor %689 : vector<80x1xf32>
    %cst_183 = arith.constant 0.000000e+00 : f32
    %693 = vector.broadcast %cst_183 : f32 to vector<80x1xf32>
    %694 = arith.addf %691, %693 : vector<80x1xf32>
    %cst_184 = arith.constant 0.000000e+00 : f32
    %695 = vector.broadcast %cst_184 : f32 to vector<80x1xf32>
    %696 = arith.addf %692, %695 : vector<80x1xf32>
    %697 = arith.subf %684, %694 : vector<80x1xf32>
    %698 = math.absf %697 : vector<80x1xf32>
    %cst_185 = arith.constant 1.000000e+00 : f32
    %699 = vector.broadcast %cst_185 : f32 to vector<80x1xf32>
    %700 = arith.subf %699, %698 : vector<80x1xf32>
    %701 = arith.subf %689, %696 : vector<80x1xf32>
    %702 = math.absf %701 : vector<80x1xf32>
    %cst_186 = arith.constant 1.000000e+00 : f32
    %703 = vector.broadcast %cst_186 : f32 to vector<80x1xf32>
    %704 = arith.subf %703, %702 : vector<80x1xf32>
    %705 = arith.mulf %700, %704 : vector<80x1xf32>
    %cst_187 = arith.constant 0.000000e+00 : f32
    %706 = vector.broadcast %cst_187 : f32 to vector<80x1xf32>
    %707 = arith.cmpf oge, %694, %706 : vector<80x1xf32>
    %cst_188 = arith.constant 3.000000e+00 : f32
    %708 = vector.broadcast %cst_188 : f32 to vector<80x1xf32>
    %709 = arith.cmpf ole, %694, %708 : vector<80x1xf32>
    %710 = arith.andi %707, %709 : vector<80x1xi1>
    %cst_189 = arith.constant 0.000000e+00 : f32
    %711 = vector.broadcast %cst_189 : f32 to vector<80x1xf32>
    %712 = arith.cmpf oge, %696, %711 : vector<80x1xf32>
    %713 = arith.andi %710, %712 : vector<80x1xi1>
    %cst_190 = arith.constant 3.000000e+00 : f32
    %714 = vector.broadcast %cst_190 : f32 to vector<80x1xf32>
    %715 = arith.cmpf ole, %696, %714 : vector<80x1xf32>
    %716 = arith.andi %713, %715 : vector<80x1xi1>
    %717 = arith.extui %716 : vector<80x1xi1> to vector<80x1xi32>
    %718 = arith.sitofp %717 : vector<80x1xi32> to vector<80x1xf32>
    %719 = arith.mulf %705, %718 : vector<80x1xf32>
    %720 = arith.mulf %719, %690 : vector<80x1xf32>
    %c0_i32_191 = arith.constant 0 : i32
    %c3_i32_192 = arith.constant 3 : i32
    %721 = arith.sitofp %c0_i32_191 : i32 to f32
    %722 = vector.broadcast %721 : f32 to vector<80x1xf32>
    %723 = arith.maximumf %722, %696 : vector<80x1xf32>
    %724 = arith.sitofp %c3_i32_192 : i32 to f32
    %725 = vector.broadcast %724 : f32 to vector<80x1xf32>
    %726 = arith.minimumf %725, %723 : vector<80x1xf32>
    %cst_193 = arith.constant 4.000000e+00 : f32
    %727 = vector.broadcast %cst_193 : f32 to vector<80x1xf32>
    %728 = arith.mulf %726, %727 : vector<80x1xf32>
    %c0_i32_194 = arith.constant 0 : i32
    %c3_i32_195 = arith.constant 3 : i32
    %729 = arith.sitofp %c0_i32_194 : i32 to f32
    %730 = vector.broadcast %729 : f32 to vector<80x1xf32>
    %731 = arith.maximumf %730, %694 : vector<80x1xf32>
    %732 = arith.sitofp %c3_i32_195 : i32 to f32
    %733 = vector.broadcast %732 : f32 to vector<80x1xf32>
    %734 = arith.minimumf %733, %731 : vector<80x1xf32>
    %735 = arith.addf %728, %734 : vector<80x1xf32>
    %736 = arith.fptosi %735 : vector<80x1xf32> to vector<80x1xi32>
    %737 = vector.broadcast %457 : vector<1x16xi32> to vector<80x16xi32>
    %738 = vector.broadcast %736 : vector<80x1xi32> to vector<80x16xi32>
    %739 = arith.cmpi eq, %737, %738 : vector<80x16xi32>
    %740 = arith.extui %739 : vector<80x16xi1> to vector<80x16xi32>
    %741 = arith.sitofp %740 : vector<80x16xi32> to vector<80x16xf32>
    %742 = vector.broadcast %720 : vector<80x1xf32> to vector<80x16xf32>
    %743 = arith.mulf %742, %741 : vector<80x16xf32>
    %744 = arith.addf %679, %743 : vector<80x16xf32>
    %cst_196 = arith.constant 1.000000e+00 : f32
    %745 = vector.broadcast %cst_196 : f32 to vector<80x1xf32>
    %746 = arith.addf %691, %745 : vector<80x1xf32>
    %cst_197 = arith.constant 0.000000e+00 : f32
    %747 = vector.broadcast %cst_197 : f32 to vector<80x1xf32>
    %748 = arith.addf %692, %747 : vector<80x1xf32>
    %749 = arith.subf %684, %746 : vector<80x1xf32>
    %750 = math.absf %749 : vector<80x1xf32>
    %cst_198 = arith.constant 1.000000e+00 : f32
    %751 = vector.broadcast %cst_198 : f32 to vector<80x1xf32>
    %752 = arith.subf %751, %750 : vector<80x1xf32>
    %753 = arith.subf %689, %748 : vector<80x1xf32>
    %754 = math.absf %753 : vector<80x1xf32>
    %cst_199 = arith.constant 1.000000e+00 : f32
    %755 = vector.broadcast %cst_199 : f32 to vector<80x1xf32>
    %756 = arith.subf %755, %754 : vector<80x1xf32>
    %757 = arith.mulf %752, %756 : vector<80x1xf32>
    %cst_200 = arith.constant 0.000000e+00 : f32
    %758 = vector.broadcast %cst_200 : f32 to vector<80x1xf32>
    %759 = arith.cmpf oge, %746, %758 : vector<80x1xf32>
    %cst_201 = arith.constant 3.000000e+00 : f32
    %760 = vector.broadcast %cst_201 : f32 to vector<80x1xf32>
    %761 = arith.cmpf ole, %746, %760 : vector<80x1xf32>
    %762 = arith.andi %759, %761 : vector<80x1xi1>
    %cst_202 = arith.constant 0.000000e+00 : f32
    %763 = vector.broadcast %cst_202 : f32 to vector<80x1xf32>
    %764 = arith.cmpf oge, %748, %763 : vector<80x1xf32>
    %765 = arith.andi %762, %764 : vector<80x1xi1>
    %cst_203 = arith.constant 3.000000e+00 : f32
    %766 = vector.broadcast %cst_203 : f32 to vector<80x1xf32>
    %767 = arith.cmpf ole, %748, %766 : vector<80x1xf32>
    %768 = arith.andi %765, %767 : vector<80x1xi1>
    %769 = arith.extui %768 : vector<80x1xi1> to vector<80x1xi32>
    %770 = arith.sitofp %769 : vector<80x1xi32> to vector<80x1xf32>
    %771 = arith.mulf %757, %770 : vector<80x1xf32>
    %772 = arith.mulf %771, %690 : vector<80x1xf32>
    %c0_i32_204 = arith.constant 0 : i32
    %c3_i32_205 = arith.constant 3 : i32
    %773 = arith.sitofp %c0_i32_204 : i32 to f32
    %774 = vector.broadcast %773 : f32 to vector<80x1xf32>
    %775 = arith.maximumf %774, %748 : vector<80x1xf32>
    %776 = arith.sitofp %c3_i32_205 : i32 to f32
    %777 = vector.broadcast %776 : f32 to vector<80x1xf32>
    %778 = arith.minimumf %777, %775 : vector<80x1xf32>
    %cst_206 = arith.constant 4.000000e+00 : f32
    %779 = vector.broadcast %cst_206 : f32 to vector<80x1xf32>
    %780 = arith.mulf %778, %779 : vector<80x1xf32>
    %c0_i32_207 = arith.constant 0 : i32
    %c3_i32_208 = arith.constant 3 : i32
    %781 = arith.sitofp %c0_i32_207 : i32 to f32
    %782 = vector.broadcast %781 : f32 to vector<80x1xf32>
    %783 = arith.maximumf %782, %746 : vector<80x1xf32>
    %784 = arith.sitofp %c3_i32_208 : i32 to f32
    %785 = vector.broadcast %784 : f32 to vector<80x1xf32>
    %786 = arith.minimumf %785, %783 : vector<80x1xf32>
    %787 = arith.addf %780, %786 : vector<80x1xf32>
    %788 = arith.fptosi %787 : vector<80x1xf32> to vector<80x1xi32>
    %789 = vector.broadcast %457 : vector<1x16xi32> to vector<80x16xi32>
    %790 = vector.broadcast %788 : vector<80x1xi32> to vector<80x16xi32>
    %791 = arith.cmpi eq, %789, %790 : vector<80x16xi32>
    %792 = arith.extui %791 : vector<80x16xi1> to vector<80x16xi32>
    %793 = arith.sitofp %792 : vector<80x16xi32> to vector<80x16xf32>
    %794 = vector.broadcast %772 : vector<80x1xf32> to vector<80x16xf32>
    %795 = arith.mulf %794, %793 : vector<80x16xf32>
    %796 = arith.addf %744, %795 : vector<80x16xf32>
    %cst_209 = arith.constant 0.000000e+00 : f32
    %797 = vector.broadcast %cst_209 : f32 to vector<80x1xf32>
    %798 = arith.addf %691, %797 : vector<80x1xf32>
    %cst_210 = arith.constant 1.000000e+00 : f32
    %799 = vector.broadcast %cst_210 : f32 to vector<80x1xf32>
    %800 = arith.addf %692, %799 : vector<80x1xf32>
    %801 = arith.subf %684, %798 : vector<80x1xf32>
    %802 = math.absf %801 : vector<80x1xf32>
    %cst_211 = arith.constant 1.000000e+00 : f32
    %803 = vector.broadcast %cst_211 : f32 to vector<80x1xf32>
    %804 = arith.subf %803, %802 : vector<80x1xf32>
    %805 = arith.subf %689, %800 : vector<80x1xf32>
    %806 = math.absf %805 : vector<80x1xf32>
    %cst_212 = arith.constant 1.000000e+00 : f32
    %807 = vector.broadcast %cst_212 : f32 to vector<80x1xf32>
    %808 = arith.subf %807, %806 : vector<80x1xf32>
    %809 = arith.mulf %804, %808 : vector<80x1xf32>
    %cst_213 = arith.constant 0.000000e+00 : f32
    %810 = vector.broadcast %cst_213 : f32 to vector<80x1xf32>
    %811 = arith.cmpf oge, %798, %810 : vector<80x1xf32>
    %cst_214 = arith.constant 3.000000e+00 : f32
    %812 = vector.broadcast %cst_214 : f32 to vector<80x1xf32>
    %813 = arith.cmpf ole, %798, %812 : vector<80x1xf32>
    %814 = arith.andi %811, %813 : vector<80x1xi1>
    %cst_215 = arith.constant 0.000000e+00 : f32
    %815 = vector.broadcast %cst_215 : f32 to vector<80x1xf32>
    %816 = arith.cmpf oge, %800, %815 : vector<80x1xf32>
    %817 = arith.andi %814, %816 : vector<80x1xi1>
    %cst_216 = arith.constant 3.000000e+00 : f32
    %818 = vector.broadcast %cst_216 : f32 to vector<80x1xf32>
    %819 = arith.cmpf ole, %800, %818 : vector<80x1xf32>
    %820 = arith.andi %817, %819 : vector<80x1xi1>
    %821 = arith.extui %820 : vector<80x1xi1> to vector<80x1xi32>
    %822 = arith.sitofp %821 : vector<80x1xi32> to vector<80x1xf32>
    %823 = arith.mulf %809, %822 : vector<80x1xf32>
    %824 = arith.mulf %823, %690 : vector<80x1xf32>
    %c0_i32_217 = arith.constant 0 : i32
    %c3_i32_218 = arith.constant 3 : i32
    %825 = arith.sitofp %c0_i32_217 : i32 to f32
    %826 = vector.broadcast %825 : f32 to vector<80x1xf32>
    %827 = arith.maximumf %826, %800 : vector<80x1xf32>
    %828 = arith.sitofp %c3_i32_218 : i32 to f32
    %829 = vector.broadcast %828 : f32 to vector<80x1xf32>
    %830 = arith.minimumf %829, %827 : vector<80x1xf32>
    %cst_219 = arith.constant 4.000000e+00 : f32
    %831 = vector.broadcast %cst_219 : f32 to vector<80x1xf32>
    %832 = arith.mulf %830, %831 : vector<80x1xf32>
    %c0_i32_220 = arith.constant 0 : i32
    %c3_i32_221 = arith.constant 3 : i32
    %833 = arith.sitofp %c0_i32_220 : i32 to f32
    %834 = vector.broadcast %833 : f32 to vector<80x1xf32>
    %835 = arith.maximumf %834, %798 : vector<80x1xf32>
    %836 = arith.sitofp %c3_i32_221 : i32 to f32
    %837 = vector.broadcast %836 : f32 to vector<80x1xf32>
    %838 = arith.minimumf %837, %835 : vector<80x1xf32>
    %839 = arith.addf %832, %838 : vector<80x1xf32>
    %840 = arith.fptosi %839 : vector<80x1xf32> to vector<80x1xi32>
    %841 = vector.broadcast %457 : vector<1x16xi32> to vector<80x16xi32>
    %842 = vector.broadcast %840 : vector<80x1xi32> to vector<80x16xi32>
    %843 = arith.cmpi eq, %841, %842 : vector<80x16xi32>
    %844 = arith.extui %843 : vector<80x16xi1> to vector<80x16xi32>
    %845 = arith.sitofp %844 : vector<80x16xi32> to vector<80x16xf32>
    %846 = vector.broadcast %824 : vector<80x1xf32> to vector<80x16xf32>
    %847 = arith.mulf %846, %845 : vector<80x16xf32>
    %848 = arith.addf %796, %847 : vector<80x16xf32>
    %cst_222 = arith.constant 1.000000e+00 : f32
    %849 = vector.broadcast %cst_222 : f32 to vector<80x1xf32>
    %850 = arith.addf %691, %849 : vector<80x1xf32>
    %cst_223 = arith.constant 1.000000e+00 : f32
    %851 = vector.broadcast %cst_223 : f32 to vector<80x1xf32>
    %852 = arith.addf %692, %851 : vector<80x1xf32>
    %853 = arith.subf %684, %850 : vector<80x1xf32>
    %854 = math.absf %853 : vector<80x1xf32>
    %cst_224 = arith.constant 1.000000e+00 : f32
    %855 = vector.broadcast %cst_224 : f32 to vector<80x1xf32>
    %856 = arith.subf %855, %854 : vector<80x1xf32>
    %857 = arith.subf %689, %852 : vector<80x1xf32>
    %858 = math.absf %857 : vector<80x1xf32>
    %cst_225 = arith.constant 1.000000e+00 : f32
    %859 = vector.broadcast %cst_225 : f32 to vector<80x1xf32>
    %860 = arith.subf %859, %858 : vector<80x1xf32>
    %861 = arith.mulf %856, %860 : vector<80x1xf32>
    %cst_226 = arith.constant 0.000000e+00 : f32
    %862 = vector.broadcast %cst_226 : f32 to vector<80x1xf32>
    %863 = arith.cmpf oge, %850, %862 : vector<80x1xf32>
    %cst_227 = arith.constant 3.000000e+00 : f32
    %864 = vector.broadcast %cst_227 : f32 to vector<80x1xf32>
    %865 = arith.cmpf ole, %850, %864 : vector<80x1xf32>
    %866 = arith.andi %863, %865 : vector<80x1xi1>
    %cst_228 = arith.constant 0.000000e+00 : f32
    %867 = vector.broadcast %cst_228 : f32 to vector<80x1xf32>
    %868 = arith.cmpf oge, %852, %867 : vector<80x1xf32>
    %869 = arith.andi %866, %868 : vector<80x1xi1>
    %cst_229 = arith.constant 3.000000e+00 : f32
    %870 = vector.broadcast %cst_229 : f32 to vector<80x1xf32>
    %871 = arith.cmpf ole, %852, %870 : vector<80x1xf32>
    %872 = arith.andi %869, %871 : vector<80x1xi1>
    %873 = arith.extui %872 : vector<80x1xi1> to vector<80x1xi32>
    %874 = arith.sitofp %873 : vector<80x1xi32> to vector<80x1xf32>
    %875 = arith.mulf %861, %874 : vector<80x1xf32>
    %876 = arith.mulf %875, %690 : vector<80x1xf32>
    %c0_i32_230 = arith.constant 0 : i32
    %c3_i32_231 = arith.constant 3 : i32
    %877 = arith.sitofp %c0_i32_230 : i32 to f32
    %878 = vector.broadcast %877 : f32 to vector<80x1xf32>
    %879 = arith.maximumf %878, %852 : vector<80x1xf32>
    %880 = arith.sitofp %c3_i32_231 : i32 to f32
    %881 = vector.broadcast %880 : f32 to vector<80x1xf32>
    %882 = arith.minimumf %881, %879 : vector<80x1xf32>
    %cst_232 = arith.constant 4.000000e+00 : f32
    %883 = vector.broadcast %cst_232 : f32 to vector<80x1xf32>
    %884 = arith.mulf %882, %883 : vector<80x1xf32>
    %c0_i32_233 = arith.constant 0 : i32
    %c3_i32_234 = arith.constant 3 : i32
    %885 = arith.sitofp %c0_i32_233 : i32 to f32
    %886 = vector.broadcast %885 : f32 to vector<80x1xf32>
    %887 = arith.maximumf %886, %850 : vector<80x1xf32>
    %888 = arith.sitofp %c3_i32_234 : i32 to f32
    %889 = vector.broadcast %888 : f32 to vector<80x1xf32>
    %890 = arith.minimumf %889, %887 : vector<80x1xf32>
    %891 = arith.addf %884, %890 : vector<80x1xf32>
    %892 = arith.fptosi %891 : vector<80x1xf32> to vector<80x1xi32>
    %893 = vector.broadcast %457 : vector<1x16xi32> to vector<80x16xi32>
    %894 = vector.broadcast %892 : vector<80x1xi32> to vector<80x16xi32>
    %895 = arith.cmpi eq, %893, %894 : vector<80x16xi32>
    %896 = arith.extui %895 : vector<80x16xi1> to vector<80x16xi32>
    %897 = arith.sitofp %896 : vector<80x16xi32> to vector<80x16xf32>
    %898 = vector.broadcast %876 : vector<80x1xf32> to vector<80x16xf32>
    %899 = arith.mulf %898, %897 : vector<80x16xf32>
    %900 = arith.addf %848, %899 : vector<80x16xf32>
    %cst_235 = arith.constant dense<0.000000e+00> : vector<80x8xf32>
    %901 = tpu.matmul %900, %456, %cst_235 {dimension_numbers = #tpu.dot_dimension_numbers<[1], [0], [0], [1], [0, 0, 1, 1], [], []>} : vector<80x16xf32>, vector<16x8xf32>, vector<80x8xf32> -> vector<80x8xf32>
    %902 = arith.addf %455, %901 : vector<80x8xf32>
    %c0_236 = arith.constant 0 : index
    %c0_237 = arith.constant 0 : index
    %c0_238 = arith.constant 0 : index
    %903 = vector.load %arg5[%c0_236, %c0_237, %c0_238] : memref<1x80x8xf32, #tpu.memory_space<vmem>>, vector<1x80x8xf32>
    %904 = vector.shape_cast %903 : vector<1x80x8xf32> to vector<80x8xf32>
    %905 = vector.shape_cast %902 : vector<80x8xf32> to vector<1x80x8xf32>
    tpu.vector_store %arg5[%c0_236, %c0_237, %c0_238], %905 {strides = array<i32>} : memref<1x80x8xf32, #tpu.memory_space<vmem>>, vector<1x80x8xf32>,
    return
  }
  func.func @transform_0(%arg0: i32) -> (i32, i32, i32) {
    %c0_i32 = arith.constant 0 : i32
    %c0_i32_0 = arith.constant 0 : i32
    %c0_i32_1 = arith.constant 0 : i32
    return %arg0, %c0_i32, %c0_i32_0 : i32, i32, i32
  }
  func.func @transform_1(%arg0: i32) -> (i32, i32, i32) {
    %c0_i32 = arith.constant 0 : i32
    %c0_i32_0 = arith.constant 0 : i32
    %c0_i32_1 = arith.constant 0 : i32
    return %arg0, %c0_i32, %c0_i32_0 : i32, i32, i32
  }
  func.func @transform_2(%arg0: i32) -> (i32, i32, i32) {
    %c0_i32 = arith.constant 0 : i32
    %c0_i32_0 = arith.constant 0 : i32
    %c0_i32_1 = arith.constant 0 : i32
    return %arg0, %c0_i32, %c0_i32_0 : i32, i32, i32
  }
  func.func @transform_3(%arg0: i32) -> (i32, i32, i32) {
    %c0_i32 = arith.constant 0 : i32
    %c0_i32_0 = arith.constant 0 : i32
    %c0_i32_1 = arith.constant 0 : i32
    return %arg0, %c0_i32, %c0_i32_0 : i32, i32, i32
  }
  func.func @transform_4(%arg0: i32) -> (i32, i32, i32) {
    %c0_i32 = arith.constant 0 : i32
    %c0_i32_0 = arith.constant 0 : i32
    %c0_i32_1 = arith.constant 0 : i32
    return %arg0, %c0_i32, %c0_i32_0 : i32, i32, i32
  }
}

module attributes {stable_mosaic.version = 11 : i64} {
  func.func @_linear_kernel(%arg0: i32, %arg1: memref<160x32xf32, #tpu.memory_space<vmem>>, %arg2: memref<32x32xf32, #tpu.memory_space<vmem>>, %arg3: memref<1x32xf32, #tpu.memory_space<vmem>>, %arg4: memref<160x32xf32, #tpu.memory_space<vmem>>, %arg5: memref<160x32xf32, #tpu.memory_space<vmem>>) attributes {dimension_semantics = [#tpu.dimension_semantics<parallel>], iteration_bounds = array<i64: 1>, scalar_prefetch = 0 : i64, scratch_operands = 0 : i64, tpu.core_type = #tpu.core_type<tc>, window_params = [{transform_indices = @transform_0, window_bounds = array<i64: 160, 32>}, {pipeline_mode = #tpu.pipeline_mode<synchronous>, transform_indices = @transform_1, window_bounds = array<i64: 32, 32>}, {pipeline_mode = #tpu.pipeline_mode<synchronous>, transform_indices = @transform_2, window_bounds = array<i64: 1, 32>}, {transform_indices = @transform_3, window_bounds = array<i64: 160, 32>}, {transform_indices = @transform_4, window_bounds = array<i64: 160, 32>}]} {
    %c0 = arith.constant 0 : index
    %c0_0 = arith.constant 0 : index
    %0 = vector.load %arg1[%c0, %c0_0] : memref<160x32xf32, #tpu.memory_space<vmem>>, vector<160x32xf32>
    %c0_1 = arith.constant 0 : index
    %c0_2 = arith.constant 0 : index
    %1 = vector.load %arg2[%c0_1, %c0_2] : memref<32x32xf32, #tpu.memory_space<vmem>>, vector<32x32xf32>
    %cst = arith.constant dense<0.000000e+00> : vector<160x32xf32>
    %2 = tpu.matmul %0, %1, %cst {dimension_numbers = #tpu.dot_dimension_numbers<[1], [0], [0], [1], [0, 0, 1, 1], [], []>} : vector<160x32xf32>, vector<32x32xf32>, vector<160x32xf32> -> vector<160x32xf32>
    %c0_3 = arith.constant 0 : index
    %c0_4 = arith.constant 0 : index
    %3 = vector.load %arg3[%c0_3, %c0_4] : memref<1x32xf32, #tpu.memory_space<vmem>>, vector<1x32xf32>
    %4 = vector.broadcast %3 : vector<1x32xf32> to vector<160x32xf32>
    %5 = arith.addf %2, %4 : vector<160x32xf32>
    %c0_5 = arith.constant 0 : index
    %c0_6 = arith.constant 0 : index
    %6 = vector.load %arg4[%c0_5, %c0_6] : memref<160x32xf32, #tpu.memory_space<vmem>>, vector<160x32xf32>
    %7 = arith.addf %5, %6 : vector<160x32xf32>
    %c0_7 = arith.constant 0 : index
    %c0_8 = arith.constant 0 : index
    %8 = vector.load %arg5[%c0_7, %c0_8] : memref<160x32xf32, #tpu.memory_space<vmem>>, vector<160x32xf32>
    tpu.vector_store %arg5[%c0_7, %c0_8], %7 {strides = array<i32>} : memref<160x32xf32, #tpu.memory_space<vmem>>, vector<160x32xf32>,
    return
  }
  func.func @transform_0(%arg0: i32) -> (i32, i32) {
    %c0_i32 = arith.constant 0 : i32
    %c0_i32_0 = arith.constant 0 : i32
    return %arg0, %c0_i32 : i32, i32
  }
  func.func @transform_1(%arg0: i32) -> (i32, i32) {
    %c0_i32 = arith.constant 0 : i32
    %c0_i32_0 = arith.constant 0 : i32
    %c0_i32_1 = arith.constant 0 : i32
    return %c0_i32, %c0_i32_0 : i32, i32
  }
  func.func @transform_2(%arg0: i32) -> (i32, i32) {
    %c0_i32 = arith.constant 0 : i32
    %c0_i32_0 = arith.constant 0 : i32
    %c0_i32_1 = arith.constant 0 : i32
    return %c0_i32, %c0_i32_0 : i32, i32
  }
  func.func @transform_3(%arg0: i32) -> (i32, i32) {
    %c0_i32 = arith.constant 0 : i32
    %c0_i32_0 = arith.constant 0 : i32
    return %arg0, %c0_i32 : i32, i32
  }
  func.func @transform_4(%arg0: i32) -> (i32, i32) {
    %c0_i32 = arith.constant 0 : i32
    %c0_i32_0 = arith.constant 0 : i32
    return %arg0, %c0_i32 : i32, i32
  }
}

module attributes {stable_mosaic.version = 11 : i64} {
  func.func @_ffn_kernel(%arg0: i32, %arg1: memref<160x32xf32, #tpu.memory_space<vmem>>, %arg2: memref<1x32xf32, #tpu.memory_space<vmem>>, %arg3: memref<1x32xf32, #tpu.memory_space<vmem>>, %arg4: memref<32x64xf32, #tpu.memory_space<vmem>>, %arg5: memref<1x64xf32, #tpu.memory_space<vmem>>, %arg6: memref<64x32xf32, #tpu.memory_space<vmem>>, %arg7: memref<1x32xf32, #tpu.memory_space<vmem>>, %arg8: memref<160x32xf32, #tpu.memory_space<vmem>>) attributes {dimension_semantics = [#tpu.dimension_semantics<parallel>], iteration_bounds = array<i64: 1>, scalar_prefetch = 0 : i64, scratch_operands = 0 : i64, tpu.core_type = #tpu.core_type<tc>, window_params = [{transform_indices = @transform_0, window_bounds = array<i64: 160, 32>}, {pipeline_mode = #tpu.pipeline_mode<synchronous>, transform_indices = @transform_1, window_bounds = array<i64: 1, 32>}, {pipeline_mode = #tpu.pipeline_mode<synchronous>, transform_indices = @transform_2, window_bounds = array<i64: 1, 32>}, {pipeline_mode = #tpu.pipeline_mode<synchronous>, transform_indices = @transform_3, window_bounds = array<i64: 32, 64>}, {pipeline_mode = #tpu.pipeline_mode<synchronous>, transform_indices = @transform_4, window_bounds = array<i64: 1, 64>}, {pipeline_mode = #tpu.pipeline_mode<synchronous>, transform_indices = @transform_5, window_bounds = array<i64: 64, 32>}, {pipeline_mode = #tpu.pipeline_mode<synchronous>, transform_indices = @transform_6, window_bounds = array<i64: 1, 32>}, {transform_indices = @transform_7, window_bounds = array<i64: 160, 32>}]} {
    %c0 = arith.constant 0 : index
    %c0_0 = arith.constant 0 : index
    %0 = vector.load %arg1[%c0, %c0_0] : memref<160x32xf32, #tpu.memory_space<vmem>>, vector<160x32xf32>
    %cst = arith.constant dense<0.000000e+00> : vector<160xf32>
    %1 = vector.multi_reduction <add>, %0, %cst [1] : vector<160x32xf32> to vector<160xf32>
    %2 = vector.shape_cast %1 : vector<160xf32> to vector<160x1xf32>
    %cst_1 = arith.constant 3.200000e+01 : f32
    %3 = vector.broadcast %cst_1 : f32 to vector<160x1xf32>
    %4 = arith.divf %2, %3 : vector<160x1xf32>
    %5 = vector.broadcast %4 : vector<160x1xf32> to vector<160x32xf32>
    %6 = arith.subf %0, %5 : vector<160x32xf32>
    %7 = arith.mulf %6, %6 : vector<160x32xf32>
    %cst_2 = arith.constant dense<0.000000e+00> : vector<160xf32>
    %8 = vector.multi_reduction <add>, %7, %cst_2 [1] : vector<160x32xf32> to vector<160xf32>
    %9 = vector.shape_cast %8 : vector<160xf32> to vector<160x1xf32>
    %cst_3 = arith.constant 3.200000e+01 : f32
    %10 = vector.broadcast %cst_3 : f32 to vector<160x1xf32>
    %11 = arith.divf %9, %10 : vector<160x1xf32>
    %cst_4 = arith.constant 9.99999974E-6 : f32
    %12 = vector.broadcast %cst_4 : f32 to vector<160x1xf32>
    %13 = arith.addf %11, %12 : vector<160x1xf32>
    %14 = math.rsqrt %13 : vector<160x1xf32>
    %15 = vector.broadcast %14 : vector<160x1xf32> to vector<160x32xf32>
    %16 = arith.mulf %6, %15 : vector<160x32xf32>
    %c0_5 = arith.constant 0 : index
    %c0_6 = arith.constant 0 : index
    %17 = vector.load %arg2[%c0_5, %c0_6] : memref<1x32xf32, #tpu.memory_space<vmem>>, vector<1x32xf32>
    %18 = vector.broadcast %17 : vector<1x32xf32> to vector<160x32xf32>
    %19 = arith.mulf %16, %18 : vector<160x32xf32>
    %c0_7 = arith.constant 0 : index
    %c0_8 = arith.constant 0 : index
    %20 = vector.load %arg3[%c0_7, %c0_8] : memref<1x32xf32, #tpu.memory_space<vmem>>, vector<1x32xf32>
    %21 = vector.broadcast %20 : vector<1x32xf32> to vector<160x32xf32>
    %22 = arith.addf %19, %21 : vector<160x32xf32>
    %c0_9 = arith.constant 0 : index
    %c0_10 = arith.constant 0 : index
    %23 = vector.load %arg4[%c0_9, %c0_10] : memref<32x64xf32, #tpu.memory_space<vmem>>, vector<32x64xf32>
    %cst_11 = arith.constant dense<0.000000e+00> : vector<160x64xf32>
    %24 = tpu.matmul %22, %23, %cst_11 {dimension_numbers = #tpu.dot_dimension_numbers<[1], [0], [0], [1], [0, 0, 1, 1], [], []>} : vector<160x32xf32>, vector<32x64xf32>, vector<160x64xf32> -> vector<160x64xf32>
    %c0_12 = arith.constant 0 : index
    %c0_13 = arith.constant 0 : index
    %25 = vector.load %arg5[%c0_12, %c0_13] : memref<1x64xf32, #tpu.memory_space<vmem>>, vector<1x64xf32>
    %26 = vector.broadcast %25 : vector<1x64xf32> to vector<160x64xf32>
    %27 = arith.addf %24, %26 : vector<160x64xf32>
    %cst_14 = arith.constant 0.000000e+00 : f32
    %28 = vector.broadcast %cst_14 : f32 to vector<160x64xf32>
    %29 = arith.maximumf %27, %28 : vector<160x64xf32>
    %c0_15 = arith.constant 0 : index
    %c0_16 = arith.constant 0 : index
    %30 = vector.load %arg6[%c0_15, %c0_16] : memref<64x32xf32, #tpu.memory_space<vmem>>, vector<64x32xf32>
    %cst_17 = arith.constant dense<0.000000e+00> : vector<160x32xf32>
    %31 = tpu.matmul %29, %30, %cst_17 {dimension_numbers = #tpu.dot_dimension_numbers<[1], [0], [0], [1], [0, 0, 1, 1], [], []>} : vector<160x64xf32>, vector<64x32xf32>, vector<160x32xf32> -> vector<160x32xf32>
    %c0_18 = arith.constant 0 : index
    %c0_19 = arith.constant 0 : index
    %32 = vector.load %arg7[%c0_18, %c0_19] : memref<1x32xf32, #tpu.memory_space<vmem>>, vector<1x32xf32>
    %33 = vector.broadcast %32 : vector<1x32xf32> to vector<160x32xf32>
    %34 = arith.addf %31, %33 : vector<160x32xf32>
    %35 = arith.addf %0, %34 : vector<160x32xf32>
    %c0_20 = arith.constant 0 : index
    %c0_21 = arith.constant 0 : index
    %36 = vector.load %arg8[%c0_20, %c0_21] : memref<160x32xf32, #tpu.memory_space<vmem>>, vector<160x32xf32>
    tpu.vector_store %arg8[%c0_20, %c0_21], %35 {strides = array<i32>} : memref<160x32xf32, #tpu.memory_space<vmem>>, vector<160x32xf32>,
    return
  }
  func.func @transform_0(%arg0: i32) -> (i32, i32) {
    %c0_i32 = arith.constant 0 : i32
    %c0_i32_0 = arith.constant 0 : i32
    return %arg0, %c0_i32 : i32, i32
  }
  func.func @transform_1(%arg0: i32) -> (i32, i32) {
    %c0_i32 = arith.constant 0 : i32
    %c0_i32_0 = arith.constant 0 : i32
    %c0_i32_1 = arith.constant 0 : i32
    return %c0_i32, %c0_i32_0 : i32, i32
  }
  func.func @transform_2(%arg0: i32) -> (i32, i32) {
    %c0_i32 = arith.constant 0 : i32
    %c0_i32_0 = arith.constant 0 : i32
    %c0_i32_1 = arith.constant 0 : i32
    return %c0_i32, %c0_i32_0 : i32, i32
  }
  func.func @transform_3(%arg0: i32) -> (i32, i32) {
    %c0_i32 = arith.constant 0 : i32
    %c0_i32_0 = arith.constant 0 : i32
    %c0_i32_1 = arith.constant 0 : i32
    return %c0_i32, %c0_i32_0 : i32, i32
  }
  func.func @transform_4(%arg0: i32) -> (i32, i32) {
    %c0_i32 = arith.constant 0 : i32
    %c0_i32_0 = arith.constant 0 : i32
    %c0_i32_1 = arith.constant 0 : i32
    return %c0_i32, %c0_i32_0 : i32, i32
  }
  func.func @transform_5(%arg0: i32) -> (i32, i32) {
    %c0_i32 = arith.constant 0 : i32
    %c0_i32_0 = arith.constant 0 : i32
    %c0_i32_1 = arith.constant 0 : i32
    return %c0_i32, %c0_i32_0 : i32, i32
  }
  func.func @transform_6(%arg0: i32) -> (i32, i32) {
    %c0_i32 = arith.constant 0 : i32
    %c0_i32_0 = arith.constant 0 : i32
    %c0_i32_1 = arith.constant 0 : i32
    return %c0_i32, %c0_i32_0 : i32, i32
  }
  func.func @transform_7(%arg0: i32) -> (i32, i32) {
    %c0_i32 = arith.constant 0 : i32
    %c0_i32_0 = arith.constant 0 : i32
    return %arg0, %c0_i32 : i32, i32
  }
}

</mosaic_0001>

<llo_original>
// kernel: run_pallas.6
$region0: #{run_pallas.6}
  #allocation0 [shape = 'u32[]', space=smem, size = 0x4, offset = 0x4, fixed_abs, tag = 'smem constant byte address 0x4 - core index']
  #allocation1 [shape = 'u32[144,128]{1,0:T(1,128)}', space=vmem, size = 0x12000, scoped, tag = 'internal scratch']
  %s0 = inlined_call_operand.vmem [shape: f32[160,32], index: 0, kind: input, shape index: {}]
  %s1 = inlined_call_operand.vmem [shape: f32[32,32], index: 1, kind: input, shape index: {}]
  %s2 = inlined_call_operand.vmem [shape: f32[1,32], index: 2, kind: input, shape index: {}]
  %s3 = inlined_call_operand.vmem [shape: f32[160,32], index: 3, kind: input, shape index: {}]
  %s4 = inlined_call_operand.vmem [shape: f32[160,32], index: 4, kind: output, shape index: {}]
  %s5 = sld [smem:[#allocation0]]
  $region26: #{run_pallas.6} parent=0
    _
  %s7 = ssub.s32 1, %s5
  %s8 = scalar_select 0, %s7, %s5
  // Predicated region
  $region2: #{run_pallas.6} parent=0 // pred_check
    _
  $region3: #{run_pallas.6} parent=0 // pred_check_branch
    %10 = sbr.rel (0) target = $region5
  $region4: #{run_pallas.6} parent=0 // pred_region
    _
  $region5: #{run_pallas.6} parent=0 // pred_fallthru
    _
  // Predicated region
  $region6: #{run_pallas.6} parent=0 // pred_check
    _
  $region7: #{run_pallas.6} parent=0 // pred_check_branch
    %12 = sbr.rel (0) target = $region9
  $region8: #{run_pallas.6} parent=0 // pred_region
    _
  $region9: #{run_pallas.6} parent=0 // pred_fallthru
    _
  // Predicated region
  $region10: #{run_pallas.6} parent=0 // pred_check
    _
  $region11: #{run_pallas.6} parent=0 // pred_check_branch
    %14 = sbr.rel (0) target = $region13
  $region12: #{run_pallas.6} parent=0 // pred_region
    _
  $region13: #{run_pallas.6} parent=0 // pred_fallthru
    _
  // Predicated region
  $region14: #{run_pallas.6} parent=0 // pred_check
    _
  $region15: #{run_pallas.6} parent=0 // pred_check_branch
    %16 = sbr.rel (0) target = $region17
  $region16: #{run_pallas.6} parent=0 // pred_region
    _
  $region17: #{run_pallas.6} parent=0 // pred_fallthru
    _
  %v17 = vld [vmem:[%s0] sm:$0xff]
  %v18 = vld [vmem:[%s0 + $0x8] sm:$0xff]
  %v19 = vld [vmem:[%s0 + $0x10] sm:$0xff]
  %v20 = vld [vmem:[%s0 + $0x18] sm:$0xff]
  %v21 = vld [vmem:[%s0 + $0x20] sm:$0xff]
  %v22 = vld [vmem:[%s0 + $0x28] sm:$0xff]
  %v23 = vld [vmem:[%s0 + $0x30] sm:$0xff]
  %v24 = vld [vmem:[%s0 + $0x38] sm:$0xff]
  %v25 = vld [vmem:[%s0 + $0x40] sm:$0xff]
  %v26 = vld [vmem:[%s0 + $0x48] sm:$0xff]
  %v27 = vld [vmem:[%s0 + $0x50] sm:$0xff]
  %v28 = vld [vmem:[%s0 + $0x58] sm:$0xff]
  %v29 = vld [vmem:[%s0 + $0x60] sm:$0xff]
  %v30 = vld [vmem:[%s0 + $0x68] sm:$0xff]
  %v31 = vld [vmem:[%s0 + $0x70] sm:$0xff]
  %v32 = vld [vmem:[%s0 + $0x78] sm:$0xff]
  %v33 = vld [vmem:[%s0 + $0x80] sm:$0xff]
  %v34 = vld [vmem:[%s0 + $0x88] sm:$0xff]
  %v35 = vld [vmem:[%s0 + $0x90] sm:$0xff]
  %v36 = vld [vmem:[%s0 + $0x98] sm:$0xff]
  %v37 = vld [vmem:[%s1] sm:$0xff]
  %v38 = vld [vmem:[%s1 + $0x8] sm:$0xff]
  %v39 = vld [vmem:[%s1 + $0x10] sm:$0xff]
  %v40 = vld [vmem:[%s1 + $0x18] sm:$0xff]
  %v41 = vld [vmem:[%s2] sm:$0x1]
  %v43 = vlaneseq
  %v44 = vshrl.u32 %v43, 7
  %v45 = vsub.s32 0, %v44
  %v46 = vrot.slane %v41, %v45
  %vm48 = vcmask 261120
  %v50 = vsel %vm48, %v17, 0
  %v53 = vsel %vm48, %v18, 0
  %v56 = vsel %vm48, %v19, 0
  %v59 = vsel %vm48, %v20, 0
  %v62 = vsel %vm48, %v21, 0
  %v65 = vsel %vm48, %v22, 0
  %v68 = vsel %vm48, %v23, 0
  %v71 = vsel %vm48, %v24, 0
  %v74 = vsel %vm48, %v25, 0
  %v77 = vsel %vm48, %v26, 0
  %v80 = vsel %vm48, %v27, 0
  %v83 = vsel %vm48, %v28, 0
  %v86 = vsel %vm48, %v29, 0
  %v89 = vsel %vm48, %v30, 0
  %v92 = vsel %vm48, %v31, 0
  %v95 = vsel %vm48, %v32, 0
  %v98 = vsel %vm48, %v33, 0
  %v101 = vsel %vm48, %v34, 0
  %v104 = vsel %vm48, %v35, 0
  %v107 = vsel %vm48, %v36, 0
  %109 = vmatprep.subr.mxu0 0.0
  %110 = vmatpush1.msra.mxu0 %v37
  %111 = vmatprep.subr.mxu0 0.0
  %112 = vmatpush1.msra.mxu0 %v38
  %113 = vmatprep.subr.mxu0 0.0
  %114 = vmatpush1.msra.mxu0 %v39
  %115 = vmatprep.subr.mxu0 0.0
  %116 = vmatpush1.msra.mxu0 %v40
  %117 = vmatprep.subr.mxu0 0.0
  %118 = vmatpush1.msra.mxu0 0.0
  %119 = vmatprep.subr.mxu0 0.0
  %120 = vmatpush1.msra.mxu0 0.0
  %121 = vmatprep.subr.mxu0 0.0
  %122 = vmatpush1.msra.mxu0 0.0
  %123 = vmatprep.subr.mxu0 0.0
  %124 = vmatpush1.msra.mxu0 0.0
  %125 = vmatprep.subr.mxu0 0.0
  %126 = vmatpush1.msra.mxu0 0.0
  %127 = vmatprep.subr.mxu0 0.0
  %128 = vmatpush1.msra.mxu0 0.0
  %129 = vmatprep.subr.mxu0 0.0
  %130 = vmatpush1.msra.mxu0 0.0
  %131 = vmatprep.subr.mxu0 0.0
  %132 = vmatpush1.msra.mxu0 0.0
  %133 = vmatprep.subr.mxu0 0.0
  %134 = vmatpush1.msra.mxu0 0.0
  %135 = vmatprep.subr.mxu0 0.0
  %136 = vmatpush1.msra.mxu0 0.0
  %137 = vmatprep.subr.mxu0 0.0
  %138 = vmatpush1.msra.mxu0 0.0
  %139 = vmatprep.subr.mxu0 0.0
  %140 = vmatpush1.msra.mxu0 0.0
  %141 = vmatprep.subr.mxu0 0.0
  %142 = vmatpush1.msra.mxu0 0.0
  %143 = vmatprep.subr.mxu0 0.0
  %144 = vmatpush1.msra.mxu0 0.0
  %145 = vmatprep.subr.mxu0 0.0
  %146 = vmatpush1.msra.mxu0 0.0
  %147 = vmatprep.subr.mxu0 0.0
  %148 = vmatpush1.msra.mxu0 0.0
  %149 = vmatprep.subr.mxu0 0.0
  %150 = vmatpush1.msra.mxu0 0.0
  %151 = vmatprep.subr.mxu0 0.0
  %152 = vmatpush1.msra.mxu0 0.0
  %153 = vmatprep.subr.mxu0 0.0
  %154 = vmatpush1.msra.mxu0 0.0
  %155 = vmatprep.subr.mxu0 0.0
  %156 = vmatpush1.msra.mxu0 0.0
  %157 = vmatprep.subr.mxu0 0.0
  %158 = vmatpush1.msra.mxu0 0.0
  %159 = vmatprep.subr.mxu0 0.0
  %160 = vmatpush1.msra.mxu0 0.0
  %161 = vmatprep.subr.mxu0 0.0
  %162 = vmatpush1.msra.mxu0 0.0
  %163 = vmatprep.subr.mxu0 0.0
  %164 = vmatpush1.msra.mxu0 0.0
  %165 = vmatprep.subr.mxu0 0.0
  %166 = vmatpush1.msra.mxu0 0.0
  %167 = vmatprep.subr.mxu0 0.0
  %168 = vmatpush1.msra.mxu0 0.0
  %169 = vmatprep.subr.mxu0 0.0
  %170 = vmatpush1.msra.mxu0 0.0
  %171 = vmatprep.subr.mxu0 0.0
  %172 = vmatpush1.msra.mxu0 0.0
  %173 = vmatprep.mubr.f32.mxu0 0.0
  %174 = vmatmul.mubr.f32.gmra.mrb[0].mxu0 %v50
  %v175 = vpop.f32.mrb[0].mxu0
  %v176 = vadd.f32 %v46, %v175
  %v177 = vpop.f32.mrb[0].mxu0
  %178 = vmatprep.mubr.f32.mxu0 0.0
  %179 = vmatmul.mubr.f32.gmra.mrb[0].mxu0 %v53
  %v180 = vpop.f32.mrb[0].mxu0
  %v181 = vadd.f32 %v46, %v180
  %v182 = vpop.f32.mrb[0].mxu0
  %183 = vmatprep.mubr.f32.mxu0 0.0
  %184 = vmatmul.mubr.f32.gmra.mrb[0].mxu0 %v56
  %v185 = vpop.f32.mrb[0].mxu0
  %v186 = vadd.f32 %v46, %v185
  %v187 = vpop.f32.mrb[0].mxu0
  %188 = vmatprep.mubr.f32.mxu0 0.0
  %189 = vmatmul.mubr.f32.gmra.mrb[0].mxu0 %v59
  %v190 = vpop.f32.mrb[0].mxu0
  %v191 = vadd.f32 %v46, %v190
  %v192 = vpop.f32.mrb[0].mxu0
  %193 = vmatprep.mubr.f32.mxu0 0.0
  %194 = vmatmul.mubr.f32.gmra.mrb[0].mxu0 %v62
  %v195 = vpop.f32.mrb[0].mxu0
  %v196 = vadd.f32 %v46, %v195
  %v197 = vpop.f32.mrb[0].mxu0
  %198 = vmatprep.mubr.f32.mxu0 0.0
  %199 = vmatmul.mubr.f32.gmra.mrb[0].mxu0 %v65
  %v200 = vpop.f32.mrb[0].mxu0
  %v201 = vadd.f32 %v46, %v200
  %v202 = vpop.f32.mrb[0].mxu0
  %203 = vmatprep.mubr.f32.mxu0 0.0
  %204 = vmatmul.mubr.f32.gmra.mrb[0].mxu0 %v68
  %v205 = vpop.f32.mrb[0].mxu0
  %v206 = vadd.f32 %v46, %v205
  %v207 = vpop.f32.mrb[0].mxu0
  %208 = vmatprep.mubr.f32.mxu0 0.0
  %209 = vmatmul.mubr.f32.gmra.mrb[0].mxu0 %v71
  %v210 = vpop.f32.mrb[0].mxu0
  %v211 = vadd.f32 %v46, %v210
  %v212 = vpop.f32.mrb[0].mxu0
  %213 = vmatprep.mubr.f32.mxu0 0.0
  %214 = vmatmul.mubr.f32.gmra.mrb[0].mxu0 %v74
  %v215 = vpop.f32.mrb[0].mxu0
  %v216 = vadd.f32 %v46, %v215
  %v217 = vpop.f32.mrb[0].mxu0
  %218 = vmatprep.mubr.f32.mxu0 0.0
  %219 = vmatmul.mubr.f32.gmra.mrb[0].mxu0 %v77
  %v220 = vpop.f32.mrb[0].mxu0
  %v221 = vadd.f32 %v46, %v220
  %v222 = vpop.f32.mrb[0].mxu0
  %223 = vmatprep.mubr.f32.mxu0 0.0
  %224 = vmatmul.mubr.f32.gmra.mrb[0].mxu0 %v80
  %v225 = vpop.f32.mrb[0].mxu0
  %v226 = vadd.f32 %v46, %v225
  %v227 = vpop.f32.mrb[0].mxu0
  %228 = vmatprep.mubr.f32.mxu0 0.0
  %229 = vmatmul.mubr.f32.gmra.mrb[0].mxu0 %v83
  %v230 = vpop.f32.mrb[0].mxu0
  %v231 = vadd.f32 %v46, %v230
  %v232 = vpop.f32.mrb[0].mxu0
  %233 = vmatprep.mubr.f32.mxu0 0.0
  %234 = vmatmul.mubr.f32.gmra.mrb[0].mxu0 %v86
  %v235 = vpop.f32.mrb[0].mxu0
  %v236 = vadd.f32 %v46, %v235
  %v237 = vpop.f32.mrb[0].mxu0
  %238 = vmatprep.mubr.f32.mxu0 0.0
  %239 = vmatmul.mubr.f32.gmra.mrb[0].mxu0 %v89
  %v240 = vpop.f32.mrb[0].mxu0
  %v241 = vadd.f32 %v46, %v240
  %v242 = vpop.f32.mrb[0].mxu0
  %243 = vmatprep.mubr.f32.mxu0 0.0
  %244 = vmatmul.mubr.f32.gmra.mrb[0].mxu0 %v92
  %v245 = vpop.f32.mrb[0].mxu0
  %v246 = vadd.f32 %v46, %v245
  %v247 = vpop.f32.mrb[0].mxu0
  %248 = vmatprep.mubr.f32.mxu0 0.0
  %249 = vmatmul.mubr.f32.gmra.mrb[0].mxu0 %v95
  %v250 = vpop.f32.mrb[0].mxu0
  %v251 = vadd.f32 %v46, %v250
  %v252 = vpop.f32.mrb[0].mxu0
  %253 = vmatprep.mubr.f32.mxu0 0.0
  %254 = vmatmul.mubr.f32.gmra.mrb[0].mxu0 %v98
  %v255 = vpop.f32.mrb[0].mxu0
  %v256 = vadd.f32 %v46, %v255
  %v257 = vpop.f32.mrb[0].mxu0
  %258 = vmatprep.mubr.f32.mxu0 0.0
  %259 = vmatmul.mubr.f32.gmra.mrb[0].mxu0 %v101
  %v260 = vpop.f32.mrb[0].mxu0
  %v261 = vadd.f32 %v46, %v260
  %v262 = vpop.f32.mrb[0].mxu0
  %263 = vmatprep.mubr.f32.mxu0 0.0
  %264 = vmatmul.mubr.f32.gmra.mrb[0].mxu0 %v104
  %v265 = vpop.f32.mrb[0].mxu0
  %v266 = vadd.f32 %v46, %v265
  %v267 = vpop.f32.mrb[0].mxu0
  %268 = vmatprep.mubr.f32.mxu0 0.0
  %269 = vmatmul.mubr.f32.gmra.mrb[0].mxu0 %v107
  %v270 = vpop.f32.mrb[0].mxu0
  %v271 = vadd.f32 %v46, %v270
  %v272 = vpop.f32.mrb[0].mxu0
  %273 = vdwg.mxu0
  %v274 = vld [vmem:[%s3] sm:$0xff]
  %v275 = vld [vmem:[%s3 + $0x8] sm:$0xff]
  %v276 = vld [vmem:[%s3 + $0x10] sm:$0xff]
  %v277 = vld [vmem:[%s3 + $0x18] sm:$0xff]
  %v278 = vld [vmem:[%s3 + $0x20] sm:$0xff]
  %v279 = vld [vmem:[%s3 + $0x28] sm:$0xff]
  %v280 = vld [vmem:[%s3 + $0x30] sm:$0xff]
  %v281 = vld [vmem:[%s3 + $0x38] sm:$0xff]
  %v282 = vld [vmem:[%s3 + $0x40] sm:$0xff]
  %v283 = vld [vmem:[%s3 + $0x48] sm:$0xff]
  %v284 = vld [vmem:[%s3 + $0x50] sm:$0xff]
  %v285 = vld [vmem:[%s3 + $0x58] sm:$0xff]
  %v286 = vld [vmem:[%s3 + $0x60] sm:$0xff]
  %v287 = vld [vmem:[%s3 + $0x68] sm:$0xff]
  %v288 = vld [vmem:[%s3 + $0x70] sm:$0xff]
  %v289 = vld [vmem:[%s3 + $0x78] sm:$0xff]
  %v290 = vld [vmem:[%s3 + $0x80] sm:$0xff]
  %v291 = vld [vmem:[%s3 + $0x88] sm:$0xff]
  %v292 = vld [vmem:[%s3 + $0x90] sm:$0xff]
  %v293 = vld [vmem:[%s3 + $0x98] sm:$0xff]
  %v294 = vadd.f32 %v176, %v274
  %v295 = vadd.f32 %v181, %v275
  %v296 = vadd.f32 %v186, %v276
  %v297 = vadd.f32 %v191, %v277
  %v298 = vadd.f32 %v196, %v278
  %v299 = vadd.f32 %v201, %v279
  %v300 = vadd.f32 %v206, %v280
  %v301 = vadd.f32 %v211, %v281
  %v302 = vadd.f32 %v216, %v282
  %v303 = vadd.f32 %v221, %v283
  %v304 = vadd.f32 %v226, %v284
  %v305 = vadd.f32 %v231, %v285
  %v306 = vadd.f32 %v236, %v286
  %v307 = vadd.f32 %v241, %v287
  %v308 = vadd.f32 %v246, %v288
  %v309 = vadd.f32 %v251, %v289
  %v310 = vadd.f32 %v256, %v290
  %v311 = vadd.f32 %v261, %v291
  %v312 = vadd.f32 %v266, %v292
  %v313 = vadd.f32 %v271, %v293
  %314 = vst.msk [vmem:[%s4] sm:$0xff] %vm48, %v294
  %315 = vst.msk [vmem:[%s4 + $0x8] sm:$0xff] %vm48, %v295
  %316 = vst.msk [vmem:[%s4 + $0x10] sm:$0xff] %vm48, %v296
  %317 = vst.msk [vmem:[%s4 + $0x18] sm:$0xff] %vm48, %v297
  %318 = vst.msk [vmem:[%s4 + $0x20] sm:$0xff] %vm48, %v298
  %319 = vst.msk [vmem:[%s4 + $0x28] sm:$0xff] %vm48, %v299
  %320 = vst.msk [vmem:[%s4 + $0x30] sm:$0xff] %vm48, %v300
  %321 = vst.msk [vmem:[%s4 + $0x38] sm:$0xff] %vm48, %v301
  %322 = vst.msk [vmem:[%s4 + $0x40] sm:$0xff] %vm48, %v302
  %323 = vst.msk [vmem:[%s4 + $0x48] sm:$0xff] %vm48, %v303
  %324 = vst.msk [vmem:[%s4 + $0x50] sm:$0xff] %vm48, %v304
  %325 = vst.msk [vmem:[%s4 + $0x58] sm:$0xff] %vm48, %v305
  %326 = vst.msk [vmem:[%s4 + $0x60] sm:$0xff] %vm48, %v306
  %327 = vst.msk [vmem:[%s4 + $0x68] sm:$0xff] %vm48, %v307
  %328 = vst.msk [vmem:[%s4 + $0x70] sm:$0xff] %vm48, %v308
  %329 = vst.msk [vmem:[%s4 + $0x78] sm:$0xff] %vm48, %v309
  %330 = vst.msk [vmem:[%s4 + $0x80] sm:$0xff] %vm48, %v310
  %331 = vst.msk [vmem:[%s4 + $0x88] sm:$0xff] %vm48, %v311
  %332 = vst.msk [vmem:[%s4 + $0x90] sm:$0xff] %vm48, %v312
  %333 = vst.msk [vmem:[%s4 + $0x98] sm:$0xff] %vm48, %v313
  // Predicated region
  $region18: #{run_pallas.6} parent=0 // pred_check
    _
  $region19: #{run_pallas.6} parent=0 // pred_check_branch
    %335 = sbr.rel (0) target = $region21
  $region20: #{run_pallas.6} parent=0 // pred_region
    _
  $region21: #{run_pallas.6} parent=0 // pred_fallthru
    _
  // Predicated region
  $region22: #{run_pallas.6} parent=0 // pred_check
    _
  $region23: #{run_pallas.6} parent=0 // pred_check_branch
    %337 = sbr.rel (0) target = $region25
  $region24: #{run_pallas.6} parent=0 // pred_region
    _
  $region25: #{run_pallas.6} parent=0 // pred_fallthru
    _

// kernel: run_pallas.4
$region0: #{run_pallas.4}
  #allocation0 [shape = 'u32[]', space=smem, size = 0x4, offset = 0x4, fixed_abs, tag = 'smem constant byte address 0x4 - core index']
  #allocation1 [shape = 'u32[144,128]{1,0:T(1,128)}', space=vmem, size = 0x12000, scoped, tag = 'internal scratch']
  %s0 = inlined_call_operand.vmem [shape: f32[160,32], index: 0, kind: input, shape index: {}]
  %s1 = inlined_call_operand.vmem [shape: f32[160,32], index: 1, kind: input, shape index: {}]
  %s2 = inlined_call_operand.vmem [shape: f32[1,32], index: 2, kind: input, shape index: {}]
  %s3 = inlined_call_operand.vmem [shape: f32[1,32], index: 3, kind: input, shape index: {}]
  %s4 = inlined_call_operand.vmem [shape: f32[32,32], index: 4, kind: input, shape index: {}]
  %s5 = inlined_call_operand.vmem [shape: f32[1,32], index: 5, kind: input, shape index: {}]
  %s6 = inlined_call_operand.vmem [shape: f32[32,48], index: 6, kind: input, shape index: {}]
  %s7 = inlined_call_operand.vmem [shape: f32[1,48], index: 7, kind: input, shape index: {}]
  %s8 = inlined_call_operand.vmem [shape: f32[160,32], index: 8, kind: output, shape index: {0}]
  %s9 = inlined_call_operand.vmem [shape: f32[160,48], index: 9, kind: output, shape index: {1}]
  %10 = xla_tuple %s8, %s9
  %s11 = sld [smem:[#allocation0]]
  $region50: #{run_pallas.4} parent=0
    _
  %s13 = ssub.s32 1, %s11
  %s14 = scalar_select 0, %s13, %s11
  // Predicated region
  $region2: #{run_pallas.4} parent=0 // pred_check
    _
  $region3: #{run_pallas.4} parent=0 // pred_check_branch
    %16 = sbr.rel (0) target = $region5
  $region4: #{run_pallas.4} parent=0 // pred_region
    _
  $region5: #{run_pallas.4} parent=0 // pred_fallthru
    _
  // Predicated region
  $region6: #{run_pallas.4} parent=0 // pred_check
    _
  $region7: #{run_pallas.4} parent=0 // pred_check_branch
    %18 = sbr.rel (0) target = $region9
  $region8: #{run_pallas.4} parent=0 // pred_region
    _
  $region9: #{run_pallas.4} parent=0 // pred_fallthru
    _
  // Predicated region
  $region10: #{run_pallas.4} parent=0 // pred_check
    _
  $region11: #{run_pallas.4} parent=0 // pred_check_branch
    %20 = sbr.rel (0) target = $region13
  $region12: #{run_pallas.4} parent=0 // pred_region
    _
  $region13: #{run_pallas.4} parent=0 // pred_fallthru
    _
  // Predicated region
  $region14: #{run_pallas.4} parent=0 // pred_check
    _
  $region15: #{run_pallas.4} parent=0 // pred_check_branch
    %22 = sbr.rel (0) target = $region17
  $region16: #{run_pallas.4} parent=0 // pred_region
    _
  $region17: #{run_pallas.4} parent=0 // pred_fallthru
    _
  // Predicated region
  $region18: #{run_pallas.4} parent=0 // pred_check
    _
  $region19: #{run_pallas.4} parent=0 // pred_check_branch
    %24 = sbr.rel (0) target = $region21
  $region20: #{run_pallas.4} parent=0 // pred_region
    _
  $region21: #{run_pallas.4} parent=0 // pred_fallthru
    _
  // Predicated region
  $region22: #{run_pallas.4} parent=0 // pred_check
    _
  $region23: #{run_pallas.4} parent=0 // pred_check_branch
    %26 = sbr.rel (0) target = $region25
  $region24: #{run_pallas.4} parent=0 // pred_region
    _
  $region25: #{run_pallas.4} parent=0 // pred_fallthru
    _
  // Predicated region
  $region26: #{run_pallas.4} parent=0 // pred_check
    _
  $region27: #{run_pallas.4} parent=0 // pred_check_branch
    %28 = sbr.rel (0) target = $region29
  $region28: #{run_pallas.4} parent=0 // pred_region
    _
  $region29: #{run_pallas.4} parent=0 // pred_fallthru
    _
  // Predicated region
  $region30: #{run_pallas.4} parent=0 // pred_check
    _
  $region31: #{run_pallas.4} parent=0 // pred_check_branch
    %30 = sbr.rel (0) target = $region33
  $region32: #{run_pallas.4} parent=0 // pred_region
    _
  $region33: #{run_pallas.4} parent=0 // pred_fallthru
    _
  %v31 = vld [vmem:[%s0] sm:$0xff]
  %v32 = vld [vmem:[%s0 + $0x8] sm:$0xff]
  %v33 = vld [vmem:[%s0 + $0x10] sm:$0xff]
  %v34 = vld [vmem:[%s0 + $0x18] sm:$0xff]
  %v35 = vld [vmem:[%s0 + $0x20] sm:$0xff]
  %v36 = vld [vmem:[%s0 + $0x28] sm:$0xff]
  %v37 = vld [vmem:[%s0 + $0x30] sm:$0xff]
  %v38 = vld [vmem:[%s0 + $0x38] sm:$0xff]
  %v39 = vld [vmem:[%s0 + $0x40] sm:$0xff]
  %v40 = vld [vmem:[%s0 + $0x48] sm:$0xff]
  %v41 = vld [vmem:[%s0 + $0x50] sm:$0xff]
  %v42 = vld [vmem:[%s0 + $0x58] sm:$0xff]
  %v43 = vld [vmem:[%s0 + $0x60] sm:$0xff]
  %v44 = vld [vmem:[%s0 + $0x68] sm:$0xff]
  %v45 = vld [vmem:[%s0 + $0x70] sm:$0xff]
  %v46 = vld [vmem:[%s0 + $0x78] sm:$0xff]
  %v47 = vld [vmem:[%s0 + $0x80] sm:$0xff]
  %v48 = vld [vmem:[%s0 + $0x88] sm:$0xff]
  %v49 = vld [vmem:[%s0 + $0x90] sm:$0xff]
  %v50 = vld [vmem:[%s0 + $0x98] sm:$0xff]
  %vm51 = vcmask 261120
  %v52 = vsel %vm51, %v31, 0.0
  %53 = vadd.xlane.f32.xlu0 %v52
  %v54 = vpop.xlane.xlu0 %53
  %v55 = vsel %vm51, %v32, 0.0
  %56 = vadd.xlane.f32.xlu0 %v55
  %v57 = vpop.xlane.xlu0 %56
  %v58 = vsel %vm51, %v33, 0.0
  %59 = vadd.xlane.f32.xlu0 %v58
  %v60 = vpop.xlane.xlu0 %59
  %v61 = vsel %vm51, %v34, 0.0
  %62 = vadd.xlane.f32.xlu0 %v61
  %v63 = vpop.xlane.xlu0 %62
  %v64 = vsel %vm51, %v35, 0.0
  %65 = vadd.xlane.f32.xlu0 %v64
  %v66 = vpop.xlane.xlu0 %65
  %v67 = vsel %vm51, %v36, 0.0
  %68 = vadd.xlane.f32.xlu0 %v67
  %v69 = vpop.xlane.xlu0 %68
  %v70 = vsel %vm51, %v37, 0.0
  %71 = vadd.xlane.f32.xlu0 %v70
  %v72 = vpop.xlane.xlu0 %71
  %v73 = vsel %vm51, %v38, 0.0
  %74 = vadd.xlane.f32.xlu0 %v73
  %v75 = vpop.xlane.xlu0 %74
  %v76 = vsel %vm51, %v39, 0.0
  %77 = vadd.xlane.f32.xlu0 %v76
  %v78 = vpop.xlane.xlu0 %77
  %v79 = vsel %vm51, %v40, 0.0
  %80 = vadd.xlane.f32.xlu0 %v79
  %v81 = vpop.xlane.xlu0 %80
  %v82 = vsel %vm51, %v41, 0.0
  %83 = vadd.xlane.f32.xlu0 %v82
  %v84 = vpop.xlane.xlu0 %83
  %v85 = vsel %vm51, %v42, 0.0
  %86 = vadd.xlane.f32.xlu0 %v85
  %v87 = vpop.xlane.xlu0 %86
  %v88 = vsel %vm51, %v43, 0.0
  %89 = vadd.xlane.f32.xlu0 %v88
  %v90 = vpop.xlane.xlu0 %89
  %v91 = vsel %vm51, %v44, 0.0
  %92 = vadd.xlane.f32.xlu0 %v91
  %v93 = vpop.xlane.xlu0 %92
  %v94 = vsel %vm51, %v45, 0.0
  %95 = vadd.xlane.f32.xlu0 %v94
  %v96 = vpop.xlane.xlu0 %95
  %v97 = vsel %vm51, %v46, 0.0
  %98 = vadd.xlane.f32.xlu0 %v97
  %v99 = vpop.xlane.xlu0 %98
  %v100 = vsel %vm51, %v47, 0.0
  %101 = vadd.xlane.f32.xlu0 %v100
  %v102 = vpop.xlane.xlu0 %101
  %v103 = vsel %vm51, %v48, 0.0
  %104 = vadd.xlane.f32.xlu0 %v103
  %v105 = vpop.xlane.xlu0 %104
  %v106 = vsel %vm51, %v49, 0.0
  %107 = vadd.xlane.f32.xlu0 %v106
  %v108 = vpop.xlane.xlu0 %107
  %v109 = vsel %vm51, %v50, 0.0
  %110 = vadd.xlane.f32.xlu0 %v109
  %v111 = vpop.xlane.xlu0 %110
  %v112 = vrcp.pop 32.0
  %v113 = vmul.f32 %v54, %v112
  %v114 = vmul.f32 %v57, %v112
  %v115 = vmul.f32 %v60, %v112
  %v116 = vmul.f32 %v63, %v112
  %v117 = vmul.f32 %v66, %v112
  %v118 = vmul.f32 %v69, %v112
  %v119 = vmul.f32 %v72, %v112
  %v120 = vmul.f32 %v75, %v112
  %v121 = vmul.f32 %v78, %v112
  %v122 = vmul.f32 %v81, %v112
  %v123 = vmul.f32 %v84, %v112
  %v124 = vmul.f32 %v87, %v112
  %v125 = vmul.f32 %v90, %v112
  %v126 = vmul.f32 %v93, %v112
  %v127 = vmul.f32 %v96, %v112
  %v128 = vmul.f32 %v99, %v112
  %v129 = vmul.f32 %v102, %v112
  %v130 = vmul.f32 %v105, %v112
  %v131 = vmul.f32 %v108, %v112
  %v132 = vmul.f32 %v111, %v112
  %v133 = vsub.f32 %v31, %v113
  %v134 = vsub.f32 %v32, %v114
  %v135 = vsub.f32 %v33, %v115
  %v136 = vsub.f32 %v34, %v116
  %v137 = vsub.f32 %v35, %v117
  %v138 = vsub.f32 %v36, %v118
  %v139 = vsub.f32 %v37, %v119
  %v140 = vsub.f32 %v38, %v120
  %v141 = vsub.f32 %v39, %v121
  %v142 = vsub.f32 %v40, %v122
  %v143 = vsub.f32 %v41, %v123
  %v144 = vsub.f32 %v42, %v124
  %v145 = vsub.f32 %v43, %v125
  %v146 = vsub.f32 %v44, %v126
  %v147 = vsub.f32 %v45, %v127
  %v148 = vsub.f32 %v46, %v128
  %v149 = vsub.f32 %v47, %v129
  %v150 = vsub.f32 %v48, %v130
  %v151 = vsub.f32 %v49, %v131
  %v152 = vsub.f32 %v50, %v132
  %v153 = vmul.f32 %v133, %v133
  %v154 = vmul.f32 %v134, %v134
  %v155 = vmul.f32 %v135, %v135
  %v156 = vmul.f32 %v136, %v136
  %v157 = vmul.f32 %v137, %v137
  %v158 = vmul.f32 %v138, %v138
  %v159 = vmul.f32 %v139, %v139
  %v160 = vmul.f32 %v140, %v140
  %v161 = vmul.f32 %v141, %v141
  %v162 = vmul.f32 %v142, %v142
  %v163 = vmul.f32 %v143, %v143
  %v164 = vmul.f32 %v144, %v144
  %v165 = vmul.f32 %v145, %v145
  %v166 = vmul.f32 %v146, %v146
  %v167 = vmul.f32 %v147, %v147
  %v168 = vmul.f32 %v148, %v148
  %v169 = vmul.f32 %v149, %v149
  %v170 = vmul.f32 %v150, %v150
  %v171 = vmul.f32 %v151, %v151
  %v172 = vmul.f32 %v152, %v152
  %v173 = vsel %vm51, %v153, 0.0
  %174 = vadd.xlane.f32.xlu0 %v173
  %v175 = vpop.xlane.xlu0 %174
  %v176 = vsel %vm51, %v154, 0.0
  %177 = vadd.xlane.f32.xlu0 %v176
  %v178 = vpop.xlane.xlu0 %177
  %v179 = vsel %vm51, %v155, 0.0
  %180 = vadd.xlane.f32.xlu0 %v179
  %v181 = vpop.xlane.xlu0 %180
  %v182 = vsel %vm51, %v156, 0.0
  %183 = vadd.xlane.f32.xlu0 %v182
  %v184 = vpop.xlane.xlu0 %183
  %v185 = vsel %vm51, %v157, 0.0
  %186 = vadd.xlane.f32.xlu0 %v185
  %v187 = vpop.xlane.xlu0 %186
  %v188 = vsel %vm51, %v158, 0.0
  %189 = vadd.xlane.f32.xlu0 %v188
  %v190 = vpop.xlane.xlu0 %189
  %v191 = vsel %vm51, %v159, 0.0
  %192 = vadd.xlane.f32.xlu0 %v191
  %v193 = vpop.xlane.xlu0 %192
  %v194 = vsel %vm51, %v160, 0.0
  %195 = vadd.xlane.f32.xlu0 %v194
  %v196 = vpop.xlane.xlu0 %195
  %v197 = vsel %vm51, %v161, 0.0
  %198 = vadd.xlane.f32.xlu0 %v197
  %v199 = vpop.xlane.xlu0 %198
  %v200 = vsel %vm51, %v162, 0.0
  %201 = vadd.xlane.f32.xlu0 %v200
  %v202 = vpop.xlane.xlu0 %201
  %v203 = vsel %vm51, %v163, 0.0
  %204 = vadd.xlane.f32.xlu0 %v203
  %v205 = vpop.xlane.xlu0 %204
  %v206 = vsel %vm51, %v164, 0.0
  %207 = vadd.xlane.f32.xlu0 %v206
  %v208 = vpop.xlane.xlu0 %207
  %v209 = vsel %vm51, %v165, 0.0
  %210 = vadd.xlane.f32.xlu0 %v209
  %v211 = vpop.xlane.xlu0 %210
  %v212 = vsel %vm51, %v166, 0.0
  %213 = vadd.xlane.f32.xlu0 %v212
  %v214 = vpop.xlane.xlu0 %213
  %v215 = vsel %vm51, %v167, 0.0
  %216 = vadd.xlane.f32.xlu0 %v215
  %v217 = vpop.xlane.xlu0 %216
  %v218 = vsel %vm51, %v168, 0.0
  %219 = vadd.xlane.f32.xlu0 %v218
  %v220 = vpop.xlane.xlu0 %219
  %v221 = vsel %vm51, %v169, 0.0
  %222 = vadd.xlane.f32.xlu0 %v221
  %v223 = vpop.xlane.xlu0 %222
  %v224 = vsel %vm51, %v170, 0.0
  %225 = vadd.xlane.f32.xlu0 %v224
  %v226 = vpop.xlane.xlu0 %225
  %v227 = vsel %vm51, %v171, 0.0
  %228 = vadd.xlane.f32.xlu0 %v227
  %v229 = vpop.xlane.xlu0 %228
  %v230 = vsel %vm51, %v172, 0.0
  %231 = vadd.xlane.f32.xlu0 %v230
  %v232 = vpop.xlane.xlu0 %231
  %v233 = vmul.f32 %v175, %v112
  %v234 = vmul.f32 %v178, %v112
  %v235 = vmul.f32 %v181, %v112
  %v236 = vmul.f32 %v184, %v112
  %v237 = vmul.f32 %v187, %v112
  %v238 = vmul.f32 %v190, %v112
  %v239 = vmul.f32 %v193, %v112
  %v240 = vmul.f32 %v196, %v112
  %v241 = vmul.f32 %v199, %v112
  %v242 = vmul.f32 %v202, %v112
  %v243 = vmul.f32 %v205, %v112
  %v244 = vmul.f32 %v208, %v112
  %v245 = vmul.f32 %v211, %v112
  %v246 = vmul.f32 %v214, %v112
  %v247 = vmul.f32 %v217, %v112
  %v248 = vmul.f32 %v220, %v112
  %v249 = vmul.f32 %v223, %v112
  %v250 = vmul.f32 %v226, %v112
  %v251 = vmul.f32 %v229, %v112
  %v252 = vmul.f32 %v232, %v112
  %v253 = vadd.f32 %v233, 1e-05
  %v254 = vadd.f32 %v234, 1e-05
  %v255 = vadd.f32 %v235, 1e-05
  %v256 = vadd.f32 %v236, 1e-05
  %v257 = vadd.f32 %v237, 1e-05
  %v258 = vadd.f32 %v238, 1e-05
  %v259 = vadd.f32 %v239, 1e-05
  %v260 = vadd.f32 %v240, 1e-05
  %v261 = vadd.f32 %v241, 1e-05
  %v262 = vadd.f32 %v242, 1e-05
  %v263 = vadd.f32 %v243, 1e-05
  %v264 = vadd.f32 %v244, 1e-05
  %v265 = vadd.f32 %v245, 1e-05
  %v266 = vadd.f32 %v246, 1e-05
  %v267 = vadd.f32 %v247, 1e-05
  %v268 = vadd.f32 %v248, 1e-05
  %v269 = vadd.f32 %v249, 1e-05
  %v270 = vadd.f32 %v250, 1e-05
  %v271 = vadd.f32 %v251, 1e-05
  %v272 = vadd.f32 %v252, 1e-05
  %v273 = vrsqrt.pop %v253
  %v274 = vrsqrt.pop %v254
  %v275 = vrsqrt.pop %v255
  %v276 = vrsqrt.pop %v256
  %v277 = vrsqrt.pop %v257
  %v278 = vrsqrt.pop %v258
  %v279 = vrsqrt.pop %v259
  %v280 = vrsqrt.pop %v260
  %v281 = vrsqrt.pop %v261
  %v282 = vrsqrt.pop %v262
  %v283 = vrsqrt.pop %v263
  %v284 = vrsqrt.pop %v264
  %v285 = vrsqrt.pop %v265
  %v286 = vrsqrt.pop %v266
  %v287 = vrsqrt.pop %v267
  %v288 = vrsqrt.pop %v268
  %v289 = vrsqrt.pop %v269
  %v290 = vrsqrt.pop %v270
  %v291 = vrsqrt.pop %v271
  %v292 = vrsqrt.pop %v272
  %v293 = vmul.f32 %v133, %v273
  %v294 = vmul.f32 %v134, %v274
  %v295 = vmul.f32 %v135, %v275
  %v296 = vmul.f32 %v136, %v276
  %v297 = vmul.f32 %v137, %v277
  %v298 = vmul.f32 %v138, %v278
  %v299 = vmul.f32 %v139, %v279
  %v300 = vmul.f32 %v140, %v280
  %v301 = vmul.f32 %v141, %v281
  %v302 = vmul.f32 %v142, %v282
  %v303 = vmul.f32 %v143, %v283
  %v304 = vmul.f32 %v144, %v284
  %v305 = vmul.f32 %v145, %v285
  %v306 = vmul.f32 %v146, %v286
  %v307 = vmul.f32 %v147, %v287
  %v308 = vmul.f32 %v148, %v288
  %v309 = vmul.f32 %v149, %v289
  %v310 = vmul.f32 %v150, %v290
  %v311 = vmul.f32 %v151, %v291
  %v312 = vmul.f32 %v152, %v292
  %v313 = vld [vmem:[%s2] sm:$0x1]
  %v315 = vlaneseq
  %v316 = vshrl.u32 %v315, 7
  %v317 = vsub.s32 0, %v316
  %v318 = vrot.slane %v313, %v317
  %v320 = vmul.f32 %v293, %v318
  %v321 = vmul.f32 %v294, %v318
  %v322 = vmul.f32 %v295, %v318
  %v323 = vmul.f32 %v296, %v318
  %v324 = vmul.f32 %v297, %v318
  %v325 = vmul.f32 %v298, %v318
  %v326 = vmul.f32 %v299, %v318
  %v327 = vmul.f32 %v300, %v318
  %v328 = vmul.f32 %v301, %v318
  %v329 = vmul.f32 %v302, %v318
  %v330 = vmul.f32 %v303, %v318
  %v331 = vmul.f32 %v304, %v318
  %v332 = vmul.f32 %v305, %v318
  %v333 = vmul.f32 %v306, %v318
  %v334 = vmul.f32 %v307, %v318
  %v335 = vmul.f32 %v308, %v318
  %v336 = vmul.f32 %v309, %v318
  %v337 = vmul.f32 %v310, %v318
  %v338 = vmul.f32 %v311, %v318
  %v339 = vmul.f32 %v312, %v318
  %v340 = vld [vmem:[%s3] sm:$0x1]
  %v342 = vlaneseq
  %v343 = vshrl.u32 %v342, 7
  %v344 = vsub.s32 0, %v343
  %v345 = vrot.slane %v340, %v344
  %v347 = vadd.f32 %v320, %v345
  %v348 = vadd.f32 %v321, %v345
  %v349 = vadd.f32 %v322, %v345
  %v350 = vadd.f32 %v323, %v345
  %v351 = vadd.f32 %v324, %v345
  %v352 = vadd.f32 %v325, %v345
  %v353 = vadd.f32 %v326, %v345
  %v354 = vadd.f32 %v327, %v345
  %v355 = vadd.f32 %v328, %v345
  %v356 = vadd.f32 %v329, %v345
  %v357 = vadd.f32 %v330, %v345
  %v358 = vadd.f32 %v331, %v345
  %v359 = vadd.f32 %v332, %v345
  %v360 = vadd.f32 %v333, %v345
  %v361 = vadd.f32 %v334, %v345
  %v362 = vadd.f32 %v335, %v345
  %v363 = vadd.f32 %v336, %v345
  %v364 = vadd.f32 %v337, %v345
  %v365 = vadd.f32 %v338, %v345
  %v366 = vadd.f32 %v339, %v345
  %v367 = vld [vmem:[%s1] sm:$0xff]
  %v368 = vld [vmem:[%s1 + $0x8] sm:$0xff]
  %v369 = vld [vmem:[%s1 + $0x10] sm:$0xff]
  %v370 = vld [vmem:[%s1 + $0x18] sm:$0xff]
  %v371 = vld [vmem:[%s1 + $0x20] sm:$0xff]
  %v372 = vld [vmem:[%s1 + $0x28] sm:$0xff]
  %v373 = vld [vmem:[%s1 + $0x30] sm:$0xff]
  %v374 = vld [vmem:[%s1 + $0x38] sm:$0xff]
  %v375 = vld [vmem:[%s1 + $0x40] sm:$0xff]
  %v376 = vld [vmem:[%s1 + $0x48] sm:$0xff]
  %v377 = vld [vmem:[%s1 + $0x50] sm:$0xff]
  %v378 = vld [vmem:[%s1 + $0x58] sm:$0xff]
  %v379 = vld [vmem:[%s1 + $0x60] sm:$0xff]
  %v380 = vld [vmem:[%s1 + $0x68] sm:$0xff]
  %v381 = vld [vmem:[%s1 + $0x70] sm:$0xff]
  %v382 = vld [vmem:[%s1 + $0x78] sm:$0xff]
  %v383 = vld [vmem:[%s1 + $0x80] sm:$0xff]
  %v384 = vld [vmem:[%s1 + $0x88] sm:$0xff]
  %v385 = vld [vmem:[%s1 + $0x90] sm:$0xff]
  %v386 = vld [vmem:[%s1 + $0x98] sm:$0xff]
  %v387 = vadd.f32 %v347, %v367
  %v388 = vadd.f32 %v348, %v368
  %v389 = vadd.f32 %v349, %v369
  %v390 = vadd.f32 %v350, %v370
  %v391 = vadd.f32 %v351, %v371
  %v392 = vadd.f32 %v352, %v372
  %v393 = vadd.f32 %v353, %v373
  %v394 = vadd.f32 %v354, %v374
  %v395 = vadd.f32 %v355, %v375
  %v396 = vadd.f32 %v356, %v376
  %v397 = vadd.f32 %v357, %v377
  %v398 = vadd.f32 %v358, %v378
  %v399 = vadd.f32 %v359, %v379
  %v400 = vadd.f32 %v360, %v380
  %v401 = vadd.f32 %v361, %v381
  %v402 = vadd.f32 %v362, %v382
  %v403 = vadd.f32 %v363, %v383
  %v404 = vadd.f32 %v364, %v384
  %v405 = vadd.f32 %v365, %v385
  %v406 = vadd.f32 %v366, %v386
  %v407 = vld [vmem:[%s4] sm:$0xff]
  %v408 = vld [vmem:[%s4 + $0x8] sm:$0xff]
  %v409 = vld [vmem:[%s4 + $0x10] sm:$0xff]
  %v410 = vld [vmem:[%s4 + $0x18] sm:$0xff]
  %v411 = vld [vmem:[%s5] sm:$0x1]
  %v413 = vlaneseq
  %v414 = vshrl.u32 %v413, 7
  %v415 = vsub.s32 0, %v414
  %v416 = vrot.slane %v411, %v415
  %v419 = vsel %vm51, %v31, 0
  %v422 = vsel %vm51, %v32, 0
  %v425 = vsel %vm51, %v33, 0
  %v428 = vsel %vm51, %v34, 0
  %v431 = vsel %vm51, %v35, 0
  %v434 = vsel %vm51, %v36, 0
  %v437 = vsel %vm51, %v37, 0
  %v440 = vsel %vm51, %v38, 0
  %v443 = vsel %vm51, %v39, 0
  %v446 = vsel %vm51, %v40, 0
  %v449 = vsel %vm51, %v41, 0
  %v452 = vsel %vm51, %v42, 0
  %v455 = vsel %vm51, %v43, 0
  %v458 = vsel %vm51, %v44, 0
  %v461 = vsel %vm51, %v45, 0
  %v464 = vsel %vm51, %v46, 0
  %v467 = vsel %vm51, %v47, 0
  %v470 = vsel %vm51, %v48, 0
  %v473 = vsel %vm51, %v49, 0
  %v476 = vsel %vm51, %v50, 0
  %478 = vmatprep.subr.mxu0 0.0
  %479 = vmatpush1.msra.mxu0 %v407
  %480 = vmatprep.subr.mxu0 0.0
  %481 = vmatpush1.msra.mxu0 %v408
  %482 = vmatprep.subr.mxu0 0.0
  %483 = vmatpush1.msra.mxu0 %v409
  %484 = vmatprep.subr.mxu0 0.0
  %485 = vmatpush1.msra.mxu0 %v410
  %486 = vmatprep.subr.mxu0 0.0
  %487 = vmatpush1.msra.mxu0 0.0
  %488 = vmatprep.subr.mxu0 0.0
  %489 = vmatpush1.msra.mxu0 0.0
  %490 = vmatprep.subr.mxu0 0.0
  %491 = vmatpush1.msra.mxu0 0.0
  %492 = vmatprep.subr.mxu0 0.0
  %493 = vmatpush1.msra.mxu0 0.0
  %494 = vmatprep.subr.mxu0 0.0
  %495 = vmatpush1.msra.mxu0 0.0
  %496 = vmatprep.subr.mxu0 0.0
  %497 = vmatpush1.msra.mxu0 0.0
  %498 = vmatprep.subr.mxu0 0.0
  %499 = vmatpush1.msra.mxu0 0.0
  %500 = vmatprep.subr.mxu0 0.0
  %501 = vmatpush1.msra.mxu0 0.0
  %502 = vmatprep.subr.mxu0 0.0
  %503 = vmatpush1.msra.mxu0 0.0
  %504 = vmatprep.subr.mxu0 0.0
  %505 = vmatpush1.msra.mxu0 0.0
  %506 = vmatprep.subr.mxu0 0.0
  %507 = vmatpush1.msra.mxu0 0.0
  %508 = vmatprep.subr.mxu0 0.0
  %509 = vmatpush1.msra.mxu0 0.0
  %510 = vmatprep.subr.mxu0 0.0
  %511 = vmatpush1.msra.mxu0 0.0
  %512 = vmatprep.subr.mxu0 0.0
  %513 = vmatpush1.msra.mxu0 0.0
  %514 = vmatprep.subr.mxu0 0.0
  %515 = vmatpush1.msra.mxu0 0.0
  %516 = vmatprep.subr.mxu0 0.0
  %517 = vmatpush1.msra.mxu0 0.0
  %518 = vmatprep.subr.mxu0 0.0
  %519 = vmatpush1.msra.mxu0 0.0
  %520 = vmatprep.subr.mxu0 0.0
  %521 = vmatpush1.msra.mxu0 0.0
  %522 = vmatprep.subr.mxu0 0.0
  %523 = vmatpush1.msra.mxu0 0.0
  %524 = vmatprep.subr.mxu0 0.0
  %525 = vmatpush1.msra.mxu0 0.0
  %526 = vmatprep.subr.mxu0 0.0
  %527 = vmatpush1.msra.mxu0 0.0
  %528 = vmatprep.subr.mxu0 0.0
  %529 = vmatpush1.msra.mxu0 0.0
  %530 = vmatprep.subr.mxu0 0.0
  %531 = vmatpush1.msra.mxu0 0.0
  %532 = vmatprep.subr.mxu0 0.0
  %533 = vmatpush1.msra.mxu0 0.0
  %534 = vmatprep.subr.mxu0 0.0
  %535 = vmatpush1.msra.mxu0 0.0
  %536 = vmatprep.subr.mxu0 0.0
  %537 = vmatpush1.msra.mxu0 0.0
  %538 = vmatprep.subr.mxu0 0.0
  %539 = vmatpush1.msra.mxu0 0.0
  %540 = vmatprep.subr.mxu0 0.0
  %541 = vmatpush1.msra.mxu0 0.0
  %542 = vmatprep.mubr.f32.mxu0 0.0
  %543 = vmatmul.mubr.f32.gmra.mrb[0].mxu0 %v419
  %v544 = vpop.f32.mrb[0].mxu0
  %v545 = vadd.f32 %v416, %v544
  %v546 = vpop.f32.mrb[0].mxu0
  %547 = vmatprep.mubr.f32.mxu0 0.0
  %548 = vmatmul.mubr.f32.gmra.mrb[0].mxu0 %v422
  %v549 = vpop.f32.mrb[0].mxu0
  %v550 = vadd.f32 %v416, %v549
  %v551 = vpop.f32.mrb[0].mxu0
  %552 = vmatprep.mubr.f32.mxu0 0.0
  %553 = vmatmul.mubr.f32.gmra.mrb[0].mxu0 %v425
  %v554 = vpop.f32.mrb[0].mxu0
  %v555 = vadd.f32 %v416, %v554
  %v556 = vpop.f32.mrb[0].mxu0
  %557 = vmatprep.mubr.f32.mxu0 0.0
  %558 = vmatmul.mubr.f32.gmra.mrb[0].mxu0 %v428
  %v559 = vpop.f32.mrb[0].mxu0
  %v560 = vadd.f32 %v416, %v559
  %v561 = vpop.f32.mrb[0].mxu0
  %562 = vmatprep.mubr.f32.mxu0 0.0
  %563 = vmatmul.mubr.f32.gmra.mrb[0].mxu0 %v431
  %v564 = vpop.f32.mrb[0].mxu0
  %v565 = vadd.f32 %v416, %v564
  %v566 = vpop.f32.mrb[0].mxu0
  %567 = vmatprep.mubr.f32.mxu0 0.0
  %568 = vmatmul.mubr.f32.gmra.mrb[0].mxu0 %v434
  %v569 = vpop.f32.mrb[0].mxu0
  %v570 = vadd.f32 %v416, %v569
  %v571 = vpop.f32.mrb[0].mxu0
  %572 = vmatprep.mubr.f32.mxu0 0.0
  %573 = vmatmul.mubr.f32.gmra.mrb[0].mxu0 %v437
  %v574 = vpop.f32.mrb[0].mxu0
  %v575 = vadd.f32 %v416, %v574
  %v576 = vpop.f32.mrb[0].mxu0
  %577 = vmatprep.mubr.f32.mxu0 0.0
  %578 = vmatmul.mubr.f32.gmra.mrb[0].mxu0 %v440
  %v579 = vpop.f32.mrb[0].mxu0
  %v580 = vadd.f32 %v416, %v579
  %v581 = vpop.f32.mrb[0].mxu0
  %582 = vmatprep.mubr.f32.mxu0 0.0
  %583 = vmatmul.mubr.f32.gmra.mrb[0].mxu0 %v443
  %v584 = vpop.f32.mrb[0].mxu0
  %v585 = vadd.f32 %v416, %v584
  %v586 = vpop.f32.mrb[0].mxu0
  %587 = vmatprep.mubr.f32.mxu0 0.0
  %588 = vmatmul.mubr.f32.gmra.mrb[0].mxu0 %v446
  %v589 = vpop.f32.mrb[0].mxu0
  %v590 = vadd.f32 %v416, %v589
  %v591 = vpop.f32.mrb[0].mxu0
  %592 = vmatprep.mubr.f32.mxu0 0.0
  %593 = vmatmul.mubr.f32.gmra.mrb[0].mxu0 %v449
  %v594 = vpop.f32.mrb[0].mxu0
  %v595 = vadd.f32 %v416, %v594
  %v596 = vpop.f32.mrb[0].mxu0
  %597 = vmatprep.mubr.f32.mxu0 0.0
  %598 = vmatmul.mubr.f32.gmra.mrb[0].mxu0 %v452
  %v599 = vpop.f32.mrb[0].mxu0
  %v600 = vadd.f32 %v416, %v599
  %v601 = vpop.f32.mrb[0].mxu0
  %602 = vmatprep.mubr.f32.mxu0 0.0
  %603 = vmatmul.mubr.f32.gmra.mrb[0].mxu0 %v455
  %v604 = vpop.f32.mrb[0].mxu0
  %v605 = vadd.f32 %v416, %v604
  %v606 = vpop.f32.mrb[0].mxu0
  %607 = vmatprep.mubr.f32.mxu0 0.0
  %608 = vmatmul.mubr.f32.gmra.mrb[0].mxu0 %v458
  %v609 = vpop.f32.mrb[0].mxu0
  %v610 = vadd.f32 %v416, %v609
  %v611 = vpop.f32.mrb[0].mxu0
  %612 = vmatprep.mubr.f32.mxu0 0.0
  %613 = vmatmul.mubr.f32.gmra.mrb[0].mxu0 %v461
  %v614 = vpop.f32.mrb[0].mxu0
  %v615 = vadd.f32 %v416, %v614
  %v616 = vpop.f32.mrb[0].mxu0
  %617 = vmatprep.mubr.f32.mxu0 0.0
  %618 = vmatmul.mubr.f32.gmra.mrb[0].mxu0 %v464
  %v619 = vpop.f32.mrb[0].mxu0
  %v620 = vadd.f32 %v416, %v619
  %v621 = vpop.f32.mrb[0].mxu0
  %622 = vmatprep.mubr.f32.mxu0 0.0
  %623 = vmatmul.mubr.f32.gmra.mrb[0].mxu0 %v467
  %v624 = vpop.f32.mrb[0].mxu0
  %v625 = vadd.f32 %v416, %v624
  %v626 = vpop.f32.mrb[0].mxu0
  %627 = vmatprep.mubr.f32.mxu0 0.0
  %628 = vmatmul.mubr.f32.gmra.mrb[0].mxu0 %v470
  %v629 = vpop.f32.mrb[0].mxu0
  %v630 = vadd.f32 %v416, %v629
  %v631 = vpop.f32.mrb[0].mxu0
  %632 = vmatprep.mubr.f32.mxu0 0.0
  %633 = vmatmul.mubr.f32.gmra.mrb[0].mxu0 %v473
  %v634 = vpop.f32.mrb[0].mxu0
  %v635 = vadd.f32 %v416, %v634
  %v636 = vpop.f32.mrb[0].mxu0
  %637 = vmatprep.mubr.f32.mxu0 0.0
  %638 = vmatmul.mubr.f32.gmra.mrb[0].mxu0 %v476
  %v639 = vpop.f32.mrb[0].mxu0
  %v640 = vadd.f32 %v416, %v639
  %v641 = vpop.f32.mrb[0].mxu0
  %642 = vdwg.mxu0
  %643 = vst.msk [vmem:[%s8] sm:$0xff] %vm51, %v545
  %644 = vst.msk [vmem:[%s8 + $0x8] sm:$0xff] %vm51, %v550
  %645 = vst.msk [vmem:[%s8 + $0x10] sm:$0xff] %vm51, %v555
  %646 = vst.msk [vmem:[%s8 + $0x18] sm:$0xff] %vm51, %v560
  %647 = vst.msk [vmem:[%s8 + $0x20] sm:$0xff] %vm51, %v565
  %648 = vst.msk [vmem:[%s8 + $0x28] sm:$0xff] %vm51, %v570
  %649 = vst.msk [vmem:[%s8 + $0x30] sm:$0xff] %vm51, %v575
  %650 = vst.msk [vmem:[%s8 + $0x38] sm:$0xff] %vm51, %v580
  %651 = vst.msk [vmem:[%s8 + $0x40] sm:$0xff] %vm51, %v585
  %652 = vst.msk [vmem:[%s8 + $0x48] sm:$0xff] %vm51, %v590
  %653 = vst.msk [vmem:[%s8 + $0x50] sm:$0xff] %vm51, %v595
  %654 = vst.msk [vmem:[%s8 + $0x58] sm:$0xff] %vm51, %v600
  %655 = vst.msk [vmem:[%s8 + $0x60] sm:$0xff] %vm51, %v605
  %656 = vst.msk [vmem:[%s8 + $0x68] sm:$0xff] %vm51, %v610
  %657 = vst.msk [vmem:[%s8 + $0x70] sm:$0xff] %vm51, %v615
  %658 = vst.msk [vmem:[%s8 + $0x78] sm:$0xff] %vm51, %v620
  %659 = vst.msk [vmem:[%s8 + $0x80] sm:$0xff] %vm51, %v625
  %660 = vst.msk [vmem:[%s8 + $0x88] sm:$0xff] %vm51, %v630
  %661 = vst.msk [vmem:[%s8 + $0x90] sm:$0xff] %vm51, %v635
  %662 = vst.msk [vmem:[%s8 + $0x98] sm:$0xff] %vm51, %v640
  %v663 = vld [vmem:[%s6] sm:$0xff]
  %v664 = vld [vmem:[%s6 + $0x8] sm:$0xff]
  %v665 = vld [vmem:[%s6 + $0x10] sm:$0xff]
  %v666 = vld [vmem:[%s6 + $0x18] sm:$0xff]
  %v667 = vld [vmem:[%s7] sm:$0x1]
  %v669 = vlaneseq
  %v670 = vshrl.u32 %v669, 7
  %v671 = vsub.s32 0, %v670
  %v672 = vrot.slane %v667, %v671
  %v675 = vsel %vm51, %v387, 0
  %v678 = vsel %vm51, %v388, 0
  %v681 = vsel %vm51, %v389, 0
  %v684 = vsel %vm51, %v390, 0
  %v687 = vsel %vm51, %v391, 0
  %v690 = vsel %vm51, %v392, 0
  %v693 = vsel %vm51, %v393, 0
  %v696 = vsel %vm51, %v394, 0
  %v699 = vsel %vm51, %v395, 0
  %v702 = vsel %vm51, %v396, 0
  %v705 = vsel %vm51, %v397, 0
  %v708 = vsel %vm51, %v398, 0
  %v711 = vsel %vm51, %v399, 0
  %v714 = vsel %vm51, %v400, 0
  %v717 = vsel %vm51, %v401, 0
  %v720 = vsel %vm51, %v402, 0
  %v723 = vsel %vm51, %v403, 0
  %v726 = vsel %vm51, %v404, 0
  %v729 = vsel %vm51, %v405, 0
  %v732 = vsel %vm51, %v406, 0
  %734 = vmatprep.subr.mxu0 0.0
  %735 = vmatpush1.msra.mxu0 %v663
  %736 = vmatprep.subr.mxu0 0.0
  %737 = vmatpush1.msra.mxu0 %v664
  %738 = vmatprep.subr.mxu0 0.0
  %739 = vmatpush1.msra.mxu0 %v665
  %740 = vmatprep.subr.mxu0 0.0
  %741 = vmatpush1.msra.mxu0 %v666
  %742 = vmatprep.subr.mxu0 0.0
  %743 = vmatpush1.msra.mxu0 0.0
  %744 = vmatprep.subr.mxu0 0.0
  %745 = vmatpush1.msra.mxu0 0.0
  %746 = vmatprep.subr.mxu0 0.0
  %747 = vmatpush1.msra.mxu0 0.0
  %748 = vmatprep.subr.mxu0 0.0
  %749 = vmatpush1.msra.mxu0 0.0
  %750 = vmatprep.subr.mxu0 0.0
  %751 = vmatpush1.msra.mxu0 0.0
  %752 = vmatprep.subr.mxu0 0.0
  %753 = vmatpush1.msra.mxu0 0.0
  %754 = vmatprep.subr.mxu0 0.0
  %755 = vmatpush1.msra.mxu0 0.0
  %756 = vmatprep.subr.mxu0 0.0
  %757 = vmatpush1.msra.mxu0 0.0
  %758 = vmatprep.subr.mxu0 0.0
  %759 = vmatpush1.msra.mxu0 0.0
  %760 = vmatprep.subr.mxu0 0.0
  %761 = vmatpush1.msra.mxu0 0.0
  %762 = vmatprep.subr.mxu0 0.0
  %763 = vmatpush1.msra.mxu0 0.0
  %764 = vmatprep.subr.mxu0 0.0
  %765 = vmatpush1.msra.mxu0 0.0
  %766 = vmatprep.subr.mxu0 0.0
  %767 = vmatpush1.msra.mxu0 0.0
  %768 = vmatprep.subr.mxu0 0.0
  %769 = vmatpush1.msra.mxu0 0.0
  %770 = vmatprep.subr.mxu0 0.0
  %771 = vmatpush1.msra.mxu0 0.0
  %772 = vmatprep.subr.mxu0 0.0
  %773 = vmatpush1.msra.mxu0 0.0
  %774 = vmatprep.subr.mxu0 0.0
  %775 = vmatpush1.msra.mxu0 0.0
  %776 = vmatprep.subr.mxu0 0.0
  %777 = vmatpush1.msra.mxu0 0.0
  %778 = vmatprep.subr.mxu0 0.0
  %779 = vmatpush1.msra.mxu0 0.0
  %780 = vmatprep.subr.mxu0 0.0
  %781 = vmatpush1.msra.mxu0 0.0
  %782 = vmatprep.subr.mxu0 0.0
  %783 = vmatpush1.msra.mxu0 0.0
  %784 = vmatprep.subr.mxu0 0.0
  %785 = vmatpush1.msra.mxu0 0.0
  %786 = vmatprep.subr.mxu0 0.0
  %787 = vmatpush1.msra.mxu0 0.0
  %788 = vmatprep.subr.mxu0 0.0
  %789 = vmatpush1.msra.mxu0 0.0
  %790 = vmatprep.subr.mxu0 0.0
  %791 = vmatpush1.msra.mxu0 0.0
  %792 = vmatprep.subr.mxu0 0.0
  %793 = vmatpush1.msra.mxu0 0.0
  %794 = vmatprep.subr.mxu0 0.0
  %795 = vmatpush1.msra.mxu0 0.0
  %796 = vmatprep.subr.mxu0 0.0
  %797 = vmatpush1.msra.mxu0 0.0
  %798 = vmatprep.mubr.f32.mxu0 0.0
  %799 = vmatmul.mubr.f32.gmra.mrb[0].mxu0 %v675
  %v800 = vpop.f32.mrb[0].mxu0
  %v801 = vadd.f32 %v672, %v800
  %v802 = vpop.f32.mrb[0].mxu0
  %803 = vmatprep.mubr.f32.mxu0 0.0
  %804 = vmatmul.mubr.f32.gmra.mrb[0].mxu0 %v678
  %v805 = vpop.f32.mrb[0].mxu0
  %v806 = vadd.f32 %v672, %v805
  %v807 = vpop.f32.mrb[0].mxu0
  %808 = vmatprep.mubr.f32.mxu0 0.0
  %809 = vmatmul.mubr.f32.gmra.mrb[0].mxu0 %v681
  %v810 = vpop.f32.mrb[0].mxu0
  %v811 = vadd.f32 %v672, %v810
  %v812 = vpop.f32.mrb[0].mxu0
  %813 = vmatprep.mubr.f32.mxu0 0.0
  %814 = vmatmul.mubr.f32.gmra.mrb[0].mxu0 %v684
  %v815 = vpop.f32.mrb[0].mxu0
  %v816 = vadd.f32 %v672, %v815
  %v817 = vpop.f32.mrb[0].mxu0
  %818 = vmatprep.mubr.f32.mxu0 0.0
  %819 = vmatmul.mubr.f32.gmra.mrb[0].mxu0 %v687
  %v820 = vpop.f32.mrb[0].mxu0
  %v821 = vadd.f32 %v672, %v820
  %v822 = vpop.f32.mrb[0].mxu0
  %823 = vmatprep.mubr.f32.mxu0 0.0
  %824 = vmatmul.mubr.f32.gmra.mrb[0].mxu0 %v690
  %v825 = vpop.f32.mrb[0].mxu0
  %v826 = vadd.f32 %v672, %v825
  %v827 = vpop.f32.mrb[0].mxu0
  %828 = vmatprep.mubr.f32.mxu0 0.0
  %829 = vmatmul.mubr.f32.gmra.mrb[0].mxu0 %v693
  %v830 = vpop.f32.mrb[0].mxu0
  %v831 = vadd.f32 %v672, %v830
  %v832 = vpop.f32.mrb[0].mxu0
  %833 = vmatprep.mubr.f32.mxu0 0.0
  %834 = vmatmul.mubr.f32.gmra.mrb[0].mxu0 %v696
  %v835 = vpop.f32.mrb[0].mxu0
  %v836 = vadd.f32 %v672, %v835
  %v837 = vpop.f32.mrb[0].mxu0
  %838 = vmatprep.mubr.f32.mxu0 0.0
  %839 = vmatmul.mubr.f32.gmra.mrb[0].mxu0 %v699
  %v840 = vpop.f32.mrb[0].mxu0
  %v841 = vadd.f32 %v672, %v840
  %v842 = vpop.f32.mrb[0].mxu0
  %843 = vmatprep.mubr.f32.mxu0 0.0
  %844 = vmatmul.mubr.f32.gmra.mrb[0].mxu0 %v702
  %v845 = vpop.f32.mrb[0].mxu0
  %v846 = vadd.f32 %v672, %v845
  %v847 = vpop.f32.mrb[0].mxu0
  %848 = vmatprep.mubr.f32.mxu0 0.0
  %849 = vmatmul.mubr.f32.gmra.mrb[0].mxu0 %v705
  %v850 = vpop.f32.mrb[0].mxu0
  %v851 = vadd.f32 %v672, %v850
  %v852 = vpop.f32.mrb[0].mxu0
  %853 = vmatprep.mubr.f32.mxu0 0.0
  %854 = vmatmul.mubr.f32.gmra.mrb[0].mxu0 %v708
  %v855 = vpop.f32.mrb[0].mxu0
  %v856 = vadd.f32 %v672, %v855
  %v857 = vpop.f32.mrb[0].mxu0
  %858 = vmatprep.mubr.f32.mxu0 0.0
  %859 = vmatmul.mubr.f32.gmra.mrb[0].mxu0 %v711
  %v860 = vpop.f32.mrb[0].mxu0
  %v861 = vadd.f32 %v672, %v860
  %v862 = vpop.f32.mrb[0].mxu0
  %863 = vmatprep.mubr.f32.mxu0 0.0
  %864 = vmatmul.mubr.f32.gmra.mrb[0].mxu0 %v714
  %v865 = vpop.f32.mrb[0].mxu0
  %v866 = vadd.f32 %v672, %v865
  %v867 = vpop.f32.mrb[0].mxu0
  %868 = vmatprep.mubr.f32.mxu0 0.0
  %869 = vmatmul.mubr.f32.gmra.mrb[0].mxu0 %v717
  %v870 = vpop.f32.mrb[0].mxu0
  %v871 = vadd.f32 %v672, %v870
  %v872 = vpop.f32.mrb[0].mxu0
  %873 = vmatprep.mubr.f32.mxu0 0.0
  %874 = vmatmul.mubr.f32.gmra.mrb[0].mxu0 %v720
  %v875 = vpop.f32.mrb[0].mxu0
  %v876 = vadd.f32 %v672, %v875
  %v877 = vpop.f32.mrb[0].mxu0
  %878 = vmatprep.mubr.f32.mxu0 0.0
  %879 = vmatmul.mubr.f32.gmra.mrb[0].mxu0 %v723
  %v880 = vpop.f32.mrb[0].mxu0
  %v881 = vadd.f32 %v672, %v880
  %v882 = vpop.f32.mrb[0].mxu0
  %883 = vmatprep.mubr.f32.mxu0 0.0
  %884 = vmatmul.mubr.f32.gmra.mrb[0].mxu0 %v726
  %v885 = vpop.f32.mrb[0].mxu0
  %v886 = vadd.f32 %v672, %v885
  %v887 = vpop.f32.mrb[0].mxu0
  %888 = vmatprep.mubr.f32.mxu0 0.0
  %889 = vmatmul.mubr.f32.gmra.mrb[0].mxu0 %v729
  %v890 = vpop.f32.mrb[0].mxu0
  %v891 = vadd.f32 %v672, %v890
  %v892 = vpop.f32.mrb[0].mxu0
  %893 = vmatprep.mubr.f32.mxu0 0.0
  %894 = vmatmul.mubr.f32.gmra.mrb[0].mxu0 %v732
  %v895 = vpop.f32.mrb[0].mxu0
  %v896 = vadd.f32 %v672, %v895
  %v897 = vpop.f32.mrb[0].mxu0
  %898 = vdwg.mxu0
  %vm899 = vcmask 392192
  %900 = vst.msk [vmem:[%s9] sm:$0xff] %vm899, %v801
  %901 = vst.msk [vmem:[%s9 + $0x8] sm:$0xff] %vm899, %v806
  %902 = vst.msk [vmem:[%s9 + $0x10] sm:$0xff] %vm899, %v811
  %903 = vst.msk [vmem:[%s9 + $0x18] sm:$0xff] %vm899, %v816
  %904 = vst.msk [vmem:[%s9 + $0x20] sm:$0xff] %vm899, %v821
  %905 = vst.msk [vmem:[%s9 + $0x28] sm:$0xff] %vm899, %v826
  %906 = vst.msk [vmem:[%s9 + $0x30] sm:$0xff] %vm899, %v831
  %907 = vst.msk [vmem:[%s9 + $0x38] sm:$0xff] %vm899, %v836
  %908 = vst.msk [vmem:[%s9 + $0x40] sm:$0xff] %vm899, %v841
  %909 = vst.msk [vmem:[%s9 + $0x48] sm:$0xff] %vm899, %v846
  %910 = vst.msk [vmem:[%s9 + $0x50] sm:$0xff] %vm899, %v851
  %911 = vst.msk [vmem:[%s9 + $0x58] sm:$0xff] %vm899, %v856
  %912 = vst.msk [vmem:[%s9 + $0x60] sm:$0xff] %vm899, %v861
  %913 = vst.msk [vmem:[%s9 + $0x68] sm:$0xff] %vm899, %v866
  %914 = vst.msk [vmem:[%s9 + $0x70] sm:$0xff] %vm899, %v871
  %915 = vst.msk [vmem:[%s9 + $0x78] sm:$0xff] %vm899, %v876
  %916 = vst.msk [vmem:[%s9 + $0x80] sm:$0xff] %vm899, %v881
  %917 = vst.msk [vmem:[%s9 + $0x88] sm:$0xff] %vm899, %v886
  %918 = vst.msk [vmem:[%s9 + $0x90] sm:$0xff] %vm899, %v891
  %919 = vst.msk [vmem:[%s9 + $0x98] sm:$0xff] %vm899, %v896
  // Predicated region
  $region34: #{run_pallas.4} parent=0 // pred_check
    _
  $region35: #{run_pallas.4} parent=0 // pred_check_branch
    %921 = sbr.rel (0) target = $region37
  $region36: #{run_pallas.4} parent=0 // pred_region
    _
  $region37: #{run_pallas.4} parent=0 // pred_fallthru
    _
  // Predicated region
  $region38: #{run_pallas.4} parent=0 // pred_check
    _
  $region39: #{run_pallas.4} parent=0 // pred_check_branch
    %923 = sbr.rel (0) target = $region41
  $region40: #{run_pallas.4} parent=0 // pred_region
    _
  $region41: #{run_pallas.4} parent=0 // pred_fallthru
    _
  // Predicated region
  $region42: #{run_pallas.4} parent=0 // pred_check
    _
  $region43: #{run_pallas.4} parent=0 // pred_check_branch
    %925 = sbr.rel (0) target = $region45
  $region44: #{run_pallas.4} parent=0 // pred_region
    _
  $region45: #{run_pallas.4} parent=0 // pred_fallthru
    _
  // Predicated region
  $region46: #{run_pallas.4} parent=0 // pred_check
    _
  $region47: #{run_pallas.4} parent=0 // pred_check_branch
    %927 = sbr.rel (0) target = $region49
  $region48: #{run_pallas.4} parent=0 // pred_region
    _
  $region49: #{run_pallas.4} parent=0 // pred_fallthru
    _

// kernel: run_pallas.7
$region0: #{run_pallas.7}
  #allocation0 [shape = 'u32[]', space=smem, size = 0x4, offset = 0x4, fixed_abs, tag = 'smem constant byte address 0x4 - core index']
  #allocation1 [shape = 'u32[144,128]{1,0:T(1,128)}', space=vmem, size = 0x12000, scoped, tag = 'internal scratch']
  %s0 = inlined_call_operand.vmem [shape: f32[160,32], index: 0, kind: input, shape index: {}]
  %s1 = inlined_call_operand.vmem [shape: f32[1,32], index: 1, kind: input, shape index: {}]
  %s2 = inlined_call_operand.vmem [shape: f32[1,32], index: 2, kind: input, shape index: {}]
  %s3 = inlined_call_operand.vmem [shape: f32[32,64], index: 3, kind: input, shape index: {}]
  %s4 = inlined_call_operand.vmem [shape: f32[1,64], index: 4, kind: input, shape index: {}]
  %s5 = inlined_call_operand.vmem [shape: f32[64,32], index: 5, kind: input, shape index: {}]
  %s6 = inlined_call_operand.vmem [shape: f32[1,32], index: 6, kind: input, shape index: {}]
  %s7 = inlined_call_operand.vmem [shape: f32[160,32], index: 7, kind: output, shape index: {}]
  %s8 = sld [smem:[#allocation0]]
  $region38: #{run_pallas.7} parent=0
    _
  %s10 = ssub.s32 1, %s8
  %s11 = scalar_select 0, %s10, %s8
  // Predicated region
  $region2: #{run_pallas.7} parent=0 // pred_check
    _
  $region3: #{run_pallas.7} parent=0 // pred_check_branch
    %13 = sbr.rel (0) target = $region5
  $region4: #{run_pallas.7} parent=0 // pred_region
    _
  $region5: #{run_pallas.7} parent=0 // pred_fallthru
    _
  // Predicated region
  $region6: #{run_pallas.7} parent=0 // pred_check
    _
  $region7: #{run_pallas.7} parent=0 // pred_check_branch
    %15 = sbr.rel (0) target = $region9
  $region8: #{run_pallas.7} parent=0 // pred_region
    _
  $region9: #{run_pallas.7} parent=0 // pred_fallthru
    _
  // Predicated region
  $region10: #{run_pallas.7} parent=0 // pred_check
    _
  $region11: #{run_pallas.7} parent=0 // pred_check_branch
    %17 = sbr.rel (0) target = $region13
  $region12: #{run_pallas.7} parent=0 // pred_region
    _
  $region13: #{run_pallas.7} parent=0 // pred_fallthru
    _
  // Predicated region
  $region14: #{run_pallas.7} parent=0 // pred_check
    _
  $region15: #{run_pallas.7} parent=0 // pred_check_branch
    %19 = sbr.rel (0) target = $region17
  $region16: #{run_pallas.7} parent=0 // pred_region
    _
  $region17: #{run_pallas.7} parent=0 // pred_fallthru
    _
  // Predicated region
  $region18: #{run_pallas.7} parent=0 // pred_check
    _
  $region19: #{run_pallas.7} parent=0 // pred_check_branch
    %21 = sbr.rel (0) target = $region21
  $region20: #{run_pallas.7} parent=0 // pred_region
    _
  $region21: #{run_pallas.7} parent=0 // pred_fallthru
    _
  // Predicated region
  $region22: #{run_pallas.7} parent=0 // pred_check
    _
  $region23: #{run_pallas.7} parent=0 // pred_check_branch
    %23 = sbr.rel (0) target = $region25
  $region24: #{run_pallas.7} parent=0 // pred_region
    _
  $region25: #{run_pallas.7} parent=0 // pred_fallthru
    _
  // Predicated region
  $region26: #{run_pallas.7} parent=0 // pred_check
    _
  $region27: #{run_pallas.7} parent=0 // pred_check_branch
    %25 = sbr.rel (0) target = $region29
  $region28: #{run_pallas.7} parent=0 // pred_region
    _
  $region29: #{run_pallas.7} parent=0 // pred_fallthru
    _
  %v26 = vld [vmem:[%s0] sm:$0xff]
  %v27 = vld [vmem:[%s0 + $0x8] sm:$0xff]
  %v28 = vld [vmem:[%s0 + $0x10] sm:$0xff]
  %v29 = vld [vmem:[%s0 + $0x18] sm:$0xff]
  %v30 = vld [vmem:[%s0 + $0x20] sm:$0xff]
  %v31 = vld [vmem:[%s0 + $0x28] sm:$0xff]
  %v32 = vld [vmem:[%s0 + $0x30] sm:$0xff]
  %v33 = vld [vmem:[%s0 + $0x38] sm:$0xff]
  %v34 = vld [vmem:[%s0 + $0x40] sm:$0xff]
  %v35 = vld [vmem:[%s0 + $0x48] sm:$0xff]
  %v36 = vld [vmem:[%s0 + $0x50] sm:$0xff]
  %v37 = vld [vmem:[%s0 + $0x58] sm:$0xff]
  %v38 = vld [vmem:[%s0 + $0x60] sm:$0xff]
  %v39 = vld [vmem:[%s0 + $0x68] sm:$0xff]
  %v40 = vld [vmem:[%s0 + $0x70] sm:$0xff]
  %v41 = vld [vmem:[%s0 + $0x78] sm:$0xff]
  %v42 = vld [vmem:[%s0 + $0x80] sm:$0xff]
  %v43 = vld [vmem:[%s0 + $0x88] sm:$0xff]
  %v44 = vld [vmem:[%s0 + $0x90] sm:$0xff]
  %v45 = vld [vmem:[%s0 + $0x98] sm:$0xff]
  %vm46 = vcmask 261120
  %v47 = vsel %vm46, %v26, 0.0
  %48 = vadd.xlane.f32.xlu0 %v47
  %v49 = vpop.xlane.xlu0 %48
  %v50 = vsel %vm46, %v27, 0.0
  %51 = vadd.xlane.f32.xlu0 %v50
  %v52 = vpop.xlane.xlu0 %51
  %v53 = vsel %vm46, %v28, 0.0
  %54 = vadd.xlane.f32.xlu0 %v53
  %v55 = vpop.xlane.xlu0 %54
  %v56 = vsel %vm46, %v29, 0.0
  %57 = vadd.xlane.f32.xlu0 %v56
  %v58 = vpop.xlane.xlu0 %57
  %v59 = vsel %vm46, %v30, 0.0
  %60 = vadd.xlane.f32.xlu0 %v59
  %v61 = vpop.xlane.xlu0 %60
  %v62 = vsel %vm46, %v31, 0.0
  %63 = vadd.xlane.f32.xlu0 %v62
  %v64 = vpop.xlane.xlu0 %63
  %v65 = vsel %vm46, %v32, 0.0
  %66 = vadd.xlane.f32.xlu0 %v65
  %v67 = vpop.xlane.xlu0 %66
  %v68 = vsel %vm46, %v33, 0.0
  %69 = vadd.xlane.f32.xlu0 %v68
  %v70 = vpop.xlane.xlu0 %69
  %v71 = vsel %vm46, %v34, 0.0
  %72 = vadd.xlane.f32.xlu0 %v71
  %v73 = vpop.xlane.xlu0 %72
  %v74 = vsel %vm46, %v35, 0.0
  %75 = vadd.xlane.f32.xlu0 %v74
  %v76 = vpop.xlane.xlu0 %75
  %v77 = vsel %vm46, %v36, 0.0
  %78 = vadd.xlane.f32.xlu0 %v77
  %v79 = vpop.xlane.xlu0 %78
  %v80 = vsel %vm46, %v37, 0.0
  %81 = vadd.xlane.f32.xlu0 %v80
  %v82 = vpop.xlane.xlu0 %81
  %v83 = vsel %vm46, %v38, 0.0
  %84 = vadd.xlane.f32.xlu0 %v83
  %v85 = vpop.xlane.xlu0 %84
  %v86 = vsel %vm46, %v39, 0.0
  %87 = vadd.xlane.f32.xlu0 %v86
  %v88 = vpop.xlane.xlu0 %87
  %v89 = vsel %vm46, %v40, 0.0
  %90 = vadd.xlane.f32.xlu0 %v89
  %v91 = vpop.xlane.xlu0 %90
  %v92 = vsel %vm46, %v41, 0.0
  %93 = vadd.xlane.f32.xlu0 %v92
  %v94 = vpop.xlane.xlu0 %93
  %v95 = vsel %vm46, %v42, 0.0
  %96 = vadd.xlane.f32.xlu0 %v95
  %v97 = vpop.xlane.xlu0 %96
  %v98 = vsel %vm46, %v43, 0.0
  %99 = vadd.xlane.f32.xlu0 %v98
  %v100 = vpop.xlane.xlu0 %99
  %v101 = vsel %vm46, %v44, 0.0
  %102 = vadd.xlane.f32.xlu0 %v101
  %v103 = vpop.xlane.xlu0 %102
  %v104 = vsel %vm46, %v45, 0.0
  %105 = vadd.xlane.f32.xlu0 %v104
  %v106 = vpop.xlane.xlu0 %105
  %v107 = vrcp.pop 32.0
  %v108 = vmul.f32 %v49, %v107
  %v109 = vmul.f32 %v52, %v107
  %v110 = vmul.f32 %v55, %v107
  %v111 = vmul.f32 %v58, %v107
  %v112 = vmul.f32 %v61, %v107
  %v113 = vmul.f32 %v64, %v107
  %v114 = vmul.f32 %v67, %v107
  %v115 = vmul.f32 %v70, %v107
  %v116 = vmul.f32 %v73, %v107
  %v117 = vmul.f32 %v76, %v107
  %v118 = vmul.f32 %v79, %v107
  %v119 = vmul.f32 %v82, %v107
  %v120 = vmul.f32 %v85, %v107
  %v121 = vmul.f32 %v88, %v107
  %v122 = vmul.f32 %v91, %v107
  %v123 = vmul.f32 %v94, %v107
  %v124 = vmul.f32 %v97, %v107
  %v125 = vmul.f32 %v100, %v107
  %v126 = vmul.f32 %v103, %v107
  %v127 = vmul.f32 %v106, %v107
  %v128 = vsub.f32 %v26, %v108
  %v129 = vsub.f32 %v27, %v109
  %v130 = vsub.f32 %v28, %v110
  %v131 = vsub.f32 %v29, %v111
  %v132 = vsub.f32 %v30, %v112
  %v133 = vsub.f32 %v31, %v113
  %v134 = vsub.f32 %v32, %v114
  %v135 = vsub.f32 %v33, %v115
  %v136 = vsub.f32 %v34, %v116
  %v137 = vsub.f32 %v35, %v117
  %v138 = vsub.f32 %v36, %v118
  %v139 = vsub.f32 %v37, %v119
  %v140 = vsub.f32 %v38, %v120
  %v141 = vsub.f32 %v39, %v121
  %v142 = vsub.f32 %v40, %v122
  %v143 = vsub.f32 %v41, %v123
  %v144 = vsub.f32 %v42, %v124
  %v145 = vsub.f32 %v43, %v125
  %v146 = vsub.f32 %v44, %v126
  %v147 = vsub.f32 %v45, %v127
  %v148 = vmul.f32 %v128, %v128
  %v149 = vmul.f32 %v129, %v129
  %v150 = vmul.f32 %v130, %v130
  %v151 = vmul.f32 %v131, %v131
  %v152 = vmul.f32 %v132, %v132
  %v153 = vmul.f32 %v133, %v133
  %v154 = vmul.f32 %v134, %v134
  %v155 = vmul.f32 %v135, %v135
  %v156 = vmul.f32 %v136, %v136
  %v157 = vmul.f32 %v137, %v137
  %v158 = vmul.f32 %v138, %v138
  %v159 = vmul.f32 %v139, %v139
  %v160 = vmul.f32 %v140, %v140
  %v161 = vmul.f32 %v141, %v141
  %v162 = vmul.f32 %v142, %v142
  %v163 = vmul.f32 %v143, %v143
  %v164 = vmul.f32 %v144, %v144
  %v165 = vmul.f32 %v145, %v145
  %v166 = vmul.f32 %v146, %v146
  %v167 = vmul.f32 %v147, %v147
  %v168 = vsel %vm46, %v148, 0.0
  %169 = vadd.xlane.f32.xlu0 %v168
  %v170 = vpop.xlane.xlu0 %169
  %v171 = vsel %vm46, %v149, 0.0
  %172 = vadd.xlane.f32.xlu0 %v171
  %v173 = vpop.xlane.xlu0 %172
  %v174 = vsel %vm46, %v150, 0.0
  %175 = vadd.xlane.f32.xlu0 %v174
  %v176 = vpop.xlane.xlu0 %175
  %v177 = vsel %vm46, %v151, 0.0
  %178 = vadd.xlane.f32.xlu0 %v177
  %v179 = vpop.xlane.xlu0 %178
  %v180 = vsel %vm46, %v152, 0.0
  %181 = vadd.xlane.f32.xlu0 %v180
  %v182 = vpop.xlane.xlu0 %181
  %v183 = vsel %vm46, %v153, 0.0
  %184 = vadd.xlane.f32.xlu0 %v183
  %v185 = vpop.xlane.xlu0 %184
  %v186 = vsel %vm46, %v154, 0.0
  %187 = vadd.xlane.f32.xlu0 %v186
  %v188 = vpop.xlane.xlu0 %187
  %v189 = vsel %vm46, %v155, 0.0
  %190 = vadd.xlane.f32.xlu0 %v189
  %v191 = vpop.xlane.xlu0 %190
  %v192 = vsel %vm46, %v156, 0.0
  %193 = vadd.xlane.f32.xlu0 %v192
  %v194 = vpop.xlane.xlu0 %193
  %v195 = vsel %vm46, %v157, 0.0
  %196 = vadd.xlane.f32.xlu0 %v195
  %v197 = vpop.xlane.xlu0 %196
  %v198 = vsel %vm46, %v158, 0.0
  %199 = vadd.xlane.f32.xlu0 %v198
  %v200 = vpop.xlane.xlu0 %199
  %v201 = vsel %vm46, %v159, 0.0
  %202 = vadd.xlane.f32.xlu0 %v201
  %v203 = vpop.xlane.xlu0 %202
  %v204 = vsel %vm46, %v160, 0.0
  %205 = vadd.xlane.f32.xlu0 %v204
  %v206 = vpop.xlane.xlu0 %205
  %v207 = vsel %vm46, %v161, 0.0
  %208 = vadd.xlane.f32.xlu0 %v207
  %v209 = vpop.xlane.xlu0 %208
  %v210 = vsel %vm46, %v162, 0.0
  %211 = vadd.xlane.f32.xlu0 %v210
  %v212 = vpop.xlane.xlu0 %211
  %v213 = vsel %vm46, %v163, 0.0
  %214 = vadd.xlane.f32.xlu0 %v213
  %v215 = vpop.xlane.xlu0 %214
  %v216 = vsel %vm46, %v164, 0.0
  %217 = vadd.xlane.f32.xlu0 %v216
  %v218 = vpop.xlane.xlu0 %217
  %v219 = vsel %vm46, %v165, 0.0
  %220 = vadd.xlane.f32.xlu0 %v219
  %v221 = vpop.xlane.xlu0 %220
  %v222 = vsel %vm46, %v166, 0.0
  %223 = vadd.xlane.f32.xlu0 %v222
  %v224 = vpop.xlane.xlu0 %223
  %v225 = vsel %vm46, %v167, 0.0
  %226 = vadd.xlane.f32.xlu0 %v225
  %v227 = vpop.xlane.xlu0 %226
  %v228 = vmul.f32 %v170, %v107
  %v229 = vmul.f32 %v173, %v107
  %v230 = vmul.f32 %v176, %v107
  %v231 = vmul.f32 %v179, %v107
  %v232 = vmul.f32 %v182, %v107
  %v233 = vmul.f32 %v185, %v107
  %v234 = vmul.f32 %v188, %v107
  %v235 = vmul.f32 %v191, %v107
  %v236 = vmul.f32 %v194, %v107
  %v237 = vmul.f32 %v197, %v107
  %v238 = vmul.f32 %v200, %v107
  %v239 = vmul.f32 %v203, %v107
  %v240 = vmul.f32 %v206, %v107
  %v241 = vmul.f32 %v209, %v107
  %v242 = vmul.f32 %v212, %v107
  %v243 = vmul.f32 %v215, %v107
  %v244 = vmul.f32 %v218, %v107
  %v245 = vmul.f32 %v221, %v107
  %v246 = vmul.f32 %v224, %v107
  %v247 = vmul.f32 %v227, %v107
  %v248 = vadd.f32 %v228, 1e-05
  %v249 = vadd.f32 %v229, 1e-05
  %v250 = vadd.f32 %v230, 1e-05
  %v251 = vadd.f32 %v231, 1e-05
  %v252 = vadd.f32 %v232, 1e-05
  %v253 = vadd.f32 %v233, 1e-05
  %v254 = vadd.f32 %v234, 1e-05
  %v255 = vadd.f32 %v235, 1e-05
  %v256 = vadd.f32 %v236, 1e-05
  %v257 = vadd.f32 %v237, 1e-05
  %v258 = vadd.f32 %v238, 1e-05
  %v259 = vadd.f32 %v239, 1e-05
  %v260 = vadd.f32 %v240, 1e-05
  %v261 = vadd.f32 %v241, 1e-05
  %v262 = vadd.f32 %v242, 1e-05
  %v263 = vadd.f32 %v243, 1e-05
  %v264 = vadd.f32 %v244, 1e-05
  %v265 = vadd.f32 %v245, 1e-05
  %v266 = vadd.f32 %v246, 1e-05
  %v267 = vadd.f32 %v247, 1e-05
  %v268 = vrsqrt.pop %v248
  %v269 = vrsqrt.pop %v249
  %v270 = vrsqrt.pop %v250
  %v271 = vrsqrt.pop %v251
  %v272 = vrsqrt.pop %v252
  %v273 = vrsqrt.pop %v253
  %v274 = vrsqrt.pop %v254
  %v275 = vrsqrt.pop %v255
  %v276 = vrsqrt.pop %v256
  %v277 = vrsqrt.pop %v257
  %v278 = vrsqrt.pop %v258
  %v279 = vrsqrt.pop %v259
  %v280 = vrsqrt.pop %v260
  %v281 = vrsqrt.pop %v261
  %v282 = vrsqrt.pop %v262
  %v283 = vrsqrt.pop %v263
  %v284 = vrsqrt.pop %v264
  %v285 = vrsqrt.pop %v265
  %v286 = vrsqrt.pop %v266
  %v287 = vrsqrt.pop %v267
  %v288 = vmul.f32 %v128, %v268
  %v289 = vmul.f32 %v129, %v269
  %v290 = vmul.f32 %v130, %v270
  %v291 = vmul.f32 %v131, %v271
  %v292 = vmul.f32 %v132, %v272
  %v293 = vmul.f32 %v133, %v273
  %v294 = vmul.f32 %v134, %v274
  %v295 = vmul.f32 %v135, %v275
  %v296 = vmul.f32 %v136, %v276
  %v297 = vmul.f32 %v137, %v277
  %v298 = vmul.f32 %v138, %v278
  %v299 = vmul.f32 %v139, %v279
  %v300 = vmul.f32 %v140, %v280
  %v301 = vmul.f32 %v141, %v281
  %v302 = vmul.f32 %v142, %v282
  %v303 = vmul.f32 %v143, %v283
  %v304 = vmul.f32 %v144, %v284
  %v305 = vmul.f32 %v145, %v285
  %v306 = vmul.f32 %v146, %v286
  %v307 = vmul.f32 %v147, %v287
  %v308 = vld [vmem:[%s1] sm:$0x1]
  %v310 = vlaneseq
  %v311 = vshrl.u32 %v310, 7
  %v312 = vsub.s32 0, %v311
  %v313 = vrot.slane %v308, %v312
  %v315 = vmul.f32 %v288, %v313
  %v316 = vmul.f32 %v289, %v313
  %v317 = vmul.f32 %v290, %v313
  %v318 = vmul.f32 %v291, %v313
  %v319 = vmul.f32 %v292, %v313
  %v320 = vmul.f32 %v293, %v313
  %v321 = vmul.f32 %v294, %v313
  %v322 = vmul.f32 %v295, %v313
  %v323 = vmul.f32 %v296, %v313
  %v324 = vmul.f32 %v297, %v313
  %v325 = vmul.f32 %v298, %v313
  %v326 = vmul.f32 %v299, %v313
  %v327 = vmul.f32 %v300, %v313
  %v328 = vmul.f32 %v301, %v313
  %v329 = vmul.f32 %v302, %v313
  %v330 = vmul.f32 %v303, %v313
  %v331 = vmul.f32 %v304, %v313
  %v332 = vmul.f32 %v305, %v313
  %v333 = vmul.f32 %v306, %v313
  %v334 = vmul.f32 %v307, %v313
  %v335 = vld [vmem:[%s2] sm:$0x1]
  %v337 = vlaneseq
  %v338 = vshrl.u32 %v337, 7
  %v339 = vsub.s32 0, %v338
  %v340 = vrot.slane %v335, %v339
  %v342 = vadd.f32 %v315, %v340
  %v343 = vadd.f32 %v316, %v340
  %v344 = vadd.f32 %v317, %v340
  %v345 = vadd.f32 %v318, %v340
  %v346 = vadd.f32 %v319, %v340
  %v347 = vadd.f32 %v320, %v340
  %v348 = vadd.f32 %v321, %v340
  %v349 = vadd.f32 %v322, %v340
  %v350 = vadd.f32 %v323, %v340
  %v351 = vadd.f32 %v324, %v340
  %v352 = vadd.f32 %v325, %v340
  %v353 = vadd.f32 %v326, %v340
  %v354 = vadd.f32 %v327, %v340
  %v355 = vadd.f32 %v328, %v340
  %v356 = vadd.f32 %v329, %v340
  %v357 = vadd.f32 %v330, %v340
  %v358 = vadd.f32 %v331, %v340
  %v359 = vadd.f32 %v332, %v340
  %v360 = vadd.f32 %v333, %v340
  %v361 = vadd.f32 %v334, %v340
  %v362 = vld [vmem:[%s3] sm:$0xff]
  %v363 = vld [vmem:[%s3 + $0x8] sm:$0xff]
  %v364 = vld [vmem:[%s3 + $0x10] sm:$0xff]
  %v365 = vld [vmem:[%s3 + $0x18] sm:$0xff]
  %v366 = vld [vmem:[%s4] sm:$0x1]
  %v368 = vlaneseq
  %v369 = vshrl.u32 %v368, 7
  %v370 = vsub.s32 0, %v369
  %v371 = vrot.slane %v366, %v370
  %v374 = vsel %vm46, %v342, 0
  %v377 = vsel %vm46, %v343, 0
  %v380 = vsel %vm46, %v344, 0
  %v383 = vsel %vm46, %v345, 0
  %v386 = vsel %vm46, %v346, 0
  %v389 = vsel %vm46, %v347, 0
  %v392 = vsel %vm46, %v348, 0
  %v395 = vsel %vm46, %v349, 0
  %v398 = vsel %vm46, %v350, 0
  %v401 = vsel %vm46, %v351, 0
  %v404 = vsel %vm46, %v352, 0
  %v407 = vsel %vm46, %v353, 0
  %v410 = vsel %vm46, %v354, 0
  %v413 = vsel %vm46, %v355, 0
  %v416 = vsel %vm46, %v356, 0
  %v419 = vsel %vm46, %v357, 0
  %v422 = vsel %vm46, %v358, 0
  %v425 = vsel %vm46, %v359, 0
  %v428 = vsel %vm46, %v360, 0
  %v431 = vsel %vm46, %v361, 0
  %433 = vmatprep.subr.mxu0 0.0
  %434 = vmatpush1.msra.mxu0 %v362
  %435 = vmatprep.subr.mxu0 0.0
  %436 = vmatpush1.msra.mxu0 %v363
  %437 = vmatprep.subr.mxu0 0.0
  %438 = vmatpush1.msra.mxu0 %v364
  %439 = vmatprep.subr.mxu0 0.0
  %440 = vmatpush1.msra.mxu0 %v365
  %441 = vmatprep.subr.mxu0 0.0
  %442 = vmatpush1.msra.mxu0 0.0
  %443 = vmatprep.subr.mxu0 0.0
  %444 = vmatpush1.msra.mxu0 0.0
  %445 = vmatprep.subr.mxu0 0.0
  %446 = vmatpush1.msra.mxu0 0.0
  %447 = vmatprep.subr.mxu0 0.0
  %448 = vmatpush1.msra.mxu0 0.0
  %449 = vmatprep.subr.mxu0 0.0
  %450 = vmatpush1.msra.mxu0 0.0
  %451 = vmatprep.subr.mxu0 0.0
  %452 = vmatpush1.msra.mxu0 0.0
  %453 = vmatprep.subr.mxu0 0.0
  %454 = vmatpush1.msra.mxu0 0.0
  %455 = vmatprep.subr.mxu0 0.0
  %456 = vmatpush1.msra.mxu0 0.0
  %457 = vmatprep.subr.mxu0 0.0
  %458 = vmatpush1.msra.mxu0 0.0
  %459 = vmatprep.subr.mxu0 0.0
  %460 = vmatpush1.msra.mxu0 0.0
  %461 = vmatprep.subr.mxu0 0.0
  %462 = vmatpush1.msra.mxu0 0.0
  %463 = vmatprep.subr.mxu0 0.0
  %464 = vmatpush1.msra.mxu0 0.0
  %465 = vmatprep.subr.mxu0 0.0
  %466 = vmatpush1.msra.mxu0 0.0
  %467 = vmatprep.subr.mxu0 0.0
  %468 = vmatpush1.msra.mxu0 0.0
  %469 = vmatprep.subr.mxu0 0.0
  %470 = vmatpush1.msra.mxu0 0.0
  %471 = vmatprep.subr.mxu0 0.0
  %472 = vmatpush1.msra.mxu0 0.0
  %473 = vmatprep.subr.mxu0 0.0
  %474 = vmatpush1.msra.mxu0 0.0
  %475 = vmatprep.subr.mxu0 0.0
  %476 = vmatpush1.msra.mxu0 0.0
  %477 = vmatprep.subr.mxu0 0.0
  %478 = vmatpush1.msra.mxu0 0.0
  %479 = vmatprep.subr.mxu0 0.0
  %480 = vmatpush1.msra.mxu0 0.0
  %481 = vmatprep.subr.mxu0 0.0
  %482 = vmatpush1.msra.mxu0 0.0
  %483 = vmatprep.subr.mxu0 0.0
  %484 = vmatpush1.msra.mxu0 0.0
  %485 = vmatprep.subr.mxu0 0.0
  %486 = vmatpush1.msra.mxu0 0.0
  %487 = vmatprep.subr.mxu0 0.0
  %488 = vmatpush1.msra.mxu0 0.0
  %489 = vmatprep.subr.mxu0 0.0
  %490 = vmatpush1.msra.mxu0 0.0
  %491 = vmatprep.subr.mxu0 0.0
  %492 = vmatpush1.msra.mxu0 0.0
  %493 = vmatprep.subr.mxu0 0.0
  %494 = vmatpush1.msra.mxu0 0.0
  %495 = vmatprep.subr.mxu0 0.0
  %496 = vmatpush1.msra.mxu0 0.0
  %497 = vmatprep.mubr.f32.mxu0 0.0
  %498 = vmatmul.mubr.f32.gmra.mrb[0].mxu0 %v374
  %v499 = vpop.f32.mrb[0].mxu0
  %v500 = vadd.f32 %v371, %v499
  %v501 = vpop.f32.mrb[0].mxu0
  %502 = vmatprep.mubr.f32.mxu0 0.0
  %503 = vmatmul.mubr.f32.gmra.mrb[0].mxu0 %v377
  %v504 = vpop.f32.mrb[0].mxu0
  %v505 = vadd.f32 %v371, %v504
  %v506 = vpop.f32.mrb[0].mxu0
  %507 = vmatprep.mubr.f32.mxu0 0.0
  %508 = vmatmul.mubr.f32.gmra.mrb[0].mxu0 %v380
  %v509 = vpop.f32.mrb[0].mxu0
  %v510 = vadd.f32 %v371, %v509
  %v511 = vpop.f32.mrb[0].mxu0
  %512 = vmatprep.mubr.f32.mxu0 0.0
  %513 = vmatmul.mubr.f32.gmra.mrb[0].mxu0 %v383
  %v514 = vpop.f32.mrb[0].mxu0
  %v515 = vadd.f32 %v371, %v514
  %v516 = vpop.f32.mrb[0].mxu0
  %517 = vmatprep.mubr.f32.mxu0 0.0
  %518 = vmatmul.mubr.f32.gmra.mrb[0].mxu0 %v386
  %v519 = vpop.f32.mrb[0].mxu0
  %v520 = vadd.f32 %v371, %v519
  %v521 = vpop.f32.mrb[0].mxu0
  %522 = vmatprep.mubr.f32.mxu0 0.0
  %523 = vmatmul.mubr.f32.gmra.mrb[0].mxu0 %v389
  %v524 = vpop.f32.mrb[0].mxu0
  %v525 = vadd.f32 %v371, %v524
  %v526 = vpop.f32.mrb[0].mxu0
  %527 = vmatprep.mubr.f32.mxu0 0.0
  %528 = vmatmul.mubr.f32.gmra.mrb[0].mxu0 %v392
  %v529 = vpop.f32.mrb[0].mxu0
  %v530 = vadd.f32 %v371, %v529
  %v531 = vpop.f32.mrb[0].mxu0
  %532 = vmatprep.mubr.f32.mxu0 0.0
  %533 = vmatmul.mubr.f32.gmra.mrb[0].mxu0 %v395
  %v534 = vpop.f32.mrb[0].mxu0
  %v535 = vadd.f32 %v371, %v534
  %v536 = vpop.f32.mrb[0].mxu0
  %537 = vmatprep.mubr.f32.mxu0 0.0
  %538 = vmatmul.mubr.f32.gmra.mrb[0].mxu0 %v398
  %v539 = vpop.f32.mrb[0].mxu0
  %v540 = vadd.f32 %v371, %v539
  %v541 = vpop.f32.mrb[0].mxu0
  %542 = vmatprep.mubr.f32.mxu0 0.0
  %543 = vmatmul.mubr.f32.gmra.mrb[0].mxu0 %v401
  %v544 = vpop.f32.mrb[0].mxu0
  %v545 = vadd.f32 %v371, %v544
  %v546 = vpop.f32.mrb[0].mxu0
  %547 = vmatprep.mubr.f32.mxu0 0.0
  %548 = vmatmul.mubr.f32.gmra.mrb[0].mxu0 %v404
  %v549 = vpop.f32.mrb[0].mxu0
  %v550 = vadd.f32 %v371, %v549
  %v551 = vpop.f32.mrb[0].mxu0
  %552 = vmatprep.mubr.f32.mxu0 0.0
  %553 = vmatmul.mubr.f32.gmra.mrb[0].mxu0 %v407
  %v554 = vpop.f32.mrb[0].mxu0
  %v555 = vadd.f32 %v371, %v554
  %v556 = vpop.f32.mrb[0].mxu0
  %557 = vmatprep.mubr.f32.mxu0 0.0
  %558 = vmatmul.mubr.f32.gmra.mrb[0].mxu0 %v410
  %v559 = vpop.f32.mrb[0].mxu0
  %v560 = vadd.f32 %v371, %v559
  %v561 = vpop.f32.mrb[0].mxu0
  %562 = vmatprep.mubr.f32.mxu0 0.0
  %563 = vmatmul.mubr.f32.gmra.mrb[0].mxu0 %v413
  %v564 = vpop.f32.mrb[0].mxu0
  %v565 = vadd.f32 %v371, %v564
  %v566 = vpop.f32.mrb[0].mxu0
  %567 = vmatprep.mubr.f32.mxu0 0.0
  %568 = vmatmul.mubr.f32.gmra.mrb[0].mxu0 %v416
  %v569 = vpop.f32.mrb[0].mxu0
  %v570 = vadd.f32 %v371, %v569
  %v571 = vpop.f32.mrb[0].mxu0
  %572 = vmatprep.mubr.f32.mxu0 0.0
  %573 = vmatmul.mubr.f32.gmra.mrb[0].mxu0 %v419
  %v574 = vpop.f32.mrb[0].mxu0
  %v575 = vadd.f32 %v371, %v574
  %v576 = vpop.f32.mrb[0].mxu0
  %577 = vmatprep.mubr.f32.mxu0 0.0
  %578 = vmatmul.mubr.f32.gmra.mrb[0].mxu0 %v422
  %v579 = vpop.f32.mrb[0].mxu0
  %v580 = vadd.f32 %v371, %v579
  %v581 = vpop.f32.mrb[0].mxu0
  %582 = vmatprep.mubr.f32.mxu0 0.0
  %583 = vmatmul.mubr.f32.gmra.mrb[0].mxu0 %v425
  %v584 = vpop.f32.mrb[0].mxu0
  %v585 = vadd.f32 %v371, %v584
  %v586 = vpop.f32.mrb[0].mxu0
  %587 = vmatprep.mubr.f32.mxu0 0.0
  %588 = vmatmul.mubr.f32.gmra.mrb[0].mxu0 %v428
  %v589 = vpop.f32.mrb[0].mxu0
  %v590 = vadd.f32 %v371, %v589
  %v591 = vpop.f32.mrb[0].mxu0
  %592 = vmatprep.mubr.f32.mxu0 0.0
  %593 = vmatmul.mubr.f32.gmra.mrb[0].mxu0 %v431
  %v594 = vpop.f32.mrb[0].mxu0
  %v595 = vadd.f32 %v371, %v594
  %v596 = vpop.f32.mrb[0].mxu0
  %597 = vdwg.mxu0
  %v598 = vmax.f32 %v500, 0.0
  %v599 = vmax.f32 %v505, 0.0
  %v600 = vmax.f32 %v510, 0.0
  %v601 = vmax.f32 %v515, 0.0
  %v602 = vmax.f32 %v520, 0.0
  %v603 = vmax.f32 %v525, 0.0
  %v604 = vmax.f32 %v530, 0.0
  %v605 = vmax.f32 %v535, 0.0
  %v606 = vmax.f32 %v540, 0.0
  %v607 = vmax.f32 %v545, 0.0
  %v608 = vmax.f32 %v550, 0.0
  %v609 = vmax.f32 %v555, 0.0
  %v610 = vmax.f32 %v560, 0.0
  %v611 = vmax.f32 %v565, 0.0
  %v612 = vmax.f32 %v570, 0.0
  %v613 = vmax.f32 %v575, 0.0
  %v614 = vmax.f32 %v580, 0.0
  %v615 = vmax.f32 %v585, 0.0
  %v616 = vmax.f32 %v590, 0.0
  %v617 = vmax.f32 %v595, 0.0
  %v618 = vld [vmem:[%s5] sm:$0xff]
  %v619 = vld [vmem:[%s5 + $0x8] sm:$0xff]
  %v620 = vld [vmem:[%s5 + $0x10] sm:$0xff]
  %v621 = vld [vmem:[%s5 + $0x18] sm:$0xff]
  %v622 = vld [vmem:[%s5 + $0x20] sm:$0xff]
  %v623 = vld [vmem:[%s5 + $0x28] sm:$0xff]
  %v624 = vld [vmem:[%s5 + $0x30] sm:$0xff]
  %v625 = vld [vmem:[%s5 + $0x38] sm:$0xff]
  %v626 = vld [vmem:[%s6] sm:$0x1]
  %v628 = vlaneseq
  %v629 = vshrl.u32 %v628, 7
  %v630 = vsub.s32 0, %v629
  %v631 = vrot.slane %v626, %v630
  %vm633 = vcmask 523264
  %v635 = vsel %vm633, %v598, 0
  %v638 = vsel %vm633, %v599, 0
  %v641 = vsel %vm633, %v600, 0
  %v644 = vsel %vm633, %v601, 0
  %v647 = vsel %vm633, %v602, 0
  %v650 = vsel %vm633, %v603, 0
  %v653 = vsel %vm633, %v604, 0
  %v656 = vsel %vm633, %v605, 0
  %v659 = vsel %vm633, %v606, 0
  %v662 = vsel %vm633, %v607, 0
  %v665 = vsel %vm633, %v608, 0
  %v668 = vsel %vm633, %v609, 0
  %v671 = vsel %vm633, %v610, 0
  %v674 = vsel %vm633, %v611, 0
  %v677 = vsel %vm633, %v612, 0
  %v680 = vsel %vm633, %v613, 0
  %v683 = vsel %vm633, %v614, 0
  %v686 = vsel %vm633, %v615, 0
  %v689 = vsel %vm633, %v616, 0
  %v692 = vsel %vm633, %v617, 0
  %694 = vmatprep.subr.mxu0 0.0
  %695 = vmatpush1.msra.mxu0 %v618
  %696 = vmatprep.subr.mxu0 0.0
  %697 = vmatpush1.msra.mxu0 %v619
  %698 = vmatprep.subr.mxu0 0.0
  %699 = vmatpush1.msra.mxu0 %v620
  %700 = vmatprep.subr.mxu0 0.0
  %701 = vmatpush1.msra.mxu0 %v621
  %702 = vmatprep.subr.mxu0 0.0
  %703 = vmatpush1.msra.mxu0 %v622
  %704 = vmatprep.subr.mxu0 0.0
  %705 = vmatpush1.msra.mxu0 %v623
  %706 = vmatprep.subr.mxu0 0.0
  %707 = vmatpush1.msra.mxu0 %v624
  %708 = vmatprep.subr.mxu0 0.0
  %709 = vmatpush1.msra.mxu0 %v625
  %710 = vmatprep.subr.mxu0 0.0
  %711 = vmatpush1.msra.mxu0 0.0
  %712 = vmatprep.subr.mxu0 0.0
  %713 = vmatpush1.msra.mxu0 0.0
  %714 = vmatprep.subr.mxu0 0.0
  %715 = vmatpush1.msra.mxu0 0.0
  %716 = vmatprep.subr.mxu0 0.0
  %717 = vmatpush1.msra.mxu0 0.0
  %718 = vmatprep.subr.mxu0 0.0
  %719 = vmatpush1.msra.mxu0 0.0
  %720 = vmatprep.subr.mxu0 0.0
  %721 = vmatpush1.msra.mxu0 0.0
  %722 = vmatprep.subr.mxu0 0.0
  %723 = vmatpush1.msra.mxu0 0.0
  %724 = vmatprep.subr.mxu0 0.0
  %725 = vmatpush1.msra.mxu0 0.0
  %726 = vmatprep.subr.mxu0 0.0
  %727 = vmatpush1.msra.mxu0 0.0
  %728 = vmatprep.subr.mxu0 0.0
  %729 = vmatpush1.msra.mxu0 0.0
  %730 = vmatprep.subr.mxu0 0.0
  %731 = vmatpush1.msra.mxu0 0.0
  %732 = vmatprep.subr.mxu0 0.0
  %733 = vmatpush1.msra.mxu0 0.0
  %734 = vmatprep.subr.mxu0 0.0
  %735 = vmatpush1.msra.mxu0 0.0
  %736 = vmatprep.subr.mxu0 0.0
  %737 = vmatpush1.msra.mxu0 0.0
  %738 = vmatprep.subr.mxu0 0.0
  %739 = vmatpush1.msra.mxu0 0.0
  %740 = vmatprep.subr.mxu0 0.0
  %741 = vmatpush1.msra.mxu0 0.0
  %742 = vmatprep.subr.mxu0 0.0
  %743 = vmatpush1.msra.mxu0 0.0
  %744 = vmatprep.subr.mxu0 0.0
  %745 = vmatpush1.msra.mxu0 0.0
  %746 = vmatprep.subr.mxu0 0.0
  %747 = vmatpush1.msra.mxu0 0.0
  %748 = vmatprep.subr.mxu0 0.0
  %749 = vmatpush1.msra.mxu0 0.0
  %750 = vmatprep.subr.mxu0 0.0
  %751 = vmatpush1.msra.mxu0 0.0
  %752 = vmatprep.subr.mxu0 0.0
  %753 = vmatpush1.msra.mxu0 0.0
  %754 = vmatprep.subr.mxu0 0.0
  %755 = vmatpush1.msra.mxu0 0.0
  %756 = vmatprep.subr.mxu0 0.0
  %757 = vmatpush1.msra.mxu0 0.0
  %758 = vmatprep.mubr.f32.mxu0 0.0
  %759 = vmatmul.mubr.f32.gmra.mrb[0].mxu0 %v635
  %v760 = vpop.f32.mrb[0].mxu0
  %v761 = vadd.f32 %v631, %v760
  %v762 = vpop.f32.mrb[0].mxu0
  %763 = vmatprep.mubr.f32.mxu0 0.0
  %764 = vmatmul.mubr.f32.gmra.mrb[0].mxu0 %v638
  %v765 = vpop.f32.mrb[0].mxu0
  %v766 = vadd.f32 %v631, %v765
  %v767 = vpop.f32.mrb[0].mxu0
  %768 = vmatprep.mubr.f32.mxu0 0.0
  %769 = vmatmul.mubr.f32.gmra.mrb[0].mxu0 %v641
  %v770 = vpop.f32.mrb[0].mxu0
  %v771 = vadd.f32 %v631, %v770
  %v772 = vpop.f32.mrb[0].mxu0
  %773 = vmatprep.mubr.f32.mxu0 0.0
  %774 = vmatmul.mubr.f32.gmra.mrb[0].mxu0 %v644
  %v775 = vpop.f32.mrb[0].mxu0
  %v776 = vadd.f32 %v631, %v775
  %v777 = vpop.f32.mrb[0].mxu0
  %778 = vmatprep.mubr.f32.mxu0 0.0
  %779 = vmatmul.mubr.f32.gmra.mrb[0].mxu0 %v647
  %v780 = vpop.f32.mrb[0].mxu0
  %v781 = vadd.f32 %v631, %v780
  %v782 = vpop.f32.mrb[0].mxu0
  %783 = vmatprep.mubr.f32.mxu0 0.0
  %784 = vmatmul.mubr.f32.gmra.mrb[0].mxu0 %v650
  %v785 = vpop.f32.mrb[0].mxu0
  %v786 = vadd.f32 %v631, %v785
  %v787 = vpop.f32.mrb[0].mxu0
  %788 = vmatprep.mubr.f32.mxu0 0.0
  %789 = vmatmul.mubr.f32.gmra.mrb[0].mxu0 %v653
  %v790 = vpop.f32.mrb[0].mxu0
  %v791 = vadd.f32 %v631, %v790
  %v792 = vpop.f32.mrb[0].mxu0
  %793 = vmatprep.mubr.f32.mxu0 0.0
  %794 = vmatmul.mubr.f32.gmra.mrb[0].mxu0 %v656
  %v795 = vpop.f32.mrb[0].mxu0
  %v796 = vadd.f32 %v631, %v795
  %v797 = vpop.f32.mrb[0].mxu0
  %798 = vmatprep.mubr.f32.mxu0 0.0
  %799 = vmatmul.mubr.f32.gmra.mrb[0].mxu0 %v659
  %v800 = vpop.f32.mrb[0].mxu0
  %v801 = vadd.f32 %v631, %v800
  %v802 = vpop.f32.mrb[0].mxu0
  %803 = vmatprep.mubr.f32.mxu0 0.0
  %804 = vmatmul.mubr.f32.gmra.mrb[0].mxu0 %v662
  %v805 = vpop.f32.mrb[0].mxu0
  %v806 = vadd.f32 %v631, %v805
  %v807 = vpop.f32.mrb[0].mxu0
  %808 = vmatprep.mubr.f32.mxu0 0.0
  %809 = vmatmul.mubr.f32.gmra.mrb[0].mxu0 %v665
  %v810 = vpop.f32.mrb[0].mxu0
  %v811 = vadd.f32 %v631, %v810
  %v812 = vpop.f32.mrb[0].mxu0
  %813 = vmatprep.mubr.f32.mxu0 0.0
  %814 = vmatmul.mubr.f32.gmra.mrb[0].mxu0 %v668
  %v815 = vpop.f32.mrb[0].mxu0
  %v816 = vadd.f32 %v631, %v815
  %v817 = vpop.f32.mrb[0].mxu0
  %818 = vmatprep.mubr.f32.mxu0 0.0
  %819 = vmatmul.mubr.f32.gmra.mrb[0].mxu0 %v671
  %v820 = vpop.f32.mrb[0].mxu0
  %v821 = vadd.f32 %v631, %v820
  %v822 = vpop.f32.mrb[0].mxu0
  %823 = vmatprep.mubr.f32.mxu0 0.0
  %824 = vmatmul.mubr.f32.gmra.mrb[0].mxu0 %v674
  %v825 = vpop.f32.mrb[0].mxu0
  %v826 = vadd.f32 %v631, %v825
  %v827 = vpop.f32.mrb[0].mxu0
  %828 = vmatprep.mubr.f32.mxu0 0.0
  %829 = vmatmul.mubr.f32.gmra.mrb[0].mxu0 %v677
  %v830 = vpop.f32.mrb[0].mxu0
  %v831 = vadd.f32 %v631, %v830
  %v832 = vpop.f32.mrb[0].mxu0
  %833 = vmatprep.mubr.f32.mxu0 0.0
  %834 = vmatmul.mubr.f32.gmra.mrb[0].mxu0 %v680
  %v835 = vpop.f32.mrb[0].mxu0
  %v836 = vadd.f32 %v631, %v835
  %v837 = vpop.f32.mrb[0].mxu0
  %838 = vmatprep.mubr.f32.mxu0 0.0
  %839 = vmatmul.mubr.f32.gmra.mrb[0].mxu0 %v683
  %v840 = vpop.f32.mrb[0].mxu0
  %v841 = vadd.f32 %v631, %v840
  %v842 = vpop.f32.mrb[0].mxu0
  %843 = vmatprep.mubr.f32.mxu0 0.0
  %844 = vmatmul.mubr.f32.gmra.mrb[0].mxu0 %v686
  %v845 = vpop.f32.mrb[0].mxu0
  %v846 = vadd.f32 %v631, %v845
  %v847 = vpop.f32.mrb[0].mxu0
  %848 = vmatprep.mubr.f32.mxu0 0.0
  %849 = vmatmul.mubr.f32.gmra.mrb[0].mxu0 %v689
  %v850 = vpop.f32.mrb[0].mxu0
  %v851 = vadd.f32 %v631, %v850
  %v852 = vpop.f32.mrb[0].mxu0
  %853 = vmatprep.mubr.f32.mxu0 0.0
  %854 = vmatmul.mubr.f32.gmra.mrb[0].mxu0 %v692
  %v855 = vpop.f32.mrb[0].mxu0
  %v856 = vadd.f32 %v631, %v855
  %v857 = vpop.f32.mrb[0].mxu0
  %858 = vdwg.mxu0
  %v859 = vadd.f32 %v26, %v761
  %v860 = vadd.f32 %v27, %v766
  %v861 = vadd.f32 %v28, %v771
  %v862 = vadd.f32 %v29, %v776
  %v863 = vadd.f32 %v30, %v781
  %v864 = vadd.f32 %v31, %v786
  %v865 = vadd.f32 %v32, %v791
  %v866 = vadd.f32 %v33, %v796
  %v867 = vadd.f32 %v34, %v801
  %v868 = vadd.f32 %v35, %v806
  %v869 = vadd.f32 %v36, %v811
  %v870 = vadd.f32 %v37, %v816
  %v871 = vadd.f32 %v38, %v821
  %v872 = vadd.f32 %v39, %v826
  %v873 = vadd.f32 %v40, %v831
  %v874 = vadd.f32 %v41, %v836
  %v875 = vadd.f32 %v42, %v841
  %v876 = vadd.f32 %v43, %v846
  %v877 = vadd.f32 %v44, %v851
  %v878 = vadd.f32 %v45, %v856
  %879 = vst.msk [vmem:[%s7] sm:$0xff] %vm46, %v859
  %880 = vst.msk [vmem:[%s7 + $0x8] sm:$0xff] %vm46, %v860
  %881 = vst.msk [vmem:[%s7 + $0x10] sm:$0xff] %vm46, %v861
  %882 = vst.msk [vmem:[%s7 + $0x18] sm:$0xff] %vm46, %v862
  %883 = vst.msk [vmem:[%s7 + $0x20] sm:$0xff] %vm46, %v863
  %884 = vst.msk [vmem:[%s7 + $0x28] sm:$0xff] %vm46, %v864
  %885 = vst.msk [vmem:[%s7 + $0x30] sm:$0xff] %vm46, %v865
  %886 = vst.msk [vmem:[%s7 + $0x38] sm:$0xff] %vm46, %v866
  %887 = vst.msk [vmem:[%s7 + $0x40] sm:$0xff] %vm46, %v867
  %888 = vst.msk [vmem:[%s7 + $0x48] sm:$0xff] %vm46, %v868
  %889 = vst.msk [vmem:[%s7 + $0x50] sm:$0xff] %vm46, %v869
  %890 = vst.msk [vmem:[%s7 + $0x58] sm:$0xff] %vm46, %v870
  %891 = vst.msk [vmem:[%s7 + $0x60] sm:$0xff] %vm46, %v871
  %892 = vst.msk [vmem:[%s7 + $0x68] sm:$0xff] %vm46, %v872
  %893 = vst.msk [vmem:[%s7 + $0x70] sm:$0xff] %vm46, %v873
  %894 = vst.msk [vmem:[%s7 + $0x78] sm:$0xff] %vm46, %v874
  %895 = vst.msk [vmem:[%s7 + $0x80] sm:$0xff] %vm46, %v875
  %896 = vst.msk [vmem:[%s7 + $0x88] sm:$0xff] %vm46, %v876
  %897 = vst.msk [vmem:[%s7 + $0x90] sm:$0xff] %vm46, %v877
  %898 = vst.msk [vmem:[%s7 + $0x98] sm:$0xff] %vm46, %v878
  // Predicated region
  $region30: #{run_pallas.7} parent=0 // pred_check
    _
  $region31: #{run_pallas.7} parent=0 // pred_check_branch
    %900 = sbr.rel (0) target = $region33
  $region32: #{run_pallas.7} parent=0 // pred_region
    _
  $region33: #{run_pallas.7} parent=0 // pred_fallthru
    _
  // Predicated region
  $region34: #{run_pallas.7} parent=0 // pred_check
    _
  $region35: #{run_pallas.7} parent=0 // pred_check_branch
    %902 = sbr.rel (0) target = $region37
  $region36: #{run_pallas.7} parent=0 // pred_region
    _
  $region37: #{run_pallas.7} parent=0 // pred_fallthru
    _

// kernel: run_pallas.5
$region0: #{run_pallas.5}
  #allocation0 [shape = 'u32[]', space=smem, size = 0x4, offset = 0x4, fixed_abs, tag = 'smem constant byte address 0x4 - core index']
  #allocation1 [shape = 'u32[144,128]{1,0:T(1,128)}', space=vmem, size = 0x12000, scoped, tag = 'internal scratch']
  %s0 = inlined_call_operand.vmem [shape: f32[8,80,4], index: 0, kind: input, shape index: {}]
  %s1 = inlined_call_operand.vmem [shape: f32[8,80,4], index: 1, kind: input, shape index: {}]
  %s2 = inlined_call_operand.vmem [shape: f32[8,80,4], index: 2, kind: input, shape index: {}]
  %s3 = inlined_call_operand.vmem [shape: f32[8,80,8], index: 3, kind: input, shape index: {}]
  %s4 = inlined_call_operand.vmem [shape: f32[8,80,8], index: 4, kind: output, shape index: {}]
  %s5 = sld [smem:[#allocation0]]
  $region49: #{run_pallas.5} parent=0
    _
  %s7 = ssub.s32 1, %s5
  %s8 = scalar_select 0, %s7, %s5
  loop: start=0, step=1, limit=10
  $region2: #{run_pallas.5} parent=0 // loop_pre_header
    _
  $region3: #{run_pallas.5} parent=0 // loop_header
    %s10 = sphi 0, %s14
    %p11 = scmp.ge.s32.totalorder %s10, 10
    %s20 = sphi 0, %s22
    %s23 = sphi 0, %s20
    %s24 = sphi 0, %s23
    %s40 = sphi 0, %s24
    %s46 = sphi 0, %s48
    %s49 = sphi 0, %s46
    %s50 = sphi 0, %s49
    %s66 = sphi 0, %s50
    %s72 = sphi 0, %s74
    %s75 = sphi 0, %s72
    %s76 = sphi 0, %s75
    %s92 = sphi 0, %s76
    %s98 = sphi 0, %s100
    %s101 = sphi 0, %s98
    %s102 = sphi 0, %s101
    %s118 = sphi 0, %s102
    %s124 = sphi 0, %s126
    %s127 = sphi 0, %s124
    %s128 = sphi 0, %s127
    %s144 = sphi 0, %s128
  $region4: #{run_pallas.5} parent=0 // loop_header_branch
    %13 = sbr.rel (%p11) target = $region8
  $region5: #{run_pallas.5} parent=0 // loop_body
    %s15 = ssub.s32 %s10, 1
    %s16 = ssub.s32 %s10, 2
    %s17 = sadd.s32 %s10, 1
    %s18 = ssub.s32 %s10, %s17
    %p19 = scmp.eq.s32.totalorder %s18, 0
    %s21 = sadd.s32 %s20, 1
    %s22 = scalar_select %p19, %s20, %s21
    %p25 = pneg %p19
    %p26 = scmp.eq.s32.totalorder %s10, 7
    %p27 = por %p25, %p26
    %p28 = scmp.ne.s32.totalorder %s20, %s23
    %p29 = scmp.eq.s32.totalorder %s10, 0
    %p30 = por %p28, %p29
    %p31 = scmp.ne.s32.totalorder %s20, %s23
    %p32 = scmp.eq.s32.totalorder %s15, 7
    %p33 = por %p31, %p32
    %p34 = scmp.ne.s32.totalorder %s23, %s24
    %p35 = scmp.eq.s32.totalorder %s15, 0
    %p36 = por %p34, %p35
    %p37 = scmp.ne.s32.totalorder %s23, %s24
    %p38 = scmp.eq.s32.totalorder %s16, 7
    %p39 = por %p37, %p38
    %p41 = scmp.ne.s32.totalorder %s24, %s40
    %p42 = scmp.eq.s32.totalorder %s16, 0
    %p43 = por %p41, %p42
    %s44 = ssub.s32 %s10, %s17
    %p45 = scmp.eq.s32.totalorder %s44, 0
    %s47 = sadd.s32 %s46, 1
    %s48 = scalar_select %p45, %s46, %s47
    %p51 = pneg %p45
    %p52 = scmp.eq.s32.totalorder %s10, 7
    %p53 = por %p51, %p52
    %p54 = scmp.ne.s32.totalorder %s46, %s49
    %p55 = scmp.eq.s32.totalorder %s10, 0
    %p56 = por %p54, %p55
    %p57 = scmp.ne.s32.totalorder %s46, %s49
    %p58 = scmp.eq.s32.totalorder %s15, 7
    %p59 = por %p57, %p58
    %p60 = scmp.ne.s32.totalorder %s49, %s50
    %p61 = scmp.eq.s32.totalorder %s15, 0
    %p62 = por %p60, %p61
    %p63 = scmp.ne.s32.totalorder %s49, %s50
    %p64 = scmp.eq.s32.totalorder %s16, 7
    %p65 = por %p63, %p64
    %p67 = scmp.ne.s32.totalorder %s50, %s66
    %p68 = scmp.eq.s32.totalorder %s16, 0
    %p69 = por %p67, %p68
    %s70 = ssub.s32 %s10, %s17
    %p71 = scmp.eq.s32.totalorder %s70, 0
    %s73 = sadd.s32 %s72, 1
    %s74 = scalar_select %p71, %s72, %s73
    %p77 = pneg %p71
    %p78 = scmp.eq.s32.totalorder %s10, 7
    %p79 = por %p77, %p78
    %p80 = scmp.ne.s32.totalorder %s72, %s75
    %p81 = scmp.eq.s32.totalorder %s10, 0
    %p82 = por %p80, %p81
    %p83 = scmp.ne.s32.totalorder %s72, %s75
    %p84 = scmp.eq.s32.totalorder %s15, 7
    %p85 = por %p83, %p84
    %p86 = scmp.ne.s32.totalorder %s75, %s76
    %p87 = scmp.eq.s32.totalorder %s15, 0
    %p88 = por %p86, %p87
    %p89 = scmp.ne.s32.totalorder %s75, %s76
    %p90 = scmp.eq.s32.totalorder %s16, 7
    %p91 = por %p89, %p90
    %p93 = scmp.ne.s32.totalorder %s76, %s92
    %p94 = scmp.eq.s32.totalorder %s16, 0
    %p95 = por %p93, %p94
    %s96 = ssub.s32 %s10, %s17
    %p97 = scmp.eq.s32.totalorder %s96, 0
    %s99 = sadd.s32 %s98, 1
    %s100 = scalar_select %p97, %s98, %s99
    %p103 = pneg %p97
    %p104 = scmp.eq.s32.totalorder %s10, 7
    %p105 = por %p103, %p104
    %p106 = scmp.ne.s32.totalorder %s98, %s101
    %p107 = scmp.eq.s32.totalorder %s10, 0
    %p108 = por %p106, %p107
    %p109 = scmp.ne.s32.totalorder %s98, %s101
    %p110 = scmp.eq.s32.totalorder %s15, 7
    %p111 = por %p109, %p110
    %p112 = scmp.ne.s32.totalorder %s101, %s102
    %p113 = scmp.eq.s32.totalorder %s15, 0
    %p114 = por %p112, %p113
    %p115 = scmp.ne.s32.totalorder %s101, %s102
    %p116 = scmp.eq.s32.totalorder %s16, 7
    %p117 = por %p115, %p116
    %p119 = scmp.ne.s32.totalorder %s102, %s118
    %p120 = scmp.eq.s32.totalorder %s16, 0
    %p121 = por %p119, %p120
    %s122 = ssub.s32 %s10, %s17
    %p123 = scmp.eq.s32.totalorder %s122, 0
    %s125 = sadd.s32 %s124, 1
    %s126 = scalar_select %p123, %s124, %s125
    %p129 = pneg %p123
    %p130 = scmp.eq.s32.totalorder %s10, 7
    %p131 = por %p129, %p130
    %p132 = scmp.ne.s32.totalorder %s124, %s127
    %p133 = scmp.eq.s32.totalorder %s10, 0
    %p134 = por %p132, %p133
    %p135 = scmp.ne.s32.totalorder %s124, %s127
    %p136 = scmp.eq.s32.totalorder %s15, 7
    %p137 = por %p135, %p136
    %p138 = scmp.ne.s32.totalorder %s127, %s128
    %p139 = scmp.eq.s32.totalorder %s15, 0
    %p140 = por %p138, %p139
    %p141 = scmp.ne.s32.totalorder %s127, %s128
    %p142 = scmp.eq.s32.totalorder %s16, 7
    %p143 = por %p141, %p142
    %p145 = scmp.ne.s32.totalorder %s128, %s144
    %p146 = scmp.eq.s32.totalorder %s16, 0
    %p147 = por %p145, %p146
    %p148 = scmp.le.s32.totalorder 1, %s10
    %p149 = scmp.lt.s32.totalorder %s10, 9
    %p150 = pnand %p148, %p149
    %p151 = pneg %p150
    // Predicated region
    $region9: #{run_pallas.5} parent=5 // pred_check
      _
    $region10: #{run_pallas.5} parent=5 // pred_check_branch
      %153 = sbr.rel (%p150) target = $region12
    $region11: #{run_pallas.5} parent=5 // pred_region
      %s154 = ssub.s32 %s10, 1
    $region12: #{run_pallas.5} parent=5 // pred_fallthru
      _
    %p155 = scmp.lt.s32.totalorder %s10, 8
    // Predicated region
    $region13: #{run_pallas.5} parent=5 // pred_check
      %p156 = pneg %p155
    $region14: #{run_pallas.5} parent=5 // pred_check_branch
      %158 = sbr.rel (%p156) target = $region16
    $region15: #{run_pallas.5} parent=5 // pred_region
      // Predicated region
      $region17: #{run_pallas.5} parent=15 // pred_check
        %p159 = pneg %p30
      $region18: #{run_pallas.5} parent=15 // pred_check_branch
        %161 = sbr.rel (%p159) target = $region20
      $region19: #{run_pallas.5} parent=15 // pred_region
        %p162 = scmp.lt.s32.totalorder %s10, 7
        %s163 = scalar_select %p162, %s10, 7
        %s164 = smul.addr %s163, 10
        %s165 = smul.addr %s164, 8
        %s166 = scalar_lea.vmem %s0, %s165
      $region20: #{run_pallas.5} parent=15 // pred_fallthru
        _
      // Predicated region
      $region21: #{run_pallas.5} parent=15 // pred_check
        %p167 = pneg %p56
      $region22: #{run_pallas.5} parent=15 // pred_check_branch
        %169 = sbr.rel (%p167) target = $region24
      $region23: #{run_pallas.5} parent=15 // pred_region
        %p170 = scmp.lt.s32.totalorder %s10, 7
        %s171 = scalar_select %p170, %s10, 7
        %s172 = smul.addr %s171, 10
        %s173 = smul.addr %s172, 8
        %s174 = scalar_lea.vmem %s1, %s173
      $region24: #{run_pallas.5} parent=15 // pred_fallthru
        _
      // Predicated region
      $region25: #{run_pallas.5} parent=15 // pred_check
        %p175 = pneg %p82
      $region26: #{run_pallas.5} parent=15 // pred_check_branch
        %177 = sbr.rel (%p175) target = $region28
      $region27: #{run_pallas.5} parent=15 // pred_region
        %p178 = scmp.lt.s32.totalorder %s10, 7
        %s179 = scalar_select %p178, %s10, 7
        %s180 = smul.addr %s179, 10
        %s181 = smul.addr %s180, 8
        %s182 = scalar_lea.vmem %s2, %s181
      $region28: #{run_pallas.5} parent=15 // pred_fallthru
        _
      // Predicated region
      $region29: #{run_pallas.5} parent=15 // pred_check
        %p183 = pneg %p108
      $region30: #{run_pallas.5} parent=15 // pred_check_branch
        %185 = sbr.rel (%p183) target = $region32
      $region31: #{run_pallas.5} parent=15 // pred_region
        %p186 = scmp.lt.s32.totalorder %s10, 7
        %s187 = scalar_select %p186, %s10, 7
        %s188 = smul.addr %s187, 10
        %s189 = smul.addr %s188, 8
        %s190 = scalar_lea.vmem %s3, %s189
      $region32: #{run_pallas.5} parent=15 // pred_fallthru
        _
    $region16: #{run_pallas.5} parent=5 // pred_fallthru
      _
    %p191 = scmp.le.s32.totalorder 1, %s10
    %p192 = scmp.lt.s32.totalorder %s10, 9
    %p193 = pnand %p191, %p192
    %p194 = pneg %p193
    // Predicated region
    $region33: #{run_pallas.5} parent=5 // pred_check
      _
    $region34: #{run_pallas.5} parent=5 // pred_check_branch
      %196 = sbr.rel (%p193) target = $region36
    $region35: #{run_pallas.5} parent=5 // pred_region
      %s197 = ssub.s32 %s10, 1
      %p198 = scmp.lt.s32.totalorder %s15, 7
      %s199 = scalar_select %p198, %s15, 7
      %s200 = smul.addr %s199, 10
      %s201 = smul.addr %s200, 8
      %s202 = scalar_lea.vmem %s0, %s201
      %p203 = pneg %p36
      %p204 = pneg %p33
      %p205 = scmp.lt.s32.totalorder %s15, 7
      %s206 = scalar_select %p205, %s15, 7
      %s207 = smul.addr %s206, 10
      %s208 = smul.addr %s207, 8
      %s209 = scalar_lea.vmem %s1, %s208
      %p210 = pneg %p62
      %p211 = pneg %p59
      %p212 = scmp.lt.s32.totalorder %s15, 7
      %s213 = scalar_select %p212, %s15, 7
      %s214 = smul.addr %s213, 10
      %s215 = smul.addr %s214, 8
      %s216 = scalar_lea.vmem %s2, %s215
      %p217 = pneg %p88
      %p218 = pneg %p85
      %p219 = scmp.lt.s32.totalorder %s15, 7
      %s220 = scalar_select %p219, %s15, 7
      %s221 = smul.addr %s220, 10
      %s222 = smul.addr %s221, 8
      %s223 = scalar_lea.vmem %s3, %s222
      %p224 = pneg %p114
      %p225 = pneg %p111
      %p226 = pneg %p140
      %p227 = pneg %p137
      %p228 = scmp.lt.s32.totalorder %s15, 7
      %s229 = scalar_select %p228, %s15, 7
      %s230 = smul.addr %s229, 10
      %s231 = smul.addr %s230, 8
      %s232 = scalar_lea.vmem %s4, %s231
      %p233 = scmp.lt.s32.totalorder %s15, 7
      %s234 = scalar_select %p233, %s15, 7
      %s235 = smul.addr %s234, 10
      %s236 = smul.addr %s235, 8
      %s237 = scalar_lea.vmem %s0, %s236
      %p238 = scmp.lt.s32.totalorder %s15, 7
      %s239 = scalar_select %p238, %s15, 7
      %s240 = smul.addr %s239, 10
      %s241 = smul.addr %s240, 8
      %s242 = scalar_lea.vmem %s1, %s241
      %p243 = scmp.lt.s32.totalorder %s15, 7
      %s244 = scalar_select %p243, %s15, 7
      %s245 = smul.addr %s244, 10
      %s246 = smul.addr %s245, 8
      %s247 = scalar_lea.vmem %s2, %s246
      %p248 = scmp.lt.s32.totalorder %s15, 7
      %s249 = scalar_select %p248, %s15, 7
      %s250 = smul.addr %s249, 10
      %s251 = smul.addr %s250, 8
      %s252 = scalar_lea.vmem %s3, %s251
      %p253 = scmp.lt.s32.totalorder %s15, 7
      %s254 = scalar_select %p253, %s15, 7
      %s255 = smul.addr %s254, 10
      %s256 = smul.addr %s255, 8
      %s257 = scalar_lea.vmem %s4, %s256
      %v258 = vld [vmem:[%s237] sm:$0xff]
      %v259 = vld [vmem:[%s237 + $0x8] sm:$0xff]
      %v260 = vld [vmem:[%s237 + $0x10] sm:$0xff]
      %v261 = vld [vmem:[%s237 + $0x18] sm:$0xff]
      %v262 = vld [vmem:[%s237 + $0x20] sm:$0xff]
      %v263 = vld [vmem:[%s237 + $0x28] sm:$0xff]
      %v264 = vld [vmem:[%s237 + $0x30] sm:$0xff]
      %v265 = vld [vmem:[%s237 + $0x38] sm:$0xff]
      %v266 = vld [vmem:[%s237 + $0x40] sm:$0xff]
      %v267 = vld [vmem:[%s237 + $0x48] sm:$0xff]
      %v268 = vld [vmem:[%s242] sm:$0xff]
      %v269 = vld [vmem:[%s242 + $0x8] sm:$0xff]
      %v270 = vld [vmem:[%s242 + $0x10] sm:$0xff]
      %v271 = vld [vmem:[%s242 + $0x18] sm:$0xff]
      %v272 = vld [vmem:[%s242 + $0x20] sm:$0xff]
      %v273 = vld [vmem:[%s242 + $0x28] sm:$0xff]
      %v274 = vld [vmem:[%s242 + $0x30] sm:$0xff]
      %v275 = vld [vmem:[%s242 + $0x38] sm:$0xff]
      %v276 = vld [vmem:[%s242 + $0x40] sm:$0xff]
      %v277 = vld [vmem:[%s242 + $0x48] sm:$0xff]
      %v278 = vld [vmem:[%s247] sm:$0xff]
      %v279 = vld [vmem:[%s247 + $0x8] sm:$0xff]
      %v280 = vld [vmem:[%s247 + $0x10] sm:$0xff]
      %v281 = vld [vmem:[%s247 + $0x18] sm:$0xff]
      %v282 = vld [vmem:[%s247 + $0x20] sm:$0xff]
      %v283 = vld [vmem:[%s247 + $0x28] sm:$0xff]
      %v284 = vld [vmem:[%s247 + $0x30] sm:$0xff]
      %v285 = vld [vmem:[%s247 + $0x38] sm:$0xff]
      %v286 = vld [vmem:[%s247 + $0x40] sm:$0xff]
      %v287 = vld [vmem:[%s247 + $0x48] sm:$0xff]
      %v288 = vld [vmem:[%s252] sm:$0xff]
      %v289 = vld [vmem:[%s252 + $0x8] sm:$0xff]
      %v290 = vld [vmem:[%s252 + $0x10] sm:$0xff]
      %v291 = vld [vmem:[%s252 + $0x18] sm:$0xff]
      %v292 = vld [vmem:[%s252 + $0x20] sm:$0xff]
      %v293 = vld [vmem:[%s252 + $0x28] sm:$0xff]
      %v294 = vld [vmem:[%s252 + $0x30] sm:$0xff]
      %v295 = vld [vmem:[%s252 + $0x38] sm:$0xff]
      %v296 = vld [vmem:[%s252 + $0x40] sm:$0xff]
      %v297 = vld [vmem:[%s252 + $0x48] sm:$0xff]
      %v298 = vlaneseq
      %v299 = vand.u32 %v298, 127
      %v300 = vmul.f32 %v258, 8.0
      %v301 = vmul.f32 %v259, 8.0
      %v302 = vmul.f32 %v260, 8.0
      %v303 = vmul.f32 %v261, 8.0
      %v304 = vmul.f32 %v262, 8.0
      %v305 = vmul.f32 %v263, 8.0
      %v306 = vmul.f32 %v264, 8.0
      %v307 = vmul.f32 %v265, 8.0
      %v308 = vmul.f32 %v266, 8.0
      %v309 = vmul.f32 %v267, 8.0
      %v310 = vsub.f32 %v300, 0.5
      %v311 = vsub.f32 %v301, 0.5
      %v312 = vsub.f32 %v302, 0.5
      %v313 = vsub.f32 %v303, 0.5
      %v314 = vsub.f32 %v304, 0.5
      %v315 = vsub.f32 %v305, 0.5
      %v316 = vsub.f32 %v306, 0.5
      %v317 = vsub.f32 %v307, 0.5
      %v318 = vsub.f32 %v308, 0.5
      %v319 = vsub.f32 %v309, 0.5
      %v320 = vmul.f32 %v268, 8.0
      %v321 = vmul.f32 %v269, 8.0
      %v322 = vmul.f32 %v270, 8.0
      %v323 = vmul.f32 %v271, 8.0
      %v324 = vmul.f32 %v272, 8.0
      %v325 = vmul.f32 %v273, 8.0
      %v326 = vmul.f32 %v274, 8.0
      %v327 = vmul.f32 %v275, 8.0
      %v328 = vmul.f32 %v276, 8.0
      %v329 = vmul.f32 %v277, 8.0
      %v330 = vsub.f32 %v320, 0.5
      %v331 = vsub.f32 %v321, 0.5
      %v332 = vsub.f32 %v322, 0.5
      %v333 = vsub.f32 %v323, 0.5
      %v334 = vsub.f32 %v324, 0.5
      %v335 = vsub.f32 %v325, 0.5
      %v336 = vsub.f32 %v326, 0.5
      %v337 = vsub.f32 %v327, 0.5
      %v338 = vsub.f32 %v328, 0.5
      %v339 = vsub.f32 %v329, 0.5
      %v340 = vfloor.f32 %v310
      %v341 = vfloor.f32 %v311
      %v342 = vfloor.f32 %v312
      %v343 = vfloor.f32 %v313
      %v344 = vfloor.f32 %v314
      %v345 = vfloor.f32 %v315
      %v346 = vfloor.f32 %v316
      %v347 = vfloor.f32 %v317
      %v348 = vfloor.f32 %v318
      %v349 = vfloor.f32 %v319
      %v350 = vfloor.f32 %v330
      %v351 = vfloor.f32 %v331
      %v352 = vfloor.f32 %v332
      %v353 = vfloor.f32 %v333
      %v354 = vfloor.f32 %v334
      %v355 = vfloor.f32 %v335
      %v356 = vfloor.f32 %v336
      %v357 = vfloor.f32 %v337
      %v358 = vfloor.f32 %v338
      %v359 = vfloor.f32 %v339
      %v360 = vadd.f32 %v340, 0.0
      %v361 = vadd.f32 %v341, 0.0
      %v362 = vadd.f32 %v342, 0.0
      %v363 = vadd.f32 %v343, 0.0
      %v364 = vadd.f32 %v344, 0.0
      %v365 = vadd.f32 %v345, 0.0
      %v366 = vadd.f32 %v346, 0.0
      %v367 = vadd.f32 %v347, 0.0
      %v368 = vadd.f32 %v348, 0.0
      %v369 = vadd.f32 %v349, 0.0
      %v370 = vadd.f32 %v350, 0.0
      %v371 = vadd.f32 %v351, 0.0
      %v372 = vadd.f32 %v352, 0.0
      %v373 = vadd.f32 %v353, 0.0
      %v374 = vadd.f32 %v354, 0.0
      %v375 = vadd.f32 %v355, 0.0
      %v376 = vadd.f32 %v356, 0.0
      %v377 = vadd.f32 %v357, 0.0
      %v378 = vadd.f32 %v358, 0.0
      %v379 = vadd.f32 %v359, 0.0
      %v380 = vsub.f32 %v310, %v360
      %v381 = vsub.f32 %v311, %v361
      %v382 = vsub.f32 %v312, %v362
      %v383 = vsub.f32 %v313, %v363
      %v384 = vsub.f32 %v314, %v364
      %v385 = vsub.f32 %v315, %v365
      %v386 = vsub.f32 %v316, %v366
      %v387 = vsub.f32 %v317, %v367
      %v388 = vsub.f32 %v318, %v368
      %v389 = vsub.f32 %v319, %v369
      %v390 = vand.u32 2147483647, %v380
      %v391 = vand.u32 2147483647, %v381
      %v392 = vand.u32 2147483647, %v382
      %v393 = vand.u32 2147483647, %v383
      %v394 = vand.u32 2147483647, %v384
      %v395 = vand.u32 2147483647, %v385
      %v396 = vand.u32 2147483647, %v386
      %v397 = vand.u32 2147483647, %v387
      %v398 = vand.u32 2147483647, %v388
      %v399 = vand.u32 2147483647, %v389
      %v400 = vsub.f32 1.0, %v390
      %v401 = vsub.f32 1.0, %v391
      %v402 = vsub.f32 1.0, %v392
      %v403 = vsub.f32 1.0, %v393
      %v404 = vsub.f32 1.0, %v394
      %v405 = vsub.f32 1.0, %v395
      %v406 = vsub.f32 1.0, %v396
      %v407 = vsub.f32 1.0, %v397
      %v408 = vsub.f32 1.0, %v398
      %v409 = vsub.f32 1.0, %v399
      %v410 = vsub.f32 %v330, %v370
      %v411 = vsub.f32 %v331, %v371
      %v412 = vsub.f32 %v332, %v372
      %v413 = vsub.f32 %v333, %v373
      %v414 = vsub.f32 %v334, %v374
      %v415 = vsub.f32 %v335, %v375
      %v416 = vsub.f32 %v336, %v376
      %v417 = vsub.f32 %v337, %v377
      %v418 = vsub.f32 %v338, %v378
      %v419 = vsub.f32 %v339, %v379
      %v420 = vand.u32 2147483647, %v410
      %v421 = vand.u32 2147483647, %v411
      %v422 = vand.u32 2147483647, %v412
      %v423 = vand.u32 2147483647, %v413
      %v424 = vand.u32 2147483647, %v414
      %v425 = vand.u32 2147483647, %v415
      %v426 = vand.u32 2147483647, %v416
      %v427 = vand.u32 2147483647, %v417
      %v428 = vand.u32 2147483647, %v418
      %v429 = vand.u32 2147483647, %v419
      %v430 = vsub.f32 1.0, %v420
      %v431 = vsub.f32 1.0, %v421
      %v432 = vsub.f32 1.0, %v422
      %v433 = vsub.f32 1.0, %v423
      %v434 = vsub.f32 1.0, %v424
      %v435 = vsub.f32 1.0, %v425
      %v436 = vsub.f32 1.0, %v426
      %v437 = vsub.f32 1.0, %v427
      %v438 = vsub.f32 1.0, %v428
      %v439 = vsub.f32 1.0, %v429
      %v440 = vmul.f32 %v400, %v430
      %v441 = vmul.f32 %v401, %v431
      %v442 = vmul.f32 %v402, %v432
      %v443 = vmul.f32 %v403, %v433
      %v444 = vmul.f32 %v404, %v434
      %v445 = vmul.f32 %v405, %v435
      %v446 = vmul.f32 %v406, %v436
      %v447 = vmul.f32 %v407, %v437
      %v448 = vmul.f32 %v408, %v438
      %v449 = vmul.f32 %v409, %v439
      %vm450 = vcmp.ge.f32.partialorder %v360, 0.0
      %vm451 = vcmp.ge.f32.partialorder %v361, 0.0
      %vm452 = vcmp.ge.f32.partialorder %v362, 0.0
      %vm453 = vcmp.ge.f32.partialorder %v363, 0.0
      %vm454 = vcmp.ge.f32.partialorder %v364, 0.0
      %vm455 = vcmp.ge.f32.partialorder %v365, 0.0
      %vm456 = vcmp.ge.f32.partialorder %v366, 0.0
      %vm457 = vcmp.ge.f32.partialorder %v367, 0.0
      %vm458 = vcmp.ge.f32.partialorder %v368, 0.0
      %vm459 = vcmp.ge.f32.partialorder %v369, 0.0
      %vm460 = vcmp.le.f32.partialorder %v360, 7.0
      %vm461 = vcmp.le.f32.partialorder %v361, 7.0
      %vm462 = vcmp.le.f32.partialorder %v362, 7.0
      %vm463 = vcmp.le.f32.partialorder %v363, 7.0
      %vm464 = vcmp.le.f32.partialorder %v364, 7.0
      %vm465 = vcmp.le.f32.partialorder %v365, 7.0
      %vm466 = vcmp.le.f32.partialorder %v366, 7.0
      %vm467 = vcmp.le.f32.partialorder %v367, 7.0
      %vm468 = vcmp.le.f32.partialorder %v368, 7.0
      %vm469 = vcmp.le.f32.partialorder %v369, 7.0
      %vm470 = vmand %vm450, %vm460
      %vm471 = vmand %vm451, %vm461
      %vm472 = vmand %vm452, %vm462
      %vm473 = vmand %vm453, %vm463
      %vm474 = vmand %vm454, %vm464
      %vm475 = vmand %vm455, %vm465
      %vm476 = vmand %vm456, %vm466
      %vm477 = vmand %vm457, %vm467
      %vm478 = vmand %vm458, %vm468
      %vm479 = vmand %vm459, %vm469
      %vm480 = vcmp.ge.f32.partialorder %v370, 0.0
      %vm481 = vcmp.ge.f32.partialorder %v371, 0.0
      %vm482 = vcmp.ge.f32.partialorder %v372, 0.0
      %vm483 = vcmp.ge.f32.partialorder %v373, 0.0
      %vm484 = vcmp.ge.f32.partialorder %v374, 0.0
      %vm485 = vcmp.ge.f32.partialorder %v375, 0.0
      %vm486 = vcmp.ge.f32.partialorder %v376, 0.0
      %vm487 = vcmp.ge.f32.partialorder %v377, 0.0
      %vm488 = vcmp.ge.f32.partialorder %v378, 0.0
      %vm489 = vcmp.ge.f32.partialorder %v379, 0.0
      %vm490 = vmand %vm470, %vm480
      %vm491 = vmand %vm471, %vm481
      %vm492 = vmand %vm472, %vm482
      %vm493 = vmand %vm473, %vm483
      %vm494 = vmand %vm474, %vm484
      %vm495 = vmand %vm475, %vm485
      %vm496 = vmand %vm476, %vm486
      %vm497 = vmand %vm477, %vm487
      %vm498 = vmand %vm478, %vm488
      %vm499 = vmand %vm479, %vm489
      %vm500 = vcmp.le.f32.partialorder %v370, 7.0
      %vm501 = vcmp.le.f32.partialorder %v371, 7.0
      %vm502 = vcmp.le.f32.partialorder %v372, 7.0
      %vm503 = vcmp.le.f32.partialorder %v373, 7.0
      %vm504 = vcmp.le.f32.partialorder %v374, 7.0
      %vm505 = vcmp.le.f32.partialorder %v375, 7.0
      %vm506 = vcmp.le.f32.partialorder %v376, 7.0
      %vm507 = vcmp.le.f32.partialorder %v377, 7.0
      %vm508 = vcmp.le.f32.partialorder %v378, 7.0
      %vm509 = vcmp.le.f32.partialorder %v379, 7.0
      %vm510 = vmand %vm490, %vm500
      %vm511 = vmand %vm491, %vm501
      %vm512 = vmand %vm492, %vm502
      %vm513 = vmand %vm493, %vm503
      %vm514 = vmand %vm494, %vm504
      %vm515 = vmand %vm495, %vm505
      %vm516 = vmand %vm496, %vm506
      %vm517 = vmand %vm497, %vm507
      %vm518 = vmand %vm498, %vm508
      %vm519 = vmand %vm499, %vm509
      %v520 = vsel %vm510, 1, 0
      %v521 = vsel %vm511, 1, 0
      %v522 = vsel %vm512, 1, 0
      %v523 = vsel %vm513, 1, 0
      %v524 = vsel %vm514, 1, 0
      %v525 = vsel %vm515, 1, 0
      %v526 = vsel %vm516, 1, 0
      %v527 = vsel %vm517, 1, 0
      %v528 = vsel %vm518, 1, 0
      %v529 = vsel %vm519, 1, 0
      %v530 = vcvt.s32.f32 %v520
      %v531 = vcvt.s32.f32 %v521
      %v532 = vcvt.s32.f32 %v522
      %v533 = vcvt.s32.f32 %v523
      %v534 = vcvt.s32.f32 %v524
      %v535 = vcvt.s32.f32 %v525
      %v536 = vcvt.s32.f32 %v526
      %v537 = vcvt.s32.f32 %v527
      %v538 = vcvt.s32.f32 %v528
      %v539 = vcvt.s32.f32 %v529
      %v540 = vmul.f32 %v440, %v530
      %v541 = vmul.f32 %v441, %v531
      %v542 = vmul.f32 %v442, %v532
      %v543 = vmul.f32 %v443, %v533
      %v544 = vmul.f32 %v444, %v534
      %v545 = vmul.f32 %v445, %v535
      %v546 = vmul.f32 %v446, %v536
      %v547 = vmul.f32 %v447, %v537
      %v548 = vmul.f32 %v448, %v538
      %v549 = vmul.f32 %v449, %v539
      %v550 = vmul.f32 %v540, %v278
      %v551 = vmul.f32 %v541, %v279
      %v552 = vmul.f32 %v542, %v280
      %v553 = vmul.f32 %v543, %v281
      %v554 = vmul.f32 %v544, %v282
      %v555 = vmul.f32 %v545, %v283
      %v556 = vmul.f32 %v546, %v284
      %v557 = vmul.f32 %v547, %v285
      %v558 = vmul.f32 %v548, %v286
      %v559 = vmul.f32 %v549, %v287
      %v560 = vmax.f32 %v370, 0.0
      %v561 = vmax.f32 %v371, 0.0
      %v562 = vmax.f32 %v372, 0.0
      %v563 = vmax.f32 %v373, 0.0
      %v564 = vmax.f32 %v374, 0.0
      %v565 = vmax.f32 %v375, 0.0
      %v566 = vmax.f32 %v376, 0.0
      %v567 = vmax.f32 %v377, 0.0
      %v568 = vmax.f32 %v378, 0.0
      %v569 = vmax.f32 %v379, 0.0
      %v570 = vmin.f32 %v560, 7.0
      %v571 = vmin.f32 %v561, 7.0
      %v572 = vmin.f32 %v562, 7.0
      %v573 = vmin.f32 %v563, 7.0
      %v574 = vmin.f32 %v564, 7.0
      %v575 = vmin.f32 %v565, 7.0
      %v576 = vmin.f32 %v566, 7.0
      %v577 = vmin.f32 %v567, 7.0
      %v578 = vmin.f32 %v568, 7.0
      %v579 = vmin.f32 %v569, 7.0
      %v580 = vmul.f32 %v570, 8.0
      %v581 = vmul.f32 %v571, 8.0
      %v582 = vmul.f32 %v572, 8.0
      %v583 = vmul.f32 %v573, 8.0
      %v584 = vmul.f32 %v574, 8.0
      %v585 = vmul.f32 %v575, 8.0
      %v586 = vmul.f32 %v576, 8.0
      %v587 = vmul.f32 %v577, 8.0
      %v588 = vmul.f32 %v578, 8.0
      %v589 = vmul.f32 %v579, 8.0
      %v590 = vmax.f32 %v360, 0.0
      %v591 = vmax.f32 %v361, 0.0
      %v592 = vmax.f32 %v362, 0.0
      %v593 = vmax.f32 %v363, 0.0
      %v594 = vmax.f32 %v364, 0.0
      %v595 = vmax.f32 %v365, 0.0
      %v596 = vmax.f32 %v366, 0.0
      %v597 = vmax.f32 %v367, 0.0
      %v598 = vmax.f32 %v368, 0.0
      %v599 = vmax.f32 %v369, 0.0
      %v600 = vmin.f32 %v590, 7.0
      %v601 = vmin.f32 %v591, 7.0
      %v602 = vmin.f32 %v592, 7.0
      %v603 = vmin.f32 %v593, 7.0
      %v604 = vmin.f32 %v594, 7.0
      %v605 = vmin.f32 %v595, 7.0
      %v606 = vmin.f32 %v596, 7.0
      %v607 = vmin.f32 %v597, 7.0
      %v608 = vmin.f32 %v598, 7.0
      %v609 = vmin.f32 %v599, 7.0
      %v610 = vadd.f32 %v580, %v600
      %v611 = vadd.f32 %v581, %v601
      %v612 = vadd.f32 %v582, %v602
      %v613 = vadd.f32 %v583, %v603
      %v614 = vadd.f32 %v584, %v604
      %v615 = vadd.f32 %v585, %v605
      %v616 = vadd.f32 %v586, %v606
      %v617 = vadd.f32 %v587, %v607
      %v618 = vadd.f32 %v588, %v608
      %v619 = vadd.f32 %v589, %v609
      %v620 = vcvt.f32.s32.to.zero.pseudo %v610
      %v621 = vcvt.f32.s32.to.zero.pseudo %v611
      %v622 = vcvt.f32.s32.to.zero.pseudo %v612
      %v623 = vcvt.f32.s32.to.zero.pseudo %v613
      %v624 = vcvt.f32.s32.to.zero.pseudo %v614
      %v625 = vcvt.f32.s32.to.zero.pseudo %v615
      %v626 = vcvt.f32.s32.to.zero.pseudo %v616
      %v627 = vcvt.f32.s32.to.zero.pseudo %v617
      %v628 = vcvt.f32.s32.to.zero.pseudo %v618
      %v629 = vcvt.f32.s32.to.zero.pseudo %v619
      %630 = vset.pattern.permute.xlu0 0
      %631 = vperm.xlu0 %630, %v620
      %v632 = vpop.permute.xlu0 %631
      %633 = vset.pattern.permute.xlu0 0
      %634 = vperm.xlu0 %633, %v621
      %v635 = vpop.permute.xlu0 %634
      %636 = vset.pattern.permute.xlu0 0
      %637 = vperm.xlu0 %636, %v622
      %v638 = vpop.permute.xlu0 %637
      %639 = vset.pattern.permute.xlu0 0
      %640 = vperm.xlu0 %639, %v623
      %v641 = vpop.permute.xlu0 %640
      %642 = vset.pattern.permute.xlu0 0
      %643 = vperm.xlu0 %642, %v624
      %v644 = vpop.permute.xlu0 %643
      %645 = vset.pattern.permute.xlu0 0
      %646 = vperm.xlu0 %645, %v625
      %v647 = vpop.permute.xlu0 %646
      %648 = vset.pattern.permute.xlu0 0
      %649 = vperm.xlu0 %648, %v626
      %v650 = vpop.permute.xlu0 %649
      %651 = vset.pattern.permute.xlu0 0
      %652 = vperm.xlu0 %651, %v627
      %v653 = vpop.permute.xlu0 %652
      %654 = vset.pattern.permute.xlu0 0
      %655 = vperm.xlu0 %654, %v628
      %v656 = vpop.permute.xlu0 %655
      %657 = vset.pattern.permute.xlu0 0
      %658 = vperm.xlu0 %657, %v629
      %v659 = vpop.permute.xlu0 %658
      %vm660 = vcmp.eq.s32.totalorder %v299, %v632
      %vm661 = vcmp.eq.s32.totalorder %v299, %v635
      %vm662 = vcmp.eq.s32.totalorder %v299, %v638
      %vm663 = vcmp.eq.s32.totalorder %v299, %v641
      %vm664 = vcmp.eq.s32.totalorder %v299, %v644
      %vm665 = vcmp.eq.s32.totalorder %v299, %v647
      %vm666 = vcmp.eq.s32.totalorder %v299, %v650
      %vm667 = vcmp.eq.s32.totalorder %v299, %v653
      %vm668 = vcmp.eq.s32.totalorder %v299, %v656
      %vm669 = vcmp.eq.s32.totalorder %v299, %v659
      %v670 = vsel %vm660, 1, 0
      %v671 = vsel %vm661, 1, 0
      %v672 = vsel %vm662, 1, 0
      %v673 = vsel %vm663, 1, 0
      %v674 = vsel %vm664, 1, 0
      %v675 = vsel %vm665, 1, 0
      %v676 = vsel %vm666, 1, 0
      %v677 = vsel %vm667, 1, 0
      %v678 = vsel %vm668, 1, 0
      %v679 = vsel %vm669, 1, 0
      %v680 = vcvt.s32.f32 %v670
      %v681 = vcvt.s32.f32 %v671
      %v682 = vcvt.s32.f32 %v672
      %v683 = vcvt.s32.f32 %v673
      %v684 = vcvt.s32.f32 %v674
      %v685 = vcvt.s32.f32 %v675
      %v686 = vcvt.s32.f32 %v676
      %v687 = vcvt.s32.f32 %v677
      %v688 = vcvt.s32.f32 %v678
      %v689 = vcvt.s32.f32 %v679
      %691 = vset.pattern.permute.xlu0 0
      %692 = vperm.xlu0 %691, %v550
      %v693 = vpop.permute.xlu0 %692
      %696 = vset.pattern.permute.xlu0 0
      %697 = vperm.xlu0 %696, %v551
      %v698 = vpop.permute.xlu0 %697
      %701 = vset.pattern.permute.xlu0 0
      %702 = vperm.xlu0 %701, %v552
      %v703 = vpop.permute.xlu0 %702
      %706 = vset.pattern.permute.xlu0 0
      %707 = vperm.xlu0 %706, %v553
      %v708 = vpop.permute.xlu0 %707
      %711 = vset.pattern.permute.xlu0 0
      %712 = vperm.xlu0 %711, %v554
      %v713 = vpop.permute.xlu0 %712
      %716 = vset.pattern.permute.xlu0 0
      %717 = vperm.xlu0 %716, %v555
      %v718 = vpop.permute.xlu0 %717
      %721 = vset.pattern.permute.xlu0 0
      %722 = vperm.xlu0 %721, %v556
      %v723 = vpop.permute.xlu0 %722
      %726 = vset.pattern.permute.xlu0 0
      %727 = vperm.xlu0 %726, %v557
      %v728 = vpop.permute.xlu0 %727
      %731 = vset.pattern.permute.xlu0 0
      %732 = vperm.xlu0 %731, %v558
      %v733 = vpop.permute.xlu0 %732
      %736 = vset.pattern.permute.xlu0 0
      %737 = vperm.xlu0 %736, %v559
      %v738 = vpop.permute.xlu0 %737
      %v740 = vmul.f32 %v693, %v680
      %v741 = vmul.f32 %v698, %v681
      %v742 = vmul.f32 %v703, %v682
      %v743 = vmul.f32 %v708, %v683
      %v744 = vmul.f32 %v713, %v684
      %v745 = vmul.f32 %v718, %v685
      %v746 = vmul.f32 %v723, %v686
      %v747 = vmul.f32 %v728, %v687
      %v748 = vmul.f32 %v733, %v688
      %v749 = vmul.f32 %v738, %v689
      %v750 = vadd.f32 %v740, 0.0
      %v751 = vadd.f32 %v741, 0.0
      %v752 = vadd.f32 %v742, 0.0
      %v753 = vadd.f32 %v743, 0.0
      %v754 = vadd.f32 %v744, 0.0
      %v755 = vadd.f32 %v745, 0.0
      %v756 = vadd.f32 %v746, 0.0
      %v757 = vadd.f32 %v747, 0.0
      %v758 = vadd.f32 %v748, 0.0
      %v759 = vadd.f32 %v749, 0.0
      %v760 = vadd.f32 %v340, 1.0
      %v761 = vadd.f32 %v341, 1.0
      %v762 = vadd.f32 %v342, 1.0
      %v763 = vadd.f32 %v343, 1.0
      %v764 = vadd.f32 %v344, 1.0
      %v765 = vadd.f32 %v345, 1.0
      %v766 = vadd.f32 %v346, 1.0
      %v767 = vadd.f32 %v347, 1.0
      %v768 = vadd.f32 %v348, 1.0
      %v769 = vadd.f32 %v349, 1.0
      %v770 = vsub.f32 %v310, %v760
      %v771 = vsub.f32 %v311, %v761
      %v772 = vsub.f32 %v312, %v762
      %v773 = vsub.f32 %v313, %v763
      %v774 = vsub.f32 %v314, %v764
      %v775 = vsub.f32 %v315, %v765
      %v776 = vsub.f32 %v316, %v766
      %v777 = vsub.f32 %v317, %v767
      %v778 = vsub.f32 %v318, %v768
      %v779 = vsub.f32 %v319, %v769
      %v780 = vand.u32 2147483647, %v770
      %v781 = vand.u32 2147483647, %v771
      %v782 = vand.u32 2147483647, %v772
      %v783 = vand.u32 2147483647, %v773
      %v784 = vand.u32 2147483647, %v774
      %v785 = vand.u32 2147483647, %v775
      %v786 = vand.u32 2147483647, %v776
      %v787 = vand.u32 2147483647, %v777
      %v788 = vand.u32 2147483647, %v778
      %v789 = vand.u32 2147483647, %v779
      %v790 = vsub.f32 1.0, %v780
      %v791 = vsub.f32 1.0, %v781
      %v792 = vsub.f32 1.0, %v782
      %v793 = vsub.f32 1.0, %v783
      %v794 = vsub.f32 1.0, %v784
      %v795 = vsub.f32 1.0, %v785
      %v796 = vsub.f32 1.0, %v786
      %v797 = vsub.f32 1.0, %v787
      %v798 = vsub.f32 1.0, %v788
      %v799 = vsub.f32 1.0, %v789
      %v800 = vmul.f32 %v790, %v430
      %v801 = vmul.f32 %v791, %v431
      %v802 = vmul.f32 %v792, %v432
      %v803 = vmul.f32 %v793, %v433
      %v804 = vmul.f32 %v794, %v434
      %v805 = vmul.f32 %v795, %v435
      %v806 = vmul.f32 %v796, %v436
      %v807 = vmul.f32 %v797, %v437
      %v808 = vmul.f32 %v798, %v438
      %v809 = vmul.f32 %v799, %v439
      %vm810 = vcmp.ge.f32.partialorder %v760, 0.0
      %vm811 = vcmp.ge.f32.partialorder %v761, 0.0
      %vm812 = vcmp.ge.f32.partialorder %v762, 0.0
      %vm813 = vcmp.ge.f32.partialorder %v763, 0.0
      %vm814 = vcmp.ge.f32.partialorder %v764, 0.0
      %vm815 = vcmp.ge.f32.partialorder %v765, 0.0
      %vm816 = vcmp.ge.f32.partialorder %v766, 0.0
      %vm817 = vcmp.ge.f32.partialorder %v767, 0.0
      %vm818 = vcmp.ge.f32.partialorder %v768, 0.0
      %vm819 = vcmp.ge.f32.partialorder %v769, 0.0
      %vm820 = vcmp.le.f32.partialorder %v760, 7.0
      %vm821 = vcmp.le.f32.partialorder %v761, 7.0
      %vm822 = vcmp.le.f32.partialorder %v762, 7.0
      %vm823 = vcmp.le.f32.partialorder %v763, 7.0
      %vm824 = vcmp.le.f32.partialorder %v764, 7.0
      %vm825 = vcmp.le.f32.partialorder %v765, 7.0
      %vm826 = vcmp.le.f32.partialorder %v766, 7.0
      %vm827 = vcmp.le.f32.partialorder %v767, 7.0
      %vm828 = vcmp.le.f32.partialorder %v768, 7.0
      %vm829 = vcmp.le.f32.partialorder %v769, 7.0
      %vm830 = vmand %vm810, %vm820
      %vm831 = vmand %vm811, %vm821
      %vm832 = vmand %vm812, %vm822
      %vm833 = vmand %vm813, %vm823
      %vm834 = vmand %vm814, %vm824
      %vm835 = vmand %vm815, %vm825
      %vm836 = vmand %vm816, %vm826
      %vm837 = vmand %vm817, %vm827
      %vm838 = vmand %vm818, %vm828
      %vm839 = vmand %vm819, %vm829
      %vm840 = vmand %vm830, %vm480
      %vm841 = vmand %vm831, %vm481
      %vm842 = vmand %vm832, %vm482
      %vm843 = vmand %vm833, %vm483
      %vm844 = vmand %vm834, %vm484
      %vm845 = vmand %vm835, %vm485
      %vm846 = vmand %vm836, %vm486
      %vm847 = vmand %vm837, %vm487
      %vm848 = vmand %vm838, %vm488
      %vm849 = vmand %vm839, %vm489
      %vm850 = vmand %vm840, %vm500
      %vm851 = vmand %vm841, %vm501
      %vm852 = vmand %vm842, %vm502
      %vm853 = vmand %vm843, %vm503
      %vm854 = vmand %vm844, %vm504
      %vm855 = vmand %vm845, %vm505
      %vm856 = vmand %vm846, %vm506
      %vm857 = vmand %vm847, %vm507
      %vm858 = vmand %vm848, %vm508
      %vm859 = vmand %vm849, %vm509
      %v860 = vsel %vm850, 1, 0
      %v861 = vsel %vm851, 1, 0
      %v862 = vsel %vm852, 1, 0
      %v863 = vsel %vm853, 1, 0
      %v864 = vsel %vm854, 1, 0
      %v865 = vsel %vm855, 1, 0
      %v866 = vsel %vm856, 1, 0
      %v867 = vsel %vm857, 1, 0
      %v868 = vsel %vm858, 1, 0
      %v869 = vsel %vm859, 1, 0
      %v870 = vcvt.s32.f32 %v860
      %v871 = vcvt.s32.f32 %v861
      %v872 = vcvt.s32.f32 %v862
      %v873 = vcvt.s32.f32 %v863
      %v874 = vcvt.s32.f32 %v864
      %v875 = vcvt.s32.f32 %v865
      %v876 = vcvt.s32.f32 %v866
      %v877 = vcvt.s32.f32 %v867
      %v878 = vcvt.s32.f32 %v868
      %v879 = vcvt.s32.f32 %v869
      %v880 = vmul.f32 %v800, %v870
      %v881 = vmul.f32 %v801, %v871
      %v882 = vmul.f32 %v802, %v872
      %v883 = vmul.f32 %v803, %v873
      %v884 = vmul.f32 %v804, %v874
      %v885 = vmul.f32 %v805, %v875
      %v886 = vmul.f32 %v806, %v876
      %v887 = vmul.f32 %v807, %v877
      %v888 = vmul.f32 %v808, %v878
      %v889 = vmul.f32 %v809, %v879
      %v890 = vmul.f32 %v880, %v278
      %v891 = vmul.f32 %v881, %v279
      %v892 = vmul.f32 %v882, %v280
      %v893 = vmul.f32 %v883, %v281
      %v894 = vmul.f32 %v884, %v282
      %v895 = vmul.f32 %v885, %v283
      %v896 = vmul.f32 %v886, %v284
      %v897 = vmul.f32 %v887, %v285
      %v898 = vmul.f32 %v888, %v286
      %v899 = vmul.f32 %v889, %v287
      %v900 = vmax.f32 %v760, 0.0
      %v901 = vmax.f32 %v761, 0.0
      %v902 = vmax.f32 %v762, 0.0
      %v903 = vmax.f32 %v763, 0.0
      %v904 = vmax.f32 %v764, 0.0
      %v905 = vmax.f32 %v765, 0.0
      %v906 = vmax.f32 %v766, 0.0
      %v907 = vmax.f32 %v767, 0.0
      %v908 = vmax.f32 %v768, 0.0
      %v909 = vmax.f32 %v769, 0.0
      %v910 = vmin.f32 %v900, 7.0
      %v911 = vmin.f32 %v901, 7.0
      %v912 = vmin.f32 %v902, 7.0
      %v913 = vmin.f32 %v903, 7.0
      %v914 = vmin.f32 %v904, 7.0
      %v915 = vmin.f32 %v905, 7.0
      %v916 = vmin.f32 %v906, 7.0
      %v917 = vmin.f32 %v907, 7.0
      %v918 = vmin.f32 %v908, 7.0
      %v919 = vmin.f32 %v909, 7.0
      %v920 = vadd.f32 %v580, %v910
      %v921 = vadd.f32 %v581, %v911
      %v922 = vadd.f32 %v582, %v912
      %v923 = vadd.f32 %v583, %v913
      %v924 = vadd.f32 %v584, %v914
      %v925 = vadd.f32 %v585, %v915
      %v926 = vadd.f32 %v586, %v916
      %v927 = vadd.f32 %v587, %v917
      %v928 = vadd.f32 %v588, %v918
      %v929 = vadd.f32 %v589, %v919
      %v930 = vcvt.f32.s32.to.zero.pseudo %v920
      %v931 = vcvt.f32.s32.to.zero.pseudo %v921
      %v932 = vcvt.f32.s32.to.zero.pseudo %v922
      %v933 = vcvt.f32.s32.to.zero.pseudo %v923
      %v934 = vcvt.f32.s32.to.zero.pseudo %v924
      %v935 = vcvt.f32.s32.to.zero.pseudo %v925
      %v936 = vcvt.f32.s32.to.zero.pseudo %v926
      %v937 = vcvt.f32.s32.to.zero.pseudo %v927
      %v938 = vcvt.f32.s32.to.zero.pseudo %v928
      %v939 = vcvt.f32.s32.to.zero.pseudo %v929
      %940 = vset.pattern.permute.xlu0 0
      %941 = vperm.xlu0 %940, %v930
      %v942 = vpop.permute.xlu0 %941
      %943 = vset.pattern.permute.xlu0 0
      %944 = vperm.xlu0 %943, %v931
      %v945 = vpop.permute.xlu0 %944
      %946 = vset.pattern.permute.xlu0 0
      %947 = vperm.xlu0 %946, %v932
      %v948 = vpop.permute.xlu0 %947
      %949 = vset.pattern.permute.xlu0 0
      %950 = vperm.xlu0 %949, %v933
      %v951 = vpop.permute.xlu0 %950
      %952 = vset.pattern.permute.xlu0 0
      %953 = vperm.xlu0 %952, %v934
      %v954 = vpop.permute.xlu0 %953
      %955 = vset.pattern.permute.xlu0 0
      %956 = vperm.xlu0 %955, %v935
      %v957 = vpop.permute.xlu0 %956
      %958 = vset.pattern.permute.xlu0 0
      %959 = vperm.xlu0 %958, %v936
      %v960 = vpop.permute.xlu0 %959
      %961 = vset.pattern.permute.xlu0 0
      %962 = vperm.xlu0 %961, %v937
      %v963 = vpop.permute.xlu0 %962
      %964 = vset.pattern.permute.xlu0 0
      %965 = vperm.xlu0 %964, %v938
      %v966 = vpop.permute.xlu0 %965
      %967 = vset.pattern.permute.xlu0 0
      %968 = vperm.xlu0 %967, %v939
      %v969 = vpop.permute.xlu0 %968
      %vm970 = vcmp.eq.s32.totalorder %v299, %v942
      %vm971 = vcmp.eq.s32.totalorder %v299, %v945
      %vm972 = vcmp.eq.s32.totalorder %v299, %v948
      %vm973 = vcmp.eq.s32.totalorder %v299, %v951
      %vm974 = vcmp.eq.s32.totalorder %v299, %v954
      %vm975 = vcmp.eq.s32.totalorder %v299, %v957
      %vm976 = vcmp.eq.s32.totalorder %v299, %v960
      %vm977 = vcmp.eq.s32.totalorder %v299, %v963
      %vm978 = vcmp.eq.s32.totalorder %v299, %v966
      %vm979 = vcmp.eq.s32.totalorder %v299, %v969
      %v980 = vsel %vm970, 1, 0
      %v981 = vsel %vm971, 1, 0
      %v982 = vsel %vm972, 1, 0
      %v983 = vsel %vm973, 1, 0
      %v984 = vsel %vm974, 1, 0
      %v985 = vsel %vm975, 1, 0
      %v986 = vsel %vm976, 1, 0
      %v987 = vsel %vm977, 1, 0
      %v988 = vsel %vm978, 1, 0
      %v989 = vsel %vm979, 1, 0
      %v990 = vcvt.s32.f32 %v980
      %v991 = vcvt.s32.f32 %v981
      %v992 = vcvt.s32.f32 %v982
      %v993 = vcvt.s32.f32 %v983
      %v994 = vcvt.s32.f32 %v984
      %v995 = vcvt.s32.f32 %v985
      %v996 = vcvt.s32.f32 %v986
      %v997 = vcvt.s32.f32 %v987
      %v998 = vcvt.s32.f32 %v988
      %v999 = vcvt.s32.f32 %v989
      %1001 = vset.pattern.permute.xlu0 0
      %1002 = vperm.xlu0 %1001, %v890
      %v1003 = vpop.permute.xlu0 %1002
      %1006 = vset.pattern.permute.xlu0 0
      %1007 = vperm.xlu0 %1006, %v891
      %v1008 = vpop.permute.xlu0 %1007
      %1011 = vset.pattern.permute.xlu0 0
      %1012 = vperm.xlu0 %1011, %v892
      %v1013 = vpop.permute.xlu0 %1012
      %1016 = vset.pattern.permute.xlu0 0
      %1017 = vperm.xlu0 %1016, %v893
      %v1018 = vpop.permute.xlu0 %1017
      %1021 = vset.pattern.permute.xlu0 0
      %1022 = vperm.xlu0 %1021, %v894
      %v1023 = vpop.permute.xlu0 %1022
      %1026 = vset.pattern.permute.xlu0 0
      %1027 = vperm.xlu0 %1026, %v895
      %v1028 = vpop.permute.xlu0 %1027
      %1031 = vset.pattern.permute.xlu0 0
      %1032 = vperm.xlu0 %1031, %v896
      %v1033 = vpop.permute.xlu0 %1032
      %1036 = vset.pattern.permute.xlu0 0
      %1037 = vperm.xlu0 %1036, %v897
      %v1038 = vpop.permute.xlu0 %1037
      %1041 = vset.pattern.permute.xlu0 0
      %1042 = vperm.xlu0 %1041, %v898
      %v1043 = vpop.permute.xlu0 %1042
      %1046 = vset.pattern.permute.xlu0 0
      %1047 = vperm.xlu0 %1046, %v899
      %v1048 = vpop.permute.xlu0 %1047
      %v1050 = vmul.f32 %v1003, %v990
      %v1051 = vmul.f32 %v1008, %v991
      %v1052 = vmul.f32 %v1013, %v992
      %v1053 = vmul.f32 %v1018, %v993
      %v1054 = vmul.f32 %v1023, %v994
      %v1055 = vmul.f32 %v1028, %v995
      %v1056 = vmul.f32 %v1033, %v996
      %v1057 = vmul.f32 %v1038, %v997
      %v1058 = vmul.f32 %v1043, %v998
      %v1059 = vmul.f32 %v1048, %v999
      %v1060 = vadd.f32 %v750, %v1050
      %v1061 = vadd.f32 %v751, %v1051
      %v1062 = vadd.f32 %v752, %v1052
      %v1063 = vadd.f32 %v753, %v1053
      %v1064 = vadd.f32 %v754, %v1054
      %v1065 = vadd.f32 %v755, %v1055
      %v1066 = vadd.f32 %v756, %v1056
      %v1067 = vadd.f32 %v757, %v1057
      %v1068 = vadd.f32 %v758, %v1058
      %v1069 = vadd.f32 %v759, %v1059
      %v1070 = vadd.f32 %v350, 1.0
      %v1071 = vadd.f32 %v351, 1.0
      %v1072 = vadd.f32 %v352, 1.0
      %v1073 = vadd.f32 %v353, 1.0
      %v1074 = vadd.f32 %v354, 1.0
      %v1075 = vadd.f32 %v355, 1.0
      %v1076 = vadd.f32 %v356, 1.0
      %v1077 = vadd.f32 %v357, 1.0
      %v1078 = vadd.f32 %v358, 1.0
      %v1079 = vadd.f32 %v359, 1.0
      %v1080 = vsub.f32 %v330, %v1070
      %v1081 = vsub.f32 %v331, %v1071
      %v1082 = vsub.f32 %v332, %v1072
      %v1083 = vsub.f32 %v333, %v1073
      %v1084 = vsub.f32 %v334, %v1074
      %v1085 = vsub.f32 %v335, %v1075
      %v1086 = vsub.f32 %v336, %v1076
      %v1087 = vsub.f32 %v337, %v1077
      %v1088 = vsub.f32 %v338, %v1078
      %v1089 = vsub.f32 %v339, %v1079
      %v1090 = vand.u32 2147483647, %v1080
      %v1091 = vand.u32 2147483647, %v1081
      %v1092 = vand.u32 2147483647, %v1082
      %v1093 = vand.u32 2147483647, %v1083
      %v1094 = vand.u32 2147483647, %v1084
      %v1095 = vand.u32 2147483647, %v1085
      %v1096 = vand.u32 2147483647, %v1086
      %v1097 = vand.u32 2147483647, %v1087
      %v1098 = vand.u32 2147483647, %v1088
      %v1099 = vand.u32 2147483647, %v1089
      %v1100 = vsub.f32 1.0, %v1090
      %v1101 = vsub.f32 1.0, %v1091
      %v1102 = vsub.f32 1.0, %v1092
      %v1103 = vsub.f32 1.0, %v1093
      %v1104 = vsub.f32 1.0, %v1094
      %v1105 = vsub.f32 1.0, %v1095
      %v1106 = vsub.f32 1.0, %v1096
      %v1107 = vsub.f32 1.0, %v1097
      %v1108 = vsub.f32 1.0, %v1098
      %v1109 = vsub.f32 1.0, %v1099
      %v1110 = vmul.f32 %v400, %v1100
      %v1111 = vmul.f32 %v401, %v1101
      %v1112 = vmul.f32 %v402, %v1102
      %v1113 = vmul.f32 %v403, %v1103
      %v1114 = vmul.f32 %v404, %v1104
      %v1115 = vmul.f32 %v405, %v1105
      %v1116 = vmul.f32 %v406, %v1106
      %v1117 = vmul.f32 %v407, %v1107
      %v1118 = vmul.f32 %v408, %v1108
      %v1119 = vmul.f32 %v409, %v1109
      %vm1120 = vcmp.ge.f32.partialorder %v1070, 0.0
      %vm1121 = vcmp.ge.f32.partialorder %v1071, 0.0
      %vm1122 = vcmp.ge.f32.partialorder %v1072, 0.0
      %vm1123 = vcmp.ge.f32.partialorder %v1073, 0.0
      %vm1124 = vcmp.ge.f32.partialorder %v1074, 0.0
      %vm1125 = vcmp.ge.f32.partialorder %v1075, 0.0
      %vm1126 = vcmp.ge.f32.partialorder %v1076, 0.0
      %vm1127 = vcmp.ge.f32.partialorder %v1077, 0.0
      %vm1128 = vcmp.ge.f32.partialorder %v1078, 0.0
      %vm1129 = vcmp.ge.f32.partialorder %v1079, 0.0
      %vm1130 = vmand %vm470, %vm1120
      %vm1131 = vmand %vm471, %vm1121
      %vm1132 = vmand %vm472, %vm1122
      %vm1133 = vmand %vm473, %vm1123
      %vm1134 = vmand %vm474, %vm1124
      %vm1135 = vmand %vm475, %vm1125
      %vm1136 = vmand %vm476, %vm1126
      %vm1137 = vmand %vm477, %vm1127
      %vm1138 = vmand %vm478, %vm1128
      %vm1139 = vmand %vm479, %vm1129
      %vm1140 = vcmp.le.f32.partialorder %v1070, 7.0
      %vm1141 = vcmp.le.f32.partialorder %v1071, 7.0
      %vm1142 = vcmp.le.f32.partialorder %v1072, 7.0
      %vm1143 = vcmp.le.f32.partialorder %v1073, 7.0
      %vm1144 = vcmp.le.f32.partialorder %v1074, 7.0
      %vm1145 = vcmp.le.f32.partialorder %v1075, 7.0
      %vm1146 = vcmp.le.f32.partialorder %v1076, 7.0
      %vm1147 = vcmp.le.f32.partialorder %v1077, 7.0
      %vm1148 = vcmp.le.f32.partialorder %v1078, 7.0
      %vm1149 = vcmp.le.f32.partialorder %v1079, 7.0
      %vm1150 = vmand %vm1130, %vm1140
      %vm1151 = vmand %vm1131, %vm1141
      %vm1152 = vmand %vm1132, %vm1142
      %vm1153 = vmand %vm1133, %vm1143
      %vm1154 = vmand %vm1134, %vm1144
      %vm1155 = vmand %vm1135, %vm1145
      %vm1156 = vmand %vm1136, %vm1146
      %vm1157 = vmand %vm1137, %vm1147
      %vm1158 = vmand %vm1138, %vm1148
      %vm1159 = vmand %vm1139, %vm1149
      %v1160 = vsel %vm1150, 1, 0
      %v1161 = vsel %vm1151, 1, 0
      %v1162 = vsel %vm1152, 1, 0
      %v1163 = vsel %vm1153, 1, 0
      %v1164 = vsel %vm1154, 1, 0
      %v1165 = vsel %vm1155, 1, 0
      %v1166 = vsel %vm1156, 1, 0
      %v1167 = vsel %vm1157, 1, 0
      %v1168 = vsel %vm1158, 1, 0
      %v1169 = vsel %vm1159, 1, 0
      %v1170 = vcvt.s32.f32 %v1160
      %v1171 = vcvt.s32.f32 %v1161
      %v1172 = vcvt.s32.f32 %v1162
      %v1173 = vcvt.s32.f32 %v1163
      %v1174 = vcvt.s32.f32 %v1164
      %v1175 = vcvt.s32.f32 %v1165
      %v1176 = vcvt.s32.f32 %v1166
      %v1177 = vcvt.s32.f32 %v1167
      %v1178 = vcvt.s32.f32 %v1168
      %v1179 = vcvt.s32.f32 %v1169
      %v1180 = vmul.f32 %v1110, %v1170
      %v1181 = vmul.f32 %v1111, %v1171
      %v1182 = vmul.f32 %v1112, %v1172
      %v1183 = vmul.f32 %v1113, %v1173
      %v1184 = vmul.f32 %v1114, %v1174
      %v1185 = vmul.f32 %v1115, %v1175
      %v1186 = vmul.f32 %v1116, %v1176
      %v1187 = vmul.f32 %v1117, %v1177
      %v1188 = vmul.f32 %v1118, %v1178
      %v1189 = vmul.f32 %v1119, %v1179
      %v1190 = vmul.f32 %v1180, %v278
      %v1191 = vmul.f32 %v1181, %v279
      %v1192 = vmul.f32 %v1182, %v280
      %v1193 = vmul.f32 %v1183, %v281
      %v1194 = vmul.f32 %v1184, %v282
      %v1195 = vmul.f32 %v1185, %v283
      %v1196 = vmul.f32 %v1186, %v284
      %v1197 = vmul.f32 %v1187, %v285
      %v1198 = vmul.f32 %v1188, %v286
      %v1199 = vmul.f32 %v1189, %v287
      %v1200 = vmax.f32 %v1070, 0.0
      %v1201 = vmax.f32 %v1071, 0.0
      %v1202 = vmax.f32 %v1072, 0.0
      %v1203 = vmax.f32 %v1073, 0.0
      %v1204 = vmax.f32 %v1074, 0.0
      %v1205 = vmax.f32 %v1075, 0.0
      %v1206 = vmax.f32 %v1076, 0.0
      %v1207 = vmax.f32 %v1077, 0.0
      %v1208 = vmax.f32 %v1078, 0.0
      %v1209 = vmax.f32 %v1079, 0.0
      %v1210 = vmin.f32 %v1200, 7.0
      %v1211 = vmin.f32 %v1201, 7.0
      %v1212 = vmin.f32 %v1202, 7.0
      %v1213 = vmin.f32 %v1203, 7.0
      %v1214 = vmin.f32 %v1204, 7.0
      %v1215 = vmin.f32 %v1205, 7.0
      %v1216 = vmin.f32 %v1206, 7.0
      %v1217 = vmin.f32 %v1207, 7.0
      %v1218 = vmin.f32 %v1208, 7.0
      %v1219 = vmin.f32 %v1209, 7.0
      %v1220 = vmul.f32 %v1210, 8.0
      %v1221 = vmul.f32 %v1211, 8.0
      %v1222 = vmul.f32 %v1212, 8.0
      %v1223 = vmul.f32 %v1213, 8.0
      %v1224 = vmul.f32 %v1214, 8.0
      %v1225 = vmul.f32 %v1215, 8.0
      %v1226 = vmul.f32 %v1216, 8.0
      %v1227 = vmul.f32 %v1217, 8.0
      %v1228 = vmul.f32 %v1218, 8.0
      %v1229 = vmul.f32 %v1219, 8.0
      %v1230 = vadd.f32 %v1220, %v600
      %v1231 = vadd.f32 %v1221, %v601
      %v1232 = vadd.f32 %v1222, %v602
      %v1233 = vadd.f32 %v1223, %v603
      %v1234 = vadd.f32 %v1224, %v604
      %v1235 = vadd.f32 %v1225, %v605
      %v1236 = vadd.f32 %v1226, %v606
      %v1237 = vadd.f32 %v1227, %v607
      %v1238 = vadd.f32 %v1228, %v608
      %v1239 = vadd.f32 %v1229, %v609
      %v1240 = vcvt.f32.s32.to.zero.pseudo %v1230
      %v1241 = vcvt.f32.s32.to.zero.pseudo %v1231
      %v1242 = vcvt.f32.s32.to.zero.pseudo %v1232
      %v1243 = vcvt.f32.s32.to.zero.pseudo %v1233
      %v1244 = vcvt.f32.s32.to.zero.pseudo %v1234
      %v1245 = vcvt.f32.s32.to.zero.pseudo %v1235
      %v1246 = vcvt.f32.s32.to.zero.pseudo %v1236
      %v1247 = vcvt.f32.s32.to.zero.pseudo %v1237
      %v1248 = vcvt.f32.s32.to.zero.pseudo %v1238
      %v1249 = vcvt.f32.s32.to.zero.pseudo %v1239
      %1250 = vset.pattern.permute.xlu0 0
      %1251 = vperm.xlu0 %1250, %v1240
      %v1252 = vpop.permute.xlu0 %1251
      %1253 = vset.pattern.permute.xlu0 0
      %1254 = vperm.xlu0 %1253, %v1241
      %v1255 = vpop.permute.xlu0 %1254
      %1256 = vset.pattern.permute.xlu0 0
      %1257 = vperm.xlu0 %1256, %v1242
      %v1258 = vpop.permute.xlu0 %1257
      %1259 = vset.pattern.permute.xlu0 0
      %1260 = vperm.xlu0 %1259, %v1243
      %v1261 = vpop.permute.xlu0 %1260
      %1262 = vset.pattern.permute.xlu0 0
      %1263 = vperm.xlu0 %1262, %v1244
      %v1264 = vpop.permute.xlu0 %1263
      %1265 = vset.pattern.permute.xlu0 0
      %1266 = vperm.xlu0 %1265, %v1245
      %v1267 = vpop.permute.xlu0 %1266
      %1268 = vset.pattern.permute.xlu0 0
      %1269 = vperm.xlu0 %1268, %v1246
      %v1270 = vpop.permute.xlu0 %1269
      %1271 = vset.pattern.permute.xlu0 0
      %1272 = vperm.xlu0 %1271, %v1247
      %v1273 = vpop.permute.xlu0 %1272
      %1274 = vset.pattern.permute.xlu0 0
      %1275 = vperm.xlu0 %1274, %v1248
      %v1276 = vpop.permute.xlu0 %1275
      %1277 = vset.pattern.permute.xlu0 0
      %1278 = vperm.xlu0 %1277, %v1249
      %v1279 = vpop.permute.xlu0 %1278
      %vm1280 = vcmp.eq.s32.totalorder %v299, %v1252
      %vm1281 = vcmp.eq.s32.totalorder %v299, %v1255
      %vm1282 = vcmp.eq.s32.totalorder %v299, %v1258
      %vm1283 = vcmp.eq.s32.totalorder %v299, %v1261
      %vm1284 = vcmp.eq.s32.totalorder %v299, %v1264
      %vm1285 = vcmp.eq.s32.totalorder %v299, %v1267
      %vm1286 = vcmp.eq.s32.totalorder %v299, %v1270
      %vm1287 = vcmp.eq.s32.totalorder %v299, %v1273
      %vm1288 = vcmp.eq.s32.totalorder %v299, %v1276
      %vm1289 = vcmp.eq.s32.totalorder %v299, %v1279
      %v1290 = vsel %vm1280, 1, 0
      %v1291 = vsel %vm1281, 1, 0
      %v1292 = vsel %vm1282, 1, 0
      %v1293 = vsel %vm1283, 1, 0
      %v1294 = vsel %vm1284, 1, 0
      %v1295 = vsel %vm1285, 1, 0
      %v1296 = vsel %vm1286, 1, 0
      %v1297 = vsel %vm1287, 1, 0
      %v1298 = vsel %vm1288, 1, 0
      %v1299 = vsel %vm1289, 1, 0
      %v1300 = vcvt.s32.f32 %v1290
      %v1301 = vcvt.s32.f32 %v1291
      %v1302 = vcvt.s32.f32 %v1292
      %v1303 = vcvt.s32.f32 %v1293
      %v1304 = vcvt.s32.f32 %v1294
      %v1305 = vcvt.s32.f32 %v1295
      %v1306 = vcvt.s32.f32 %v1296
      %v1307 = vcvt.s32.f32 %v1297
      %v1308 = vcvt.s32.f32 %v1298
      %v1309 = vcvt.s32.f32 %v1299
      %1311 = vset.pattern.permute.xlu0 0
      %1312 = vperm.xlu0 %1311, %v1190
      %v1313 = vpop.permute.xlu0 %1312
      %1316 = vset.pattern.permute.xlu0 0
      %1317 = vperm.xlu0 %1316, %v1191
      %v1318 = vpop.permute.xlu0 %1317
      %1321 = vset.pattern.permute.xlu0 0
      %1322 = vperm.xlu0 %1321, %v1192
      %v1323 = vpop.permute.xlu0 %1322
      %1326 = vset.pattern.permute.xlu0 0
      %1327 = vperm.xlu0 %1326, %v1193
      %v1328 = vpop.permute.xlu0 %1327
      %1331 = vset.pattern.permute.xlu0 0
      %1332 = vperm.xlu0 %1331, %v1194
      %v1333 = vpop.permute.xlu0 %1332
      %1336 = vset.pattern.permute.xlu0 0
      %1337 = vperm.xlu0 %1336, %v1195
      %v1338 = vpop.permute.xlu0 %1337
      %1341 = vset.pattern.permute.xlu0 0
      %1342 = vperm.xlu0 %1341, %v1196
      %v1343 = vpop.permute.xlu0 %1342
      %1346 = vset.pattern.permute.xlu0 0
      %1347 = vperm.xlu0 %1346, %v1197
      %v1348 = vpop.permute.xlu0 %1347
      %1351 = vset.pattern.permute.xlu0 0
      %1352 = vperm.xlu0 %1351, %v1198
      %v1353 = vpop.permute.xlu0 %1352
      %1356 = vset.pattern.permute.xlu0 0
      %1357 = vperm.xlu0 %1356, %v1199
      %v1358 = vpop.permute.xlu0 %1357
      %v1360 = vmul.f32 %v1313, %v1300
      %v1361 = vmul.f32 %v1318, %v1301
      %v1362 = vmul.f32 %v1323, %v1302
      %v1363 = vmul.f32 %v1328, %v1303
      %v1364 = vmul.f32 %v1333, %v1304
      %v1365 = vmul.f32 %v1338, %v1305
      %v1366 = vmul.f32 %v1343, %v1306
      %v1367 = vmul.f32 %v1348, %v1307
      %v1368 = vmul.f32 %v1353, %v1308
      %v1369 = vmul.f32 %v1358, %v1309
      %v1370 = vadd.f32 %v1060, %v1360
      %v1371 = vadd.f32 %v1061, %v1361
      %v1372 = vadd.f32 %v1062, %v1362
      %v1373 = vadd.f32 %v1063, %v1363
      %v1374 = vadd.f32 %v1064, %v1364
      %v1375 = vadd.f32 %v1065, %v1365
      %v1376 = vadd.f32 %v1066, %v1366
      %v1377 = vadd.f32 %v1067, %v1367
      %v1378 = vadd.f32 %v1068, %v1368
      %v1379 = vadd.f32 %v1069, %v1369
      %v1380 = vmul.f32 %v790, %v1100
      %v1381 = vmul.f32 %v791, %v1101
      %v1382 = vmul.f32 %v792, %v1102
      %v1383 = vmul.f32 %v793, %v1103
      %v1384 = vmul.f32 %v794, %v1104
      %v1385 = vmul.f32 %v795, %v1105
      %v1386 = vmul.f32 %v796, %v1106
      %v1387 = vmul.f32 %v797, %v1107
      %v1388 = vmul.f32 %v798, %v1108
      %v1389 = vmul.f32 %v799, %v1109
      %vm1390 = vmand %vm830, %vm1120
      %vm1391 = vmand %vm831, %vm1121
      %vm1392 = vmand %vm832, %vm1122
      %vm1393 = vmand %vm833, %vm1123
      %vm1394 = vmand %vm834, %vm1124
      %vm1395 = vmand %vm835, %vm1125
      %vm1396 = vmand %vm836, %vm1126
      %vm1397 = vmand %vm837, %vm1127
      %vm1398 = vmand %vm838, %vm1128
      %vm1399 = vmand %vm839, %vm1129
      %vm1400 = vmand %vm1390, %vm1140
      %vm1401 = vmand %vm1391, %vm1141
      %vm1402 = vmand %vm1392, %vm1142
      %vm1403 = vmand %vm1393, %vm1143
      %vm1404 = vmand %vm1394, %vm1144
      %vm1405 = vmand %vm1395, %vm1145
      %vm1406 = vmand %vm1396, %vm1146
      %vm1407 = vmand %vm1397, %vm1147
      %vm1408 = vmand %vm1398, %vm1148
      %vm1409 = vmand %vm1399, %vm1149
      %v1410 = vsel %vm1400, 1, 0
      %v1411 = vsel %vm1401, 1, 0
      %v1412 = vsel %vm1402, 1, 0
      %v1413 = vsel %vm1403, 1, 0
      %v1414 = vsel %vm1404, 1, 0
      %v1415 = vsel %vm1405, 1, 0
      %v1416 = vsel %vm1406, 1, 0
      %v1417 = vsel %vm1407, 1, 0
      %v1418 = vsel %vm1408, 1, 0
      %v1419 = vsel %vm1409, 1, 0
      %v1420 = vcvt.s32.f32 %v1410
      %v1421 = vcvt.s32.f32 %v1411
      %v1422 = vcvt.s32.f32 %v1412
      %v1423 = vcvt.s32.f32 %v1413
      %v1424 = vcvt.s32.f32 %v1414
      %v1425 = vcvt.s32.f32 %v1415
      %v1426 = vcvt.s32.f32 %v1416
      %v1427 = vcvt.s32.f32 %v1417
      %v1428 = vcvt.s32.f32 %v1418
      %v1429 = vcvt.s32.f32 %v1419
      %v1430 = vmul.f32 %v1380, %v1420
      %v1431 = vmul.f32 %v1381, %v1421
      %v1432 = vmul.f32 %v1382, %v1422
      %v1433 = vmul.f32 %v1383, %v1423
      %v1434 = vmul.f32 %v1384, %v1424
      %v1435 = vmul.f32 %v1385, %v1425
      %v1436 = vmul.f32 %v1386, %v1426
      %v1437 = vmul.f32 %v1387, %v1427
      %v1438 = vmul.f32 %v1388, %v1428
      %v1439 = vmul.f32 %v1389, %v1429
      %v1440 = vmul.f32 %v1430, %v278
      %v1441 = vmul.f32 %v1431, %v279
      %v1442 = vmul.f32 %v1432, %v280
      %v1443 = vmul.f32 %v1433, %v281
      %v1444 = vmul.f32 %v1434, %v282
      %v1445 = vmul.f32 %v1435, %v283
      %v1446 = vmul.f32 %v1436, %v284
      %v1447 = vmul.f32 %v1437, %v285
      %v1448 = vmul.f32 %v1438, %v286
      %v1449 = vmul.f32 %v1439, %v287
      %v1450 = vadd.f32 %v1220, %v910
      %v1451 = vadd.f32 %v1221, %v911
      %v1452 = vadd.f32 %v1222, %v912
      %v1453 = vadd.f32 %v1223, %v913
      %v1454 = vadd.f32 %v1224, %v914
      %v1455 = vadd.f32 %v1225, %v915
      %v1456 = vadd.f32 %v1226, %v916
      %v1457 = vadd.f32 %v1227, %v917
      %v1458 = vadd.f32 %v1228, %v918
      %v1459 = vadd.f32 %v1229, %v919
      %v1460 = vcvt.f32.s32.to.zero.pseudo %v1450
      %v1461 = vcvt.f32.s32.to.zero.pseudo %v1451
      %v1462 = vcvt.f32.s32.to.zero.pseudo %v1452
      %v1463 = vcvt.f32.s32.to.zero.pseudo %v1453
      %v1464 = vcvt.f32.s32.to.zero.pseudo %v1454
      %v1465 = vcvt.f32.s32.to.zero.pseudo %v1455
      %v1466 = vcvt.f32.s32.to.zero.pseudo %v1456
      %v1467 = vcvt.f32.s32.to.zero.pseudo %v1457
      %v1468 = vcvt.f32.s32.to.zero.pseudo %v1458
      %v1469 = vcvt.f32.s32.to.zero.pseudo %v1459
      %1470 = vset.pattern.permute.xlu0 0
      %1471 = vperm.xlu0 %1470, %v1460
      %v1472 = vpop.permute.xlu0 %1471
      %1473 = vset.pattern.permute.xlu0 0
      %1474 = vperm.xlu0 %1473, %v1461
      %v1475 = vpop.permute.xlu0 %1474
      %1476 = vset.pattern.permute.xlu0 0
      %1477 = vperm.xlu0 %1476, %v1462
      %v1478 = vpop.permute.xlu0 %1477
      %1479 = vset.pattern.permute.xlu0 0
      %1480 = vperm.xlu0 %1479, %v1463
      %v1481 = vpop.permute.xlu0 %1480
      %1482 = vset.pattern.permute.xlu0 0
      %1483 = vperm.xlu0 %1482, %v1464
      %v1484 = vpop.permute.xlu0 %1483
      %1485 = vset.pattern.permute.xlu0 0
      %1486 = vperm.xlu0 %1485, %v1465
      %v1487 = vpop.permute.xlu0 %1486
      %1488 = vset.pattern.permute.xlu0 0
      %1489 = vperm.xlu0 %1488, %v1466
      %v1490 = vpop.permute.xlu0 %1489
      %1491 = vset.pattern.permute.xlu0 0
      %1492 = vperm.xlu0 %1491, %v1467
      %v1493 = vpop.permute.xlu0 %1492
      %1494 = vset.pattern.permute.xlu0 0
      %1495 = vperm.xlu0 %1494, %v1468
      %v1496 = vpop.permute.xlu0 %1495
      %1497 = vset.pattern.permute.xlu0 0
      %1498 = vperm.xlu0 %1497, %v1469
      %v1499 = vpop.permute.xlu0 %1498
      %vm1500 = vcmp.eq.s32.totalorder %v299, %v1472
      %vm1501 = vcmp.eq.s32.totalorder %v299, %v1475
      %vm1502 = vcmp.eq.s32.totalorder %v299, %v1478
      %vm1503 = vcmp.eq.s32.totalorder %v299, %v1481
      %vm1504 = vcmp.eq.s32.totalorder %v299, %v1484
      %vm1505 = vcmp.eq.s32.totalorder %v299, %v1487
      %vm1506 = vcmp.eq.s32.totalorder %v299, %v1490
      %vm1507 = vcmp.eq.s32.totalorder %v299, %v1493
      %vm1508 = vcmp.eq.s32.totalorder %v299, %v1496
      %vm1509 = vcmp.eq.s32.totalorder %v299, %v1499
      %v1510 = vsel %vm1500, 1, 0
      %v1511 = vsel %vm1501, 1, 0
      %v1512 = vsel %vm1502, 1, 0
      %v1513 = vsel %vm1503, 1, 0
      %v1514 = vsel %vm1504, 1, 0
      %v1515 = vsel %vm1505, 1, 0
      %v1516 = vsel %vm1506, 1, 0
      %v1517 = vsel %vm1507, 1, 0
      %v1518 = vsel %vm1508, 1, 0
      %v1519 = vsel %vm1509, 1, 0
      %v1520 = vcvt.s32.f32 %v1510
      %v1521 = vcvt.s32.f32 %v1511
      %v1522 = vcvt.s32.f32 %v1512
      %v1523 = vcvt.s32.f32 %v1513
      %v1524 = vcvt.s32.f32 %v1514
      %v1525 = vcvt.s32.f32 %v1515
      %v1526 = vcvt.s32.f32 %v1516
      %v1527 = vcvt.s32.f32 %v1517
      %v1528 = vcvt.s32.f32 %v1518
      %v1529 = vcvt.s32.f32 %v1519
      %1531 = vset.pattern.permute.xlu0 0
      %1532 = vperm.xlu0 %1531, %v1440
      %v1533 = vpop.permute.xlu0 %1532
      %1536 = vset.pattern.permute.xlu0 0
      %1537 = vperm.xlu0 %1536, %v1441
      %v1538 = vpop.permute.xlu0 %1537
      %1541 = vset.pattern.permute.xlu0 0
      %1542 = vperm.xlu0 %1541, %v1442
      %v1543 = vpop.permute.xlu0 %1542
      %1546 = vset.pattern.permute.xlu0 0
      %1547 = vperm.xlu0 %1546, %v1443
      %v1548 = vpop.permute.xlu0 %1547
      %1551 = vset.pattern.permute.xlu0 0
      %1552 = vperm.xlu0 %1551, %v1444
      %v1553 = vpop.permute.xlu0 %1552
      %1556 = vset.pattern.permute.xlu0 0
      %1557 = vperm.xlu0 %1556, %v1445
      %v1558 = vpop.permute.xlu0 %1557
      %1561 = vset.pattern.permute.xlu0 0
      %1562 = vperm.xlu0 %1561, %v1446
      %v1563 = vpop.permute.xlu0 %1562
      %1566 = vset.pattern.permute.xlu0 0
      %1567 = vperm.xlu0 %1566, %v1447
      %v1568 = vpop.permute.xlu0 %1567
      %1571 = vset.pattern.permute.xlu0 0
      %1572 = vperm.xlu0 %1571, %v1448
      %v1573 = vpop.permute.xlu0 %1572
      %1576 = vset.pattern.permute.xlu0 0
      %1577 = vperm.xlu0 %1576, %v1449
      %v1578 = vpop.permute.xlu0 %1577
      %v1580 = vmul.f32 %v1533, %v1520
      %v1581 = vmul.f32 %v1538, %v1521
      %v1582 = vmul.f32 %v1543, %v1522
      %v1583 = vmul.f32 %v1548, %v1523
      %v1584 = vmul.f32 %v1553, %v1524
      %v1585 = vmul.f32 %v1558, %v1525
      %v1586 = vmul.f32 %v1563, %v1526
      %v1587 = vmul.f32 %v1568, %v1527
      %v1588 = vmul.f32 %v1573, %v1528
      %v1589 = vmul.f32 %v1578, %v1529
      %v1590 = vadd.f32 %v1370, %v1580
      %v1591 = vadd.f32 %v1371, %v1581
      %v1592 = vadd.f32 %v1372, %v1582
      %v1593 = vadd.f32 %v1373, %v1583
      %v1594 = vadd.f32 %v1374, %v1584
      %v1595 = vadd.f32 %v1375, %v1585
      %v1596 = vadd.f32 %v1376, %v1586
      %v1597 = vadd.f32 %v1377, %v1587
      %v1598 = vadd.f32 %v1378, %v1588
      %v1599 = vadd.f32 %v1379, %v1589
      %1600 = vset.pattern.permute.xlu0 1
      %1601 = vperm.xlu0 %1600, %v620
      %v1602 = vpop.permute.xlu0 %1601
      %1603 = vset.pattern.permute.xlu0 1
      %1604 = vperm.xlu0 %1603, %v621
      %v1605 = vpop.permute.xlu0 %1604
      %1606 = vset.pattern.permute.xlu0 1
      %1607 = vperm.xlu0 %1606, %v622
      %v1608 = vpop.permute.xlu0 %1607
      %1609 = vset.pattern.permute.xlu0 1
      %1610 = vperm.xlu0 %1609, %v623
      %v1611 = vpop.permute.xlu0 %1610
      %1612 = vset.pattern.permute.xlu0 1
      %1613 = vperm.xlu0 %1612, %v624
      %v1614 = vpop.permute.xlu0 %1613
      %1615 = vset.pattern.permute.xlu0 1
      %1616 = vperm.xlu0 %1615, %v625
      %v1617 = vpop.permute.xlu0 %1616
      %1618 = vset.pattern.permute.xlu0 1
      %1619 = vperm.xlu0 %1618, %v626
      %v1620 = vpop.permute.xlu0 %1619
      %1621 = vset.pattern.permute.xlu0 1
      %1622 = vperm.xlu0 %1621, %v627
      %v1623 = vpop.permute.xlu0 %1622
      %1624 = vset.pattern.permute.xlu0 1
      %1625 = vperm.xlu0 %1624, %v628
      %v1626 = vpop.permute.xlu0 %1625
      %1627 = vset.pattern.permute.xlu0 1
      %1628 = vperm.xlu0 %1627, %v629
      %v1629 = vpop.permute.xlu0 %1628
      %vm1630 = vcmp.eq.s32.totalorder %v299, %v1602
      %vm1631 = vcmp.eq.s32.totalorder %v299, %v1605
      %vm1632 = vcmp.eq.s32.totalorder %v299, %v1608
      %vm1633 = vcmp.eq.s32.totalorder %v299, %v1611
      %vm1634 = vcmp.eq.s32.totalorder %v299, %v1614
      %vm1635 = vcmp.eq.s32.totalorder %v299, %v1617
      %vm1636 = vcmp.eq.s32.totalorder %v299, %v1620
      %vm1637 = vcmp.eq.s32.totalorder %v299, %v1623
      %vm1638 = vcmp.eq.s32.totalorder %v299, %v1626
      %vm1639 = vcmp.eq.s32.totalorder %v299, %v1629
      %v1640 = vsel %vm1630, 1, 0
      %v1641 = vsel %vm1631, 1, 0
      %v1642 = vsel %vm1632, 1, 0
      %v1643 = vsel %vm1633, 1, 0
      %v1644 = vsel %vm1634, 1, 0
      %v1645 = vsel %vm1635, 1, 0
      %v1646 = vsel %vm1636, 1, 0
      %v1647 = vsel %vm1637, 1, 0
      %v1648 = vsel %vm1638, 1, 0
      %v1649 = vsel %vm1639, 1, 0
      %v1650 = vcvt.s32.f32 %v1640
      %v1651 = vcvt.s32.f32 %v1641
      %v1652 = vcvt.s32.f32 %v1642
      %v1653 = vcvt.s32.f32 %v1643
      %v1654 = vcvt.s32.f32 %v1644
      %v1655 = vcvt.s32.f32 %v1645
      %v1656 = vcvt.s32.f32 %v1646
      %v1657 = vcvt.s32.f32 %v1647
      %v1658 = vcvt.s32.f32 %v1648
      %v1659 = vcvt.s32.f32 %v1649
      %1660 = vset.pattern.permute.xlu0 1
      %1661 = vperm.xlu0 %1660, %v550
      %v1662 = vpop.permute.xlu0 %1661
      %1664 = vset.pattern.permute.xlu0 1
      %1665 = vperm.xlu0 %1664, %v551
      %v1666 = vpop.permute.xlu0 %1665
      %1668 = vset.pattern.permute.xlu0 1
      %1669 = vperm.xlu0 %1668, %v552
      %v1670 = vpop.permute.xlu0 %1669
      %1672 = vset.pattern.permute.xlu0 1
      %1673 = vperm.xlu0 %1672, %v553
      %v1674 = vpop.permute.xlu0 %1673
      %1676 = vset.pattern.permute.xlu0 1
      %1677 = vperm.xlu0 %1676, %v554
      %v1678 = vpop.permute.xlu0 %1677
      %1680 = vset.pattern.permute.xlu0 1
      %1681 = vperm.xlu0 %1680, %v555
      %v1682 = vpop.permute.xlu0 %1681
      %1684 = vset.pattern.permute.xlu0 1
      %1685 = vperm.xlu0 %1684, %v556
      %v1686 = vpop.permute.xlu0 %1685
      %1688 = vset.pattern.permute.xlu0 1
      %1689 = vperm.xlu0 %1688, %v557
      %v1690 = vpop.permute.xlu0 %1689
      %1692 = vset.pattern.permute.xlu0 1
      %1693 = vperm.xlu0 %1692, %v558
      %v1694 = vpop.permute.xlu0 %1693
      %1696 = vset.pattern.permute.xlu0 1
      %1697 = vperm.xlu0 %1696, %v559
      %v1698 = vpop.permute.xlu0 %1697
      %v1700 = vmul.f32 %v1662, %v1650
      %v1701 = vmul.f32 %v1666, %v1651
      %v1702 = vmul.f32 %v1670, %v1652
      %v1703 = vmul.f32 %v1674, %v1653
      %v1704 = vmul.f32 %v1678, %v1654
      %v1705 = vmul.f32 %v1682, %v1655
      %v1706 = vmul.f32 %v1686, %v1656
      %v1707 = vmul.f32 %v1690, %v1657
      %v1708 = vmul.f32 %v1694, %v1658
      %v1709 = vmul.f32 %v1698, %v1659
      %v1710 = vadd.f32 %v1590, %v1700
      %v1711 = vadd.f32 %v1591, %v1701
      %v1712 = vadd.f32 %v1592, %v1702
      %v1713 = vadd.f32 %v1593, %v1703
      %v1714 = vadd.f32 %v1594, %v1704
      %v1715 = vadd.f32 %v1595, %v1705
      %v1716 = vadd.f32 %v1596, %v1706
      %v1717 = vadd.f32 %v1597, %v1707
      %v1718 = vadd.f32 %v1598, %v1708
      %v1719 = vadd.f32 %v1599, %v1709
      %1720 = vset.pattern.permute.xlu0 1
      %1721 = vperm.xlu0 %1720, %v930
      %v1722 = vpop.permute.xlu0 %1721
      %1723 = vset.pattern.permute.xlu0 1
      %1724 = vperm.xlu0 %1723, %v931
      %v1725 = vpop.permute.xlu0 %1724
      %1726 = vset.pattern.permute.xlu0 1
      %1727 = vperm.xlu0 %1726, %v932
      %v1728 = vpop.permute.xlu0 %1727
      %1729 = vset.pattern.permute.xlu0 1
      %1730 = vperm.xlu0 %1729, %v933
      %v1731 = vpop.permute.xlu0 %1730
      %1732 = vset.pattern.permute.xlu0 1
      %1733 = vperm.xlu0 %1732, %v934
      %v1734 = vpop.permute.xlu0 %1733
      %1735 = vset.pattern.permute.xlu0 1
      %1736 = vperm.xlu0 %1735, %v935
      %v1737 = vpop.permute.xlu0 %1736
      %1738 = vset.pattern.permute.xlu0 1
      %1739 = vperm.xlu0 %1738, %v936
      %v1740 = vpop.permute.xlu0 %1739
      %1741 = vset.pattern.permute.xlu0 1
      %1742 = vperm.xlu0 %1741, %v937
      %v1743 = vpop.permute.xlu0 %1742
      %1744 = vset.pattern.permute.xlu0 1
      %1745 = vperm.xlu0 %1744, %v938
      %v1746 = vpop.permute.xlu0 %1745
      %1747 = vset.pattern.permute.xlu0 1
      %1748 = vperm.xlu0 %1747, %v939
      %v1749 = vpop.permute.xlu0 %1748
      %vm1750 = vcmp.eq.s32.totalorder %v299, %v1722
      %vm1751 = vcmp.eq.s32.totalorder %v299, %v1725
      %vm1752 = vcmp.eq.s32.totalorder %v299, %v1728
      %vm1753 = vcmp.eq.s32.totalorder %v299, %v1731
      %vm1754 = vcmp.eq.s32.totalorder %v299, %v1734
      %vm1755 = vcmp.eq.s32.totalorder %v299, %v1737
      %vm1756 = vcmp.eq.s32.totalorder %v299, %v1740
      %vm1757 = vcmp.eq.s32.totalorder %v299, %v1743
      %vm1758 = vcmp.eq.s32.totalorder %v299, %v1746
      %vm1759 = vcmp.eq.s32.totalorder %v299, %v1749
      %v1760 = vsel %vm1750, 1, 0
      %v1761 = vsel %vm1751, 1, 0
      %v1762 = vsel %vm1752, 1, 0
      %v1763 = vsel %vm1753, 1, 0
      %v1764 = vsel %vm1754, 1, 0
      %v1765 = vsel %vm1755, 1, 0
      %v1766 = vsel %vm1756, 1, 0
      %v1767 = vsel %vm1757, 1, 0
      %v1768 = vsel %vm1758, 1, 0
      %v1769 = vsel %vm1759, 1, 0
      %v1770 = vcvt.s32.f32 %v1760
      %v1771 = vcvt.s32.f32 %v1761
      %v1772 = vcvt.s32.f32 %v1762
      %v1773 = vcvt.s32.f32 %v1763
      %v1774 = vcvt.s32.f32 %v1764
      %v1775 = vcvt.s32.f32 %v1765
      %v1776 = vcvt.s32.f32 %v1766
      %v1777 = vcvt.s32.f32 %v1767
      %v1778 = vcvt.s32.f32 %v1768
      %v1779 = vcvt.s32.f32 %v1769
      %1780 = vset.pattern.permute.xlu0 1
      %1781 = vperm.xlu0 %1780, %v890
      %v1782 = vpop.permute.xlu0 %1781
      %1784 = vset.pattern.permute.xlu0 1
      %1785 = vperm.xlu0 %1784, %v891
      %v1786 = vpop.permute.xlu0 %1785
      %1788 = vset.pattern.permute.xlu0 1
      %1789 = vperm.xlu0 %1788, %v892
      %v1790 = vpop.permute.xlu0 %1789
      %1792 = vset.pattern.permute.xlu0 1
      %1793 = vperm.xlu0 %1792, %v893
      %v1794 = vpop.permute.xlu0 %1793
      %1796 = vset.pattern.permute.xlu0 1
      %1797 = vperm.xlu0 %1796, %v894
      %v1798 = vpop.permute.xlu0 %1797
      %1800 = vset.pattern.permute.xlu0 1
      %1801 = vperm.xlu0 %1800, %v895
      %v1802 = vpop.permute.xlu0 %1801
      %1804 = vset.pattern.permute.xlu0 1
      %1805 = vperm.xlu0 %1804, %v896
      %v1806 = vpop.permute.xlu0 %1805
      %1808 = vset.pattern.permute.xlu0 1
      %1809 = vperm.xlu0 %1808, %v897
      %v1810 = vpop.permute.xlu0 %1809
      %1812 = vset.pattern.permute.xlu0 1
      %1813 = vperm.xlu0 %1812, %v898
      %v1814 = vpop.permute.xlu0 %1813
      %1816 = vset.pattern.permute.xlu0 1
      %1817 = vperm.xlu0 %1816, %v899
      %v1818 = vpop.permute.xlu0 %1817
      %v1820 = vmul.f32 %v1782, %v1770
      %v1821 = vmul.f32 %v1786, %v1771
      %v1822 = vmul.f32 %v1790, %v1772
      %v1823 = vmul.f32 %v1794, %v1773
      %v1824 = vmul.f32 %v1798, %v1774
      %v1825 = vmul.f32 %v1802, %v1775
      %v1826 = vmul.f32 %v1806, %v1776
      %v1827 = vmul.f32 %v1810, %v1777
      %v1828 = vmul.f32 %v1814, %v1778
      %v1829 = vmul.f32 %v1818, %v1779
      %v1830 = vadd.f32 %v1710, %v1820
      %v1831 = vadd.f32 %v1711, %v1821
      %v1832 = vadd.f32 %v1712, %v1822
      %v1833 = vadd.f32 %v1713, %v1823
      %v1834 = vadd.f32 %v1714, %v1824
      %v1835 = vadd.f32 %v1715, %v1825
      %v1836 = vadd.f32 %v1716, %v1826
      %v1837 = vadd.f32 %v1717, %v1827
      %v1838 = vadd.f32 %v1718, %v1828
      %v1839 = vadd.f32 %v1719, %v1829
      %1840 = vset.pattern.permute.xlu0 1
      %1841 = vperm.xlu0 %1840, %v1240
      %v1842 = vpop.permute.xlu0 %1841
      %1843 = vset.pattern.permute.xlu0 1
      %1844 = vperm.xlu0 %1843, %v1241
      %v1845 = vpop.permute.xlu0 %1844
      %1846 = vset.pattern.permute.xlu0 1
      %1847 = vperm.xlu0 %1846, %v1242
      %v1848 = vpop.permute.xlu0 %1847
      %1849 = vset.pattern.permute.xlu0 1
      %1850 = vperm.xlu0 %1849, %v1243
      %v1851 = vpop.permute.xlu0 %1850
      %1852 = vset.pattern.permute.xlu0 1
      %1853 = vperm.xlu0 %1852, %v1244
      %v1854 = vpop.permute.xlu0 %1853
      %1855 = vset.pattern.permute.xlu0 1
      %1856 = vperm.xlu0 %1855, %v1245
      %v1857 = vpop.permute.xlu0 %1856
      %1858 = vset.pattern.permute.xlu0 1
      %1859 = vperm.xlu0 %1858, %v1246
      %v1860 = vpop.permute.xlu0 %1859
      %1861 = vset.pattern.permute.xlu0 1
      %1862 = vperm.xlu0 %1861, %v1247
      %v1863 = vpop.permute.xlu0 %1862
      %1864 = vset.pattern.permute.xlu0 1
      %1865 = vperm.xlu0 %1864, %v1248
      %v1866 = vpop.permute.xlu0 %1865
      %1867 = vset.pattern.permute.xlu0 1
      %1868 = vperm.xlu0 %1867, %v1249
      %v1869 = vpop.permute.xlu0 %1868
      %vm1870 = vcmp.eq.s32.totalorder %v299, %v1842
      %vm1871 = vcmp.eq.s32.totalorder %v299, %v1845
      %vm1872 = vcmp.eq.s32.totalorder %v299, %v1848
      %vm1873 = vcmp.eq.s32.totalorder %v299, %v1851
      %vm1874 = vcmp.eq.s32.totalorder %v299, %v1854
      %vm1875 = vcmp.eq.s32.totalorder %v299, %v1857
      %vm1876 = vcmp.eq.s32.totalorder %v299, %v1860
      %vm1877 = vcmp.eq.s32.totalorder %v299, %v1863
      %vm1878 = vcmp.eq.s32.totalorder %v299, %v1866
      %vm1879 = vcmp.eq.s32.totalorder %v299, %v1869
      %v1880 = vsel %vm1870, 1, 0
      %v1881 = vsel %vm1871, 1, 0
      %v1882 = vsel %vm1872, 1, 0
      %v1883 = vsel %vm1873, 1, 0
      %v1884 = vsel %vm1874, 1, 0
      %v1885 = vsel %vm1875, 1, 0
      %v1886 = vsel %vm1876, 1, 0
      %v1887 = vsel %vm1877, 1, 0
      %v1888 = vsel %vm1878, 1, 0
      %v1889 = vsel %vm1879, 1, 0
      %v1890 = vcvt.s32.f32 %v1880
      %v1891 = vcvt.s32.f32 %v1881
      %v1892 = vcvt.s32.f32 %v1882
      %v1893 = vcvt.s32.f32 %v1883
      %v1894 = vcvt.s32.f32 %v1884
      %v1895 = vcvt.s32.f32 %v1885
      %v1896 = vcvt.s32.f32 %v1886
      %v1897 = vcvt.s32.f32 %v1887
      %v1898 = vcvt.s32.f32 %v1888
      %v1899 = vcvt.s32.f32 %v1889
      %1900 = vset.pattern.permute.xlu0 1
      %1901 = vperm.xlu0 %1900, %v1190
      %v1902 = vpop.permute.xlu0 %1901
      %1904 = vset.pattern.permute.xlu0 1
      %1905 = vperm.xlu0 %1904, %v1191
      %v1906 = vpop.permute.xlu0 %1905
      %1908 = vset.pattern.permute.xlu0 1
      %1909 = vperm.xlu0 %1908, %v1192
      %v1910 = vpop.permute.xlu0 %1909
      %1912 = vset.pattern.permute.xlu0 1
      %1913 = vperm.xlu0 %1912, %v1193
      %v1914 = vpop.permute.xlu0 %1913
      %1916 = vset.pattern.permute.xlu0 1
      %1917 = vperm.xlu0 %1916, %v1194
      %v1918 = vpop.permute.xlu0 %1917
      %1920 = vset.pattern.permute.xlu0 1
      %1921 = vperm.xlu0 %1920, %v1195
      %v1922 = vpop.permute.xlu0 %1921
      %1924 = vset.pattern.permute.xlu0 1
      %1925 = vperm.xlu0 %1924, %v1196
      %v1926 = vpop.permute.xlu0 %1925
      %1928 = vset.pattern.permute.xlu0 1
      %1929 = vperm.xlu0 %1928, %v1197
      %v1930 = vpop.permute.xlu0 %1929
      %1932 = vset.pattern.permute.xlu0 1
      %1933 = vperm.xlu0 %1932, %v1198
      %v1934 = vpop.permute.xlu0 %1933
      %1936 = vset.pattern.permute.xlu0 1
      %1937 = vperm.xlu0 %1936, %v1199
      %v1938 = vpop.permute.xlu0 %1937
      %v1940 = vmul.f32 %v1902, %v1890
      %v1941 = vmul.f32 %v1906, %v1891
      %v1942 = vmul.f32 %v1910, %v1892
      %v1943 = vmul.f32 %v1914, %v1893
      %v1944 = vmul.f32 %v1918, %v1894
      %v1945 = vmul.f32 %v1922, %v1895
      %v1946 = vmul.f32 %v1926, %v1896
      %v1947 = vmul.f32 %v1930, %v1897
      %v1948 = vmul.f32 %v1934, %v1898
      %v1949 = vmul.f32 %v1938, %v1899
      %v1950 = vadd.f32 %v1830, %v1940
      %v1951 = vadd.f32 %v1831, %v1941
      %v1952 = vadd.f32 %v1832, %v1942
      %v1953 = vadd.f32 %v1833, %v1943
      %v1954 = vadd.f32 %v1834, %v1944
      %v1955 = vadd.f32 %v1835, %v1945
      %v1956 = vadd.f32 %v1836, %v1946
      %v1957 = vadd.f32 %v1837, %v1947
      %v1958 = vadd.f32 %v1838, %v1948
      %v1959 = vadd.f32 %v1839, %v1949
      %1960 = vset.pattern.permute.xlu0 1
      %1961 = vperm.xlu0 %1960, %v1460
      %v1962 = vpop.permute.xlu0 %1961
      %1963 = vset.pattern.permute.xlu0 1
      %1964 = vperm.xlu0 %1963, %v1461
      %v1965 = vpop.permute.xlu0 %1964
      %1966 = vset.pattern.permute.xlu0 1
      %1967 = vperm.xlu0 %1966, %v1462
      %v1968 = vpop.permute.xlu0 %1967
      %1969 = vset.pattern.permute.xlu0 1
      %1970 = vperm.xlu0 %1969, %v1463
      %v1971 = vpop.permute.xlu0 %1970
      %1972 = vset.pattern.permute.xlu0 1
      %1973 = vperm.xlu0 %1972, %v1464
      %v1974 = vpop.permute.xlu0 %1973
      %1975 = vset.pattern.permute.xlu0 1
      %1976 = vperm.xlu0 %1975, %v1465
      %v1977 = vpop.permute.xlu0 %1976
      %1978 = vset.pattern.permute.xlu0 1
      %1979 = vperm.xlu0 %1978, %v1466
      %v1980 = vpop.permute.xlu0 %1979
      %1981 = vset.pattern.permute.xlu0 1
      %1982 = vperm.xlu0 %1981, %v1467
      %v1983 = vpop.permute.xlu0 %1982
      %1984 = vset.pattern.permute.xlu0 1
      %1985 = vperm.xlu0 %1984, %v1468
      %v1986 = vpop.permute.xlu0 %1985
      %1987 = vset.pattern.permute.xlu0 1
      %1988 = vperm.xlu0 %1987, %v1469
      %v1989 = vpop.permute.xlu0 %1988
      %vm1990 = vcmp.eq.s32.totalorder %v299, %v1962
      %vm1991 = vcmp.eq.s32.totalorder %v299, %v1965
      %vm1992 = vcmp.eq.s32.totalorder %v299, %v1968
      %vm1993 = vcmp.eq.s32.totalorder %v299, %v1971
      %vm1994 = vcmp.eq.s32.totalorder %v299, %v1974
      %vm1995 = vcmp.eq.s32.totalorder %v299, %v1977
      %vm1996 = vcmp.eq.s32.totalorder %v299, %v1980
      %vm1997 = vcmp.eq.s32.totalorder %v299, %v1983
      %vm1998 = vcmp.eq.s32.totalorder %v299, %v1986
      %vm1999 = vcmp.eq.s32.totalorder %v299, %v1989
      %v2000 = vsel %vm1990, 1, 0
      %v2001 = vsel %vm1991, 1, 0
      %v2002 = vsel %vm1992, 1, 0
      %v2003 = vsel %vm1993, 1, 0
      %v2004 = vsel %vm1994, 1, 0
      %v2005 = vsel %vm1995, 1, 0
      %v2006 = vsel %vm1996, 1, 0
      %v2007 = vsel %vm1997, 1, 0
      %v2008 = vsel %vm1998, 1, 0
      %v2009 = vsel %vm1999, 1, 0
      %v2010 = vcvt.s32.f32 %v2000
      %v2011 = vcvt.s32.f32 %v2001
      %v2012 = vcvt.s32.f32 %v2002
      %v2013 = vcvt.s32.f32 %v2003
      %v2014 = vcvt.s32.f32 %v2004
      %v2015 = vcvt.s32.f32 %v2005
      %v2016 = vcvt.s32.f32 %v2006
      %v2017 = vcvt.s32.f32 %v2007
      %v2018 = vcvt.s32.f32 %v2008
      %v2019 = vcvt.s32.f32 %v2009
      %2020 = vset.pattern.permute.xlu0 1
      %2021 = vperm.xlu0 %2020, %v1440
      %v2022 = vpop.permute.xlu0 %2021
      %2024 = vset.pattern.permute.xlu0 1
      %2025 = vperm.xlu0 %2024, %v1441
      %v2026 = vpop.permute.xlu0 %2025
      %2028 = vset.pattern.permute.xlu0 1
      %2029 = vperm.xlu0 %2028, %v1442
      %v2030 = vpop.permute.xlu0 %2029
      %2032 = vset.pattern.permute.xlu0 1
      %2033 = vperm.xlu0 %2032, %v1443
      %v2034 = vpop.permute.xlu0 %2033
      %2036 = vset.pattern.permute.xlu0 1
      %2037 = vperm.xlu0 %2036, %v1444
      %v2038 = vpop.permute.xlu0 %2037
      %2040 = vset.pattern.permute.xlu0 1
      %2041 = vperm.xlu0 %2040, %v1445
      %v2042 = vpop.permute.xlu0 %2041
      %2044 = vset.pattern.permute.xlu0 1
      %2045 = vperm.xlu0 %2044, %v1446
      %v2046 = vpop.permute.xlu0 %2045
      %2048 = vset.pattern.permute.xlu0 1
      %2049 = vperm.xlu0 %2048, %v1447
      %v2050 = vpop.permute.xlu0 %2049
      %2052 = vset.pattern.permute.xlu0 1
      %2053 = vperm.xlu0 %2052, %v1448
      %v2054 = vpop.permute.xlu0 %2053
      %2056 = vset.pattern.permute.xlu0 1
      %2057 = vperm.xlu0 %2056, %v1449
      %v2058 = vpop.permute.xlu0 %2057
      %v2060 = vmul.f32 %v2022, %v2010
      %v2061 = vmul.f32 %v2026, %v2011
      %v2062 = vmul.f32 %v2030, %v2012
      %v2063 = vmul.f32 %v2034, %v2013
      %v2064 = vmul.f32 %v2038, %v2014
      %v2065 = vmul.f32 %v2042, %v2015
      %v2066 = vmul.f32 %v2046, %v2016
      %v2067 = vmul.f32 %v2050, %v2017
      %v2068 = vmul.f32 %v2054, %v2018
      %v2069 = vmul.f32 %v2058, %v2019
      %v2070 = vadd.f32 %v1950, %v2060
      %v2071 = vadd.f32 %v1951, %v2061
      %v2072 = vadd.f32 %v1952, %v2062
      %v2073 = vadd.f32 %v1953, %v2063
      %v2074 = vadd.f32 %v1954, %v2064
      %v2075 = vadd.f32 %v1955, %v2065
      %v2076 = vadd.f32 %v1956, %v2066
      %v2077 = vadd.f32 %v1957, %v2067
      %v2078 = vadd.f32 %v1958, %v2068
      %v2079 = vadd.f32 %v1959, %v2069
      %v2080 = vmul.f32 %v258, 4.0
      %v2081 = vmul.f32 %v259, 4.0
      %v2082 = vmul.f32 %v260, 4.0
      %v2083 = vmul.f32 %v261, 4.0
      %v2084 = vmul.f32 %v262, 4.0
      %v2085 = vmul.f32 %v263, 4.0
      %v2086 = vmul.f32 %v264, 4.0
      %v2087 = vmul.f32 %v265, 4.0
      %v2088 = vmul.f32 %v266, 4.0
      %v2089 = vmul.f32 %v267, 4.0
      %v2090 = vsub.f32 %v2080, 0.5
      %v2091 = vsub.f32 %v2081, 0.5
      %v2092 = vsub.f32 %v2082, 0.5
      %v2093 = vsub.f32 %v2083, 0.5
      %v2094 = vsub.f32 %v2084, 0.5
      %v2095 = vsub.f32 %v2085, 0.5
      %v2096 = vsub.f32 %v2086, 0.5
      %v2097 = vsub.f32 %v2087, 0.5
      %v2098 = vsub.f32 %v2088, 0.5
      %v2099 = vsub.f32 %v2089, 0.5
      %v2100 = vmul.f32 %v268, 4.0
      %v2101 = vmul.f32 %v269, 4.0
      %v2102 = vmul.f32 %v270, 4.0
      %v2103 = vmul.f32 %v271, 4.0
      %v2104 = vmul.f32 %v272, 4.0
      %v2105 = vmul.f32 %v273, 4.0
      %v2106 = vmul.f32 %v274, 4.0
      %v2107 = vmul.f32 %v275, 4.0
      %v2108 = vmul.f32 %v276, 4.0
      %v2109 = vmul.f32 %v277, 4.0
      %v2110 = vsub.f32 %v2100, 0.5
      %v2111 = vsub.f32 %v2101, 0.5
      %v2112 = vsub.f32 %v2102, 0.5
      %v2113 = vsub.f32 %v2103, 0.5
      %v2114 = vsub.f32 %v2104, 0.5
      %v2115 = vsub.f32 %v2105, 0.5
      %v2116 = vsub.f32 %v2106, 0.5
      %v2117 = vsub.f32 %v2107, 0.5
      %v2118 = vsub.f32 %v2108, 0.5
      %v2119 = vsub.f32 %v2109, 0.5
      %v2120 = vfloor.f32 %v2090
      %v2121 = vfloor.f32 %v2091
      %v2122 = vfloor.f32 %v2092
      %v2123 = vfloor.f32 %v2093
      %v2124 = vfloor.f32 %v2094
      %v2125 = vfloor.f32 %v2095
      %v2126 = vfloor.f32 %v2096
      %v2127 = vfloor.f32 %v2097
      %v2128 = vfloor.f32 %v2098
      %v2129 = vfloor.f32 %v2099
      %v2130 = vfloor.f32 %v2110
      %v2131 = vfloor.f32 %v2111
      %v2132 = vfloor.f32 %v2112
      %v2133 = vfloor.f32 %v2113
      %v2134 = vfloor.f32 %v2114
      %v2135 = vfloor.f32 %v2115
      %v2136 = vfloor.f32 %v2116
      %v2137 = vfloor.f32 %v2117
      %v2138 = vfloor.f32 %v2118
      %v2139 = vfloor.f32 %v2119
      %v2140 = vadd.f32 %v2120, 0.0
      %v2141 = vadd.f32 %v2121, 0.0
      %v2142 = vadd.f32 %v2122, 0.0
      %v2143 = vadd.f32 %v2123, 0.0
      %v2144 = vadd.f32 %v2124, 0.0
      %v2145 = vadd.f32 %v2125, 0.0
      %v2146 = vadd.f32 %v2126, 0.0
      %v2147 = vadd.f32 %v2127, 0.0
      %v2148 = vadd.f32 %v2128, 0.0
      %v2149 = vadd.f32 %v2129, 0.0
      %v2150 = vadd.f32 %v2130, 0.0
      %v2151 = vadd.f32 %v2131, 0.0
      %v2152 = vadd.f32 %v2132, 0.0
      %v2153 = vadd.f32 %v2133, 0.0
      %v2154 = vadd.f32 %v2134, 0.0
      %v2155 = vadd.f32 %v2135, 0.0
      %v2156 = vadd.f32 %v2136, 0.0
      %v2157 = vadd.f32 %v2137, 0.0
      %v2158 = vadd.f32 %v2138, 0.0
      %v2159 = vadd.f32 %v2139, 0.0
      %v2160 = vsub.f32 %v2090, %v2140
      %v2161 = vsub.f32 %v2091, %v2141
      %v2162 = vsub.f32 %v2092, %v2142
      %v2163 = vsub.f32 %v2093, %v2143
      %v2164 = vsub.f32 %v2094, %v2144
      %v2165 = vsub.f32 %v2095, %v2145
      %v2166 = vsub.f32 %v2096, %v2146
      %v2167 = vsub.f32 %v2097, %v2147
      %v2168 = vsub.f32 %v2098, %v2148
      %v2169 = vsub.f32 %v2099, %v2149
      %v2170 = vand.u32 2147483647, %v2160
      %v2171 = vand.u32 2147483647, %v2161
      %v2172 = vand.u32 2147483647, %v2162
      %v2173 = vand.u32 2147483647, %v2163
      %v2174 = vand.u32 2147483647, %v2164
      %v2175 = vand.u32 2147483647, %v2165
      %v2176 = vand.u32 2147483647, %v2166
      %v2177 = vand.u32 2147483647, %v2167
      %v2178 = vand.u32 2147483647, %v2168
      %v2179 = vand.u32 2147483647, %v2169
      %v2180 = vsub.f32 1.0, %v2170
      %v2181 = vsub.f32 1.0, %v2171
      %v2182 = vsub.f32 1.0, %v2172
      %v2183 = vsub.f32 1.0, %v2173
      %v2184 = vsub.f32 1.0, %v2174
      %v2185 = vsub.f32 1.0, %v2175
      %v2186 = vsub.f32 1.0, %v2176
      %v2187 = vsub.f32 1.0, %v2177
      %v2188 = vsub.f32 1.0, %v2178
      %v2189 = vsub.f32 1.0, %v2179
      %v2190 = vsub.f32 %v2110, %v2150
      %v2191 = vsub.f32 %v2111, %v2151
      %v2192 = vsub.f32 %v2112, %v2152
      %v2193 = vsub.f32 %v2113, %v2153
      %v2194 = vsub.f32 %v2114, %v2154
      %v2195 = vsub.f32 %v2115, %v2155
      %v2196 = vsub.f32 %v2116, %v2156
      %v2197 = vsub.f32 %v2117, %v2157
      %v2198 = vsub.f32 %v2118, %v2158
      %v2199 = vsub.f32 %v2119, %v2159
      %v2200 = vand.u32 2147483647, %v2190
      %v2201 = vand.u32 2147483647, %v2191
      %v2202 = vand.u32 2147483647, %v2192
      %v2203 = vand.u32 2147483647, %v2193
      %v2204 = vand.u32 2147483647, %v2194
      %v2205 = vand.u32 2147483647, %v2195
      %v2206 = vand.u32 2147483647, %v2196
      %v2207 = vand.u32 2147483647, %v2197
      %v2208 = vand.u32 2147483647, %v2198
      %v2209 = vand.u32 2147483647, %v2199
      %v2210 = vsub.f32 1.0, %v2200
      %v2211 = vsub.f32 1.0, %v2201
      %v2212 = vsub.f32 1.0, %v2202
      %v2213 = vsub.f32 1.0, %v2203
      %v2214 = vsub.f32 1.0, %v2204
      %v2215 = vsub.f32 1.0, %v2205
      %v2216 = vsub.f32 1.0, %v2206
      %v2217 = vsub.f32 1.0, %v2207
      %v2218 = vsub.f32 1.0, %v2208
      %v2219 = vsub.f32 1.0, %v2209
      %v2220 = vmul.f32 %v2180, %v2210
      %v2221 = vmul.f32 %v2181, %v2211
      %v2222 = vmul.f32 %v2182, %v2212
      %v2223 = vmul.f32 %v2183, %v2213
      %v2224 = vmul.f32 %v2184, %v2214
      %v2225 = vmul.f32 %v2185, %v2215
      %v2226 = vmul.f32 %v2186, %v2216
      %v2227 = vmul.f32 %v2187, %v2217
      %v2228 = vmul.f32 %v2188, %v2218
      %v2229 = vmul.f32 %v2189, %v2219
      %vm2230 = vcmp.ge.f32.partialorder %v2140, 0.0
      %vm2231 = vcmp.ge.f32.partialorder %v2141, 0.0
      %vm2232 = vcmp.ge.f32.partialorder %v2142, 0.0
      %vm2233 = vcmp.ge.f32.partialorder %v2143, 0.0
      %vm2234 = vcmp.ge.f32.partialorder %v2144, 0.0
      %vm2235 = vcmp.ge.f32.partialorder %v2145, 0.0
      %vm2236 = vcmp.ge.f32.partialorder %v2146, 0.0
      %vm2237 = vcmp.ge.f32.partialorder %v2147, 0.0
      %vm2238 = vcmp.ge.f32.partialorder %v2148, 0.0
      %vm2239 = vcmp.ge.f32.partialorder %v2149, 0.0
      %vm2240 = vcmp.le.f32.partialorder %v2140, 3.0
      %vm2241 = vcmp.le.f32.partialorder %v2141, 3.0
      %vm2242 = vcmp.le.f32.partialorder %v2142, 3.0
      %vm2243 = vcmp.le.f32.partialorder %v2143, 3.0
      %vm2244 = vcmp.le.f32.partialorder %v2144, 3.0
      %vm2245 = vcmp.le.f32.partialorder %v2145, 3.0
      %vm2246 = vcmp.le.f32.partialorder %v2146, 3.0
      %vm2247 = vcmp.le.f32.partialorder %v2147, 3.0
      %vm2248 = vcmp.le.f32.partialorder %v2148, 3.0
      %vm2249 = vcmp.le.f32.partialorder %v2149, 3.0
      %vm2250 = vmand %vm2230, %vm2240
      %vm2251 = vmand %vm2231, %vm2241
      %vm2252 = vmand %vm2232, %vm2242
      %vm2253 = vmand %vm2233, %vm2243
      %vm2254 = vmand %vm2234, %vm2244
      %vm2255 = vmand %vm2235, %vm2245
      %vm2256 = vmand %vm2236, %vm2246
      %vm2257 = vmand %vm2237, %vm2247
      %vm2258 = vmand %vm2238, %vm2248
      %vm2259 = vmand %vm2239, %vm2249
      %vm2260 = vcmp.ge.f32.partialorder %v2150, 0.0
      %vm2261 = vcmp.ge.f32.partialorder %v2151, 0.0
      %vm2262 = vcmp.ge.f32.partialorder %v2152, 0.0
      %vm2263 = vcmp.ge.f32.partialorder %v2153, 0.0
      %vm2264 = vcmp.ge.f32.partialorder %v2154, 0.0
      %vm2265 = vcmp.ge.f32.partialorder %v2155, 0.0
      %vm2266 = vcmp.ge.f32.partialorder %v2156, 0.0
      %vm2267 = vcmp.ge.f32.partialorder %v2157, 0.0
      %vm2268 = vcmp.ge.f32.partialorder %v2158, 0.0
      %vm2269 = vcmp.ge.f32.partialorder %v2159, 0.0
      %vm2270 = vmand %vm2250, %vm2260
      %vm2271 = vmand %vm2251, %vm2261
      %vm2272 = vmand %vm2252, %vm2262
      %vm2273 = vmand %vm2253, %vm2263
      %vm2274 = vmand %vm2254, %vm2264
      %vm2275 = vmand %vm2255, %vm2265
      %vm2276 = vmand %vm2256, %vm2266
      %vm2277 = vmand %vm2257, %vm2267
      %vm2278 = vmand %vm2258, %vm2268
      %vm2279 = vmand %vm2259, %vm2269
      %vm2280 = vcmp.le.f32.partialorder %v2150, 3.0
      %vm2281 = vcmp.le.f32.partialorder %v2151, 3.0
      %vm2282 = vcmp.le.f32.partialorder %v2152, 3.0
      %vm2283 = vcmp.le.f32.partialorder %v2153, 3.0
      %vm2284 = vcmp.le.f32.partialorder %v2154, 3.0
      %vm2285 = vcmp.le.f32.partialorder %v2155, 3.0
      %vm2286 = vcmp.le.f32.partialorder %v2156, 3.0
      %vm2287 = vcmp.le.f32.partialorder %v2157, 3.0
      %vm2288 = vcmp.le.f32.partialorder %v2158, 3.0
      %vm2289 = vcmp.le.f32.partialorder %v2159, 3.0
      %vm2290 = vmand %vm2270, %vm2280
      %vm2291 = vmand %vm2271, %vm2281
      %vm2292 = vmand %vm2272, %vm2282
      %vm2293 = vmand %vm2273, %vm2283
      %vm2294 = vmand %vm2274, %vm2284
      %vm2295 = vmand %vm2275, %vm2285
      %vm2296 = vmand %vm2276, %vm2286
      %vm2297 = vmand %vm2277, %vm2287
      %vm2298 = vmand %vm2278, %vm2288
      %vm2299 = vmand %vm2279, %vm2289
      %v2300 = vsel %vm2290, 1, 0
      %v2301 = vsel %vm2291, 1, 0
      %v2302 = vsel %vm2292, 1, 0
      %v2303 = vsel %vm2293, 1, 0
      %v2304 = vsel %vm2294, 1, 0
      %v2305 = vsel %vm2295, 1, 0
      %v2306 = vsel %vm2296, 1, 0
      %v2307 = vsel %vm2297, 1, 0
      %v2308 = vsel %vm2298, 1, 0
      %v2309 = vsel %vm2299, 1, 0
      %v2310 = vcvt.s32.f32 %v2300
      %v2311 = vcvt.s32.f32 %v2301
      %v2312 = vcvt.s32.f32 %v2302
      %v2313 = vcvt.s32.f32 %v2303
      %v2314 = vcvt.s32.f32 %v2304
      %v2315 = vcvt.s32.f32 %v2305
      %v2316 = vcvt.s32.f32 %v2306
      %v2317 = vcvt.s32.f32 %v2307
      %v2318 = vcvt.s32.f32 %v2308
      %v2319 = vcvt.s32.f32 %v2309
      %v2320 = vmul.f32 %v2220, %v2310
      %v2321 = vmul.f32 %v2221, %v2311
      %v2322 = vmul.f32 %v2222, %v2312
      %v2323 = vmul.f32 %v2223, %v2313
      %v2324 = vmul.f32 %v2224, %v2314
      %v2325 = vmul.f32 %v2225, %v2315
      %v2326 = vmul.f32 %v2226, %v2316
      %v2327 = vmul.f32 %v2227, %v2317
      %v2328 = vmul.f32 %v2228, %v2318
      %v2329 = vmul.f32 %v2229, %v2319
      %v2330 = vmul.f32 %v2320, %v278
      %v2331 = vmul.f32 %v2321, %v279
      %v2332 = vmul.f32 %v2322, %v280
      %v2333 = vmul.f32 %v2323, %v281
      %v2334 = vmul.f32 %v2324, %v282
      %v2335 = vmul.f32 %v2325, %v283
      %v2336 = vmul.f32 %v2326, %v284
      %v2337 = vmul.f32 %v2327, %v285
      %v2338 = vmul.f32 %v2328, %v286
      %v2339 = vmul.f32 %v2329, %v287
      %v2340 = vmax.f32 %v2150, 0.0
      %v2341 = vmax.f32 %v2151, 0.0
      %v2342 = vmax.f32 %v2152, 0.0
      %v2343 = vmax.f32 %v2153, 0.0
      %v2344 = vmax.f32 %v2154, 0.0
      %v2345 = vmax.f32 %v2155, 0.0
      %v2346 = vmax.f32 %v2156, 0.0
      %v2347 = vmax.f32 %v2157, 0.0
      %v2348 = vmax.f32 %v2158, 0.0
      %v2349 = vmax.f32 %v2159, 0.0
      %v2350 = vmin.f32 %v2340, 3.0
      %v2351 = vmin.f32 %v2341, 3.0
      %v2352 = vmin.f32 %v2342, 3.0
      %v2353 = vmin.f32 %v2343, 3.0
      %v2354 = vmin.f32 %v2344, 3.0
      %v2355 = vmin.f32 %v2345, 3.0
      %v2356 = vmin.f32 %v2346, 3.0
      %v2357 = vmin.f32 %v2347, 3.0
      %v2358 = vmin.f32 %v2348, 3.0
      %v2359 = vmin.f32 %v2349, 3.0
      %v2360 = vmul.f32 %v2350, 4.0
      %v2361 = vmul.f32 %v2351, 4.0
      %v2362 = vmul.f32 %v2352, 4.0
      %v2363 = vmul.f32 %v2353, 4.0
      %v2364 = vmul.f32 %v2354, 4.0
      %v2365 = vmul.f32 %v2355, 4.0
      %v2366 = vmul.f32 %v2356, 4.0
      %v2367 = vmul.f32 %v2357, 4.0
      %v2368 = vmul.f32 %v2358, 4.0
      %v2369 = vmul.f32 %v2359, 4.0
      %v2370 = vmax.f32 %v2140, 0.0
      %v2371 = vmax.f32 %v2141, 0.0
      %v2372 = vmax.f32 %v2142, 0.0
      %v2373 = vmax.f32 %v2143, 0.0
      %v2374 = vmax.f32 %v2144, 0.0
      %v2375 = vmax.f32 %v2145, 0.0
      %v2376 = vmax.f32 %v2146, 0.0
      %v2377 = vmax.f32 %v2147, 0.0
      %v2378 = vmax.f32 %v2148, 0.0
      %v2379 = vmax.f32 %v2149, 0.0
      %v2380 = vmin.f32 %v2370, 3.0
      %v2381 = vmin.f32 %v2371, 3.0
      %v2382 = vmin.f32 %v2372, 3.0
      %v2383 = vmin.f32 %v2373, 3.0
      %v2384 = vmin.f32 %v2374, 3.0
      %v2385 = vmin.f32 %v2375, 3.0
      %v2386 = vmin.f32 %v2376, 3.0
      %v2387 = vmin.f32 %v2377, 3.0
      %v2388 = vmin.f32 %v2378, 3.0
      %v2389 = vmin.f32 %v2379, 3.0
      %v2390 = vadd.f32 %v2360, %v2380
      %v2391 = vadd.f32 %v2361, %v2381
      %v2392 = vadd.f32 %v2362, %v2382
      %v2393 = vadd.f32 %v2363, %v2383
      %v2394 = vadd.f32 %v2364, %v2384
      %v2395 = vadd.f32 %v2365, %v2385
      %v2396 = vadd.f32 %v2366, %v2386
      %v2397 = vadd.f32 %v2367, %v2387
      %v2398 = vadd.f32 %v2368, %v2388
      %v2399 = vadd.f32 %v2369, %v2389
      %v2400 = vcvt.f32.s32.to.zero.pseudo %v2390
      %v2401 = vcvt.f32.s32.to.zero.pseudo %v2391
      %v2402 = vcvt.f32.s32.to.zero.pseudo %v2392
      %v2403 = vcvt.f32.s32.to.zero.pseudo %v2393
      %v2404 = vcvt.f32.s32.to.zero.pseudo %v2394
      %v2405 = vcvt.f32.s32.to.zero.pseudo %v2395
      %v2406 = vcvt.f32.s32.to.zero.pseudo %v2396
      %v2407 = vcvt.f32.s32.to.zero.pseudo %v2397
      %v2408 = vcvt.f32.s32.to.zero.pseudo %v2398
      %v2409 = vcvt.f32.s32.to.zero.pseudo %v2399
      %2410 = vset.pattern.permute.xlu0 2
      %2411 = vperm.xlu0 %2410, %v2400
      %v2412 = vpop.permute.xlu0 %2411
      %2413 = vset.pattern.permute.xlu0 2
      %2414 = vperm.xlu0 %2413, %v2401
      %v2415 = vpop.permute.xlu0 %2414
      %2416 = vset.pattern.permute.xlu0 2
      %2417 = vperm.xlu0 %2416, %v2402
      %v2418 = vpop.permute.xlu0 %2417
      %2419 = vset.pattern.permute.xlu0 2
      %2420 = vperm.xlu0 %2419, %v2403
      %v2421 = vpop.permute.xlu0 %2420
      %2422 = vset.pattern.permute.xlu0 2
      %2423 = vperm.xlu0 %2422, %v2404
      %v2424 = vpop.permute.xlu0 %2423
      %2425 = vset.pattern.permute.xlu0 2
      %2426 = vperm.xlu0 %2425, %v2405
      %v2427 = vpop.permute.xlu0 %2426
      %2428 = vset.pattern.permute.xlu0 2
      %2429 = vperm.xlu0 %2428, %v2406
      %v2430 = vpop.permute.xlu0 %2429
      %2431 = vset.pattern.permute.xlu0 2
      %2432 = vperm.xlu0 %2431, %v2407
      %v2433 = vpop.permute.xlu0 %2432
      %2434 = vset.pattern.permute.xlu0 2
      %2435 = vperm.xlu0 %2434, %v2408
      %v2436 = vpop.permute.xlu0 %2435
      %2437 = vset.pattern.permute.xlu0 2
      %2438 = vperm.xlu0 %2437, %v2409
      %v2439 = vpop.permute.xlu0 %2438
      %vm2440 = vcmp.eq.s32.totalorder %v299, %v2412
      %vm2441 = vcmp.eq.s32.totalorder %v299, %v2415
      %vm2442 = vcmp.eq.s32.totalorder %v299, %v2418
      %vm2443 = vcmp.eq.s32.totalorder %v299, %v2421
      %vm2444 = vcmp.eq.s32.totalorder %v299, %v2424
      %vm2445 = vcmp.eq.s32.totalorder %v299, %v2427
      %vm2446 = vcmp.eq.s32.totalorder %v299, %v2430
      %vm2447 = vcmp.eq.s32.totalorder %v299, %v2433
      %vm2448 = vcmp.eq.s32.totalorder %v299, %v2436
      %vm2449 = vcmp.eq.s32.totalorder %v299, %v2439
      %v2450 = vsel %vm2440, 1, 0
      %v2451 = vsel %vm2441, 1, 0
      %v2452 = vsel %vm2442, 1, 0
      %v2453 = vsel %vm2443, 1, 0
      %v2454 = vsel %vm2444, 1, 0
      %v2455 = vsel %vm2445, 1, 0
      %v2456 = vsel %vm2446, 1, 0
      %v2457 = vsel %vm2447, 1, 0
      %v2458 = vsel %vm2448, 1, 0
      %v2459 = vsel %vm2449, 1, 0
      %v2460 = vcvt.s32.f32 %v2450
      %v2461 = vcvt.s32.f32 %v2451
      %v2462 = vcvt.s32.f32 %v2452
      %v2463 = vcvt.s32.f32 %v2453
      %v2464 = vcvt.s32.f32 %v2454
      %v2465 = vcvt.s32.f32 %v2455
      %v2466 = vcvt.s32.f32 %v2456
      %v2467 = vcvt.s32.f32 %v2457
      %v2468 = vcvt.s32.f32 %v2458
      %v2469 = vcvt.s32.f32 %v2459
      %2471 = vset.pattern.permute.xlu0 2
      %2472 = vperm.xlu0 %2471, %v2330
      %v2473 = vpop.permute.xlu0 %2472
      %2476 = vset.pattern.permute.xlu0 2
      %2477 = vperm.xlu0 %2476, %v2331
      %v2478 = vpop.permute.xlu0 %2477
      %2481 = vset.pattern.permute.xlu0 2
      %2482 = vperm.xlu0 %2481, %v2332
      %v2483 = vpop.permute.xlu0 %2482
      %2486 = vset.pattern.permute.xlu0 2
      %2487 = vperm.xlu0 %2486, %v2333
      %v2488 = vpop.permute.xlu0 %2487
      %2491 = vset.pattern.permute.xlu0 2
      %2492 = vperm.xlu0 %2491, %v2334
      %v2493 = vpop.permute.xlu0 %2492
      %2496 = vset.pattern.permute.xlu0 2
      %2497 = vperm.xlu0 %2496, %v2335
      %v2498 = vpop.permute.xlu0 %2497
      %2501 = vset.pattern.permute.xlu0 2
      %2502 = vperm.xlu0 %2501, %v2336
      %v2503 = vpop.permute.xlu0 %2502
      %2506 = vset.pattern.permute.xlu0 2
      %2507 = vperm.xlu0 %2506, %v2337
      %v2508 = vpop.permute.xlu0 %2507
      %2511 = vset.pattern.permute.xlu0 2
      %2512 = vperm.xlu0 %2511, %v2338
      %v2513 = vpop.permute.xlu0 %2512
      %2516 = vset.pattern.permute.xlu0 2
      %2517 = vperm.xlu0 %2516, %v2339
      %v2518 = vpop.permute.xlu0 %2517
      %v2520 = vmul.f32 %v2473, %v2460
      %v2521 = vmul.f32 %v2478, %v2461
      %v2522 = vmul.f32 %v2483, %v2462
      %v2523 = vmul.f32 %v2488, %v2463
      %v2524 = vmul.f32 %v2493, %v2464
      %v2525 = vmul.f32 %v2498, %v2465
      %v2526 = vmul.f32 %v2503, %v2466
      %v2527 = vmul.f32 %v2508, %v2467
      %v2528 = vmul.f32 %v2513, %v2468
      %v2529 = vmul.f32 %v2518, %v2469
      %v2530 = vadd.f32 %v2520, 0.0
      %v2531 = vadd.f32 %v2521, 0.0
      %v2532 = vadd.f32 %v2522, 0.0
      %v2533 = vadd.f32 %v2523, 0.0
      %v2534 = vadd.f32 %v2524, 0.0
      %v2535 = vadd.f32 %v2525, 0.0
      %v2536 = vadd.f32 %v2526, 0.0
      %v2537 = vadd.f32 %v2527, 0.0
      %v2538 = vadd.f32 %v2528, 0.0
      %v2539 = vadd.f32 %v2529, 0.0
      %v2540 = vadd.f32 %v2120, 1.0
      %v2541 = vadd.f32 %v2121, 1.0
      %v2542 = vadd.f32 %v2122, 1.0
      %v2543 = vadd.f32 %v2123, 1.0
      %v2544 = vadd.f32 %v2124, 1.0
      %v2545 = vadd.f32 %v2125, 1.0
      %v2546 = vadd.f32 %v2126, 1.0
      %v2547 = vadd.f32 %v2127, 1.0
      %v2548 = vadd.f32 %v2128, 1.0
      %v2549 = vadd.f32 %v2129, 1.0
      %v2550 = vsub.f32 %v2090, %v2540
      %v2551 = vsub.f32 %v2091, %v2541
      %v2552 = vsub.f32 %v2092, %v2542
      %v2553 = vsub.f32 %v2093, %v2543
      %v2554 = vsub.f32 %v2094, %v2544
      %v2555 = vsub.f32 %v2095, %v2545
      %v2556 = vsub.f32 %v2096, %v2546
      %v2557 = vsub.f32 %v2097, %v2547
      %v2558 = vsub.f32 %v2098, %v2548
      %v2559 = vsub.f32 %v2099, %v2549
      %v2560 = vand.u32 2147483647, %v2550
      %v2561 = vand.u32 2147483647, %v2551
      %v2562 = vand.u32 2147483647, %v2552
      %v2563 = vand.u32 2147483647, %v2553
      %v2564 = vand.u32 2147483647, %v2554
      %v2565 = vand.u32 2147483647, %v2555
      %v2566 = vand.u32 2147483647, %v2556
      %v2567 = vand.u32 2147483647, %v2557
      %v2568 = vand.u32 2147483647, %v2558
      %v2569 = vand.u32 2147483647, %v2559
      %v2570 = vsub.f32 1.0, %v2560
      %v2571 = vsub.f32 1.0, %v2561
      %v2572 = vsub.f32 1.0, %v2562
      %v2573 = vsub.f32 1.0, %v2563
      %v2574 = vsub.f32 1.0, %v2564
      %v2575 = vsub.f32 1.0, %v2565
      %v2576 = vsub.f32 1.0, %v2566
      %v2577 = vsub.f32 1.0, %v2567
      %v2578 = vsub.f32 1.0, %v2568
      %v2579 = vsub.f32 1.0, %v2569
      %v2580 = vmul.f32 %v2570, %v2210
      %v2581 = vmul.f32 %v2571, %v2211
      %v2582 = vmul.f32 %v2572, %v2212
      %v2583 = vmul.f32 %v2573, %v2213
      %v2584 = vmul.f32 %v2574, %v2214
      %v2585 = vmul.f32 %v2575, %v2215
      %v2586 = vmul.f32 %v2576, %v2216
      %v2587 = vmul.f32 %v2577, %v2217
      %v2588 = vmul.f32 %v2578, %v2218
      %v2589 = vmul.f32 %v2579, %v2219
      %vm2590 = vcmp.ge.f32.partialorder %v2540, 0.0
      %vm2591 = vcmp.ge.f32.partialorder %v2541, 0.0
      %vm2592 = vcmp.ge.f32.partialorder %v2542, 0.0
      %vm2593 = vcmp.ge.f32.partialorder %v2543, 0.0
      %vm2594 = vcmp.ge.f32.partialorder %v2544, 0.0
      %vm2595 = vcmp.ge.f32.partialorder %v2545, 0.0
      %vm2596 = vcmp.ge.f32.partialorder %v2546, 0.0
      %vm2597 = vcmp.ge.f32.partialorder %v2547, 0.0
      %vm2598 = vcmp.ge.f32.partialorder %v2548, 0.0
      %vm2599 = vcmp.ge.f32.partialorder %v2549, 0.0
      %vm2600 = vcmp.le.f32.partialorder %v2540, 3.0
      %vm2601 = vcmp.le.f32.partialorder %v2541, 3.0
      %vm2602 = vcmp.le.f32.partialorder %v2542, 3.0
      %vm2603 = vcmp.le.f32.partialorder %v2543, 3.0
      %vm2604 = vcmp.le.f32.partialorder %v2544, 3.0
      %vm2605 = vcmp.le.f32.partialorder %v2545, 3.0
      %vm2606 = vcmp.le.f32.partialorder %v2546, 3.0
      %vm2607 = vcmp.le.f32.partialorder %v2547, 3.0
      %vm2608 = vcmp.le.f32.partialorder %v2548, 3.0
      %vm2609 = vcmp.le.f32.partialorder %v2549, 3.0
      %vm2610 = vmand %vm2590, %vm2600
      %vm2611 = vmand %vm2591, %vm2601
      %vm2612 = vmand %vm2592, %vm2602
      %vm2613 = vmand %vm2593, %vm2603
      %vm2614 = vmand %vm2594, %vm2604
      %vm2615 = vmand %vm2595, %vm2605
      %vm2616 = vmand %vm2596, %vm2606
      %vm2617 = vmand %vm2597, %vm2607
      %vm2618 = vmand %vm2598, %vm2608
      %vm2619 = vmand %vm2599, %vm2609
      %vm2620 = vmand %vm2610, %vm2260
      %vm2621 = vmand %vm2611, %vm2261
      %vm2622 = vmand %vm2612, %vm2262
      %vm2623 = vmand %vm2613, %vm2263
      %vm2624 = vmand %vm2614, %vm2264
      %vm2625 = vmand %vm2615, %vm2265
      %vm2626 = vmand %vm2616, %vm2266
      %vm2627 = vmand %vm2617, %vm2267
      %vm2628 = vmand %vm2618, %vm2268
      %vm2629 = vmand %vm2619, %vm2269
      %vm2630 = vmand %vm2620, %vm2280
      %vm2631 = vmand %vm2621, %vm2281
      %vm2632 = vmand %vm2622, %vm2282
      %vm2633 = vmand %vm2623, %vm2283
      %vm2634 = vmand %vm2624, %vm2284
      %vm2635 = vmand %vm2625, %vm2285
      %vm2636 = vmand %vm2626, %vm2286
      %vm2637 = vmand %vm2627, %vm2287
      %vm2638 = vmand %vm2628, %vm2288
      %vm2639 = vmand %vm2629, %vm2289
      %v2640 = vsel %vm2630, 1, 0
      %v2641 = vsel %vm2631, 1, 0
      %v2642 = vsel %vm2632, 1, 0
      %v2643 = vsel %vm2633, 1, 0
      %v2644 = vsel %vm2634, 1, 0
      %v2645 = vsel %vm2635, 1, 0
      %v2646 = vsel %vm2636, 1, 0
      %v2647 = vsel %vm2637, 1, 0
      %v2648 = vsel %vm2638, 1, 0
      %v2649 = vsel %vm2639, 1, 0
      %v2650 = vcvt.s32.f32 %v2640
      %v2651 = vcvt.s32.f32 %v2641
      %v2652 = vcvt.s32.f32 %v2642
      %v2653 = vcvt.s32.f32 %v2643
      %v2654 = vcvt.s32.f32 %v2644
      %v2655 = vcvt.s32.f32 %v2645
      %v2656 = vcvt.s32.f32 %v2646
      %v2657 = vcvt.s32.f32 %v2647
      %v2658 = vcvt.s32.f32 %v2648
      %v2659 = vcvt.s32.f32 %v2649
      %v2660 = vmul.f32 %v2580, %v2650
      %v2661 = vmul.f32 %v2581, %v2651
      %v2662 = vmul.f32 %v2582, %v2652
      %v2663 = vmul.f32 %v2583, %v2653
      %v2664 = vmul.f32 %v2584, %v2654
      %v2665 = vmul.f32 %v2585, %v2655
      %v2666 = vmul.f32 %v2586, %v2656
      %v2667 = vmul.f32 %v2587, %v2657
      %v2668 = vmul.f32 %v2588, %v2658
      %v2669 = vmul.f32 %v2589, %v2659
      %v2670 = vmul.f32 %v2660, %v278
      %v2671 = vmul.f32 %v2661, %v279
      %v2672 = vmul.f32 %v2662, %v280
      %v2673 = vmul.f32 %v2663, %v281
      %v2674 = vmul.f32 %v2664, %v282
      %v2675 = vmul.f32 %v2665, %v283
      %v2676 = vmul.f32 %v2666, %v284
      %v2677 = vmul.f32 %v2667, %v285
      %v2678 = vmul.f32 %v2668, %v286
      %v2679 = vmul.f32 %v2669, %v287
      %v2680 = vmax.f32 %v2540, 0.0
      %v2681 = vmax.f32 %v2541, 0.0
      %v2682 = vmax.f32 %v2542, 0.0
      %v2683 = vmax.f32 %v2543, 0.0
      %v2684 = vmax.f32 %v2544, 0.0
      %v2685 = vmax.f32 %v2545, 0.0
      %v2686 = vmax.f32 %v2546, 0.0
      %v2687 = vmax.f32 %v2547, 0.0
      %v2688 = vmax.f32 %v2548, 0.0
      %v2689 = vmax.f32 %v2549, 0.0
      %v2690 = vmin.f32 %v2680, 3.0
      %v2691 = vmin.f32 %v2681, 3.0
      %v2692 = vmin.f32 %v2682, 3.0
      %v2693 = vmin.f32 %v2683, 3.0
      %v2694 = vmin.f32 %v2684, 3.0
      %v2695 = vmin.f32 %v2685, 3.0
      %v2696 = vmin.f32 %v2686, 3.0
      %v2697 = vmin.f32 %v2687, 3.0
      %v2698 = vmin.f32 %v2688, 3.0
      %v2699 = vmin.f32 %v2689, 3.0
      %v2700 = vadd.f32 %v2360, %v2690
      %v2701 = vadd.f32 %v2361, %v2691
      %v2702 = vadd.f32 %v2362, %v2692
      %v2703 = vadd.f32 %v2363, %v2693
      %v2704 = vadd.f32 %v2364, %v2694
      %v2705 = vadd.f32 %v2365, %v2695
      %v2706 = vadd.f32 %v2366, %v2696
      %v2707 = vadd.f32 %v2367, %v2697
      %v2708 = vadd.f32 %v2368, %v2698
      %v2709 = vadd.f32 %v2369, %v2699
      %v2710 = vcvt.f32.s32.to.zero.pseudo %v2700
      %v2711 = vcvt.f32.s32.to.zero.pseudo %v2701
      %v2712 = vcvt.f32.s32.to.zero.pseudo %v2702
      %v2713 = vcvt.f32.s32.to.zero.pseudo %v2703
      %v2714 = vcvt.f32.s32.to.zero.pseudo %v2704
      %v2715 = vcvt.f32.s32.to.zero.pseudo %v2705
      %v2716 = vcvt.f32.s32.to.zero.pseudo %v2706
      %v2717 = vcvt.f32.s32.to.zero.pseudo %v2707
      %v2718 = vcvt.f32.s32.to.zero.pseudo %v2708
      %v2719 = vcvt.f32.s32.to.zero.pseudo %v2709
      %2720 = vset.pattern.permute.xlu0 2
      %2721 = vperm.xlu0 %2720, %v2710
      %v2722 = vpop.permute.xlu0 %2721
      %2723 = vset.pattern.permute.xlu0 2
      %2724 = vperm.xlu0 %2723, %v2711
      %v2725 = vpop.permute.xlu0 %2724
      %2726 = vset.pattern.permute.xlu0 2
      %2727 = vperm.xlu0 %2726, %v2712
      %v2728 = vpop.permute.xlu0 %2727
      %2729 = vset.pattern.permute.xlu0 2
      %2730 = vperm.xlu0 %2729, %v2713
      %v2731 = vpop.permute.xlu0 %2730
      %2732 = vset.pattern.permute.xlu0 2
      %2733 = vperm.xlu0 %2732, %v2714
      %v2734 = vpop.permute.xlu0 %2733
      %2735 = vset.pattern.permute.xlu0 2
      %2736 = vperm.xlu0 %2735, %v2715
      %v2737 = vpop.permute.xlu0 %2736
      %2738 = vset.pattern.permute.xlu0 2
      %2739 = vperm.xlu0 %2738, %v2716
      %v2740 = vpop.permute.xlu0 %2739
      %2741 = vset.pattern.permute.xlu0 2
      %2742 = vperm.xlu0 %2741, %v2717
      %v2743 = vpop.permute.xlu0 %2742
      %2744 = vset.pattern.permute.xlu0 2
      %2745 = vperm.xlu0 %2744, %v2718
      %v2746 = vpop.permute.xlu0 %2745
      %2747 = vset.pattern.permute.xlu0 2
      %2748 = vperm.xlu0 %2747, %v2719
      %v2749 = vpop.permute.xlu0 %2748
      %vm2750 = vcmp.eq.s32.totalorder %v299, %v2722
      %vm2751 = vcmp.eq.s32.totalorder %v299, %v2725
      %vm2752 = vcmp.eq.s32.totalorder %v299, %v2728
      %vm2753 = vcmp.eq.s32.totalorder %v299, %v2731
      %vm2754 = vcmp.eq.s32.totalorder %v299, %v2734
      %vm2755 = vcmp.eq.s32.totalorder %v299, %v2737
      %vm2756 = vcmp.eq.s32.totalorder %v299, %v2740
      %vm2757 = vcmp.eq.s32.totalorder %v299, %v2743
      %vm2758 = vcmp.eq.s32.totalorder %v299, %v2746
      %vm2759 = vcmp.eq.s32.totalorder %v299, %v2749
      %v2760 = vsel %vm2750, 1, 0
      %v2761 = vsel %vm2751, 1, 0
      %v2762 = vsel %vm2752, 1, 0
      %v2763 = vsel %vm2753, 1, 0
      %v2764 = vsel %vm2754, 1, 0
      %v2765 = vsel %vm2755, 1, 0
      %v2766 = vsel %vm2756, 1, 0
      %v2767 = vsel %vm2757, 1, 0
      %v2768 = vsel %vm2758, 1, 0
      %v2769 = vsel %vm2759, 1, 0
      %v2770 = vcvt.s32.f32 %v2760
      %v2771 = vcvt.s32.f32 %v2761
      %v2772 = vcvt.s32.f32 %v2762
      %v2773 = vcvt.s32.f32 %v2763
      %v2774 = vcvt.s32.f32 %v2764
      %v2775 = vcvt.s32.f32 %v2765
      %v2776 = vcvt.s32.f32 %v2766
      %v2777 = vcvt.s32.f32 %v2767
      %v2778 = vcvt.s32.f32 %v2768
      %v2779 = vcvt.s32.f32 %v2769
      %2781 = vset.pattern.permute.xlu0 2
      %2782 = vperm.xlu0 %2781, %v2670
      %v2783 = vpop.permute.xlu0 %2782
      %2786 = vset.pattern.permute.xlu0 2
      %2787 = vperm.xlu0 %2786, %v2671
      %v2788 = vpop.permute.xlu0 %2787
      %2791 = vset.pattern.permute.xlu0 2
      %2792 = vperm.xlu0 %2791, %v2672
      %v2793 = vpop.permute.xlu0 %2792
      %2796 = vset.pattern.permute.xlu0 2
      %2797 = vperm.xlu0 %2796, %v2673
      %v2798 = vpop.permute.xlu0 %2797
      %2801 = vset.pattern.permute.xlu0 2
      %2802 = vperm.xlu0 %2801, %v2674
      %v2803 = vpop.permute.xlu0 %2802
      %2806 = vset.pattern.permute.xlu0 2
      %2807 = vperm.xlu0 %2806, %v2675
      %v2808 = vpop.permute.xlu0 %2807
      %2811 = vset.pattern.permute.xlu0 2
      %2812 = vperm.xlu0 %2811, %v2676
      %v2813 = vpop.permute.xlu0 %2812
      %2816 = vset.pattern.permute.xlu0 2
      %2817 = vperm.xlu0 %2816, %v2677
      %v2818 = vpop.permute.xlu0 %2817
      %2821 = vset.pattern.permute.xlu0 2
      %2822 = vperm.xlu0 %2821, %v2678
      %v2823 = vpop.permute.xlu0 %2822
      %2826 = vset.pattern.permute.xlu0 2
      %2827 = vperm.xlu0 %2826, %v2679
      %v2828 = vpop.permute.xlu0 %2827
      %v2830 = vmul.f32 %v2783, %v2770
      %v2831 = vmul.f32 %v2788, %v2771
      %v2832 = vmul.f32 %v2793, %v2772
      %v2833 = vmul.f32 %v2798, %v2773
      %v2834 = vmul.f32 %v2803, %v2774
      %v2835 = vmul.f32 %v2808, %v2775
      %v2836 = vmul.f32 %v2813, %v2776
      %v2837 = vmul.f32 %v2818, %v2777
      %v2838 = vmul.f32 %v2823, %v2778
      %v2839 = vmul.f32 %v2828, %v2779
      %v2840 = vadd.f32 %v2530, %v2830
      %v2841 = vadd.f32 %v2531, %v2831
      %v2842 = vadd.f32 %v2532, %v2832
      %v2843 = vadd.f32 %v2533, %v2833
      %v2844 = vadd.f32 %v2534, %v2834
      %v2845 = vadd.f32 %v2535, %v2835
      %v2846 = vadd.f32 %v2536, %v2836
      %v2847 = vadd.f32 %v2537, %v2837
      %v2848 = vadd.f32 %v2538, %v2838
      %v2849 = vadd.f32 %v2539, %v2839
      %v2850 = vadd.f32 %v2130, 1.0
      %v2851 = vadd.f32 %v2131, 1.0
      %v2852 = vadd.f32 %v2132, 1.0
      %v2853 = vadd.f32 %v2133, 1.0
      %v2854 = vadd.f32 %v2134, 1.0
      %v2855 = vadd.f32 %v2135, 1.0
      %v2856 = vadd.f32 %v2136, 1.0
      %v2857 = vadd.f32 %v2137, 1.0
      %v2858 = vadd.f32 %v2138, 1.0
      %v2859 = vadd.f32 %v2139, 1.0
      %v2860 = vsub.f32 %v2110, %v2850
      %v2861 = vsub.f32 %v2111, %v2851
      %v2862 = vsub.f32 %v2112, %v2852
      %v2863 = vsub.f32 %v2113, %v2853
      %v2864 = vsub.f32 %v2114, %v2854
      %v2865 = vsub.f32 %v2115, %v2855
      %v2866 = vsub.f32 %v2116, %v2856
      %v2867 = vsub.f32 %v2117, %v2857
      %v2868 = vsub.f32 %v2118, %v2858
      %v2869 = vsub.f32 %v2119, %v2859
      %v2870 = vand.u32 2147483647, %v2860
      %v2871 = vand.u32 2147483647, %v2861
      %v2872 = vand.u32 2147483647, %v2862
      %v2873 = vand.u32 2147483647, %v2863
      %v2874 = vand.u32 2147483647, %v2864
      %v2875 = vand.u32 2147483647, %v2865
      %v2876 = vand.u32 2147483647, %v2866
      %v2877 = vand.u32 2147483647, %v2867
      %v2878 = vand.u32 2147483647, %v2868
      %v2879 = vand.u32 2147483647, %v2869
      %v2880 = vsub.f32 1.0, %v2870
      %v2881 = vsub.f32 1.0, %v2871
      %v2882 = vsub.f32 1.0, %v2872
      %v2883 = vsub.f32 1.0, %v2873
      %v2884 = vsub.f32 1.0, %v2874
      %v2885 = vsub.f32 1.0, %v2875
      %v2886 = vsub.f32 1.0, %v2876
      %v2887 = vsub.f32 1.0, %v2877
      %v2888 = vsub.f32 1.0, %v2878
      %v2889 = vsub.f32 1.0, %v2879
      %v2890 = vmul.f32 %v2180, %v2880
      %v2891 = vmul.f32 %v2181, %v2881
      %v2892 = vmul.f32 %v2182, %v2882
      %v2893 = vmul.f32 %v2183, %v2883
      %v2894 = vmul.f32 %v2184, %v2884
      %v2895 = vmul.f32 %v2185, %v2885
      %v2896 = vmul.f32 %v2186, %v2886
      %v2897 = vmul.f32 %v2187, %v2887
      %v2898 = vmul.f32 %v2188, %v2888
      %v2899 = vmul.f32 %v2189, %v2889
      %vm2900 = vcmp.ge.f32.partialorder %v2850, 0.0
      %vm2901 = vcmp.ge.f32.partialorder %v2851, 0.0
      %vm2902 = vcmp.ge.f32.partialorder %v2852, 0.0
      %vm2903 = vcmp.ge.f32.partialorder %v2853, 0.0
      %vm2904 = vcmp.ge.f32.partialorder %v2854, 0.0
      %vm2905 = vcmp.ge.f32.partialorder %v2855, 0.0
      %vm2906 = vcmp.ge.f32.partialorder %v2856, 0.0
      %vm2907 = vcmp.ge.f32.partialorder %v2857, 0.0
      %vm2908 = vcmp.ge.f32.partialorder %v2858, 0.0
      %vm2909 = vcmp.ge.f32.partialorder %v2859, 0.0
      %vm2910 = vmand %vm2250, %vm2900
      %vm2911 = vmand %vm2251, %vm2901
      %vm2912 = vmand %vm2252, %vm2902
      %vm2913 = vmand %vm2253, %vm2903
      %vm2914 = vmand %vm2254, %vm2904
      %vm2915 = vmand %vm2255, %vm2905
      %vm2916 = vmand %vm2256, %vm2906
      %vm2917 = vmand %vm2257, %vm2907
      %vm2918 = vmand %vm2258, %vm2908
      %vm2919 = vmand %vm2259, %vm2909
      %vm2920 = vcmp.le.f32.partialorder %v2850, 3.0
      %vm2921 = vcmp.le.f32.partialorder %v2851, 3.0
      %vm2922 = vcmp.le.f32.partialorder %v2852, 3.0
      %vm2923 = vcmp.le.f32.partialorder %v2853, 3.0
      %vm2924 = vcmp.le.f32.partialorder %v2854, 3.0
      %vm2925 = vcmp.le.f32.partialorder %v2855, 3.0
      %vm2926 = vcmp.le.f32.partialorder %v2856, 3.0
      %vm2927 = vcmp.le.f32.partialorder %v2857, 3.0
      %vm2928 = vcmp.le.f32.partialorder %v2858, 3.0
      %vm2929 = vcmp.le.f32.partialorder %v2859, 3.0
      %vm2930 = vmand %vm2910, %vm2920
      %vm2931 = vmand %vm2911, %vm2921
      %vm2932 = vmand %vm2912, %vm2922
      %vm2933 = vmand %vm2913, %vm2923
      %vm2934 = vmand %vm2914, %vm2924
      %vm2935 = vmand %vm2915, %vm2925
      %vm2936 = vmand %vm2916, %vm2926
      %vm2937 = vmand %vm2917, %vm2927
      %vm2938 = vmand %vm2918, %vm2928
      %vm2939 = vmand %vm2919, %vm2929
      %v2940 = vsel %vm2930, 1, 0
      %v2941 = vsel %vm2931, 1, 0
      %v2942 = vsel %vm2932, 1, 0
      %v2943 = vsel %vm2933, 1, 0
      %v2944 = vsel %vm2934, 1, 0
      %v2945 = vsel %vm2935, 1, 0
      %v2946 = vsel %vm2936, 1, 0
      %v2947 = vsel %vm2937, 1, 0
      %v2948 = vsel %vm2938, 1, 0
      %v2949 = vsel %vm2939, 1, 0
      %v2950 = vcvt.s32.f32 %v2940
      %v2951 = vcvt.s32.f32 %v2941
      %v2952 = vcvt.s32.f32 %v2942
      %v2953 = vcvt.s32.f32 %v2943
      %v2954 = vcvt.s32.f32 %v2944
      %v2955 = vcvt.s32.f32 %v2945
      %v2956 = vcvt.s32.f32 %v2946
      %v2957 = vcvt.s32.f32 %v2947
      %v2958 = vcvt.s32.f32 %v2948
      %v2959 = vcvt.s32.f32 %v2949
      %v2960 = vmul.f32 %v2890, %v2950
      %v2961 = vmul.f32 %v2891, %v2951
      %v2962 = vmul.f32 %v2892, %v2952
      %v2963 = vmul.f32 %v2893, %v2953
      %v2964 = vmul.f32 %v2894, %v2954
      %v2965 = vmul.f32 %v2895, %v2955
      %v2966 = vmul.f32 %v2896, %v2956
      %v2967 = vmul.f32 %v2897, %v2957
      %v2968 = vmul.f32 %v2898, %v2958
      %v2969 = vmul.f32 %v2899, %v2959
      %v2970 = vmul.f32 %v2960, %v278
      %v2971 = vmul.f32 %v2961, %v279
      %v2972 = vmul.f32 %v2962, %v280
      %v2973 = vmul.f32 %v2963, %v281
      %v2974 = vmul.f32 %v2964, %v282
      %v2975 = vmul.f32 %v2965, %v283
      %v2976 = vmul.f32 %v2966, %v284
      %v2977 = vmul.f32 %v2967, %v285
      %v2978 = vmul.f32 %v2968, %v286
      %v2979 = vmul.f32 %v2969, %v287
      %v2980 = vmax.f32 %v2850, 0.0
      %v2981 = vmax.f32 %v2851, 0.0
      %v2982 = vmax.f32 %v2852, 0.0
      %v2983 = vmax.f32 %v2853, 0.0
      %v2984 = vmax.f32 %v2854, 0.0
      %v2985 = vmax.f32 %v2855, 0.0
      %v2986 = vmax.f32 %v2856, 0.0
      %v2987 = vmax.f32 %v2857, 0.0
      %v2988 = vmax.f32 %v2858, 0.0
      %v2989 = vmax.f32 %v2859, 0.0
      %v2990 = vmin.f32 %v2980, 3.0
      %v2991 = vmin.f32 %v2981, 3.0
      %v2992 = vmin.f32 %v2982, 3.0
      %v2993 = vmin.f32 %v2983, 3.0
      %v2994 = vmin.f32 %v2984, 3.0
      %v2995 = vmin.f32 %v2985, 3.0
      %v2996 = vmin.f32 %v2986, 3.0
      %v2997 = vmin.f32 %v2987, 3.0
      %v2998 = vmin.f32 %v2988, 3.0
      %v2999 = vmin.f32 %v2989, 3.0
      %v3000 = vmul.f32 %v2990, 4.0
      %v3001 = vmul.f32 %v2991, 4.0
      %v3002 = vmul.f32 %v2992, 4.0
      %v3003 = vmul.f32 %v2993, 4.0
      %v3004 = vmul.f32 %v2994, 4.0
      %v3005 = vmul.f32 %v2995, 4.0
      %v3006 = vmul.f32 %v2996, 4.0
      %v3007 = vmul.f32 %v2997, 4.0
      %v3008 = vmul.f32 %v2998, 4.0
      %v3009 = vmul.f32 %v2999, 4.0
      %v3010 = vadd.f32 %v3000, %v2380
      %v3011 = vadd.f32 %v3001, %v2381
      %v3012 = vadd.f32 %v3002, %v2382
      %v3013 = vadd.f32 %v3003, %v2383
      %v3014 = vadd.f32 %v3004, %v2384
      %v3015 = vadd.f32 %v3005, %v2385
      %v3016 = vadd.f32 %v3006, %v2386
      %v3017 = vadd.f32 %v3007, %v2387
      %v3018 = vadd.f32 %v3008, %v2388
      %v3019 = vadd.f32 %v3009, %v2389
      %v3020 = vcvt.f32.s32.to.zero.pseudo %v3010
      %v3021 = vcvt.f32.s32.to.zero.pseudo %v3011
      %v3022 = vcvt.f32.s32.to.zero.pseudo %v3012
      %v3023 = vcvt.f32.s32.to.zero.pseudo %v3013
      %v3024 = vcvt.f32.s32.to.zero.pseudo %v3014
      %v3025 = vcvt.f32.s32.to.zero.pseudo %v3015
      %v3026 = vcvt.f32.s32.to.zero.pseudo %v3016
      %v3027 = vcvt.f32.s32.to.zero.pseudo %v3017
      %v3028 = vcvt.f32.s32.to.zero.pseudo %v3018
      %v3029 = vcvt.f32.s32.to.zero.pseudo %v3019
      %3030 = vset.pattern.permute.xlu0 2
      %3031 = vperm.xlu0 %3030, %v3020
      %v3032 = vpop.permute.xlu0 %3031
      %3033 = vset.pattern.permute.xlu0 2
      %3034 = vperm.xlu0 %3033, %v3021
      %v3035 = vpop.permute.xlu0 %3034
      %3036 = vset.pattern.permute.xlu0 2
      %3037 = vperm.xlu0 %3036, %v3022
      %v3038 = vpop.permute.xlu0 %3037
      %3039 = vset.pattern.permute.xlu0 2
      %3040 = vperm.xlu0 %3039, %v3023
      %v3041 = vpop.permute.xlu0 %3040
      %3042 = vset.pattern.permute.xlu0 2
      %3043 = vperm.xlu0 %3042, %v3024
      %v3044 = vpop.permute.xlu0 %3043
      %3045 = vset.pattern.permute.xlu0 2
      %3046 = vperm.xlu0 %3045, %v3025
      %v3047 = vpop.permute.xlu0 %3046
      %3048 = vset.pattern.permute.xlu0 2
      %3049 = vperm.xlu0 %3048, %v3026
      %v3050 = vpop.permute.xlu0 %3049
      %3051 = vset.pattern.permute.xlu0 2
      %3052 = vperm.xlu0 %3051, %v3027
      %v3053 = vpop.permute.xlu0 %3052
      %3054 = vset.pattern.permute.xlu0 2
      %3055 = vperm.xlu0 %3054, %v3028
      %v3056 = vpop.permute.xlu0 %3055
      %3057 = vset.pattern.permute.xlu0 2
      %3058 = vperm.xlu0 %3057, %v3029
      %v3059 = vpop.permute.xlu0 %3058
      %vm3060 = vcmp.eq.s32.totalorder %v299, %v3032
      %vm3061 = vcmp.eq.s32.totalorder %v299, %v3035
      %vm3062 = vcmp.eq.s32.totalorder %v299, %v3038
      %vm3063 = vcmp.eq.s32.totalorder %v299, %v3041
      %vm3064 = vcmp.eq.s32.totalorder %v299, %v3044
      %vm3065 = vcmp.eq.s32.totalorder %v299, %v3047
      %vm3066 = vcmp.eq.s32.totalorder %v299, %v3050
      %vm3067 = vcmp.eq.s32.totalorder %v299, %v3053
      %vm3068 = vcmp.eq.s32.totalorder %v299, %v3056
      %vm3069 = vcmp.eq.s32.totalorder %v299, %v3059
      %v3070 = vsel %vm3060, 1, 0
      %v3071 = vsel %vm3061, 1, 0
      %v3072 = vsel %vm3062, 1, 0
      %v3073 = vsel %vm3063, 1, 0
      %v3074 = vsel %vm3064, 1, 0
      %v3075 = vsel %vm3065, 1, 0
      %v3076 = vsel %vm3066, 1, 0
      %v3077 = vsel %vm3067, 1, 0
      %v3078 = vsel %vm3068, 1, 0
      %v3079 = vsel %vm3069, 1, 0
      %v3080 = vcvt.s32.f32 %v3070
      %v3081 = vcvt.s32.f32 %v3071
      %v3082 = vcvt.s32.f32 %v3072
      %v3083 = vcvt.s32.f32 %v3073
      %v3084 = vcvt.s32.f32 %v3074
      %v3085 = vcvt.s32.f32 %v3075
      %v3086 = vcvt.s32.f32 %v3076
      %v3087 = vcvt.s32.f32 %v3077
      %v3088 = vcvt.s32.f32 %v3078
      %v3089 = vcvt.s32.f32 %v3079
      %3091 = vset.pattern.permute.xlu0 2
      %3092 = vperm.xlu0 %3091, %v2970
      %v3093 = vpop.permute.xlu0 %3092
      %3096 = vset.pattern.permute.xlu0 2
      %3097 = vperm.xlu0 %3096, %v2971
      %v3098 = vpop.permute.xlu0 %3097
      %3101 = vset.pattern.permute.xlu0 2
      %3102 = vperm.xlu0 %3101, %v2972
      %v3103 = vpop.permute.xlu0 %3102
      %3106 = vset.pattern.permute.xlu0 2
      %3107 = vperm.xlu0 %3106, %v2973
      %v3108 = vpop.permute.xlu0 %3107
      %3111 = vset.pattern.permute.xlu0 2
      %3112 = vperm.xlu0 %3111, %v2974
      %v3113 = vpop.permute.xlu0 %3112
      %3116 = vset.pattern.permute.xlu0 2
      %3117 = vperm.xlu0 %3116, %v2975
      %v3118 = vpop.permute.xlu0 %3117
      %3121 = vset.pattern.permute.xlu0 2
      %3122 = vperm.xlu0 %3121, %v2976
      %v3123 = vpop.permute.xlu0 %3122
      %3126 = vset.pattern.permute.xlu0 2
      %3127 = vperm.xlu0 %3126, %v2977
      %v3128 = vpop.permute.xlu0 %3127
      %3131 = vset.pattern.permute.xlu0 2
      %3132 = vperm.xlu0 %3131, %v2978
      %v3133 = vpop.permute.xlu0 %3132
      %3136 = vset.pattern.permute.xlu0 2
      %3137 = vperm.xlu0 %3136, %v2979
      %v3138 = vpop.permute.xlu0 %3137
      %v3140 = vmul.f32 %v3093, %v3080
      %v3141 = vmul.f32 %v3098, %v3081
      %v3142 = vmul.f32 %v3103, %v3082
      %v3143 = vmul.f32 %v3108, %v3083
      %v3144 = vmul.f32 %v3113, %v3084
      %v3145 = vmul.f32 %v3118, %v3085
      %v3146 = vmul.f32 %v3123, %v3086
      %v3147 = vmul.f32 %v3128, %v3087
      %v3148 = vmul.f32 %v3133, %v3088
      %v3149 = vmul.f32 %v3138, %v3089
      %v3150 = vadd.f32 %v2840, %v3140
      %v3151 = vadd.f32 %v2841, %v3141
      %v3152 = vadd.f32 %v2842, %v3142
      %v3153 = vadd.f32 %v2843, %v3143
      %v3154 = vadd.f32 %v2844, %v3144
      %v3155 = vadd.f32 %v2845, %v3145
      %v3156 = vadd.f32 %v2846, %v3146
      %v3157 = vadd.f32 %v2847, %v3147
      %v3158 = vadd.f32 %v2848, %v3148
      %v3159 = vadd.f32 %v2849, %v3149
      %v3160 = vmul.f32 %v2570, %v2880
      %v3161 = vmul.f32 %v2571, %v2881
      %v3162 = vmul.f32 %v2572, %v2882
      %v3163 = vmul.f32 %v2573, %v2883
      %v3164 = vmul.f32 %v2574, %v2884
      %v3165 = vmul.f32 %v2575, %v2885
      %v3166 = vmul.f32 %v2576, %v2886
      %v3167 = vmul.f32 %v2577, %v2887
      %v3168 = vmul.f32 %v2578, %v2888
      %v3169 = vmul.f32 %v2579, %v2889
      %vm3170 = vmand %vm2610, %vm2900
      %vm3171 = vmand %vm2611, %vm2901
      %vm3172 = vmand %vm2612, %vm2902
      %vm3173 = vmand %vm2613, %vm2903
      %vm3174 = vmand %vm2614, %vm2904
      %vm3175 = vmand %vm2615, %vm2905
      %vm3176 = vmand %vm2616, %vm2906
      %vm3177 = vmand %vm2617, %vm2907
      %vm3178 = vmand %vm2618, %vm2908
      %vm3179 = vmand %vm2619, %vm2909
      %vm3180 = vmand %vm3170, %vm2920
      %vm3181 = vmand %vm3171, %vm2921
      %vm3182 = vmand %vm3172, %vm2922
      %vm3183 = vmand %vm3173, %vm2923
      %vm3184 = vmand %vm3174, %vm2924
      %vm3185 = vmand %vm3175, %vm2925
      %vm3186 = vmand %vm3176, %vm2926
      %vm3187 = vmand %vm3177, %vm2927
      %vm3188 = vmand %vm3178, %vm2928
      %vm3189 = vmand %vm3179, %vm2929
      %v3190 = vsel %vm3180, 1, 0
      %v3191 = vsel %vm3181, 1, 0
      %v3192 = vsel %vm3182, 1, 0
      %v3193 = vsel %vm3183, 1, 0
      %v3194 = vsel %vm3184, 1, 0
      %v3195 = vsel %vm3185, 1, 0
      %v3196 = vsel %vm3186, 1, 0
      %v3197 = vsel %vm3187, 1, 0
      %v3198 = vsel %vm3188, 1, 0
      %v3199 = vsel %vm3189, 1, 0
      %v3200 = vcvt.s32.f32 %v3190
      %v3201 = vcvt.s32.f32 %v3191
      %v3202 = vcvt.s32.f32 %v3192
      %v3203 = vcvt.s32.f32 %v3193
      %v3204 = vcvt.s32.f32 %v3194
      %v3205 = vcvt.s32.f32 %v3195
      %v3206 = vcvt.s32.f32 %v3196
      %v3207 = vcvt.s32.f32 %v3197
      %v3208 = vcvt.s32.f32 %v3198
      %v3209 = vcvt.s32.f32 %v3199
      %v3210 = vmul.f32 %v3160, %v3200
      %v3211 = vmul.f32 %v3161, %v3201
      %v3212 = vmul.f32 %v3162, %v3202
      %v3213 = vmul.f32 %v3163, %v3203
      %v3214 = vmul.f32 %v3164, %v3204
      %v3215 = vmul.f32 %v3165, %v3205
      %v3216 = vmul.f32 %v3166, %v3206
      %v3217 = vmul.f32 %v3167, %v3207
      %v3218 = vmul.f32 %v3168, %v3208
      %v3219 = vmul.f32 %v3169, %v3209
      %v3220 = vmul.f32 %v3210, %v278
      %v3221 = vmul.f32 %v3211, %v279
      %v3222 = vmul.f32 %v3212, %v280
      %v3223 = vmul.f32 %v3213, %v281
      %v3224 = vmul.f32 %v3214, %v282
      %v3225 = vmul.f32 %v3215, %v283
      %v3226 = vmul.f32 %v3216, %v284
      %v3227 = vmul.f32 %v3217, %v285
      %v3228 = vmul.f32 %v3218, %v286
      %v3229 = vmul.f32 %v3219, %v287
      %v3230 = vadd.f32 %v3000, %v2690
      %v3231 = vadd.f32 %v3001, %v2691
      %v3232 = vadd.f32 %v3002, %v2692
      %v3233 = vadd.f32 %v3003, %v2693
      %v3234 = vadd.f32 %v3004, %v2694
      %v3235 = vadd.f32 %v3005, %v2695
      %v3236 = vadd.f32 %v3006, %v2696
      %v3237 = vadd.f32 %v3007, %v2697
      %v3238 = vadd.f32 %v3008, %v2698
      %v3239 = vadd.f32 %v3009, %v2699
      %v3240 = vcvt.f32.s32.to.zero.pseudo %v3230
      %v3241 = vcvt.f32.s32.to.zero.pseudo %v3231
      %v3242 = vcvt.f32.s32.to.zero.pseudo %v3232
      %v3243 = vcvt.f32.s32.to.zero.pseudo %v3233
      %v3244 = vcvt.f32.s32.to.zero.pseudo %v3234
      %v3245 = vcvt.f32.s32.to.zero.pseudo %v3235
      %v3246 = vcvt.f32.s32.to.zero.pseudo %v3236
      %v3247 = vcvt.f32.s32.to.zero.pseudo %v3237
      %v3248 = vcvt.f32.s32.to.zero.pseudo %v3238
      %v3249 = vcvt.f32.s32.to.zero.pseudo %v3239
      %3250 = vset.pattern.permute.xlu0 2
      %3251 = vperm.xlu0 %3250, %v3240
      %v3252 = vpop.permute.xlu0 %3251
      %3253 = vset.pattern.permute.xlu0 2
      %3254 = vperm.xlu0 %3253, %v3241
      %v3255 = vpop.permute.xlu0 %3254
      %3256 = vset.pattern.permute.xlu0 2
      %3257 = vperm.xlu0 %3256, %v3242
      %v3258 = vpop.permute.xlu0 %3257
      %3259 = vset.pattern.permute.xlu0 2
      %3260 = vperm.xlu0 %3259, %v3243
      %v3261 = vpop.permute.xlu0 %3260
      %3262 = vset.pattern.permute.xlu0 2
      %3263 = vperm.xlu0 %3262, %v3244
      %v3264 = vpop.permute.xlu0 %3263
      %3265 = vset.pattern.permute.xlu0 2
      %3266 = vperm.xlu0 %3265, %v3245
      %v3267 = vpop.permute.xlu0 %3266
      %3268 = vset.pattern.permute.xlu0 2
      %3269 = vperm.xlu0 %3268, %v3246
      %v3270 = vpop.permute.xlu0 %3269
      %3271 = vset.pattern.permute.xlu0 2
      %3272 = vperm.xlu0 %3271, %v3247
      %v3273 = vpop.permute.xlu0 %3272
      %3274 = vset.pattern.permute.xlu0 2
      %3275 = vperm.xlu0 %3274, %v3248
      %v3276 = vpop.permute.xlu0 %3275
      %3277 = vset.pattern.permute.xlu0 2
      %3278 = vperm.xlu0 %3277, %v3249
      %v3279 = vpop.permute.xlu0 %3278
      %vm3280 = vcmp.eq.s32.totalorder %v299, %v3252
      %vm3281 = vcmp.eq.s32.totalorder %v299, %v3255
      %vm3282 = vcmp.eq.s32.totalorder %v299, %v3258
      %vm3283 = vcmp.eq.s32.totalorder %v299, %v3261
      %vm3284 = vcmp.eq.s32.totalorder %v299, %v3264
      %vm3285 = vcmp.eq.s32.totalorder %v299, %v3267
      %vm3286 = vcmp.eq.s32.totalorder %v299, %v3270
      %vm3287 = vcmp.eq.s32.totalorder %v299, %v3273
      %vm3288 = vcmp.eq.s32.totalorder %v299, %v3276
      %vm3289 = vcmp.eq.s32.totalorder %v299, %v3279
      %v3290 = vsel %vm3280, 1, 0
      %v3291 = vsel %vm3281, 1, 0
      %v3292 = vsel %vm3282, 1, 0
      %v3293 = vsel %vm3283, 1, 0
      %v3294 = vsel %vm3284, 1, 0
      %v3295 = vsel %vm3285, 1, 0
      %v3296 = vsel %vm3286, 1, 0
      %v3297 = vsel %vm3287, 1, 0
      %v3298 = vsel %vm3288, 1, 0
      %v3299 = vsel %vm3289, 1, 0
      %v3300 = vcvt.s32.f32 %v3290
      %v3301 = vcvt.s32.f32 %v3291
      %v3302 = vcvt.s32.f32 %v3292
      %v3303 = vcvt.s32.f32 %v3293
      %v3304 = vcvt.s32.f32 %v3294
      %v3305 = vcvt.s32.f32 %v3295
      %v3306 = vcvt.s32.f32 %v3296
      %v3307 = vcvt.s32.f32 %v3297
      %v3308 = vcvt.s32.f32 %v3298
      %v3309 = vcvt.s32.f32 %v3299
      %3311 = vset.pattern.permute.xlu0 2
      %3312 = vperm.xlu0 %3311, %v3220
      %v3313 = vpop.permute.xlu0 %3312
      %3316 = vset.pattern.permute.xlu0 2
      %3317 = vperm.xlu0 %3316, %v3221
      %v3318 = vpop.permute.xlu0 %3317
      %3321 = vset.pattern.permute.xlu0 2
      %3322 = vperm.xlu0 %3321, %v3222
      %v3323 = vpop.permute.xlu0 %3322
      %3326 = vset.pattern.permute.xlu0 2
      %3327 = vperm.xlu0 %3326, %v3223
      %v3328 = vpop.permute.xlu0 %3327
      %3331 = vset.pattern.permute.xlu0 2
      %3332 = vperm.xlu0 %3331, %v3224
      %v3333 = vpop.permute.xlu0 %3332
      %3336 = vset.pattern.permute.xlu0 2
      %3337 = vperm.xlu0 %3336, %v3225
      %v3338 = vpop.permute.xlu0 %3337
      %3341 = vset.pattern.permute.xlu0 2
      %3342 = vperm.xlu0 %3341, %v3226
      %v3343 = vpop.permute.xlu0 %3342
      %3346 = vset.pattern.permute.xlu0 2
      %3347 = vperm.xlu0 %3346, %v3227
      %v3348 = vpop.permute.xlu0 %3347
      %3351 = vset.pattern.permute.xlu0 2
      %3352 = vperm.xlu0 %3351, %v3228
      %v3353 = vpop.permute.xlu0 %3352
      %3356 = vset.pattern.permute.xlu0 2
      %3357 = vperm.xlu0 %3356, %v3229
      %v3358 = vpop.permute.xlu0 %3357
      %v3360 = vmul.f32 %v3313, %v3300
      %v3361 = vmul.f32 %v3318, %v3301
      %v3362 = vmul.f32 %v3323, %v3302
      %v3363 = vmul.f32 %v3328, %v3303
      %v3364 = vmul.f32 %v3333, %v3304
      %v3365 = vmul.f32 %v3338, %v3305
      %v3366 = vmul.f32 %v3343, %v3306
      %v3367 = vmul.f32 %v3348, %v3307
      %v3368 = vmul.f32 %v3353, %v3308
      %v3369 = vmul.f32 %v3358, %v3309
      %v3370 = vadd.f32 %v3150, %v3360
      %v3371 = vadd.f32 %v3151, %v3361
      %v3372 = vadd.f32 %v3152, %v3362
      %v3373 = vadd.f32 %v3153, %v3363
      %v3374 = vadd.f32 %v3154, %v3364
      %v3375 = vadd.f32 %v3155, %v3365
      %v3376 = vadd.f32 %v3156, %v3366
      %v3377 = vadd.f32 %v3157, %v3367
      %v3378 = vadd.f32 %v3158, %v3368
      %v3379 = vadd.f32 %v3159, %v3369
      %3380 = vset.pattern.permute.xlu0 3
      %3381 = vperm.xlu0 %3380, %v2400
      %v3382 = vpop.permute.xlu0 %3381
      %3383 = vset.pattern.permute.xlu0 3
      %3384 = vperm.xlu0 %3383, %v2401
      %v3385 = vpop.permute.xlu0 %3384
      %3386 = vset.pattern.permute.xlu0 3
      %3387 = vperm.xlu0 %3386, %v2402
      %v3388 = vpop.permute.xlu0 %3387
      %3389 = vset.pattern.permute.xlu0 3
      %3390 = vperm.xlu0 %3389, %v2403
      %v3391 = vpop.permute.xlu0 %3390
      %3392 = vset.pattern.permute.xlu0 3
      %3393 = vperm.xlu0 %3392, %v2404
      %v3394 = vpop.permute.xlu0 %3393
      %3395 = vset.pattern.permute.xlu0 3
      %3396 = vperm.xlu0 %3395, %v2405
      %v3397 = vpop.permute.xlu0 %3396
      %3398 = vset.pattern.permute.xlu0 3
      %3399 = vperm.xlu0 %3398, %v2406
      %v3400 = vpop.permute.xlu0 %3399
      %3401 = vset.pattern.permute.xlu0 3
      %3402 = vperm.xlu0 %3401, %v2407
      %v3403 = vpop.permute.xlu0 %3402
      %3404 = vset.pattern.permute.xlu0 3
      %3405 = vperm.xlu0 %3404, %v2408
      %v3406 = vpop.permute.xlu0 %3405
      %3407 = vset.pattern.permute.xlu0 3
      %3408 = vperm.xlu0 %3407, %v2409
      %v3409 = vpop.permute.xlu0 %3408
      %vm3410 = vcmp.eq.s32.totalorder %v299, %v3382
      %vm3411 = vcmp.eq.s32.totalorder %v299, %v3385
      %vm3412 = vcmp.eq.s32.totalorder %v299, %v3388
      %vm3413 = vcmp.eq.s32.totalorder %v299, %v3391
      %vm3414 = vcmp.eq.s32.totalorder %v299, %v3394
      %vm3415 = vcmp.eq.s32.totalorder %v299, %v3397
      %vm3416 = vcmp.eq.s32.totalorder %v299, %v3400
      %vm3417 = vcmp.eq.s32.totalorder %v299, %v3403
      %vm3418 = vcmp.eq.s32.totalorder %v299, %v3406
      %vm3419 = vcmp.eq.s32.totalorder %v299, %v3409
      %v3420 = vsel %vm3410, 1, 0
      %v3421 = vsel %vm3411, 1, 0
      %v3422 = vsel %vm3412, 1, 0
      %v3423 = vsel %vm3413, 1, 0
      %v3424 = vsel %vm3414, 1, 0
      %v3425 = vsel %vm3415, 1, 0
      %v3426 = vsel %vm3416, 1, 0
      %v3427 = vsel %vm3417, 1, 0
      %v3428 = vsel %vm3418, 1, 0
      %v3429 = vsel %vm3419, 1, 0
      %v3430 = vcvt.s32.f32 %v3420
      %v3431 = vcvt.s32.f32 %v3421
      %v3432 = vcvt.s32.f32 %v3422
      %v3433 = vcvt.s32.f32 %v3423
      %v3434 = vcvt.s32.f32 %v3424
      %v3435 = vcvt.s32.f32 %v3425
      %v3436 = vcvt.s32.f32 %v3426
      %v3437 = vcvt.s32.f32 %v3427
      %v3438 = vcvt.s32.f32 %v3428
      %v3439 = vcvt.s32.f32 %v3429
      %3440 = vset.pattern.permute.xlu0 3
      %3441 = vperm.xlu0 %3440, %v2330
      %v3442 = vpop.permute.xlu0 %3441
      %3444 = vset.pattern.permute.xlu0 3
      %3445 = vperm.xlu0 %3444, %v2331
      %v3446 = vpop.permute.xlu0 %3445
      %3448 = vset.pattern.permute.xlu0 3
      %3449 = vperm.xlu0 %3448, %v2332
      %v3450 = vpop.permute.xlu0 %3449
      %3452 = vset.pattern.permute.xlu0 3
      %3453 = vperm.xlu0 %3452, %v2333
      %v3454 = vpop.permute.xlu0 %3453
      %3456 = vset.pattern.permute.xlu0 3
      %3457 = vperm.xlu0 %3456, %v2334
      %v3458 = vpop.permute.xlu0 %3457
      %3460 = vset.pattern.permute.xlu0 3
      %3461 = vperm.xlu0 %3460, %v2335
      %v3462 = vpop.permute.xlu0 %3461
      %3464 = vset.pattern.permute.xlu0 3
      %3465 = vperm.xlu0 %3464, %v2336
      %v3466 = vpop.permute.xlu0 %3465
      %3468 = vset.pattern.permute.xlu0 3
      %3469 = vperm.xlu0 %3468, %v2337
      %v3470 = vpop.permute.xlu0 %3469
      %3472 = vset.pattern.permute.xlu0 3
      %3473 = vperm.xlu0 %3472, %v2338
      %v3474 = vpop.permute.xlu0 %3473
      %3476 = vset.pattern.permute.xlu0 3
      %3477 = vperm.xlu0 %3476, %v2339
      %v3478 = vpop.permute.xlu0 %3477
      %v3480 = vmul.f32 %v3442, %v3430
      %v3481 = vmul.f32 %v3446, %v3431
      %v3482 = vmul.f32 %v3450, %v3432
      %v3483 = vmul.f32 %v3454, %v3433
      %v3484 = vmul.f32 %v3458, %v3434
      %v3485 = vmul.f32 %v3462, %v3435
      %v3486 = vmul.f32 %v3466, %v3436
      %v3487 = vmul.f32 %v3470, %v3437
      %v3488 = vmul.f32 %v3474, %v3438
      %v3489 = vmul.f32 %v3478, %v3439
      %v3490 = vadd.f32 %v3370, %v3480
      %v3491 = vadd.f32 %v3371, %v3481
      %v3492 = vadd.f32 %v3372, %v3482
      %v3493 = vadd.f32 %v3373, %v3483
      %v3494 = vadd.f32 %v3374, %v3484
      %v3495 = vadd.f32 %v3375, %v3485
      %v3496 = vadd.f32 %v3376, %v3486
      %v3497 = vadd.f32 %v3377, %v3487
      %v3498 = vadd.f32 %v3378, %v3488
      %v3499 = vadd.f32 %v3379, %v3489
      %3500 = vset.pattern.permute.xlu0 3
      %3501 = vperm.xlu0 %3500, %v2710
      %v3502 = vpop.permute.xlu0 %3501
      %3503 = vset.pattern.permute.xlu0 3
      %3504 = vperm.xlu0 %3503, %v2711
      %v3505 = vpop.permute.xlu0 %3504
      %3506 = vset.pattern.permute.xlu0 3
      %3507 = vperm.xlu0 %3506, %v2712
      %v3508 = vpop.permute.xlu0 %3507
      %3509 = vset.pattern.permute.xlu0 3
      %3510 = vperm.xlu0 %3509, %v2713
      %v3511 = vpop.permute.xlu0 %3510
      %3512 = vset.pattern.permute.xlu0 3
      %3513 = vperm.xlu0 %3512, %v2714
      %v3514 = vpop.permute.xlu0 %3513
      %3515 = vset.pattern.permute.xlu0 3
      %3516 = vperm.xlu0 %3515, %v2715
      %v3517 = vpop.permute.xlu0 %3516
      %3518 = vset.pattern.permute.xlu0 3
      %3519 = vperm.xlu0 %3518, %v2716
      %v3520 = vpop.permute.xlu0 %3519
      %3521 = vset.pattern.permute.xlu0 3
      %3522 = vperm.xlu0 %3521, %v2717
      %v3523 = vpop.permute.xlu0 %3522
      %3524 = vset.pattern.permute.xlu0 3
      %3525 = vperm.xlu0 %3524, %v2718
      %v3526 = vpop.permute.xlu0 %3525
      %3527 = vset.pattern.permute.xlu0 3
      %3528 = vperm.xlu0 %3527, %v2719
      %v3529 = vpop.permute.xlu0 %3528
      %vm3530 = vcmp.eq.s32.totalorder %v299, %v3502
      %vm3531 = vcmp.eq.s32.totalorder %v299, %v3505
      %vm3532 = vcmp.eq.s32.totalorder %v299, %v3508
      %vm3533 = vcmp.eq.s32.totalorder %v299, %v3511
      %vm3534 = vcmp.eq.s32.totalorder %v299, %v3514
      %vm3535 = vcmp.eq.s32.totalorder %v299, %v3517
      %vm3536 = vcmp.eq.s32.totalorder %v299, %v3520
      %vm3537 = vcmp.eq.s32.totalorder %v299, %v3523
      %vm3538 = vcmp.eq.s32.totalorder %v299, %v3526
      %vm3539 = vcmp.eq.s32.totalorder %v299, %v3529
      %v3540 = vsel %vm3530, 1, 0
      %v3541 = vsel %vm3531, 1, 0
      %v3542 = vsel %vm3532, 1, 0
      %v3543 = vsel %vm3533, 1, 0
      %v3544 = vsel %vm3534, 1, 0
      %v3545 = vsel %vm3535, 1, 0
      %v3546 = vsel %vm3536, 1, 0
      %v3547 = vsel %vm3537, 1, 0
      %v3548 = vsel %vm3538, 1, 0
      %v3549 = vsel %vm3539, 1, 0
      %v3550 = vcvt.s32.f32 %v3540
      %v3551 = vcvt.s32.f32 %v3541
      %v3552 = vcvt.s32.f32 %v3542
      %v3553 = vcvt.s32.f32 %v3543
      %v3554 = vcvt.s32.f32 %v3544
      %v3555 = vcvt.s32.f32 %v3545
      %v3556 = vcvt.s32.f32 %v3546
      %v3557 = vcvt.s32.f32 %v3547
      %v3558 = vcvt.s32.f32 %v3548
      %v3559 = vcvt.s32.f32 %v3549
      %3560 = vset.pattern.permute.xlu0 3
      %3561 = vperm.xlu0 %3560, %v2670
      %v3562 = vpop.permute.xlu0 %3561
      %3564 = vset.pattern.permute.xlu0 3
      %3565 = vperm.xlu0 %3564, %v2671
      %v3566 = vpop.permute.xlu0 %3565
      %3568 = vset.pattern.permute.xlu0 3
      %3569 = vperm.xlu0 %3568, %v2672
      %v3570 = vpop.permute.xlu0 %3569
      %3572 = vset.pattern.permute.xlu0 3
      %3573 = vperm.xlu0 %3572, %v2673
      %v3574 = vpop.permute.xlu0 %3573
      %3576 = vset.pattern.permute.xlu0 3
      %3577 = vperm.xlu0 %3576, %v2674
      %v3578 = vpop.permute.xlu0 %3577
      %3580 = vset.pattern.permute.xlu0 3
      %3581 = vperm.xlu0 %3580, %v2675
      %v3582 = vpop.permute.xlu0 %3581
      %3584 = vset.pattern.permute.xlu0 3
      %3585 = vperm.xlu0 %3584, %v2676
      %v3586 = vpop.permute.xlu0 %3585
      %3588 = vset.pattern.permute.xlu0 3
      %3589 = vperm.xlu0 %3588, %v2677
      %v3590 = vpop.permute.xlu0 %3589
      %3592 = vset.pattern.permute.xlu0 3
      %3593 = vperm.xlu0 %3592, %v2678
      %v3594 = vpop.permute.xlu0 %3593
      %3596 = vset.pattern.permute.xlu0 3
      %3597 = vperm.xlu0 %3596, %v2679
      %v3598 = vpop.permute.xlu0 %3597
      %v3600 = vmul.f32 %v3562, %v3550
      %v3601 = vmul.f32 %v3566, %v3551
      %v3602 = vmul.f32 %v3570, %v3552
      %v3603 = vmul.f32 %v3574, %v3553
      %v3604 = vmul.f32 %v3578, %v3554
      %v3605 = vmul.f32 %v3582, %v3555
      %v3606 = vmul.f32 %v3586, %v3556
      %v3607 = vmul.f32 %v3590, %v3557
      %v3608 = vmul.f32 %v3594, %v3558
      %v3609 = vmul.f32 %v3598, %v3559
      %v3610 = vadd.f32 %v3490, %v3600
      %v3611 = vadd.f32 %v3491, %v3601
      %v3612 = vadd.f32 %v3492, %v3602
      %v3613 = vadd.f32 %v3493, %v3603
      %v3614 = vadd.f32 %v3494, %v3604
      %v3615 = vadd.f32 %v3495, %v3605
      %v3616 = vadd.f32 %v3496, %v3606
      %v3617 = vadd.f32 %v3497, %v3607
      %v3618 = vadd.f32 %v3498, %v3608
      %v3619 = vadd.f32 %v3499, %v3609
      %3620 = vset.pattern.permute.xlu0 3
      %3621 = vperm.xlu0 %3620, %v3020
      %v3622 = vpop.permute.xlu0 %3621
      %3623 = vset.pattern.permute.xlu0 3
      %3624 = vperm.xlu0 %3623, %v3021
      %v3625 = vpop.permute.xlu0 %3624
      %3626 = vset.pattern.permute.xlu0 3
      %3627 = vperm.xlu0 %3626, %v3022
      %v3628 = vpop.permute.xlu0 %3627
      %3629 = vset.pattern.permute.xlu0 3
      %3630 = vperm.xlu0 %3629, %v3023
      %v3631 = vpop.permute.xlu0 %3630
      %3632 = vset.pattern.permute.xlu0 3
      %3633 = vperm.xlu0 %3632, %v3024
      %v3634 = vpop.permute.xlu0 %3633
      %3635 = vset.pattern.permute.xlu0 3
      %3636 = vperm.xlu0 %3635, %v3025
      %v3637 = vpop.permute.xlu0 %3636
      %3638 = vset.pattern.permute.xlu0 3
      %3639 = vperm.xlu0 %3638, %v3026
      %v3640 = vpop.permute.xlu0 %3639
      %3641 = vset.pattern.permute.xlu0 3
      %3642 = vperm.xlu0 %3641, %v3027
      %v3643 = vpop.permute.xlu0 %3642
      %3644 = vset.pattern.permute.xlu0 3
      %3645 = vperm.xlu0 %3644, %v3028
      %v3646 = vpop.permute.xlu0 %3645
      %3647 = vset.pattern.permute.xlu0 3
      %3648 = vperm.xlu0 %3647, %v3029
      %v3649 = vpop.permute.xlu0 %3648
      %vm3650 = vcmp.eq.s32.totalorder %v299, %v3622
      %vm3651 = vcmp.eq.s32.totalorder %v299, %v3625
      %vm3652 = vcmp.eq.s32.totalorder %v299, %v3628
      %vm3653 = vcmp.eq.s32.totalorder %v299, %v3631
      %vm3654 = vcmp.eq.s32.totalorder %v299, %v3634
      %vm3655 = vcmp.eq.s32.totalorder %v299, %v3637
      %vm3656 = vcmp.eq.s32.totalorder %v299, %v3640
      %vm3657 = vcmp.eq.s32.totalorder %v299, %v3643
      %vm3658 = vcmp.eq.s32.totalorder %v299, %v3646
      %vm3659 = vcmp.eq.s32.totalorder %v299, %v3649
      %v3660 = vsel %vm3650, 1, 0
      %v3661 = vsel %vm3651, 1, 0
      %v3662 = vsel %vm3652, 1, 0
      %v3663 = vsel %vm3653, 1, 0
      %v3664 = vsel %vm3654, 1, 0
      %v3665 = vsel %vm3655, 1, 0
      %v3666 = vsel %vm3656, 1, 0
      %v3667 = vsel %vm3657, 1, 0
      %v3668 = vsel %vm3658, 1, 0
      %v3669 = vsel %vm3659, 1, 0
      %v3670 = vcvt.s32.f32 %v3660
      %v3671 = vcvt.s32.f32 %v3661
      %v3672 = vcvt.s32.f32 %v3662
      %v3673 = vcvt.s32.f32 %v3663
      %v3674 = vcvt.s32.f32 %v3664
      %v3675 = vcvt.s32.f32 %v3665
      %v3676 = vcvt.s32.f32 %v3666
      %v3677 = vcvt.s32.f32 %v3667
      %v3678 = vcvt.s32.f32 %v3668
      %v3679 = vcvt.s32.f32 %v3669
      %3680 = vset.pattern.permute.xlu0 3
      %3681 = vperm.xlu0 %3680, %v2970
      %v3682 = vpop.permute.xlu0 %3681
      %3684 = vset.pattern.permute.xlu0 3
      %3685 = vperm.xlu0 %3684, %v2971
      %v3686 = vpop.permute.xlu0 %3685
      %3688 = vset.pattern.permute.xlu0 3
      %3689 = vperm.xlu0 %3688, %v2972
      %v3690 = vpop.permute.xlu0 %3689
      %3692 = vset.pattern.permute.xlu0 3
      %3693 = vperm.xlu0 %3692, %v2973
      %v3694 = vpop.permute.xlu0 %3693
      %3696 = vset.pattern.permute.xlu0 3
      %3697 = vperm.xlu0 %3696, %v2974
      %v3698 = vpop.permute.xlu0 %3697
      %3700 = vset.pattern.permute.xlu0 3
      %3701 = vperm.xlu0 %3700, %v2975
      %v3702 = vpop.permute.xlu0 %3701
      %3704 = vset.pattern.permute.xlu0 3
      %3705 = vperm.xlu0 %3704, %v2976
      %v3706 = vpop.permute.xlu0 %3705
      %3708 = vset.pattern.permute.xlu0 3
      %3709 = vperm.xlu0 %3708, %v2977
      %v3710 = vpop.permute.xlu0 %3709
      %3712 = vset.pattern.permute.xlu0 3
      %3713 = vperm.xlu0 %3712, %v2978
      %v3714 = vpop.permute.xlu0 %3713
      %3716 = vset.pattern.permute.xlu0 3
      %3717 = vperm.xlu0 %3716, %v2979
      %v3718 = vpop.permute.xlu0 %3717
      %v3720 = vmul.f32 %v3682, %v3670
      %v3721 = vmul.f32 %v3686, %v3671
      %v3722 = vmul.f32 %v3690, %v3672
      %v3723 = vmul.f32 %v3694, %v3673
      %v3724 = vmul.f32 %v3698, %v3674
      %v3725 = vmul.f32 %v3702, %v3675
      %v3726 = vmul.f32 %v3706, %v3676
      %v3727 = vmul.f32 %v3710, %v3677
      %v3728 = vmul.f32 %v3714, %v3678
      %v3729 = vmul.f32 %v3718, %v3679
      %v3730 = vadd.f32 %v3610, %v3720
      %v3731 = vadd.f32 %v3611, %v3721
      %v3732 = vadd.f32 %v3612, %v3722
      %v3733 = vadd.f32 %v3613, %v3723
      %v3734 = vadd.f32 %v3614, %v3724
      %v3735 = vadd.f32 %v3615, %v3725
      %v3736 = vadd.f32 %v3616, %v3726
      %v3737 = vadd.f32 %v3617, %v3727
      %v3738 = vadd.f32 %v3618, %v3728
      %v3739 = vadd.f32 %v3619, %v3729
      %3740 = vset.pattern.permute.xlu0 3
      %3741 = vperm.xlu0 %3740, %v3240
      %v3742 = vpop.permute.xlu0 %3741
      %3743 = vset.pattern.permute.xlu0 3
      %3744 = vperm.xlu0 %3743, %v3241
      %v3745 = vpop.permute.xlu0 %3744
      %3746 = vset.pattern.permute.xlu0 3
      %3747 = vperm.xlu0 %3746, %v3242
      %v3748 = vpop.permute.xlu0 %3747
      %3749 = vset.pattern.permute.xlu0 3
      %3750 = vperm.xlu0 %3749, %v3243
      %v3751 = vpop.permute.xlu0 %3750
      %3752 = vset.pattern.permute.xlu0 3
      %3753 = vperm.xlu0 %3752, %v3244
      %v3754 = vpop.permute.xlu0 %3753
      %3755 = vset.pattern.permute.xlu0 3
      %3756 = vperm.xlu0 %3755, %v3245
      %v3757 = vpop.permute.xlu0 %3756
      %3758 = vset.pattern.permute.xlu0 3
      %3759 = vperm.xlu0 %3758, %v3246
      %v3760 = vpop.permute.xlu0 %3759
      %3761 = vset.pattern.permute.xlu0 3
      %3762 = vperm.xlu0 %3761, %v3247
      %v3763 = vpop.permute.xlu0 %3762
      %3764 = vset.pattern.permute.xlu0 3
      %3765 = vperm.xlu0 %3764, %v3248
      %v3766 = vpop.permute.xlu0 %3765
      %3767 = vset.pattern.permute.xlu0 3
      %3768 = vperm.xlu0 %3767, %v3249
      %v3769 = vpop.permute.xlu0 %3768
      %vm3770 = vcmp.eq.s32.totalorder %v299, %v3742
      %vm3771 = vcmp.eq.s32.totalorder %v299, %v3745
      %vm3772 = vcmp.eq.s32.totalorder %v299, %v3748
      %vm3773 = vcmp.eq.s32.totalorder %v299, %v3751
      %vm3774 = vcmp.eq.s32.totalorder %v299, %v3754
      %vm3775 = vcmp.eq.s32.totalorder %v299, %v3757
      %vm3776 = vcmp.eq.s32.totalorder %v299, %v3760
      %vm3777 = vcmp.eq.s32.totalorder %v299, %v3763
      %vm3778 = vcmp.eq.s32.totalorder %v299, %v3766
      %vm3779 = vcmp.eq.s32.totalorder %v299, %v3769
      %v3780 = vsel %vm3770, 1, 0
      %v3781 = vsel %vm3771, 1, 0
      %v3782 = vsel %vm3772, 1, 0
      %v3783 = vsel %vm3773, 1, 0
      %v3784 = vsel %vm3774, 1, 0
      %v3785 = vsel %vm3775, 1, 0
      %v3786 = vsel %vm3776, 1, 0
      %v3787 = vsel %vm3777, 1, 0
      %v3788 = vsel %vm3778, 1, 0
      %v3789 = vsel %vm3779, 1, 0
      %v3790 = vcvt.s32.f32 %v3780
      %v3791 = vcvt.s32.f32 %v3781
      %v3792 = vcvt.s32.f32 %v3782
      %v3793 = vcvt.s32.f32 %v3783
      %v3794 = vcvt.s32.f32 %v3784
      %v3795 = vcvt.s32.f32 %v3785
      %v3796 = vcvt.s32.f32 %v3786
      %v3797 = vcvt.s32.f32 %v3787
      %v3798 = vcvt.s32.f32 %v3788
      %v3799 = vcvt.s32.f32 %v3789
      %3800 = vset.pattern.permute.xlu0 3
      %3801 = vperm.xlu0 %3800, %v3220
      %v3802 = vpop.permute.xlu0 %3801
      %3804 = vset.pattern.permute.xlu0 3
      %3805 = vperm.xlu0 %3804, %v3221
      %v3806 = vpop.permute.xlu0 %3805
      %3808 = vset.pattern.permute.xlu0 3
      %3809 = vperm.xlu0 %3808, %v3222
      %v3810 = vpop.permute.xlu0 %3809
      %3812 = vset.pattern.permute.xlu0 3
      %3813 = vperm.xlu0 %3812, %v3223
      %v3814 = vpop.permute.xlu0 %3813
      %3816 = vset.pattern.permute.xlu0 3
      %3817 = vperm.xlu0 %3816, %v3224
      %v3818 = vpop.permute.xlu0 %3817
      %3820 = vset.pattern.permute.xlu0 3
      %3821 = vperm.xlu0 %3820, %v3225
      %v3822 = vpop.permute.xlu0 %3821
      %3824 = vset.pattern.permute.xlu0 3
      %3825 = vperm.xlu0 %3824, %v3226
      %v3826 = vpop.permute.xlu0 %3825
      %3828 = vset.pattern.permute.xlu0 3
      %3829 = vperm.xlu0 %3828, %v3227
      %v3830 = vpop.permute.xlu0 %3829
      %3832 = vset.pattern.permute.xlu0 3
      %3833 = vperm.xlu0 %3832, %v3228
      %v3834 = vpop.permute.xlu0 %3833
      %3836 = vset.pattern.permute.xlu0 3
      %3837 = vperm.xlu0 %3836, %v3229
      %v3838 = vpop.permute.xlu0 %3837
      %v3840 = vmul.f32 %v3802, %v3790
      %v3841 = vmul.f32 %v3806, %v3791
      %v3842 = vmul.f32 %v3810, %v3792
      %v3843 = vmul.f32 %v3814, %v3793
      %v3844 = vmul.f32 %v3818, %v3794
      %v3845 = vmul.f32 %v3822, %v3795
      %v3846 = vmul.f32 %v3826, %v3796
      %v3847 = vmul.f32 %v3830, %v3797
      %v3848 = vmul.f32 %v3834, %v3798
      %v3849 = vmul.f32 %v3838, %v3799
      %v3850 = vadd.f32 %v3730, %v3840
      %v3851 = vadd.f32 %v3731, %v3841
      %v3852 = vadd.f32 %v3732, %v3842
      %v3853 = vadd.f32 %v3733, %v3843
      %v3854 = vadd.f32 %v3734, %v3844
      %v3855 = vadd.f32 %v3735, %v3845
      %v3856 = vadd.f32 %v3736, %v3846
      %v3857 = vadd.f32 %v3737, %v3847
      %v3858 = vadd.f32 %v3738, %v3848
      %v3859 = vadd.f32 %v3739, %v3849
      %vm3860 = vcmask 130048
      %v3862 = vsel %vm3860, %v3850, 0
      %v3865 = vsel %vm3860, %v3851, 0
      %v3868 = vsel %vm3860, %v3852, 0
      %v3871 = vsel %vm3860, %v3853, 0
      %v3874 = vsel %vm3860, %v3854, 0
      %v3877 = vsel %vm3860, %v3855, 0
      %v3880 = vsel %vm3860, %v3856, 0
      %v3883 = vsel %vm3860, %v3857, 0
      %v3886 = vsel %vm3860, %v3858, 0
      %v3889 = vsel %vm3860, %v3859, 0
      %3891 = vmatprep.subr.mxu0 0.0
      %3892 = vmatpush1.msra.mxu0 %v296
      %3893 = vmatprep.subr.mxu0 0.0
      %3894 = vmatpush1.msra.mxu0 %v297
      %3895 = vmatprep.subr.mxu0 0.0
      %3896 = vmatpush1.msra.mxu0 0.0
      %3897 = vmatprep.subr.mxu0 0.0
      %3898 = vmatpush1.msra.mxu0 0.0
      %3899 = vmatprep.subr.mxu0 0.0
      %3900 = vmatpush1.msra.mxu0 0.0
      %3901 = vmatprep.subr.mxu0 0.0
      %3902 = vmatpush1.msra.mxu0 0.0
      %3903 = vmatprep.subr.mxu0 0.0
      %3904 = vmatpush1.msra.mxu0 0.0
      %3905 = vmatprep.subr.mxu0 0.0
      %3906 = vmatpush1.msra.mxu0 0.0
      %3907 = vmatprep.subr.mxu0 0.0
      %3908 = vmatpush1.msra.mxu0 0.0
      %3909 = vmatprep.subr.mxu0 0.0
      %3910 = vmatpush1.msra.mxu0 0.0
      %3911 = vmatprep.subr.mxu0 0.0
      %3912 = vmatpush1.msra.mxu0 0.0
      %3913 = vmatprep.subr.mxu0 0.0
      %3914 = vmatpush1.msra.mxu0 0.0
      %3915 = vmatprep.subr.mxu0 0.0
      %3916 = vmatpush1.msra.mxu0 0.0
      %3917 = vmatprep.subr.mxu0 0.0
      %3918 = vmatpush1.msra.mxu0 0.0
      %3919 = vmatprep.subr.mxu0 0.0
      %3920 = vmatpush1.msra.mxu0 0.0
      %3921 = vmatprep.subr.mxu0 0.0
      %3922 = vmatpush1.msra.mxu0 0.0
      %3923 = vmatprep.subr.mxu0 0.0
      %3924 = vmatpush1.msra.mxu0 0.0
      %3925 = vmatprep.subr.mxu0 0.0
      %3926 = vmatpush1.msra.mxu0 0.0
      %3927 = vmatprep.subr.mxu0 0.0
      %3928 = vmatpush1.msra.mxu0 0.0
      %3929 = vmatprep.subr.mxu0 0.0
      %3930 = vmatpush1.msra.mxu0 0.0
      %3931 = vmatprep.subr.mxu0 0.0
      %3932 = vmatpush1.msra.mxu0 0.0
      %3933 = vmatprep.subr.mxu0 0.0
      %3934 = vmatpush1.msra.mxu0 0.0
      %3935 = vmatprep.subr.mxu0 0.0
      %3936 = vmatpush1.msra.mxu0 0.0
      %3937 = vmatprep.subr.mxu0 0.0
      %3938 = vmatpush1.msra.mxu0 0.0
      %3939 = vmatprep.subr.mxu0 0.0
      %3940 = vmatpush1.msra.mxu0 0.0
      %3941 = vmatprep.subr.mxu0 0.0
      %3942 = vmatpush1.msra.mxu0 0.0
      %3943 = vmatprep.subr.mxu0 0.0
      %3944 = vmatpush1.msra.mxu0 0.0
      %3945 = vmatprep.subr.mxu0 0.0
      %3946 = vmatpush1.msra.mxu0 0.0
      %3947 = vmatprep.subr.mxu0 0.0
      %3948 = vmatpush1.msra.mxu0 0.0
      %3949 = vmatprep.subr.mxu0 0.0
      %3950 = vmatpush1.msra.mxu0 0.0
      %3951 = vmatprep.subr.mxu0 0.0
      %3952 = vmatpush1.msra.mxu0 0.0
      %3953 = vmatprep.subr.mxu0 0.0
      %3954 = vmatpush1.msra.mxu0 0.0
      %3955 = vmatprep.mubr.f32.mxu0 0.0
      %3956 = vmatmul.mubr.f32.gmra.mrb[0].mxu0 %v3862
      %v3957 = vpop.f32.mrb[0].mxu0
      %v3958 = vadd.f32 0.0, %v3957
      %v3959 = vpop.f32.mrb[0].mxu0
      %3960 = vmatprep.mubr.f32.mxu0 0.0
      %3961 = vmatmul.mubr.f32.gmra.mrb[0].mxu0 %v3865
      %v3962 = vpop.f32.mrb[0].mxu0
      %v3963 = vadd.f32 0.0, %v3962
      %v3964 = vpop.f32.mrb[0].mxu0
      %3965 = vmatprep.mubr.f32.mxu0 0.0
      %3966 = vmatmul.mubr.f32.gmra.mrb[0].mxu0 %v3868
      %v3967 = vpop.f32.mrb[0].mxu0
      %v3968 = vadd.f32 0.0, %v3967
      %v3969 = vpop.f32.mrb[0].mxu0
      %3970 = vmatprep.mubr.f32.mxu0 0.0
      %3971 = vmatmul.mubr.f32.gmra.mrb[0].mxu0 %v3871
      %v3972 = vpop.f32.mrb[0].mxu0
      %v3973 = vadd.f32 0.0, %v3972
      %v3974 = vpop.f32.mrb[0].mxu0
      %3975 = vmatprep.mubr.f32.mxu0 0.0
      %3976 = vmatmul.mubr.f32.gmra.mrb[0].mxu0 %v3874
      %v3977 = vpop.f32.mrb[0].mxu0
      %v3978 = vadd.f32 0.0, %v3977
      %v3979 = vpop.f32.mrb[0].mxu0
      %3980 = vmatprep.mubr.f32.mxu0 0.0
      %3981 = vmatmul.mubr.f32.gmra.mrb[0].mxu0 %v3877
      %v3982 = vpop.f32.mrb[0].mxu0
      %v3983 = vadd.f32 0.0, %v3982
      %v3984 = vpop.f32.mrb[0].mxu0
      %3985 = vmatprep.mubr.f32.mxu0 0.0
      %3986 = vmatmul.mubr.f32.gmra.mrb[0].mxu0 %v3880
      %v3987 = vpop.f32.mrb[0].mxu0
      %v3988 = vadd.f32 0.0, %v3987
      %v3989 = vpop.f32.mrb[0].mxu0
      %3990 = vmatprep.mubr.f32.mxu0 0.0
      %3991 = vmatmul.mubr.f32.gmra.mrb[0].mxu0 %v3883
      %v3992 = vpop.f32.mrb[0].mxu0
      %v3993 = vadd.f32 0.0, %v3992
      %v3994 = vpop.f32.mrb[0].mxu0
      %3995 = vmatprep.mubr.f32.mxu0 0.0
      %3996 = vmatmul.mubr.f32.gmra.mrb[0].mxu0 %v3886
      %v3997 = vpop.f32.mrb[0].mxu0
      %v3998 = vadd.f32 0.0, %v3997
      %v3999 = vpop.f32.mrb[0].mxu0
      %4000 = vmatprep.mubr.f32.mxu0 0.0
      %4001 = vmatmul.mubr.f32.gmra.mrb[0].mxu0 %v3889
      %v4002 = vpop.f32.mrb[0].mxu0
      %v4003 = vadd.f32 0.0, %v4002
      %v4004 = vpop.f32.mrb[0].mxu0
      %4005 = vdwg.mxu0
      %vm4006 = vcmask 523264
      %v4008 = vsel %vm4006, %v2070, 0
      %v4011 = vsel %vm4006, %v2071, 0
      %v4014 = vsel %vm4006, %v2072, 0
      %v4017 = vsel %vm4006, %v2073, 0
      %v4020 = vsel %vm4006, %v2074, 0
      %v4023 = vsel %vm4006, %v2075, 0
      %v4026 = vsel %vm4006, %v2076, 0
      %v4029 = vsel %vm4006, %v2077, 0
      %v4032 = vsel %vm4006, %v2078, 0
      %v4035 = vsel %vm4006, %v2079, 0
      %4037 = vmatprep.subr.mxu0 0.0
      %4038 = vmatpush1.msra.mxu0 %v288
      %4039 = vmatprep.subr.mxu0 0.0
      %4040 = vmatpush1.msra.mxu0 %v289
      %4041 = vmatprep.subr.mxu0 0.0
      %4042 = vmatpush1.msra.mxu0 %v290
      %4043 = vmatprep.subr.mxu0 0.0
      %4044 = vmatpush1.msra.mxu0 %v291
      %4045 = vmatprep.subr.mxu0 0.0
      %4046 = vmatpush1.msra.mxu0 %v292
      %4047 = vmatprep.subr.mxu0 0.0
      %4048 = vmatpush1.msra.mxu0 %v293
      %4049 = vmatprep.subr.mxu0 0.0
      %4050 = vmatpush1.msra.mxu0 %v294
      %4051 = vmatprep.subr.mxu0 0.0
      %4052 = vmatpush1.msra.mxu0 %v295
      %4053 = vmatprep.subr.mxu0 0.0
      %4054 = vmatpush1.msra.mxu0 0.0
      %4055 = vmatprep.subr.mxu0 0.0
      %4056 = vmatpush1.msra.mxu0 0.0
      %4057 = vmatprep.subr.mxu0 0.0
      %4058 = vmatpush1.msra.mxu0 0.0
      %4059 = vmatprep.subr.mxu0 0.0
      %4060 = vmatpush1.msra.mxu0 0.0
      %4061 = vmatprep.subr.mxu0 0.0
      %4062 = vmatpush1.msra.mxu0 0.0
      %4063 = vmatprep.subr.mxu0 0.0
      %4064 = vmatpush1.msra.mxu0 0.0
      %4065 = vmatprep.subr.mxu0 0.0
      %4066 = vmatpush1.msra.mxu0 0.0
      %4067 = vmatprep.subr.mxu0 0.0
      %4068 = vmatpush1.msra.mxu0 0.0
      %4069 = vmatprep.subr.mxu0 0.0
      %4070 = vmatpush1.msra.mxu0 0.0
      %4071 = vmatprep.subr.mxu0 0.0
      %4072 = vmatpush1.msra.mxu0 0.0
      %4073 = vmatprep.subr.mxu0 0.0
      %4074 = vmatpush1.msra.mxu0 0.0
      %4075 = vmatprep.subr.mxu0 0.0
      %4076 = vmatpush1.msra.mxu0 0.0
      %4077 = vmatprep.subr.mxu0 0.0
      %4078 = vmatpush1.msra.mxu0 0.0
      %4079 = vmatprep.subr.mxu0 0.0
      %4080 = vmatpush1.msra.mxu0 0.0
      %4081 = vmatprep.subr.mxu0 0.0
      %4082 = vmatpush1.msra.mxu0 0.0
      %4083 = vmatprep.subr.mxu0 0.0
      %4084 = vmatpush1.msra.mxu0 0.0
      %4085 = vmatprep.subr.mxu0 0.0
      %4086 = vmatpush1.msra.mxu0 0.0
      %4087 = vmatprep.subr.mxu0 0.0
      %4088 = vmatpush1.msra.mxu0 0.0
      %4089 = vmatprep.subr.mxu0 0.0
      %4090 = vmatpush1.msra.mxu0 0.0
      %4091 = vmatprep.subr.mxu0 0.0
      %4092 = vmatpush1.msra.mxu0 0.0
      %4093 = vmatprep.subr.mxu0 0.0
      %4094 = vmatpush1.msra.mxu0 0.0
      %4095 = vmatprep.subr.mxu0 0.0
      %4096 = vmatpush1.msra.mxu0 0.0
      %4097 = vmatprep.subr.mxu0 0.0
      %4098 = vmatpush1.msra.mxu0 0.0
      %4099 = vmatprep.subr.mxu0 0.0
      %4100 = vmatpush1.msra.mxu0 0.0
      %4101 = vmatprep.mubr.f32.mxu0 0.0
      %4102 = vmatmul.mubr.f32.gmra.mrb[0].mxu0 %v4008
      %v4103 = vpop.f32.mrb[0].mxu0
      %v4104 = vadd.f32 %v3958, %v4103
      %v4105 = vpop.f32.mrb[0].mxu0
      %4106 = vmatprep.mubr.f32.mxu0 0.0
      %4107 = vmatmul.mubr.f32.gmra.mrb[0].mxu0 %v4011
      %v4108 = vpop.f32.mrb[0].mxu0
      %v4109 = vadd.f32 %v3963, %v4108
      %v4110 = vpop.f32.mrb[0].mxu0
      %4111 = vmatprep.mubr.f32.mxu0 0.0
      %4112 = vmatmul.mubr.f32.gmra.mrb[0].mxu0 %v4014
      %v4113 = vpop.f32.mrb[0].mxu0
      %v4114 = vadd.f32 %v3968, %v4113
      %v4115 = vpop.f32.mrb[0].mxu0
      %4116 = vmatprep.mubr.f32.mxu0 0.0
      %4117 = vmatmul.mubr.f32.gmra.mrb[0].mxu0 %v4017
      %v4118 = vpop.f32.mrb[0].mxu0
      %v4119 = vadd.f32 %v3973, %v4118
      %v4120 = vpop.f32.mrb[0].mxu0
      %4121 = vmatprep.mubr.f32.mxu0 0.0
      %4122 = vmatmul.mubr.f32.gmra.mrb[0].mxu0 %v4020
      %v4123 = vpop.f32.mrb[0].mxu0
      %v4124 = vadd.f32 %v3978, %v4123
      %v4125 = vpop.f32.mrb[0].mxu0
      %4126 = vmatprep.mubr.f32.mxu0 0.0
      %4127 = vmatmul.mubr.f32.gmra.mrb[0].mxu0 %v4023
      %v4128 = vpop.f32.mrb[0].mxu0
      %v4129 = vadd.f32 %v3983, %v4128
      %v4130 = vpop.f32.mrb[0].mxu0
      %4131 = vmatprep.mubr.f32.mxu0 0.0
      %4132 = vmatmul.mubr.f32.gmra.mrb[0].mxu0 %v4026
      %v4133 = vpop.f32.mrb[0].mxu0
      %v4134 = vadd.f32 %v3988, %v4133
      %v4135 = vpop.f32.mrb[0].mxu0
      %4136 = vmatprep.mubr.f32.mxu0 0.0
      %4137 = vmatmul.mubr.f32.gmra.mrb[0].mxu0 %v4029
      %v4138 = vpop.f32.mrb[0].mxu0
      %v4139 = vadd.f32 %v3993, %v4138
      %v4140 = vpop.f32.mrb[0].mxu0
      %4141 = vmatprep.mubr.f32.mxu0 0.0
      %4142 = vmatmul.mubr.f32.gmra.mrb[0].mxu0 %v4032
      %v4143 = vpop.f32.mrb[0].mxu0
      %v4144 = vadd.f32 %v3998, %v4143
      %v4145 = vpop.f32.mrb[0].mxu0
      %4146 = vmatprep.mubr.f32.mxu0 0.0
      %4147 = vmatmul.mubr.f32.gmra.mrb[0].mxu0 %v4035
      %v4148 = vpop.f32.mrb[0].mxu0
      %v4149 = vadd.f32 %v4003, %v4148
      %v4150 = vpop.f32.mrb[0].mxu0
      %4151 = vdwg.mxu0
      %vm4152 = vcmask 64512
      %4153 = vst.msk [vmem:[%s257] sm:$0xff] %vm4152, %v4104
      %4154 = vst.msk [vmem:[%s257 + $0x8] sm:$0xff] %vm4152, %v4109
      %4155 = vst.msk [vmem:[%s257 + $0x10] sm:$0xff] %vm4152, %v4114
      %4156 = vst.msk [vmem:[%s257 + $0x18] sm:$0xff] %vm4152, %v4119
      %4157 = vst.msk [vmem:[%s257 + $0x20] sm:$0xff] %vm4152, %v4124
      %4158 = vst.msk [vmem:[%s257 + $0x28] sm:$0xff] %vm4152, %v4129
      %4159 = vst.msk [vmem:[%s257 + $0x30] sm:$0xff] %vm4152, %v4134
      %4160 = vst.msk [vmem:[%s257 + $0x38] sm:$0xff] %vm4152, %v4139
      %4161 = vst.msk [vmem:[%s257 + $0x40] sm:$0xff] %vm4152, %v4144
      %4162 = vst.msk [vmem:[%s257 + $0x48] sm:$0xff] %vm4152, %v4149
      %p4163 = scmp.lt.s32.totalorder %s15, 7
      %s4164 = scalar_select %p4163, %s15, 7
      %s4165 = smul.addr %s4164, 10
      %s4166 = smul.addr %s4165, 8
      %s4167 = scalar_lea.vmem %s4, %s4166
      // Predicated region
      $region37: #{run_pallas.5} parent=35 // pred_check
        %p4168 = pneg %p137
      $region38: #{run_pallas.5} parent=35 // pred_check_branch
        %4170 = sbr.rel (%p4168) target = $region40
      $region39: #{run_pallas.5} parent=35 // pred_region
        _
      $region40: #{run_pallas.5} parent=35 // pred_fallthru
        _
    $region36: #{run_pallas.5} parent=5 // pred_fallthru
      _
    %p4171 = scmp.le.s32.totalorder 2, %s10
    // Predicated region
    $region41: #{run_pallas.5} parent=5 // pred_check
      %p4172 = pneg %p4171
    $region42: #{run_pallas.5} parent=5 // pred_check_branch
      %4174 = sbr.rel (%p4172) target = $region44
    $region43: #{run_pallas.5} parent=5 // pred_region
      %s4175 = ssub.s32 %s10, 2
      // Predicated region
      $region45: #{run_pallas.5} parent=43 // pred_check
        %p4176 = pneg %p143
      $region46: #{run_pallas.5} parent=43 // pred_check_branch
        %4178 = sbr.rel (%p4176) target = $region48
      $region47: #{run_pallas.5} parent=43 // pred_region
        %p4179 = scmp.lt.s32.totalorder %s16, 7
        %s4180 = scalar_select %p4179, %s16, 7
        %s4181 = smul.addr %s4180, 10
        %s4182 = smul.addr %s4181, 8
        %s4183 = scalar_lea.vmem %s4, %s4182
      $region48: #{run_pallas.5} parent=43 // pred_fallthru
        _
    $region44: #{run_pallas.5} parent=5 // pred_fallthru
      _
  $region6: #{run_pallas.5} parent=0 // loop_footer
    %s14 = sadd.s32 1, %s10
  $region7: #{run_pallas.5} parent=0 // loop_footer_branch
    %9 = sbr.rel target = $region3
  $region8: #{run_pallas.5} parent=0 // loop_exit
    _

</llo_original>
